<compile_context>
chip_gen: v6e
topology: v6e:2x2x1
jax: 0.10.0
libtpu: 0.0.40
codegen_flags: <defaults>
</compile_context>

<pallas_src>
import functools

import jax
import jax.numpy as jnp
from jax.experimental import pallas as pl
from jax.experimental.pallas import tpu as pltpu

# Geometry implied by Linear(3200) = 8 * 20 * 20  ->  28x28 single-channel input.
_H = 28
_P = _H * _H                  # 784 logical spatial positions
_LANE = 128
_PL = 896                     # 7 * 128 lane-padded spatial width
_K = 5
_C1_IN, _C1_OUT = 1, 4
_C2_OUT = 8
_H1 = _H - _K + 1             # 24 (conv1 valid output size)
_H2 = _H1 - _K + 1            # 20 (conv2 valid output size)
_FC_IN = _C2_OUT * _H2 * _H2  # 3200

_TB = 32                      # batch tile (32 on v6e/v7x; 16 is a better fit on v5e)
_COMPUTE_DTYPE = jnp.bfloat16


# ----------------------------------------------------------------------------
# One-time probe: pin down pltpu.roll's rotate convention (or fall back).
# Must be executed outside jit; prepare_params() warms the cache.
# ----------------------------------------------------------------------------
@functools.cache
def _roll_mode():
    try:
        def _probe(x_ref, o_ref):
            o_ref[...] = pltpu.roll(x_ref[...], shift=1, axis=1)
        x = jnp.arange(8 * _LANE, dtype=jnp.float32).reshape(8, _LANE)
        y = pl.pallas_call(
            _probe, out_shape=jax.ShapeDtypeStruct((8, _LANE), jnp.float32))(x)
        if bool(jnp.array_equal(y, jnp.roll(x, 1, axis=1))):
            return "jnp"      # pltpu.roll(x, s) == jnp.roll(x, s)
        if bool(jnp.array_equal(y, jnp.roll(x, -1, axis=1))):
            return "neg"      # opposite convention
    except Exception:
        pass
    return "concat"           # roll unavailable: slice + zero-tail fallback


def _shift_piece(a, d, mode):
    """Return an array whose lane p holds a[:, p + d] for every lane a valid
    conv output reads (p + d < 784 by construction)."""
    if d == 0:
        return a
    if mode == "jnp":
        return pltpu.roll(a, shift=_PL - d, axis=1)
    if mode == "neg":
        return pltpu.roll(a, shift=d, axis=1)
    tail = jnp.zeros((a.shape[0], d), a.dtype)          # always-correct fallback
    return jnp.concatenate([a[:, d:], tail], axis=1)


def _rolled_stack(a):
    """a: [R, _PL], each row an independent flattened (28x28, lane-padded) map.
    Returns [25*R, _PL]; rows [o*R:(o+1)*R] (o = kh*5 + kw) hold a shifted left
    along lanes by kh*28 + kw.  Wrapped / zero-tail lanes land only in positions
    never read by valid conv outputs."""
    mode = _roll_mode()
    pieces = []
    for kh in range(_K):
        for kw in range(_K):
            pieces.append(_shift_piece(a, kh * _H + kw, mode))
    return jnp.concatenate(pieces, axis=0)


# ----------------------------------------------------------------------------
# Fused Pallas kernel
# ----------------------------------------------------------------------------
def _encoder_kernel(x_ref, mask_ref, w1_ref, b1_ref, w2_ref, b2_ref,
                    wfc_ref, bfc_ref, o_ref):
    cd = w1_ref.dtype                 # matmul operand dtype (bf16 in production)
    tb = x_ref.shape[0]               # images in this batch tile

    # conv1 + ReLU  ->  [C1_OUT*tb, PL], rows ordered (c1, b).
    r1 = _rolled_stack(x_ref[...].astype(cd))                     # [25*tb, PL]
    h1 = jnp.dot(w1_ref[...], r1, preferred_element_type=jnp.float32)
    h1 = jnp.maximum(h1 + b1_ref[...], 0.0) * mask_ref[...]       # junk lanes -> 0

    # conv2 + ReLU  ->  [C2_OUT*tb, PL], rows ordered (c2, b).
    r2 = _rolled_stack(h1.astype(cd))                             # [100*tb, PL]
    h2 = jnp.dot(w2_ref[...], r2, preferred_element_type=jnp.float32)
    h2 = jnp.maximum(h2 + b2_ref[...], 0.0).astype(cd)

    # fc: y[b, e] = sum_c h2[c*tb + b, :] @ wfc[c, :, e]  + bias.
    # (NCHW flatten + 20x20 valid-window selection folded into wfc; lanes >= 400
    #  of each channel's window and all lane padding are zero-weighted.)
    acc = jnp.zeros((tb, o_ref.shape[1]), jnp.float32)
    for c in range(_C2_OUT):
        acc = acc + jnp.dot(h2[c * tb:(c + 1) * tb, :], wfc_ref[c],
                            preferred_element_type=jnp.float32)
    o_ref[...] = (acc + bfc_ref[...]).astype(o_ref.dtype)


# ----------------------------------------------------------------------------
# Parameters (PyTorch-shaped) and one-time layout folding
# ----------------------------------------------------------------------------
def init_params(embed, key):
    k1, k2, k3, k4, k5, k6 = jax.random.split(key, 6)
    return {
        "conv1_w": jax.random.normal(k1, (_C1_OUT, _C1_IN, _K, _K), jnp.float32) * 0.1,
        "conv1_b": jax.random.normal(k2, (_C1_OUT,), jnp.float32) * 0.1,
        "conv2_w": jax.random.normal(k3, (_C2_OUT, _C1_OUT, _K, _K), jnp.float32) * 0.1,
        "conv2_b": jax.random.normal(k4, (_C2_OUT,), jnp.float32) * 0.1,
        "fc_w": jax.random.normal(k5, (embed, _FC_IN), jnp.float32) * 0.02,  # [out, in]
        "fc_b": jax.random.normal(k6, (embed,), jnp.float32) * 0.02,
    }


def prepare_params(params, tb=_TB, compute_dtype=_COMPUTE_DTYPE):
    """Fold PyTorch-layout parameters into kernel-ready layouts (run once,
    outside jit — it also warms the roll-convention probe)."""
    _roll_mode()
    embed = params["fc_w"].shape[0]
    embed_pad = -(-embed // _LANE) * _LANE
    eye = jnp.eye(tb, dtype=jnp.float32)

    # conv1: rows (c1, b), cols (offset, b).
    w1f = params["conv1_w"].reshape(_C1_OUT, _K * _K)
    w1e = jnp.kron(w1f, eye)                                        # [4tb, 25tb]
    b1e = jnp.repeat(params["conv1_b"], tb).reshape(_C1_OUT * tb, 1)

    # conv2: cols ordered (kh, kw, cin, b) to match the rolled stack of h1.
    w2m = params["conv2_w"].transpose(0, 2, 3, 1).reshape(_C2_OUT, _K * _K * _C1_OUT)
    w2e = jnp.kron(w2m, eye)                                        # [8tb, 100tb]
    b2e = jnp.repeat(params["conv2_b"], tb).reshape(_C2_OUT * tb, 1)

    # fc: fold the NCHW flatten into the weight; zero-pad the 20x20 valid window
    # onto the 28x28 grid, lane-pad 784->896, pad embed to a multiple of 128.
    wf = params["fc_w"].reshape(embed, _C2_OUT, _H2, _H2)
    wf = jnp.pad(wf, ((0, 0), (0, 0), (0, _H - _H2), (0, _H - _H2)))
    wf = wf.reshape(embed, _C2_OUT, _P)
    wf = jnp.pad(wf, ((0, 0), (0, 0), (0, _PL - _P)))
    wfc = wf.transpose(1, 2, 0)                                     # [8, PL, embed]
    wfc = jnp.pad(wfc, ((0, 0), (0, 0), (0, embed_pad - embed)))
    bfc = jnp.pad(params["fc_b"], (0, embed_pad - embed)).reshape(1, embed_pad)

    # Valid-window mask for conv1 outputs (h < 24 and w < 24); zero elsewhere.
    hw = jnp.arange(_H)
    valid = ((hw[:, None] < _H1) & (hw[None, :] < _H1)).astype(jnp.float32)
    mask = jnp.pad(valid.reshape(1, _P), ((0, 0), (0, _PL - _P)))

    return {
        "w1e": w1e.astype(compute_dtype), "b1e": b1e.astype(jnp.float32),
        "w2e": w2e.astype(compute_dtype), "b2e": b2e.astype(jnp.float32),
        "wfc": wfc.astype(compute_dtype), "bfc": bfc.astype(jnp.float32),
        "mask": mask,
    }


# ----------------------------------------------------------------------------
# Forward pass
# ----------------------------------------------------------------------------
def cnn_encoder_forward(prep, x, embed):
    """x: [B, 1, 28, 28] (NCHW, PyTorch layout)  ->  [B, embed]."""
    B = x.shape[0]
    tb = prep["b1e"].shape[0] // _C1_OUT
    embed_pad = prep["bfc"].shape[1]
    bp = -(-B // tb) * tb
    n_steps = bp // tb          # NOTE(v7x): keep >= 2 (or shrink tb) for 2-TC use

    x2 = x.reshape(B, _P).astype(jnp.float32)
    x2 = jnp.pad(x2, ((0, bp - B), (0, _PL - _P)))

    weights = (prep["mask"], prep["w1e"], prep["b1e"], prep["w2e"],
               prep["b2e"], prep["wfc"], prep["bfc"])

    flops = n_steps * (
        2 * (_C1_OUT * tb) * (_K * _K * tb) * _PL
        + 2 * (_C2_OUT * tb) * (_K * _K * _C1_OUT * tb) * _PL
        + 2 * tb * _PL * embed_pad * _C2_OUT)
    bytes_accessed = int(x2.size * 4
                         + sum(int(w.size) * w.dtype.itemsize for w in weights)
                         + bp * embed_pad * 4)

    # VMEM budget from actual prepared sizes (double-buffered blocks + slabs).
    cdb = prep["w1e"].dtype.itemsize
    slab_bytes = (_K * _K * _C1_IN * tb * _PL * cdb          # r1
                  + _K * _K * _C1_OUT * tb * _PL * cdb       # r2
                  + _C1_OUT * tb * _PL * 4                   # h1 (f32)
                  + _C2_OUT * tb * _PL * (4 + cdb))          # h2 (f32 + cast)
    block_bytes = 2 * (tb * _PL * 4 + _PL * 4
                       + int(prep["w1e"].size) * cdb
                       + int(prep["w2e"].size) * cdb
                       + int(prep["wfc"].size) * cdb
                       + (_C1_OUT + _C2_OUT) * tb * _LANE * 4    # lane-padded biases
                       + 8 * embed_pad * 4                       # bfc (sublane pad)
                       + tb * embed_pad * 4)                     # out tile
    vmem_limit = int(min(max((slab_bytes + block_bytes) * 5 // 4 + (4 << 20),
                             32 << 20), 64 << 20))

    y = pl.pallas_call(
        _encoder_kernel,
        out_shape=jax.ShapeDtypeStruct((bp, embed_pad), jnp.float32),
        grid=(n_steps,),
        in_specs=[
            pl.BlockSpec((tb, _PL), lambda i: (i, 0)),             # batch tile
            pl.BlockSpec(prep["mask"].shape, lambda i: (0, 0)),    # VMEM-resident
            pl.BlockSpec(prep["w1e"].shape, lambda i: (0, 0)),
            pl.BlockSpec(prep["b1e"].shape, lambda i: (0, 0)),
            pl.BlockSpec(prep["w2e"].shape, lambda i: (0, 0)),
            pl.BlockSpec(prep["b2e"].shape, lambda i: (0, 0)),
            pl.BlockSpec(prep["wfc"].shape, lambda i: (0, 0, 0)),
            pl.BlockSpec(prep["bfc"].shape, lambda i: (0, 0)),
        ],
        out_specs=pl.BlockSpec((tb, embed_pad), lambda i: (i, 0)),
        compiler_params=pltpu.CompilerParams(
            dimension_semantics=("parallel",),
            vmem_limit_bytes=vmem_limit),
        cost_estimate=pl.CostEstimate(
            flops=flops, transcendentals=0, bytes_accessed=bytes_accessed),
    )(x2, *weights)
    return y[:B, :embed]


# ----------------------------------------------------------------------------
# Pure-JAX reference (correctness self-check only)
# ----------------------------------------------------------------------------
def _reference_forward(params, x):
    dn1 = jax.lax.conv_dimension_numbers(
        x.shape, params["conv1_w"].shape, ("NCHW", "OIHW", "NCHW"))
    h = jax.lax.conv_general_dilated(
        x, params["conv1_w"], (1, 1), "VALID", dimension_numbers=dn1,
        precision=jax.lax.Precision.HIGHEST)
    h = jnp.maximum(h + params["conv1_b"][None, :, None, None], 0.0)
    dn2 = jax.lax.conv_dimension_numbers(
        h.shape, params["conv2_w"].shape, ("NCHW", "OIHW", "NCHW"))
    h = jax.lax.conv_general_dilated(
        h, params["conv2_w"], (1, 1), "VALID", dimension_numbers=dn2,
        precision=jax.lax.Precision.HIGHEST)
    h = jnp.maximum(h + params["conv2_b"][None, :, None, None], 0.0)
    flat = h.reshape(h.shape[0], -1)
    return jnp.dot(flat, params["fc_w"].T,
                   precision=jax.lax.Precision.HIGHEST) + params["fc_b"]


if __name__ == "__main__":
    B, embed = 2, 32
    key = jax.random.PRNGKey(0)
    kx, kp = jax.random.split(key)
    x = jax.random.normal(kx, (B, _C1_IN, _H, _H), jnp.float32)
    params = init_params(embed, kp)
    ref = jax.block_until_ready(_reference_forward(params, x))

    fwd = jax.jit(cnn_encoder_forward, static_argnums=(2,))

    # Layout check at tighter tolerance: f32 operands, small batch tile.
    prep_f32 = prepare_params(params, tb=8, compute_dtype=jnp.float32)
    out_f32 = jax.block_until_ready(fwd(prep_f32, x, embed))
    assert out_f32.shape == (B, embed), out_f32.shape
    err_f32 = float(jnp.max(jnp.abs(out_f32 - ref)))
    assert err_f32 < 2e-2, f"f32 max abs error vs reference = {err_f32}"

    # Production config: bf16 operands, batch tile 32.
    prep = prepare_params(params)
    out = jax.block_until_ready(fwd(prep, x, embed))
    assert out.shape == (B, embed), out.shape
    err = float(jnp.max(jnp.abs(out - ref)))
    assert err < 6e-2, f"bf16 max abs error vs reference = {err}"

    print("KERNEL_OK")
</pallas_src>

<mosaic_0001>
module attributes {stable_mosaic.version = 11 : i64} {
  func.func @_probe(%arg0: memref<8x128xf32, #tpu.memory_space<vmem>>, %arg1: memref<8x128xf32, #tpu.memory_space<vmem>>) attributes {dimension_semantics = [], scalar_prefetch = 0 : i64, scratch_operands = 0 : i64, tpu.core_type = #tpu.core_type<tc>} {
    %c0 = arith.constant 0 : index
    %c0_0 = arith.constant 0 : index
    %0 = vector.load %arg0[%c0, %c0_0] : memref<8x128xf32, #tpu.memory_space<vmem>>, vector<8x128xf32>
    %c1_i32 = arith.constant 1 : i32
    %1 = tpu.dynamic_rotate %0 by %c1_i32 dim 1 : vector<8x128xf32>, i32 -> vector<8x128xf32>
    %c0_1 = arith.constant 0 : index
    %c0_2 = arith.constant 0 : index
    %2 = vector.load %arg1[%c0_1, %c0_2] : memref<8x128xf32, #tpu.memory_space<vmem>>, vector<8x128xf32>
    tpu.vector_store %arg1[%c0_1, %c0_2], %1 {strides = array<i32>} : memref<8x128xf32, #tpu.memory_space<vmem>>, vector<8x128xf32>,
    return
  }
}

module attributes {stable_mosaic.version = 11 : i64} {
  func.func @_encoder_kernel(%arg0: i32, %arg1: memref<8x896xf32, #tpu.memory_space<vmem>>, %arg2: memref<1x896xf32, #tpu.memory_space<vmem>>, %arg3: memref<32x200xf32, #tpu.memory_space<vmem>>, %arg4: memref<32x1xf32, #tpu.memory_space<vmem>>, %arg5: memref<64x800xf32, #tpu.memory_space<vmem>>, %arg6: memref<64x1xf32, #tpu.memory_space<vmem>>, %arg7: memref<8x896x128xf32, #tpu.memory_space<vmem>>, %arg8: memref<1x128xf32, #tpu.memory_space<vmem>>, %arg9: memref<8x128xf32, #tpu.memory_space<vmem>>) attributes {dimension_semantics = [#tpu.dimension_semantics<parallel>], iteration_bounds = array<i64: 1>, scalar_prefetch = 0 : i64, scratch_operands = 0 : i64, tpu.core_type = #tpu.core_type<tc>, window_params = [{transform_indices = @transform_0, window_bounds = array<i64: 8, 896>}, {pipeline_mode = #tpu.pipeline_mode<synchronous>, transform_indices = @transform_1, window_bounds = array<i64: 1, 896>}, {pipeline_mode = #tpu.pipeline_mode<synchronous>, transform_indices = @transform_2, window_bounds = array<i64: 32, 200>}, {pipeline_mode = #tpu.pipeline_mode<synchronous>, transform_indices = @transform_3, window_bounds = array<i64: 32, 1>}, {pipeline_mode = #tpu.pipeline_mode<synchronous>, transform_indices = @transform_4, window_bounds = array<i64: 64, 800>}, {pipeline_mode = #tpu.pipeline_mode<synchronous>, transform_indices = @transform_5, window_bounds = array<i64: 64, 1>}, {pipeline_mode = #tpu.pipeline_mode<synchronous>, transform_indices = @transform_6, window_bounds = array<i64: 8, 896, 128>}, {pipeline_mode = #tpu.pipeline_mode<synchronous>, transform_indices = @transform_7, window_bounds = array<i64: 1, 128>}, {transform_indices = @transform_8, window_bounds = array<i64: 8, 128>}]} {
    %c0 = arith.constant 0 : index
    %c0_0 = arith.constant 0 : index
    %0 = vector.load %arg1[%c0, %c0_0] : memref<8x896xf32, #tpu.memory_space<vmem>>, vector<8x896xf32>
    %cst = arith.constant 0.000000e+00 : f32
    %1 = vector.broadcast %cst : f32 to vector<8x1xf32>
    %2 = vector.extract_strided_slice %0 {offsets = [0, 1], sizes = [8, 895], strides = [1, 1]} : vector<8x896xf32> to vector<8x895xf32>
    %3 = tpu.concatenate %2, %1 in 1 : vector<8x895xf32>, vector<8x1xf32> -> vector<8x896xf32>
    %cst_1 = arith.constant 0.000000e+00 : f32
    %4 = vector.broadcast %cst_1 : f32 to vector<8x2xf32>
    %5 = vector.extract_strided_slice %0 {offsets = [0, 2], sizes = [8, 894], strides = [1, 1]} : vector<8x896xf32> to vector<8x894xf32>
    %6 = tpu.concatenate %5, %4 in 1 : vector<8x894xf32>, vector<8x2xf32> -> vector<8x896xf32>
    %cst_2 = arith.constant 0.000000e+00 : f32
    %7 = vector.broadcast %cst_2 : f32 to vector<8x3xf32>
    %8 = vector.extract_strided_slice %0 {offsets = [0, 3], sizes = [8, 893], strides = [1, 1]} : vector<8x896xf32> to vector<8x893xf32>
    %9 = tpu.concatenate %8, %7 in 1 : vector<8x893xf32>, vector<8x3xf32> -> vector<8x896xf32>
    %cst_3 = arith.constant 0.000000e+00 : f32
    %10 = vector.broadcast %cst_3 : f32 to vector<8x4xf32>
    %11 = vector.extract_strided_slice %0 {offsets = [0, 4], sizes = [8, 892], strides = [1, 1]} : vector<8x896xf32> to vector<8x892xf32>
    %12 = tpu.concatenate %11, %10 in 1 : vector<8x892xf32>, vector<8x4xf32> -> vector<8x896xf32>
    %cst_4 = arith.constant 0.000000e+00 : f32
    %13 = vector.broadcast %cst_4 : f32 to vector<8x28xf32>
    %14 = vector.extract_strided_slice %0 {offsets = [0, 28], sizes = [8, 868], strides = [1, 1]} : vector<8x896xf32> to vector<8x868xf32>
    %15 = tpu.concatenate %14, %13 in 1 : vector<8x868xf32>, vector<8x28xf32> -> vector<8x896xf32>
    %cst_5 = arith.constant 0.000000e+00 : f32
    %16 = vector.broadcast %cst_5 : f32 to vector<8x29xf32>
    %17 = vector.extract_strided_slice %0 {offsets = [0, 29], sizes = [8, 867], strides = [1, 1]} : vector<8x896xf32> to vector<8x867xf32>
    %18 = tpu.concatenate %17, %16 in 1 : vector<8x867xf32>, vector<8x29xf32> -> vector<8x896xf32>
    %cst_6 = arith.constant 0.000000e+00 : f32
    %19 = vector.broadcast %cst_6 : f32 to vector<8x30xf32>
    %20 = vector.extract_strided_slice %0 {offsets = [0, 30], sizes = [8, 866], strides = [1, 1]} : vector<8x896xf32> to vector<8x866xf32>
    %21 = tpu.concatenate %20, %19 in 1 : vector<8x866xf32>, vector<8x30xf32> -> vector<8x896xf32>
    %cst_7 = arith.constant 0.000000e+00 : f32
    %22 = vector.broadcast %cst_7 : f32 to vector<8x31xf32>
    %23 = vector.extract_strided_slice %0 {offsets = [0, 31], sizes = [8, 865], strides = [1, 1]} : vector<8x896xf32> to vector<8x865xf32>
    %24 = tpu.concatenate %23, %22 in 1 : vector<8x865xf32>, vector<8x31xf32> -> vector<8x896xf32>
    %cst_8 = arith.constant 0.000000e+00 : f32
    %25 = vector.broadcast %cst_8 : f32 to vector<8x32xf32>
    %26 = vector.extract_strided_slice %0 {offsets = [0, 32], sizes = [8, 864], strides = [1, 1]} : vector<8x896xf32> to vector<8x864xf32>
    %27 = tpu.concatenate %26, %25 in 1 : vector<8x864xf32>, vector<8x32xf32> -> vector<8x896xf32>
    %cst_9 = arith.constant 0.000000e+00 : f32
    %28 = vector.broadcast %cst_9 : f32 to vector<8x56xf32>
    %29 = vector.extract_strided_slice %0 {offsets = [0, 56], sizes = [8, 840], strides = [1, 1]} : vector<8x896xf32> to vector<8x840xf32>
    %30 = tpu.concatenate %29, %28 in 1 : vector<8x840xf32>, vector<8x56xf32> -> vector<8x896xf32>
    %cst_10 = arith.constant 0.000000e+00 : f32
    %31 = vector.broadcast %cst_10 : f32 to vector<8x57xf32>
    %32 = vector.extract_strided_slice %0 {offsets = [0, 57], sizes = [8, 839], strides = [1, 1]} : vector<8x896xf32> to vector<8x839xf32>
    %33 = tpu.concatenate %32, %31 in 1 : vector<8x839xf32>, vector<8x57xf32> -> vector<8x896xf32>
    %cst_11 = arith.constant 0.000000e+00 : f32
    %34 = vector.broadcast %cst_11 : f32 to vector<8x58xf32>
    %35 = vector.extract_strided_slice %0 {offsets = [0, 58], sizes = [8, 838], strides = [1, 1]} : vector<8x896xf32> to vector<8x838xf32>
    %36 = tpu.concatenate %35, %34 in 1 : vector<8x838xf32>, vector<8x58xf32> -> vector<8x896xf32>
    %cst_12 = arith.constant 0.000000e+00 : f32
    %37 = vector.broadcast %cst_12 : f32 to vector<8x59xf32>
    %38 = vector.extract_strided_slice %0 {offsets = [0, 59], sizes = [8, 837], strides = [1, 1]} : vector<8x896xf32> to vector<8x837xf32>
    %39 = tpu.concatenate %38, %37 in 1 : vector<8x837xf32>, vector<8x59xf32> -> vector<8x896xf32>
    %cst_13 = arith.constant 0.000000e+00 : f32
    %40 = vector.broadcast %cst_13 : f32 to vector<8x60xf32>
    %41 = vector.extract_strided_slice %0 {offsets = [0, 60], sizes = [8, 836], strides = [1, 1]} : vector<8x896xf32> to vector<8x836xf32>
    %42 = tpu.concatenate %41, %40 in 1 : vector<8x836xf32>, vector<8x60xf32> -> vector<8x896xf32>
    %cst_14 = arith.constant 0.000000e+00 : f32
    %43 = vector.broadcast %cst_14 : f32 to vector<8x84xf32>
    %44 = vector.extract_strided_slice %0 {offsets = [0, 84], sizes = [8, 812], strides = [1, 1]} : vector<8x896xf32> to vector<8x812xf32>
    %45 = tpu.concatenate %44, %43 in 1 : vector<8x812xf32>, vector<8x84xf32> -> vector<8x896xf32>
    %cst_15 = arith.constant 0.000000e+00 : f32
    %46 = vector.broadcast %cst_15 : f32 to vector<8x85xf32>
    %47 = vector.extract_strided_slice %0 {offsets = [0, 85], sizes = [8, 811], strides = [1, 1]} : vector<8x896xf32> to vector<8x811xf32>
    %48 = tpu.concatenate %47, %46 in 1 : vector<8x811xf32>, vector<8x85xf32> -> vector<8x896xf32>
    %cst_16 = arith.constant 0.000000e+00 : f32
    %49 = vector.broadcast %cst_16 : f32 to vector<8x86xf32>
    %50 = vector.extract_strided_slice %0 {offsets = [0, 86], sizes = [8, 810], strides = [1, 1]} : vector<8x896xf32> to vector<8x810xf32>
    %51 = tpu.concatenate %50, %49 in 1 : vector<8x810xf32>, vector<8x86xf32> -> vector<8x896xf32>
    %cst_17 = arith.constant 0.000000e+00 : f32
    %52 = vector.broadcast %cst_17 : f32 to vector<8x87xf32>
    %53 = vector.extract_strided_slice %0 {offsets = [0, 87], sizes = [8, 809], strides = [1, 1]} : vector<8x896xf32> to vector<8x809xf32>
    %54 = tpu.concatenate %53, %52 in 1 : vector<8x809xf32>, vector<8x87xf32> -> vector<8x896xf32>
    %cst_18 = arith.constant 0.000000e+00 : f32
    %55 = vector.broadcast %cst_18 : f32 to vector<8x88xf32>
    %56 = vector.extract_strided_slice %0 {offsets = [0, 88], sizes = [8, 808], strides = [1, 1]} : vector<8x896xf32> to vector<8x808xf32>
    %57 = tpu.concatenate %56, %55 in 1 : vector<8x808xf32>, vector<8x88xf32> -> vector<8x896xf32>
    %cst_19 = arith.constant 0.000000e+00 : f32
    %58 = vector.broadcast %cst_19 : f32 to vector<8x112xf32>
    %59 = vector.extract_strided_slice %0 {offsets = [0, 112], sizes = [8, 784], strides = [1, 1]} : vector<8x896xf32> to vector<8x784xf32>
    %60 = tpu.concatenate %59, %58 in 1 : vector<8x784xf32>, vector<8x112xf32> -> vector<8x896xf32>
    %cst_20 = arith.constant 0.000000e+00 : f32
    %61 = vector.broadcast %cst_20 : f32 to vector<8x113xf32>
    %62 = vector.extract_strided_slice %0 {offsets = [0, 113], sizes = [8, 783], strides = [1, 1]} : vector<8x896xf32> to vector<8x783xf32>
    %63 = tpu.concatenate %62, %61 in 1 : vector<8x783xf32>, vector<8x113xf32> -> vector<8x896xf32>
    %cst_21 = arith.constant 0.000000e+00 : f32
    %64 = vector.broadcast %cst_21 : f32 to vector<8x114xf32>
    %65 = vector.extract_strided_slice %0 {offsets = [0, 114], sizes = [8, 782], strides = [1, 1]} : vector<8x896xf32> to vector<8x782xf32>
    %66 = tpu.concatenate %65, %64 in 1 : vector<8x782xf32>, vector<8x114xf32> -> vector<8x896xf32>
    %cst_22 = arith.constant 0.000000e+00 : f32
    %67 = vector.broadcast %cst_22 : f32 to vector<8x115xf32>
    %68 = vector.extract_strided_slice %0 {offsets = [0, 115], sizes = [8, 781], strides = [1, 1]} : vector<8x896xf32> to vector<8x781xf32>
    %69 = tpu.concatenate %68, %67 in 1 : vector<8x781xf32>, vector<8x115xf32> -> vector<8x896xf32>
    %cst_23 = arith.constant 0.000000e+00 : f32
    %70 = vector.broadcast %cst_23 : f32 to vector<8x116xf32>
    %71 = vector.extract_strided_slice %0 {offsets = [0, 116], sizes = [8, 780], strides = [1, 1]} : vector<8x896xf32> to vector<8x780xf32>
    %72 = tpu.concatenate %71, %70 in 1 : vector<8x780xf32>, vector<8x116xf32> -> vector<8x896xf32>
    %73 = tpu.concatenate %0, %3, %6, %9, %12, %15, %18, %21, %24, %27, %30, %33, %36, %39, %42, %45 in 0 : vector<8x896xf32>, vector<8x896xf32>, vector<8x896xf32>, vector<8x896xf32>, vector<8x896xf32>, vector<8x896xf32>, vector<8x896xf32>, vector<8x896xf32>, vector<8x896xf32>, vector<8x896xf32>, vector<8x896xf32>, vector<8x896xf32>, vector<8x896xf32>, vector<8x896xf32>, vector<8x896xf32>, vector<8x896xf32> -> vector<128x896xf32>
    %74 = tpu.concatenate %48, %51, %54, %57, %60, %63, %66, %69, %72 in 0 : vector<8x896xf32>, vector<8x896xf32>, vector<8x896xf32>, vector<8x896xf32>, vector<8x896xf32>, vector<8x896xf32>, vector<8x896xf32>, vector<8x896xf32>, vector<8x896xf32> -> vector<72x896xf32>
    %75 = tpu.concatenate %73, %74 in 0 : vector<128x896xf32>, vector<72x896xf32> -> vector<200x896xf32>
    %c0_24 = arith.constant 0 : index
    %c0_25 = arith.constant 0 : index
    %76 = vector.load %arg3[%c0_24, %c0_25] : memref<32x200xf32, #tpu.memory_space<vmem>>, vector<32x200xf32>
    %cst_26 = arith.constant dense<0.000000e+00> : vector<32x896xf32>
    %77 = tpu.matmul %76, %75, %cst_26 {dimension_numbers = #tpu.dot_dimension_numbers<[1], [0], [0], [1], [0, 0, 1, 1], [], []>} : vector<32x200xf32>, vector<200x896xf32>, vector<32x896xf32> -> vector<32x896xf32>
    %c0_27 = arith.constant 0 : index
    %c0_28 = arith.constant 0 : index
    %78 = vector.load %arg4[%c0_27, %c0_28] : memref<32x1xf32, #tpu.memory_space<vmem>>, vector<32x1xf32>
    %79 = vector.broadcast %78 : vector<32x1xf32> to vector<32x896xf32>
    %80 = arith.addf %77, %79 : vector<32x896xf32>
    %cst_29 = arith.constant 0.000000e+00 : f32
    %81 = vector.broadcast %cst_29 : f32 to vector<32x896xf32>
    %82 = arith.maximumf %80, %81 : vector<32x896xf32>
    %c0_30 = arith.constant 0 : index
    %c0_31 = arith.constant 0 : index
    %83 = vector.load %arg2[%c0_30, %c0_31] : memref<1x896xf32, #tpu.memory_space<vmem>>, vector<1x896xf32>
    %84 = vector.broadcast %83 : vector<1x896xf32> to vector<32x896xf32>
    %85 = arith.mulf %82, %84 : vector<32x896xf32>
    %cst_32 = arith.constant 0.000000e+00 : f32
    %86 = vector.broadcast %cst_32 : f32 to vector<32x1xf32>
    %87 = vector.extract_strided_slice %85 {offsets = [0, 1], sizes = [32, 895], strides = [1, 1]} : vector<32x896xf32> to vector<32x895xf32>
    %88 = tpu.concatenate %87, %86 in 1 : vector<32x895xf32>, vector<32x1xf32> -> vector<32x896xf32>
    %cst_33 = arith.constant 0.000000e+00 : f32
    %89 = vector.broadcast %cst_33 : f32 to vector<32x2xf32>
    %90 = vector.extract_strided_slice %85 {offsets = [0, 2], sizes = [32, 894], strides = [1, 1]} : vector<32x896xf32> to vector<32x894xf32>
    %91 = tpu.concatenate %90, %89 in 1 : vector<32x894xf32>, vector<32x2xf32> -> vector<32x896xf32>
    %cst_34 = arith.constant 0.000000e+00 : f32
    %92 = vector.broadcast %cst_34 : f32 to vector<32x3xf32>
    %93 = vector.extract_strided_slice %85 {offsets = [0, 3], sizes = [32, 893], strides = [1, 1]} : vector<32x896xf32> to vector<32x893xf32>
    %94 = tpu.concatenate %93, %92 in 1 : vector<32x893xf32>, vector<32x3xf32> -> vector<32x896xf32>
    %cst_35 = arith.constant 0.000000e+00 : f32
    %95 = vector.broadcast %cst_35 : f32 to vector<32x4xf32>
    %96 = vector.extract_strided_slice %85 {offsets = [0, 4], sizes = [32, 892], strides = [1, 1]} : vector<32x896xf32> to vector<32x892xf32>
    %97 = tpu.concatenate %96, %95 in 1 : vector<32x892xf32>, vector<32x4xf32> -> vector<32x896xf32>
    %cst_36 = arith.constant 0.000000e+00 : f32
    %98 = vector.broadcast %cst_36 : f32 to vector<32x28xf32>
    %99 = vector.extract_strided_slice %85 {offsets = [0, 28], sizes = [32, 868], strides = [1, 1]} : vector<32x896xf32> to vector<32x868xf32>
    %100 = tpu.concatenate %99, %98 in 1 : vector<32x868xf32>, vector<32x28xf32> -> vector<32x896xf32>
    %cst_37 = arith.constant 0.000000e+00 : f32
    %101 = vector.broadcast %cst_37 : f32 to vector<32x29xf32>
    %102 = vector.extract_strided_slice %85 {offsets = [0, 29], sizes = [32, 867], strides = [1, 1]} : vector<32x896xf32> to vector<32x867xf32>
    %103 = tpu.concatenate %102, %101 in 1 : vector<32x867xf32>, vector<32x29xf32> -> vector<32x896xf32>
    %cst_38 = arith.constant 0.000000e+00 : f32
    %104 = vector.broadcast %cst_38 : f32 to vector<32x30xf32>
    %105 = vector.extract_strided_slice %85 {offsets = [0, 30], sizes = [32, 866], strides = [1, 1]} : vector<32x896xf32> to vector<32x866xf32>
    %106 = tpu.concatenate %105, %104 in 1 : vector<32x866xf32>, vector<32x30xf32> -> vector<32x896xf32>
    %cst_39 = arith.constant 0.000000e+00 : f32
    %107 = vector.broadcast %cst_39 : f32 to vector<32x31xf32>
    %108 = vector.extract_strided_slice %85 {offsets = [0, 31], sizes = [32, 865], strides = [1, 1]} : vector<32x896xf32> to vector<32x865xf32>
    %109 = tpu.concatenate %108, %107 in 1 : vector<32x865xf32>, vector<32x31xf32> -> vector<32x896xf32>
    %cst_40 = arith.constant 0.000000e+00 : f32
    %110 = vector.broadcast %cst_40 : f32 to vector<32x32xf32>
    %111 = vector.extract_strided_slice %85 {offsets = [0, 32], sizes = [32, 864], strides = [1, 1]} : vector<32x896xf32> to vector<32x864xf32>
    %112 = tpu.concatenate %111, %110 in 1 : vector<32x864xf32>, vector<32x32xf32> -> vector<32x896xf32>
    %cst_41 = arith.constant 0.000000e+00 : f32
    %113 = vector.broadcast %cst_41 : f32 to vector<32x56xf32>
    %114 = vector.extract_strided_slice %85 {offsets = [0, 56], sizes = [32, 840], strides = [1, 1]} : vector<32x896xf32> to vector<32x840xf32>
    %115 = tpu.concatenate %114, %113 in 1 : vector<32x840xf32>, vector<32x56xf32> -> vector<32x896xf32>
    %cst_42 = arith.constant 0.000000e+00 : f32
    %116 = vector.broadcast %cst_42 : f32 to vector<32x57xf32>
    %117 = vector.extract_strided_slice %85 {offsets = [0, 57], sizes = [32, 839], strides = [1, 1]} : vector<32x896xf32> to vector<32x839xf32>
    %118 = tpu.concatenate %117, %116 in 1 : vector<32x839xf32>, vector<32x57xf32> -> vector<32x896xf32>
    %cst_43 = arith.constant 0.000000e+00 : f32
    %119 = vector.broadcast %cst_43 : f32 to vector<32x58xf32>
    %120 = vector.extract_strided_slice %85 {offsets = [0, 58], sizes = [32, 838], strides = [1, 1]} : vector<32x896xf32> to vector<32x838xf32>
    %121 = tpu.concatenate %120, %119 in 1 : vector<32x838xf32>, vector<32x58xf32> -> vector<32x896xf32>
    %cst_44 = arith.constant 0.000000e+00 : f32
    %122 = vector.broadcast %cst_44 : f32 to vector<32x59xf32>
    %123 = vector.extract_strided_slice %85 {offsets = [0, 59], sizes = [32, 837], strides = [1, 1]} : vector<32x896xf32> to vector<32x837xf32>
    %124 = tpu.concatenate %123, %122 in 1 : vector<32x837xf32>, vector<32x59xf32> -> vector<32x896xf32>
    %cst_45 = arith.constant 0.000000e+00 : f32
    %125 = vector.broadcast %cst_45 : f32 to vector<32x60xf32>
    %126 = vector.extract_strided_slice %85 {offsets = [0, 60], sizes = [32, 836], strides = [1, 1]} : vector<32x896xf32> to vector<32x836xf32>
    %127 = tpu.concatenate %126, %125 in 1 : vector<32x836xf32>, vector<32x60xf32> -> vector<32x896xf32>
    %cst_46 = arith.constant 0.000000e+00 : f32
    %128 = vector.broadcast %cst_46 : f32 to vector<32x84xf32>
    %129 = vector.extract_strided_slice %85 {offsets = [0, 84], sizes = [32, 812], strides = [1, 1]} : vector<32x896xf32> to vector<32x812xf32>
    %130 = tpu.concatenate %129, %128 in 1 : vector<32x812xf32>, vector<32x84xf32> -> vector<32x896xf32>
    %cst_47 = arith.constant 0.000000e+00 : f32
    %131 = vector.broadcast %cst_47 : f32 to vector<32x85xf32>
    %132 = vector.extract_strided_slice %85 {offsets = [0, 85], sizes = [32, 811], strides = [1, 1]} : vector<32x896xf32> to vector<32x811xf32>
    %133 = tpu.concatenate %132, %131 in 1 : vector<32x811xf32>, vector<32x85xf32> -> vector<32x896xf32>
    %cst_48 = arith.constant 0.000000e+00 : f32
    %134 = vector.broadcast %cst_48 : f32 to vector<32x86xf32>
    %135 = vector.extract_strided_slice %85 {offsets = [0, 86], sizes = [32, 810], strides = [1, 1]} : vector<32x896xf32> to vector<32x810xf32>
    %136 = tpu.concatenate %135, %134 in 1 : vector<32x810xf32>, vector<32x86xf32> -> vector<32x896xf32>
    %cst_49 = arith.constant 0.000000e+00 : f32
    %137 = vector.broadcast %cst_49 : f32 to vector<32x87xf32>
    %138 = vector.extract_strided_slice %85 {offsets = [0, 87], sizes = [32, 809], strides = [1, 1]} : vector<32x896xf32> to vector<32x809xf32>
    %139 = tpu.concatenate %138, %137 in 1 : vector<32x809xf32>, vector<32x87xf32> -> vector<32x896xf32>
    %cst_50 = arith.constant 0.000000e+00 : f32
    %140 = vector.broadcast %cst_50 : f32 to vector<32x88xf32>
    %141 = vector.extract_strided_slice %85 {offsets = [0, 88], sizes = [32, 808], strides = [1, 1]} : vector<32x896xf32> to vector<32x808xf32>
    %142 = tpu.concatenate %141, %140 in 1 : vector<32x808xf32>, vector<32x88xf32> -> vector<32x896xf32>
    %cst_51 = arith.constant 0.000000e+00 : f32
    %143 = vector.broadcast %cst_51 : f32 to vector<32x112xf32>
    %144 = vector.extract_strided_slice %85 {offsets = [0, 112], sizes = [32, 784], strides = [1, 1]} : vector<32x896xf32> to vector<32x784xf32>
    %145 = tpu.concatenate %144, %143 in 1 : vector<32x784xf32>, vector<32x112xf32> -> vector<32x896xf32>
    %cst_52 = arith.constant 0.000000e+00 : f32
    %146 = vector.broadcast %cst_52 : f32 to vector<32x113xf32>
    %147 = vector.extract_strided_slice %85 {offsets = [0, 113], sizes = [32, 783], strides = [1, 1]} : vector<32x896xf32> to vector<32x783xf32>
    %148 = tpu.concatenate %147, %146 in 1 : vector<32x783xf32>, vector<32x113xf32> -> vector<32x896xf32>
    %cst_53 = arith.constant 0.000000e+00 : f32
    %149 = vector.broadcast %cst_53 : f32 to vector<32x114xf32>
    %150 = vector.extract_strided_slice %85 {offsets = [0, 114], sizes = [32, 782], strides = [1, 1]} : vector<32x896xf32> to vector<32x782xf32>
    %151 = tpu.concatenate %150, %149 in 1 : vector<32x782xf32>, vector<32x114xf32> -> vector<32x896xf32>
    %cst_54 = arith.constant 0.000000e+00 : f32
    %152 = vector.broadcast %cst_54 : f32 to vector<32x115xf32>
    %153 = vector.extract_strided_slice %85 {offsets = [0, 115], sizes = [32, 781], strides = [1, 1]} : vector<32x896xf32> to vector<32x781xf32>
    %154 = tpu.concatenate %153, %152 in 1 : vector<32x781xf32>, vector<32x115xf32> -> vector<32x896xf32>
    %cst_55 = arith.constant 0.000000e+00 : f32
    %155 = vector.broadcast %cst_55 : f32 to vector<32x116xf32>
    %156 = vector.extract_strided_slice %85 {offsets = [0, 116], sizes = [32, 780], strides = [1, 1]} : vector<32x896xf32> to vector<32x780xf32>
    %157 = tpu.concatenate %156, %155 in 1 : vector<32x780xf32>, vector<32x116xf32> -> vector<32x896xf32>
    %158 = tpu.concatenate %85, %88, %91, %94, %97, %100, %103, %106, %109, %112, %115, %118, %121, %124, %127, %130 in 0 : vector<32x896xf32>, vector<32x896xf32>, vector<32x896xf32>, vector<32x896xf32>, vector<32x896xf32>, vector<32x896xf32>, vector<32x896xf32>, vector<32x896xf32>, vector<32x896xf32>, vector<32x896xf32>, vector<32x896xf32>, vector<32x896xf32>, vector<32x896xf32>, vector<32x896xf32>, vector<32x896xf32>, vector<32x896xf32> -> vector<512x896xf32>
    %159 = tpu.concatenate %133, %136, %139, %142, %145, %148, %151, %154, %157 in 0 : vector<32x896xf32>, vector<32x896xf32>, vector<32x896xf32>, vector<32x896xf32>, vector<32x896xf32>, vector<32x896xf32>, vector<32x896xf32>, vector<32x896xf32>, vector<32x896xf32> -> vector<288x896xf32>
    %160 = tpu.concatenate %158, %159 in 0 : vector<512x896xf32>, vector<288x896xf32> -> vector<800x896xf32>
    %c0_56 = arith.constant 0 : index
    %c0_57 = arith.constant 0 : index
    %161 = vector.load %arg5[%c0_56, %c0_57] : memref<64x800xf32, #tpu.memory_space<vmem>>, vector<64x800xf32>
    %cst_58 = arith.constant dense<0.000000e+00> : vector<64x896xf32>
    %162 = tpu.matmul %161, %160, %cst_58 {dimension_numbers = #tpu.dot_dimension_numbers<[1], [0], [0], [1], [0, 0, 1, 1], [], []>} : vector<64x800xf32>, vector<800x896xf32>, vector<64x896xf32> -> vector<64x896xf32>
    %c0_59 = arith.constant 0 : index
    %c0_60 = arith.constant 0 : index
    %163 = vector.load %arg6[%c0_59, %c0_60] : memref<64x1xf32, #tpu.memory_space<vmem>>, vector<64x1xf32>
    %164 = vector.broadcast %163 : vector<64x1xf32> to vector<64x896xf32>
    %165 = arith.addf %162, %164 : vector<64x896xf32>
    %cst_61 = arith.constant 0.000000e+00 : f32
    %166 = vector.broadcast %cst_61 : f32 to vector<64x896xf32>
    %167 = arith.maximumf %165, %166 : vector<64x896xf32>
    %cst_62 = arith.constant 0.000000e+00 : f32
    %168 = vector.broadcast %cst_62 : f32 to vector<8x128xf32>
    %169 = vector.extract_strided_slice %167 {offsets = [0, 0], sizes = [8, 896], strides = [1, 1]} : vector<64x896xf32> to vector<8x896xf32>
    %c0_63 = arith.constant 0 : index
    %c0_64 = arith.constant 0 : index
    %c0_65 = arith.constant 0 : index
    %170 = vector.load %arg7[%c0_63, %c0_64, %c0_65] : memref<8x896x128xf32, #tpu.memory_space<vmem>>, vector<1x896x128xf32>
    %171 = vector.shape_cast %170 : vector<1x896x128xf32> to vector<896x128xf32>
    %cst_66 = arith.constant dense<0.000000e+00> : vector<8x128xf32>
    %172 = tpu.matmul %169, %171, %cst_66 {dimension_numbers = #tpu.dot_dimension_numbers<[1], [0], [0], [1], [0, 0, 1, 1], [], []>} : vector<8x896xf32>, vector<896x128xf32>, vector<8x128xf32> -> vector<8x128xf32>
    %173 = arith.addf %168, %172 : vector<8x128xf32>
    %174 = vector.extract_strided_slice %167 {offsets = [8, 0], sizes = [8, 896], strides = [1, 1]} : vector<64x896xf32> to vector<8x896xf32>
    %c1 = arith.constant 1 : index
    %c0_67 = arith.constant 0 : index
    %c0_68 = arith.constant 0 : index
    %175 = vector.load %arg7[%c1, %c0_67, %c0_68] : memref<8x896x128xf32, #tpu.memory_space<vmem>>, vector<1x896x128xf32>
    %176 = vector.shape_cast %175 : vector<1x896x128xf32> to vector<896x128xf32>
    %cst_69 = arith.constant dense<0.000000e+00> : vector<8x128xf32>
    %177 = tpu.matmul %174, %176, %cst_69 {dimension_numbers = #tpu.dot_dimension_numbers<[1], [0], [0], [1], [0, 0, 1, 1], [], []>} : vector<8x896xf32>, vector<896x128xf32>, vector<8x128xf32> -> vector<8x128xf32>
    %178 = arith.addf %173, %177 : vector<8x128xf32>
    %179 = vector.extract_strided_slice %167 {offsets = [16, 0], sizes = [8, 896], strides = [1, 1]} : vector<64x896xf32> to vector<8x896xf32>
    %c2 = arith.constant 2 : index
    %c0_70 = arith.constant 0 : index
    %c0_71 = arith.constant 0 : index
    %180 = vector.load %arg7[%c2, %c0_70, %c0_71] : memref<8x896x128xf32, #tpu.memory_space<vmem>>, vector<1x896x128xf32>
    %181 = vector.shape_cast %180 : vector<1x896x128xf32> to vector<896x128xf32>
    %cst_72 = arith.constant dense<0.000000e+00> : vector<8x128xf32>
    %182 = tpu.matmul %179, %181, %cst_72 {dimension_numbers = #tpu.dot_dimension_numbers<[1], [0], [0], [1], [0, 0, 1, 1], [], []>} : vector<8x896xf32>, vector<896x128xf32>, vector<8x128xf32> -> vector<8x128xf32>
    %183 = arith.addf %178, %182 : vector<8x128xf32>
    %184 = vector.extract_strided_slice %167 {offsets = [24, 0], sizes = [8, 896], strides = [1, 1]} : vector<64x896xf32> to vector<8x896xf32>
    %c3 = arith.constant 3 : index
    %c0_73 = arith.constant 0 : index
    %c0_74 = arith.constant 0 : index
    %185 = vector.load %arg7[%c3, %c0_73, %c0_74] : memref<8x896x128xf32, #tpu.memory_space<vmem>>, vector<1x896x128xf32>
    %186 = vector.shape_cast %185 : vector<1x896x128xf32> to vector<896x128xf32>
    %cst_75 = arith.constant dense<0.000000e+00> : vector<8x128xf32>
    %187 = tpu.matmul %184, %186, %cst_75 {dimension_numbers = #tpu.dot_dimension_numbers<[1], [0], [0], [1], [0, 0, 1, 1], [], []>} : vector<8x896xf32>, vector<896x128xf32>, vector<8x128xf32> -> vector<8x128xf32>
    %188 = arith.addf %183, %187 : vector<8x128xf32>
    %189 = vector.extract_strided_slice %167 {offsets = [32, 0], sizes = [8, 896], strides = [1, 1]} : vector<64x896xf32> to vector<8x896xf32>
    %c4 = arith.constant 4 : index
    %c0_76 = arith.constant 0 : index
    %c0_77 = arith.constant 0 : index
    %190 = vector.load %arg7[%c4, %c0_76, %c0_77] : memref<8x896x128xf32, #tpu.memory_space<vmem>>, vector<1x896x128xf32>
    %191 = vector.shape_cast %190 : vector<1x896x128xf32> to vector<896x128xf32>
    %cst_78 = arith.constant dense<0.000000e+00> : vector<8x128xf32>
    %192 = tpu.matmul %189, %191, %cst_78 {dimension_numbers = #tpu.dot_dimension_numbers<[1], [0], [0], [1], [0, 0, 1, 1], [], []>} : vector<8x896xf32>, vector<896x128xf32>, vector<8x128xf32> -> vector<8x128xf32>
    %193 = arith.addf %188, %192 : vector<8x128xf32>
    %194 = vector.extract_strided_slice %167 {offsets = [40, 0], sizes = [8, 896], strides = [1, 1]} : vector<64x896xf32> to vector<8x896xf32>
    %c5 = arith.constant 5 : index
    %c0_79 = arith.constant 0 : index
    %c0_80 = arith.constant 0 : index
    %195 = vector.load %arg7[%c5, %c0_79, %c0_80] : memref<8x896x128xf32, #tpu.memory_space<vmem>>, vector<1x896x128xf32>
    %196 = vector.shape_cast %195 : vector<1x896x128xf32> to vector<896x128xf32>
    %cst_81 = arith.constant dense<0.000000e+00> : vector<8x128xf32>
    %197 = tpu.matmul %194, %196, %cst_81 {dimension_numbers = #tpu.dot_dimension_numbers<[1], [0], [0], [1], [0, 0, 1, 1], [], []>} : vector<8x896xf32>, vector<896x128xf32>, vector<8x128xf32> -> vector<8x128xf32>
    %198 = arith.addf %193, %197 : vector<8x128xf32>
    %199 = vector.extract_strided_slice %167 {offsets = [48, 0], sizes = [8, 896], strides = [1, 1]} : vector<64x896xf32> to vector<8x896xf32>
    %c6 = arith.constant 6 : index
    %c0_82 = arith.constant 0 : index
    %c0_83 = arith.constant 0 : index
    %200 = vector.load %arg7[%c6, %c0_82, %c0_83] : memref<8x896x128xf32, #tpu.memory_space<vmem>>, vector<1x896x128xf32>
    %201 = vector.shape_cast %200 : vector<1x896x128xf32> to vector<896x128xf32>
    %cst_84 = arith.constant dense<0.000000e+00> : vector<8x128xf32>
    %202 = tpu.matmul %199, %201, %cst_84 {dimension_numbers = #tpu.dot_dimension_numbers<[1], [0], [0], [1], [0, 0, 1, 1], [], []>} : vector<8x896xf32>, vector<896x128xf32>, vector<8x128xf32> -> vector<8x128xf32>
    %203 = arith.addf %198, %202 : vector<8x128xf32>
    %204 = vector.extract_strided_slice %167 {offsets = [56, 0], sizes = [8, 896], strides = [1, 1]} : vector<64x896xf32> to vector<8x896xf32>
    %c7 = arith.constant 7 : index
    %c0_85 = arith.constant 0 : index
    %c0_86 = arith.constant 0 : index
    %205 = vector.load %arg7[%c7, %c0_85, %c0_86] : memref<8x896x128xf32, #tpu.memory_space<vmem>>, vector<1x896x128xf32>
    %206 = vector.shape_cast %205 : vector<1x896x128xf32> to vector<896x128xf32>
    %cst_87 = arith.constant dense<0.000000e+00> : vector<8x128xf32>
    %207 = tpu.matmul %204, %206, %cst_87 {dimension_numbers = #tpu.dot_dimension_numbers<[1], [0], [0], [1], [0, 0, 1, 1], [], []>} : vector<8x896xf32>, vector<896x128xf32>, vector<8x128xf32> -> vector<8x128xf32>
    %208 = arith.addf %203, %207 : vector<8x128xf32>
    %c0_88 = arith.constant 0 : index
    %c0_89 = arith.constant 0 : index
    %209 = vector.load %arg8[%c0_88, %c0_89] : memref<1x128xf32, #tpu.memory_space<vmem>>, vector<1x128xf32>
    %210 = vector.broadcast %209 : vector<1x128xf32> to vector<8x128xf32>
    %211 = arith.addf %208, %210 : vector<8x128xf32>
    %c0_90 = arith.constant 0 : index
    %c0_91 = arith.constant 0 : index
    %212 = vector.load %arg9[%c0_90, %c0_91] : memref<8x128xf32, #tpu.memory_space<vmem>>, vector<8x128xf32>
    tpu.vector_store %arg9[%c0_90, %c0_91], %211 {strides = array<i32>} : memref<8x128xf32, #tpu.memory_space<vmem>>, vector<8x128xf32>,
    return
  }
  func.func @transform_0(%arg0: i32) -> (i32, i32) {
    %c0_i32 = arith.constant 0 : i32
    %c0_i32_0 = arith.constant 0 : i32
    return %arg0, %c0_i32 : i32, i32
  }
  func.func @transform_1(%arg0: i32) -> (i32, i32) {
    %c0_i32 = arith.constant 0 : i32
    %c0_i32_0 = arith.constant 0 : i32
    %c0_i32_1 = arith.constant 0 : i32
    return %c0_i32, %c0_i32_0 : i32, i32
  }
  func.func @transform_2(%arg0: i32) -> (i32, i32) {
    %c0_i32 = arith.constant 0 : i32
    %c0_i32_0 = arith.constant 0 : i32
    %c0_i32_1 = arith.constant 0 : i32
    return %c0_i32, %c0_i32_0 : i32, i32
  }
  func.func @transform_3(%arg0: i32) -> (i32, i32) {
    %c0_i32 = arith.constant 0 : i32
    %c0_i32_0 = arith.constant 0 : i32
    %c0_i32_1 = arith.constant 0 : i32
    return %c0_i32, %c0_i32_0 : i32, i32
  }
  func.func @transform_4(%arg0: i32) -> (i32, i32) {
    %c0_i32 = arith.constant 0 : i32
    %c0_i32_0 = arith.constant 0 : i32
    %c0_i32_1 = arith.constant 0 : i32
    return %c0_i32, %c0_i32_0 : i32, i32
  }
  func.func @transform_5(%arg0: i32) -> (i32, i32) {
    %c0_i32 = arith.constant 0 : i32
    %c0_i32_0 = arith.constant 0 : i32
    %c0_i32_1 = arith.constant 0 : i32
    return %c0_i32, %c0_i32_0 : i32, i32
  }
  func.func @transform_6(%arg0: i32) -> (i32, i32, i32) {
    %c0_i32 = arith.constant 0 : i32
    %c0_i32_0 = arith.constant 0 : i32
    %c0_i32_1 = arith.constant 0 : i32
    %c0_i32_2 = arith.constant 0 : i32
    return %c0_i32, %c0_i32_0, %c0_i32_1 : i32, i32, i32
  }
  func.func @transform_7(%arg0: i32) -> (i32, i32) {
    %c0_i32 = arith.constant 0 : i32
    %c0_i32_0 = arith.constant 0 : i32
    %c0_i32_1 = arith.constant 0 : i32
    return %c0_i32, %c0_i32_0 : i32, i32
  }
  func.func @transform_8(%arg0: i32) -> (i32, i32) {
    %c0_i32 = arith.constant 0 : i32
    %c0_i32_0 = arith.constant 0 : i32
    return %arg0, %c0_i32 : i32, i32
  }
}

</mosaic_0001>

<llo_original>
// kernel: tpu_custom_call.1
$region0: #{tpu_custom_call.1}
  #allocation0 [shape = 'u32[]', space=smem, size = 0x4, offset = 0x4, fixed_abs, tag = 'smem constant byte address 0x4 - core index']
  #allocation1 [shape = 'u32[144,128]{1,0:T(1,128)}', space=vmem, size = 0x12000, scoped, tag = 'internal scratch']
  %s0 = inlined_call_operand.hbm [shape: f32[8,128], index: 0, kind: input, shape index: {}]
  %s1 = inlined_call_operand.hbm [shape: f32[8,128], index: 1, kind: output, shape index: {}]
  %s2 = sld [smem:[#allocation0]]
  $region18: #{tpu_custom_call.1} parent=0
    _
  %s4 = ssub.s32 1, %s2
  %s5 = scalar_select 0, %s4, %s2
  $region1: #{tpu_custom_call.1} parent=0
    #allocation2 [shape = 'u8[4096]{0}', space=vmem, size = 0x1000, scoped, tag = 'input window, operand 0, single buffered']
    #allocation3 [shape = 's32[1]{0}', space=sflag, size = 0x4, scoped, tag = 'scoped memory for tpu_custom_call.1']
    #allocation4 [shape = 's32[1]{0}', space=sflag, size = 0x4, scoped, tag = 'scoped memory for tpu_custom_call.1']
    #allocation5 [shape = 'u8[4096]{0}', space=vmem, size = 0x1000, scoped, tag = 'output window, operand 0, single buffered']
    %6 = vsyncpa [#allocation3], 0
    %7 = vsyncpa [#allocation4], 0
    // Predicated region
    $region2: #{tpu_custom_call.1} parent=1 // pred_check
      _
    $region3: #{tpu_custom_call.1} parent=1 // pred_check_branch
      %9 = sbr.rel (0) target = $region5
    $region4: #{tpu_custom_call.1} parent=1 // pred_region
      %s11 = ssub.s32 128, 128
      %12 = vsyncadd [#allocation3], %s11
      %s14 = sshll.u32 [#allocation2], 4
      %s15 = int_to_ptr.vmem [resolvable:$true] %s14
      %17 = dma.hbm_to_vmem [thread:$0]  %s0, 128, %s15, [#allocation3]
    $region5: #{tpu_custom_call.1} parent=1 // pred_fallthru
      _
    // Predicated region
    $region6: #{tpu_custom_call.1} parent=1 // pred_check
      _
    $region7: #{tpu_custom_call.1} parent=1 // pred_check_branch
      %19 = sbr.rel (0) target = $region9
    $region8: #{tpu_custom_call.1} parent=1 // pred_region
      %20 = dma.done [#allocation3], 128
    $region9: #{tpu_custom_call.1} parent=1 // pred_fallthru
      _
    %v21 = vld [vmem:[#allocation2] sm:$0xff]
    %22 = vrot.lane.b32.xlu0 %v21, 1
    %v23 = vpop.permute.xlu0 %22
    %24 = vst [vmem:[#allocation5] sm:$0xff] %v23
    // Predicated region
    $region10: #{tpu_custom_call.1} parent=1 // pred_check
      _
    $region11: #{tpu_custom_call.1} parent=1 // pred_check_branch
      %26 = sbr.rel (0) target = $region13
    $region12: #{tpu_custom_call.1} parent=1 // pred_region
      %s28 = ssub.s32 128, 128
      %29 = vsyncadd [#allocation4], %s28
      %s31 = sshll.u32 [#allocation5], 4
      %s32 = int_to_ptr.vmem [resolvable:$true] %s31
      %34 = dma.vmem_to_hbm [thread:$0]  %s32, 128, %s1, [#allocation4]
    $region13: #{tpu_custom_call.1} parent=1 // pred_fallthru
      _
    // Predicated region
    $region14: #{tpu_custom_call.1} parent=1 // pred_check
      _
    $region15: #{tpu_custom_call.1} parent=1 // pred_check_branch
      %36 = sbr.rel (0) target = $region17
    $region16: #{tpu_custom_call.1} parent=1 // pred_region
      %37 = dma.done [#allocation4], 128
    $region17: #{tpu_custom_call.1} parent=1 // pred_fallthru
      _
    %38 = vsyncpa [#allocation3], 1
    %39 = vsyncpa [#allocation4], 1

// kernel: cnn_encoder_forward.1
$region0: #{cnn_encoder_forward.1}
  #allocation0 [shape = 'u32[]', space=smem, size = 0x4, offset = 0x4, fixed_abs, tag = 'smem constant byte address 0x4 - core index']
  #allocation1 [shape = 'u32[144,128]{1,0:T(1,128)}', space=vmem, size = 0x12000, scoped, tag = 'internal scratch']
  %s0 = inlined_call_operand.vmem [shape: f32[8,896], index: 0, kind: input, shape index: {}]
  %s1 = inlined_call_operand.hbm [shape: f32[1,896], index: 1, kind: input, shape index: {}]
  %s2 = inlined_call_operand.hbm [shape: f32[32,200], index: 2, kind: input, shape index: {}]
  %s3 = inlined_call_operand.vmem [shape: f32[32,1], index: 3, kind: input, shape index: {}]
  %s4 = inlined_call_operand.hbm [shape: f32[64,800], index: 4, kind: input, shape index: {}]
  %s5 = inlined_call_operand.vmem [shape: f32[64,1], index: 5, kind: input, shape index: {}]
  %s6 = inlined_call_operand.hbm [shape: f32[8,896,128], index: 6, kind: input, shape index: {}]
  %s7 = inlined_call_operand.hbm [shape: f32[1,128], index: 7, kind: input, shape index: {}]
  %s8 = inlined_call_operand.vmem [shape: f32[8,128], index: 8, kind: output, shape index: {}]
  %s9 = sld [smem:[#allocation0]]
  $region62: #{cnn_encoder_forward.1} parent=0
    _
  %s11 = ssub.s32 1, %s9
  %s12 = scalar_select 0, %s11, %s9
  $region1: #{cnn_encoder_forward.1} parent=0
    #allocation2 [shape = 'u8[3584]{0}', space=vmem, size = 0x1000, scoped, tag = 'input window, operand 1, single buffered']
    #allocation3 [shape = 's32[1]{0}', space=sflag, size = 0x4, scoped, tag = 'scoped memory for cnn_encoder_forward.1']
    #allocation4 [shape = 'u8[32768]{0}', space=vmem, size = 0x8000, scoped, tag = 'input window, operand 2, single buffered']
    #allocation5 [shape = 's32[1]{0}', space=sflag, size = 0x4, scoped, tag = 'scoped memory for cnn_encoder_forward.1']
    #allocation6 [shape = 'u8[229376]{0}', space=vmem, size = 0x38000, scoped, tag = 'input window, operand 4, single buffered']
    #allocation7 [shape = 'u8[3670016]{0}', space=vmem, size = 0x380000, scoped, tag = 'input window, operand 6, single buffered']
    #allocation8 [shape = 's32[1]{0}', space=sflag, size = 0x4, scoped, tag = 'scoped memory for cnn_encoder_forward.1']
    #allocation9 [shape = 'u8[512]{0}', space=vmem, size = 0x400, scoped, tag = 'input window, operand 7, single buffered']
    %13 = vsyncpa [#allocation3], 0
    %14 = vsyncpa [#allocation5], 0
    %15 = vsyncpa [#allocation8], 0
    // Predicated region
    $region2: #{cnn_encoder_forward.1} parent=1 // pred_check
      _
    $region3: #{cnn_encoder_forward.1} parent=1 // pred_check_branch
      %17 = sbr.rel (0) target = $region5
    $region4: #{cnn_encoder_forward.1} parent=1 // pred_region
      _
    $region5: #{cnn_encoder_forward.1} parent=1 // pred_fallthru
      _
    // Predicated region
    $region6: #{cnn_encoder_forward.1} parent=1 // pred_check
      _
    $region7: #{cnn_encoder_forward.1} parent=1 // pred_check_branch
      %19 = sbr.rel (0) target = $region9
    $region8: #{cnn_encoder_forward.1} parent=1 // pred_region
      %s21 = ssub.s32 112, 112
      %22 = vsyncadd [#allocation3], %s21
      %s24 = sshll.u32 [#allocation2], 4
      %s25 = int_to_ptr.vmem [resolvable:$true] %s24
      %27 = dma.hbm_to_vmem [thread:$0]  %s1, 112, %s25, [#allocation3]
    $region9: #{cnn_encoder_forward.1} parent=1 // pred_fallthru
      _
    // Predicated region
    $region10: #{cnn_encoder_forward.1} parent=1 // pred_check
      _
    $region11: #{cnn_encoder_forward.1} parent=1 // pred_check_branch
      %29 = sbr.rel (0) target = $region13
    $region12: #{cnn_encoder_forward.1} parent=1 // pred_region
      %s31 = ssub.s32 1024, 1024
      %32 = vsyncadd [#allocation5], %s31
      %s33 = sshll.u32 [#allocation4], 4
      %s34 = int_to_ptr.vmem [resolvable:$true] %s33
      %39 = dma.hbm_to_vmem [thread:$0]  %s2, 1024, %s34, [#allocation5], 256, 256, 16
    $region13: #{cnn_encoder_forward.1} parent=1 // pred_fallthru
      _
    // Predicated region
    $region14: #{cnn_encoder_forward.1} parent=1 // pred_check
      _
    $region15: #{cnn_encoder_forward.1} parent=1 // pred_check_branch
      %41 = sbr.rel (0) target = $region17
    $region16: #{cnn_encoder_forward.1} parent=1 // pred_region
      _
    $region17: #{cnn_encoder_forward.1} parent=1 // pred_fallthru
      _
    // Predicated region
    $region18: #{cnn_encoder_forward.1} parent=1 // pred_check
      _
    $region19: #{cnn_encoder_forward.1} parent=1 // pred_check_branch
      %43 = sbr.rel (0) target = $region21
    $region20: #{cnn_encoder_forward.1} parent=1 // pred_region
      %s45 = ssub.s32 7168, 7168
      %46 = vsyncadd [#allocation5], %s45
      %s47 = sshll.u32 [#allocation6], 4
      %s48 = int_to_ptr.vmem [resolvable:$true] %s47
      %53 = dma.hbm_to_vmem [thread:$0]  %s4, 7168, %s48, [#allocation5], 896, 896, 56
    $region21: #{cnn_encoder_forward.1} parent=1 // pred_fallthru
      _
    // Predicated region
    $region22: #{cnn_encoder_forward.1} parent=1 // pred_check
      _
    $region23: #{cnn_encoder_forward.1} parent=1 // pred_check_branch
      %55 = sbr.rel (0) target = $region25
    $region24: #{cnn_encoder_forward.1} parent=1 // pred_region
      _
    $region25: #{cnn_encoder_forward.1} parent=1 // pred_fallthru
      _
    // Predicated region
    $region26: #{cnn_encoder_forward.1} parent=1 // pred_check
      _
    $region27: #{cnn_encoder_forward.1} parent=1 // pred_check_branch
      %57 = sbr.rel (0) target = $region29
    $region28: #{cnn_encoder_forward.1} parent=1 // pred_region
      %s59 = ssub.s32 114688, 114688
      %60 = vsyncadd [#allocation8], %s59
      %s61 = sshll.u32 [#allocation7], 4
      %s62 = int_to_ptr.vmem [resolvable:$true] %s61
      %67 = dma.hbm_to_vmem [thread:$0]  %s6, 114688, %s62, [#allocation8], 128, 128, 8
    $region29: #{cnn_encoder_forward.1} parent=1 // pred_fallthru
      _
    // Predicated region
    $region30: #{cnn_encoder_forward.1} parent=1 // pred_check
      _
    $region31: #{cnn_encoder_forward.1} parent=1 // pred_check_branch
      %69 = sbr.rel (0) target = $region33
    $region32: #{cnn_encoder_forward.1} parent=1 // pred_region
      %s71 = ssub.s32 16, 16
      %72 = vsyncadd [#allocation8], %s71
      %s74 = sshll.u32 [#allocation9], 4
      %s75 = int_to_ptr.vmem [resolvable:$true] %s74
      %77 = dma.hbm_to_vmem [thread:$0]  %s7, 16, %s75, [#allocation8]
    $region33: #{cnn_encoder_forward.1} parent=1 // pred_fallthru
      _
    // Predicated region
    $region34: #{cnn_encoder_forward.1} parent=1 // pred_check
      _
    $region35: #{cnn_encoder_forward.1} parent=1 // pred_check_branch
      %79 = sbr.rel (0) target = $region37
    $region36: #{cnn_encoder_forward.1} parent=1 // pred_region
      %80 = dma.done [#allocation3], 112
    $region37: #{cnn_encoder_forward.1} parent=1 // pred_fallthru
      _
    // Predicated region
    $region38: #{cnn_encoder_forward.1} parent=1 // pred_check
      _
    $region39: #{cnn_encoder_forward.1} parent=1 // pred_check_branch
      %82 = sbr.rel (0) target = $region41
    $region40: #{cnn_encoder_forward.1} parent=1 // pred_region
      %83 = dma.done [#allocation5], 1024
    $region41: #{cnn_encoder_forward.1} parent=1 // pred_fallthru
      _
    // Predicated region
    $region42: #{cnn_encoder_forward.1} parent=1 // pred_check
      _
    $region43: #{cnn_encoder_forward.1} parent=1 // pred_check_branch
      %85 = sbr.rel (0) target = $region45
    $region44: #{cnn_encoder_forward.1} parent=1 // pred_region
      %86 = dma.done [#allocation5], 7168
    $region45: #{cnn_encoder_forward.1} parent=1 // pred_fallthru
      _
    // Predicated region
    $region46: #{cnn_encoder_forward.1} parent=1 // pred_check
      _
    $region47: #{cnn_encoder_forward.1} parent=1 // pred_check_branch
      %88 = sbr.rel (0) target = $region49
    $region48: #{cnn_encoder_forward.1} parent=1 // pred_region
      %89 = dma.done [#allocation8], 114688
    $region49: #{cnn_encoder_forward.1} parent=1 // pred_fallthru
      _
    // Predicated region
    $region50: #{cnn_encoder_forward.1} parent=1 // pred_check
      _
    $region51: #{cnn_encoder_forward.1} parent=1 // pred_check_branch
      %91 = sbr.rel (0) target = $region53
    $region52: #{cnn_encoder_forward.1} parent=1 // pred_region
      %92 = dma.done [#allocation8], 16
    $region53: #{cnn_encoder_forward.1} parent=1 // pred_fallthru
      _
    %v93 = vld [vmem:[%s0] sm:$0xff]
    %v94 = vld [vmem:[%s0 + $0x8] sm:$0xff]
    %v95 = vld [vmem:[%s0 + $0x10] sm:$0xff]
    %v96 = vld [vmem:[%s0 + $0x18] sm:$0xff]
    %v97 = vld [vmem:[%s0 + $0x20] sm:$0xff]
    %v98 = vld [vmem:[%s0 + $0x28] sm:$0xff]
    %v99 = vld [vmem:[%s0 + $0x30] sm:$0xff]
    %107 = vrot.lane.b32.xlu0 %v93, 127
    %v108 = vpop.permute.xlu0 %107
    %109 = vrot.lane.b32.xlu0 %v94, 127
    %v110 = vpop.permute.xlu0 %109
    %111 = vrot.lane.b32.xlu0 %v95, 127
    %v112 = vpop.permute.xlu0 %111
    %113 = vrot.lane.b32.xlu0 %v96, 127
    %v114 = vpop.permute.xlu0 %113
    %115 = vrot.lane.b32.xlu0 %v97, 127
    %v116 = vpop.permute.xlu0 %115
    %117 = vrot.lane.b32.xlu0 %v98, 127
    %v118 = vpop.permute.xlu0 %117
    %119 = vrot.lane.b32.xlu0 %v99, 127
    %v120 = vpop.permute.xlu0 %119
    %vm121 = vcmask 1039360
    %v122 = vsel %vm121, %v108, %v110
    %v123 = vsel %vm121, %v110, %v112
    %v124 = vsel %vm121, %v112, %v114
    %v125 = vsel %vm121, %v114, %v116
    %v126 = vsel %vm121, %v116, %v118
    %v127 = vsel %vm121, %v118, %v120
    %v135 = vsel %vm121, %v120, 0.0
    %136 = vrot.lane.b32.xlu0 %v93, 126
    %v137 = vpop.permute.xlu0 %136
    %138 = vrot.lane.b32.xlu0 %v94, 126
    %v139 = vpop.permute.xlu0 %138
    %140 = vrot.lane.b32.xlu0 %v95, 126
    %v141 = vpop.permute.xlu0 %140
    %142 = vrot.lane.b32.xlu0 %v96, 126
    %v143 = vpop.permute.xlu0 %142
    %144 = vrot.lane.b32.xlu0 %v97, 126
    %v145 = vpop.permute.xlu0 %144
    %146 = vrot.lane.b32.xlu0 %v98, 126
    %v147 = vpop.permute.xlu0 %146
    %148 = vrot.lane.b32.xlu0 %v99, 126
    %v149 = vpop.permute.xlu0 %148
    %vm150 = vcmask 1031168
    %v151 = vsel %vm150, %v137, %v139
    %v152 = vsel %vm150, %v139, %v141
    %v153 = vsel %vm150, %v141, %v143
    %v154 = vsel %vm150, %v143, %v145
    %v155 = vsel %vm150, %v145, %v147
    %v156 = vsel %vm150, %v147, %v149
    %v164 = vsel %vm150, %v149, 0.0
    %165 = vrot.lane.b32.xlu0 %v93, 125
    %v166 = vpop.permute.xlu0 %165
    %167 = vrot.lane.b32.xlu0 %v94, 125
    %v168 = vpop.permute.xlu0 %167
    %169 = vrot.lane.b32.xlu0 %v95, 125
    %v170 = vpop.permute.xlu0 %169
    %171 = vrot.lane.b32.xlu0 %v96, 125
    %v172 = vpop.permute.xlu0 %171
    %173 = vrot.lane.b32.xlu0 %v97, 125
    %v174 = vpop.permute.xlu0 %173
    %175 = vrot.lane.b32.xlu0 %v98, 125
    %v176 = vpop.permute.xlu0 %175
    %177 = vrot.lane.b32.xlu0 %v99, 125
    %v178 = vpop.permute.xlu0 %177
    %vm179 = vcmask 1022976
    %v180 = vsel %vm179, %v166, %v168
    %v181 = vsel %vm179, %v168, %v170
    %v182 = vsel %vm179, %v170, %v172
    %v183 = vsel %vm179, %v172, %v174
    %v184 = vsel %vm179, %v174, %v176
    %v185 = vsel %vm179, %v176, %v178
    %v193 = vsel %vm179, %v178, 0.0
    %194 = vrot.lane.b32.xlu0 %v93, 124
    %v195 = vpop.permute.xlu0 %194
    %196 = vrot.lane.b32.xlu0 %v94, 124
    %v197 = vpop.permute.xlu0 %196
    %198 = vrot.lane.b32.xlu0 %v95, 124
    %v199 = vpop.permute.xlu0 %198
    %200 = vrot.lane.b32.xlu0 %v96, 124
    %v201 = vpop.permute.xlu0 %200
    %202 = vrot.lane.b32.xlu0 %v97, 124
    %v203 = vpop.permute.xlu0 %202
    %204 = vrot.lane.b32.xlu0 %v98, 124
    %v205 = vpop.permute.xlu0 %204
    %206 = vrot.lane.b32.xlu0 %v99, 124
    %v207 = vpop.permute.xlu0 %206
    %vm208 = vcmask 1014784
    %v209 = vsel %vm208, %v195, %v197
    %v210 = vsel %vm208, %v197, %v199
    %v211 = vsel %vm208, %v199, %v201
    %v212 = vsel %vm208, %v201, %v203
    %v213 = vsel %vm208, %v203, %v205
    %v214 = vsel %vm208, %v205, %v207
    %v222 = vsel %vm208, %v207, 0.0
    %223 = vrot.lane.b32.xlu0 %v93, 100
    %v224 = vpop.permute.xlu0 %223
    %225 = vrot.lane.b32.xlu0 %v94, 100
    %v226 = vpop.permute.xlu0 %225
    %227 = vrot.lane.b32.xlu0 %v95, 100
    %v228 = vpop.permute.xlu0 %227
    %229 = vrot.lane.b32.xlu0 %v96, 100
    %v230 = vpop.permute.xlu0 %229
    %231 = vrot.lane.b32.xlu0 %v97, 100
    %v232 = vpop.permute.xlu0 %231
    %233 = vrot.lane.b32.xlu0 %v98, 100
    %v234 = vpop.permute.xlu0 %233
    %235 = vrot.lane.b32.xlu0 %v99, 100
    %v236 = vpop.permute.xlu0 %235
    %vm237 = vcmask 818176
    %v238 = vsel %vm237, %v224, %v226
    %v239 = vsel %vm237, %v226, %v228
    %v240 = vsel %vm237, %v228, %v230
    %v241 = vsel %vm237, %v230, %v232
    %v242 = vsel %vm237, %v232, %v234
    %v243 = vsel %vm237, %v234, %v236
    %v251 = vsel %vm237, %v236, 0.0
    %252 = vrot.lane.b32.xlu0 %v93, 99
    %v253 = vpop.permute.xlu0 %252
    %254 = vrot.lane.b32.xlu0 %v94, 99
    %v255 = vpop.permute.xlu0 %254
    %256 = vrot.lane.b32.xlu0 %v95, 99
    %v257 = vpop.permute.xlu0 %256
    %258 = vrot.lane.b32.xlu0 %v96, 99
    %v259 = vpop.permute.xlu0 %258
    %260 = vrot.lane.b32.xlu0 %v97, 99
    %v261 = vpop.permute.xlu0 %260
    %262 = vrot.lane.b32.xlu0 %v98, 99
    %v263 = vpop.permute.xlu0 %262
    %264 = vrot.lane.b32.xlu0 %v99, 99
    %v265 = vpop.permute.xlu0 %264
    %vm266 = vcmask 809984
    %v267 = vsel %vm266, %v253, %v255
    %v268 = vsel %vm266, %v255, %v257
    %v269 = vsel %vm266, %v257, %v259
    %v270 = vsel %vm266, %v259, %v261
    %v271 = vsel %vm266, %v261, %v263
    %v272 = vsel %vm266, %v263, %v265
    %v280 = vsel %vm266, %v265, 0.0
    %281 = vrot.lane.b32.xlu0 %v93, 98
    %v282 = vpop.permute.xlu0 %281
    %283 = vrot.lane.b32.xlu0 %v94, 98
    %v284 = vpop.permute.xlu0 %283
    %285 = vrot.lane.b32.xlu0 %v95, 98
    %v286 = vpop.permute.xlu0 %285
    %287 = vrot.lane.b32.xlu0 %v96, 98
    %v288 = vpop.permute.xlu0 %287
    %289 = vrot.lane.b32.xlu0 %v97, 98
    %v290 = vpop.permute.xlu0 %289
    %291 = vrot.lane.b32.xlu0 %v98, 98
    %v292 = vpop.permute.xlu0 %291
    %293 = vrot.lane.b32.xlu0 %v99, 98
    %v294 = vpop.permute.xlu0 %293
    %vm295 = vcmask 801792
    %v296 = vsel %vm295, %v282, %v284
    %v297 = vsel %vm295, %v284, %v286
    %v298 = vsel %vm295, %v286, %v288
    %v299 = vsel %vm295, %v288, %v290
    %v300 = vsel %vm295, %v290, %v292
    %v301 = vsel %vm295, %v292, %v294
    %v309 = vsel %vm295, %v294, 0.0
    %310 = vrot.lane.b32.xlu0 %v93, 97
    %v311 = vpop.permute.xlu0 %310
    %312 = vrot.lane.b32.xlu0 %v94, 97
    %v313 = vpop.permute.xlu0 %312
    %314 = vrot.lane.b32.xlu0 %v95, 97
    %v315 = vpop.permute.xlu0 %314
    %316 = vrot.lane.b32.xlu0 %v96, 97
    %v317 = vpop.permute.xlu0 %316
    %318 = vrot.lane.b32.xlu0 %v97, 97
    %v319 = vpop.permute.xlu0 %318
    %320 = vrot.lane.b32.xlu0 %v98, 97
    %v321 = vpop.permute.xlu0 %320
    %322 = vrot.lane.b32.xlu0 %v99, 97
    %v323 = vpop.permute.xlu0 %322
    %vm324 = vcmask 793600
    %v325 = vsel %vm324, %v311, %v313
    %v326 = vsel %vm324, %v313, %v315
    %v327 = vsel %vm324, %v315, %v317
    %v328 = vsel %vm324, %v317, %v319
    %v329 = vsel %vm324, %v319, %v321
    %v330 = vsel %vm324, %v321, %v323
    %v338 = vsel %vm324, %v323, 0.0
    %339 = vrot.lane.b32.xlu0 %v93, 96
    %v340 = vpop.permute.xlu0 %339
    %341 = vrot.lane.b32.xlu0 %v94, 96
    %v342 = vpop.permute.xlu0 %341
    %343 = vrot.lane.b32.xlu0 %v95, 96
    %v344 = vpop.permute.xlu0 %343
    %345 = vrot.lane.b32.xlu0 %v96, 96
    %v346 = vpop.permute.xlu0 %345
    %347 = vrot.lane.b32.xlu0 %v97, 96
    %v348 = vpop.permute.xlu0 %347
    %349 = vrot.lane.b32.xlu0 %v98, 96
    %v350 = vpop.permute.xlu0 %349
    %351 = vrot.lane.b32.xlu0 %v99, 96
    %v352 = vpop.permute.xlu0 %351
    %vm353 = vcmask 785408
    %v354 = vsel %vm353, %v340, %v342
    %v355 = vsel %vm353, %v342, %v344
    %v356 = vsel %vm353, %v344, %v346
    %v357 = vsel %vm353, %v346, %v348
    %v358 = vsel %vm353, %v348, %v350
    %v359 = vsel %vm353, %v350, %v352
    %v367 = vsel %vm353, %v352, 0.0
    %368 = vrot.lane.b32.xlu0 %v93, 72
    %v369 = vpop.permute.xlu0 %368
    %370 = vrot.lane.b32.xlu0 %v94, 72
    %v371 = vpop.permute.xlu0 %370
    %372 = vrot.lane.b32.xlu0 %v95, 72
    %v373 = vpop.permute.xlu0 %372
    %374 = vrot.lane.b32.xlu0 %v96, 72
    %v375 = vpop.permute.xlu0 %374
    %376 = vrot.lane.b32.xlu0 %v97, 72
    %v377 = vpop.permute.xlu0 %376
    %378 = vrot.lane.b32.xlu0 %v98, 72
    %v379 = vpop.permute.xlu0 %378
    %380 = vrot.lane.b32.xlu0 %v99, 72
    %v381 = vpop.permute.xlu0 %380
    %vm382 = vcmask 588800
    %v383 = vsel %vm382, %v369, %v371
    %v384 = vsel %vm382, %v371, %v373
    %v385 = vsel %vm382, %v373, %v375
    %v386 = vsel %vm382, %v375, %v377
    %v387 = vsel %vm382, %v377, %v379
    %v388 = vsel %vm382, %v379, %v381
    %v396 = vsel %vm382, %v381, 0.0
    %397 = vrot.lane.b32.xlu0 %v93, 71
    %v398 = vpop.permute.xlu0 %397
    %399 = vrot.lane.b32.xlu0 %v94, 71
    %v400 = vpop.permute.xlu0 %399
    %401 = vrot.lane.b32.xlu0 %v95, 71
    %v402 = vpop.permute.xlu0 %401
    %403 = vrot.lane.b32.xlu0 %v96, 71
    %v404 = vpop.permute.xlu0 %403
    %405 = vrot.lane.b32.xlu0 %v97, 71
    %v406 = vpop.permute.xlu0 %405
    %407 = vrot.lane.b32.xlu0 %v98, 71
    %v408 = vpop.permute.xlu0 %407
    %409 = vrot.lane.b32.xlu0 %v99, 71
    %v410 = vpop.permute.xlu0 %409
    %vm411 = vcmask 580608
    %v412 = vsel %vm411, %v398, %v400
    %v413 = vsel %vm411, %v400, %v402
    %v414 = vsel %vm411, %v402, %v404
    %v415 = vsel %vm411, %v404, %v406
    %v416 = vsel %vm411, %v406, %v408
    %v417 = vsel %vm411, %v408, %v410
    %v425 = vsel %vm411, %v410, 0.0
    %426 = vrot.lane.b32.xlu0 %v93, 70
    %v427 = vpop.permute.xlu0 %426
    %428 = vrot.lane.b32.xlu0 %v94, 70
    %v429 = vpop.permute.xlu0 %428
    %430 = vrot.lane.b32.xlu0 %v95, 70
    %v431 = vpop.permute.xlu0 %430
    %432 = vrot.lane.b32.xlu0 %v96, 70
    %v433 = vpop.permute.xlu0 %432
    %434 = vrot.lane.b32.xlu0 %v97, 70
    %v435 = vpop.permute.xlu0 %434
    %436 = vrot.lane.b32.xlu0 %v98, 70
    %v437 = vpop.permute.xlu0 %436
    %438 = vrot.lane.b32.xlu0 %v99, 70
    %v439 = vpop.permute.xlu0 %438
    %vm440 = vcmask 572416
    %v441 = vsel %vm440, %v427, %v429
    %v442 = vsel %vm440, %v429, %v431
    %v443 = vsel %vm440, %v431, %v433
    %v444 = vsel %vm440, %v433, %v435
    %v445 = vsel %vm440, %v435, %v437
    %v446 = vsel %vm440, %v437, %v439
    %v454 = vsel %vm440, %v439, 0.0
    %455 = vrot.lane.b32.xlu0 %v93, 69
    %v456 = vpop.permute.xlu0 %455
    %457 = vrot.lane.b32.xlu0 %v94, 69
    %v458 = vpop.permute.xlu0 %457
    %459 = vrot.lane.b32.xlu0 %v95, 69
    %v460 = vpop.permute.xlu0 %459
    %461 = vrot.lane.b32.xlu0 %v96, 69
    %v462 = vpop.permute.xlu0 %461
    %463 = vrot.lane.b32.xlu0 %v97, 69
    %v464 = vpop.permute.xlu0 %463
    %465 = vrot.lane.b32.xlu0 %v98, 69
    %v466 = vpop.permute.xlu0 %465
    %467 = vrot.lane.b32.xlu0 %v99, 69
    %v468 = vpop.permute.xlu0 %467
    %vm469 = vcmask 564224
    %v470 = vsel %vm469, %v456, %v458
    %v471 = vsel %vm469, %v458, %v460
    %v472 = vsel %vm469, %v460, %v462
    %v473 = vsel %vm469, %v462, %v464
    %v474 = vsel %vm469, %v464, %v466
    %v475 = vsel %vm469, %v466, %v468
    %v483 = vsel %vm469, %v468, 0.0
    %484 = vrot.lane.b32.xlu0 %v93, 68
    %v485 = vpop.permute.xlu0 %484
    %486 = vrot.lane.b32.xlu0 %v94, 68
    %v487 = vpop.permute.xlu0 %486
    %488 = vrot.lane.b32.xlu0 %v95, 68
    %v489 = vpop.permute.xlu0 %488
    %490 = vrot.lane.b32.xlu0 %v96, 68
    %v491 = vpop.permute.xlu0 %490
    %492 = vrot.lane.b32.xlu0 %v97, 68
    %v493 = vpop.permute.xlu0 %492
    %494 = vrot.lane.b32.xlu0 %v98, 68
    %v495 = vpop.permute.xlu0 %494
    %496 = vrot.lane.b32.xlu0 %v99, 68
    %v497 = vpop.permute.xlu0 %496
    %vm498 = vcmask 556032
    %v499 = vsel %vm498, %v485, %v487
    %v500 = vsel %vm498, %v487, %v489
    %v501 = vsel %vm498, %v489, %v491
    %v502 = vsel %vm498, %v491, %v493
    %v503 = vsel %vm498, %v493, %v495
    %v504 = vsel %vm498, %v495, %v497
    %v512 = vsel %vm498, %v497, 0.0
    %513 = vrot.lane.b32.xlu0 %v93, 44
    %v514 = vpop.permute.xlu0 %513
    %515 = vrot.lane.b32.xlu0 %v94, 44
    %v516 = vpop.permute.xlu0 %515
    %517 = vrot.lane.b32.xlu0 %v95, 44
    %v518 = vpop.permute.xlu0 %517
    %519 = vrot.lane.b32.xlu0 %v96, 44
    %v520 = vpop.permute.xlu0 %519
    %521 = vrot.lane.b32.xlu0 %v97, 44
    %v522 = vpop.permute.xlu0 %521
    %523 = vrot.lane.b32.xlu0 %v98, 44
    %v524 = vpop.permute.xlu0 %523
    %525 = vrot.lane.b32.xlu0 %v99, 44
    %v526 = vpop.permute.xlu0 %525
    %vm527 = vcmask 359424
    %v528 = vsel %vm527, %v514, %v516
    %v529 = vsel %vm527, %v516, %v518
    %v530 = vsel %vm527, %v518, %v520
    %v531 = vsel %vm527, %v520, %v522
    %v532 = vsel %vm527, %v522, %v524
    %v533 = vsel %vm527, %v524, %v526
    %v541 = vsel %vm527, %v526, 0.0
    %542 = vrot.lane.b32.xlu0 %v93, 43
    %v543 = vpop.permute.xlu0 %542
    %544 = vrot.lane.b32.xlu0 %v94, 43
    %v545 = vpop.permute.xlu0 %544
    %546 = vrot.lane.b32.xlu0 %v95, 43
    %v547 = vpop.permute.xlu0 %546
    %548 = vrot.lane.b32.xlu0 %v96, 43
    %v549 = vpop.permute.xlu0 %548
    %550 = vrot.lane.b32.xlu0 %v97, 43
    %v551 = vpop.permute.xlu0 %550
    %552 = vrot.lane.b32.xlu0 %v98, 43
    %v553 = vpop.permute.xlu0 %552
    %554 = vrot.lane.b32.xlu0 %v99, 43
    %v555 = vpop.permute.xlu0 %554
    %vm556 = vcmask 351232
    %v557 = vsel %vm556, %v543, %v545
    %v558 = vsel %vm556, %v545, %v547
    %v559 = vsel %vm556, %v547, %v549
    %v560 = vsel %vm556, %v549, %v551
    %v561 = vsel %vm556, %v551, %v553
    %v562 = vsel %vm556, %v553, %v555
    %v570 = vsel %vm556, %v555, 0.0
    %571 = vrot.lane.b32.xlu0 %v93, 42
    %v572 = vpop.permute.xlu0 %571
    %573 = vrot.lane.b32.xlu0 %v94, 42
    %v574 = vpop.permute.xlu0 %573
    %575 = vrot.lane.b32.xlu0 %v95, 42
    %v576 = vpop.permute.xlu0 %575
    %577 = vrot.lane.b32.xlu0 %v96, 42
    %v578 = vpop.permute.xlu0 %577
    %579 = vrot.lane.b32.xlu0 %v97, 42
    %v580 = vpop.permute.xlu0 %579
    %581 = vrot.lane.b32.xlu0 %v98, 42
    %v582 = vpop.permute.xlu0 %581
    %583 = vrot.lane.b32.xlu0 %v99, 42
    %v584 = vpop.permute.xlu0 %583
    %vm585 = vcmask 343040
    %v586 = vsel %vm585, %v572, %v574
    %v587 = vsel %vm585, %v574, %v576
    %v588 = vsel %vm585, %v576, %v578
    %v589 = vsel %vm585, %v578, %v580
    %v590 = vsel %vm585, %v580, %v582
    %v591 = vsel %vm585, %v582, %v584
    %v599 = vsel %vm585, %v584, 0.0
    %600 = vrot.lane.b32.xlu0 %v93, 41
    %v601 = vpop.permute.xlu0 %600
    %602 = vrot.lane.b32.xlu0 %v94, 41
    %v603 = vpop.permute.xlu0 %602
    %604 = vrot.lane.b32.xlu0 %v95, 41
    %v605 = vpop.permute.xlu0 %604
    %606 = vrot.lane.b32.xlu0 %v96, 41
    %v607 = vpop.permute.xlu0 %606
    %608 = vrot.lane.b32.xlu0 %v97, 41
    %v609 = vpop.permute.xlu0 %608
    %610 = vrot.lane.b32.xlu0 %v98, 41
    %v611 = vpop.permute.xlu0 %610
    %612 = vrot.lane.b32.xlu0 %v99, 41
    %v613 = vpop.permute.xlu0 %612
    %vm614 = vcmask 334848
    %v615 = vsel %vm614, %v601, %v603
    %v616 = vsel %vm614, %v603, %v605
    %v617 = vsel %vm614, %v605, %v607
    %v618 = vsel %vm614, %v607, %v609
    %v619 = vsel %vm614, %v609, %v611
    %v620 = vsel %vm614, %v611, %v613
    %v628 = vsel %vm614, %v613, 0.0
    %629 = vrot.lane.b32.xlu0 %v93, 40
    %v630 = vpop.permute.xlu0 %629
    %631 = vrot.lane.b32.xlu0 %v94, 40
    %v632 = vpop.permute.xlu0 %631
    %633 = vrot.lane.b32.xlu0 %v95, 40
    %v634 = vpop.permute.xlu0 %633
    %635 = vrot.lane.b32.xlu0 %v96, 40
    %v636 = vpop.permute.xlu0 %635
    %637 = vrot.lane.b32.xlu0 %v97, 40
    %v638 = vpop.permute.xlu0 %637
    %639 = vrot.lane.b32.xlu0 %v98, 40
    %v640 = vpop.permute.xlu0 %639
    %641 = vrot.lane.b32.xlu0 %v99, 40
    %v642 = vpop.permute.xlu0 %641
    %vm643 = vcmask 326656
    %v644 = vsel %vm643, %v630, %v632
    %v645 = vsel %vm643, %v632, %v634
    %v646 = vsel %vm643, %v634, %v636
    %v647 = vsel %vm643, %v636, %v638
    %v648 = vsel %vm643, %v638, %v640
    %v649 = vsel %vm643, %v640, %v642
    %v657 = vsel %vm643, %v642, 0.0
    %658 = vrot.lane.b32.xlu0 %v93, 16
    %v659 = vpop.permute.xlu0 %658
    %660 = vrot.lane.b32.xlu0 %v94, 16
    %v661 = vpop.permute.xlu0 %660
    %662 = vrot.lane.b32.xlu0 %v95, 16
    %v663 = vpop.permute.xlu0 %662
    %664 = vrot.lane.b32.xlu0 %v96, 16
    %v665 = vpop.permute.xlu0 %664
    %666 = vrot.lane.b32.xlu0 %v97, 16
    %v667 = vpop.permute.xlu0 %666
    %668 = vrot.lane.b32.xlu0 %v98, 16
    %v669 = vpop.permute.xlu0 %668
    %670 = vrot.lane.b32.xlu0 %v99, 16
    %v671 = vpop.permute.xlu0 %670
    %vm672 = vcmask 130048
    %v673 = vsel %vm672, %v659, %v661
    %v674 = vsel %vm672, %v661, %v663
    %v675 = vsel %vm672, %v663, %v665
    %v676 = vsel %vm672, %v665, %v667
    %v677 = vsel %vm672, %v667, %v669
    %v678 = vsel %vm672, %v669, %v671
    %v686 = vsel %vm672, %v671, 0.0
    %687 = vrot.lane.b32.xlu0 %v93, 15
    %v688 = vpop.permute.xlu0 %687
    %689 = vrot.lane.b32.xlu0 %v94, 15
    %v690 = vpop.permute.xlu0 %689
    %691 = vrot.lane.b32.xlu0 %v95, 15
    %v692 = vpop.permute.xlu0 %691
    %693 = vrot.lane.b32.xlu0 %v96, 15
    %v694 = vpop.permute.xlu0 %693
    %695 = vrot.lane.b32.xlu0 %v97, 15
    %v696 = vpop.permute.xlu0 %695
    %697 = vrot.lane.b32.xlu0 %v98, 15
    %v698 = vpop.permute.xlu0 %697
    %699 = vrot.lane.b32.xlu0 %v99, 15
    %v700 = vpop.permute.xlu0 %699
    %vm701 = vcmask 121856
    %v702 = vsel %vm701, %v688, %v690
    %v703 = vsel %vm701, %v690, %v692
    %v704 = vsel %vm701, %v692, %v694
    %v705 = vsel %vm701, %v694, %v696
    %v706 = vsel %vm701, %v696, %v698
    %v707 = vsel %vm701, %v698, %v700
    %v715 = vsel %vm701, %v700, 0.0
    %716 = vrot.lane.b32.xlu0 %v93, 14
    %v717 = vpop.permute.xlu0 %716
    %718 = vrot.lane.b32.xlu0 %v94, 14
    %v719 = vpop.permute.xlu0 %718
    %720 = vrot.lane.b32.xlu0 %v95, 14
    %v721 = vpop.permute.xlu0 %720
    %722 = vrot.lane.b32.xlu0 %v96, 14
    %v723 = vpop.permute.xlu0 %722
    %724 = vrot.lane.b32.xlu0 %v97, 14
    %v725 = vpop.permute.xlu0 %724
    %726 = vrot.lane.b32.xlu0 %v98, 14
    %v727 = vpop.permute.xlu0 %726
    %728 = vrot.lane.b32.xlu0 %v99, 14
    %v729 = vpop.permute.xlu0 %728
    %vm730 = vcmask 113664
    %v731 = vsel %vm730, %v717, %v719
    %v732 = vsel %vm730, %v719, %v721
    %v733 = vsel %vm730, %v721, %v723
    %v734 = vsel %vm730, %v723, %v725
    %v735 = vsel %vm730, %v725, %v727
    %v736 = vsel %vm730, %v727, %v729
    %v744 = vsel %vm730, %v729, 0.0
    %745 = vrot.lane.b32.xlu0 %v93, 13
    %v746 = vpop.permute.xlu0 %745
    %747 = vrot.lane.b32.xlu0 %v94, 13
    %v748 = vpop.permute.xlu0 %747
    %749 = vrot.lane.b32.xlu0 %v95, 13
    %v750 = vpop.permute.xlu0 %749
    %751 = vrot.lane.b32.xlu0 %v96, 13
    %v752 = vpop.permute.xlu0 %751
    %753 = vrot.lane.b32.xlu0 %v97, 13
    %v754 = vpop.permute.xlu0 %753
    %755 = vrot.lane.b32.xlu0 %v98, 13
    %v756 = vpop.permute.xlu0 %755
    %757 = vrot.lane.b32.xlu0 %v99, 13
    %v758 = vpop.permute.xlu0 %757
    %vm759 = vcmask 105472
    %v760 = vsel %vm759, %v746, %v748
    %v761 = vsel %vm759, %v748, %v750
    %v762 = vsel %vm759, %v750, %v752
    %v763 = vsel %vm759, %v752, %v754
    %v764 = vsel %vm759, %v754, %v756
    %v765 = vsel %vm759, %v756, %v758
    %v773 = vsel %vm759, %v758, 0.0
    %774 = vrot.lane.b32.xlu0 %v93, 12
    %v775 = vpop.permute.xlu0 %774
    %776 = vrot.lane.b32.xlu0 %v94, 12
    %v777 = vpop.permute.xlu0 %776
    %778 = vrot.lane.b32.xlu0 %v95, 12
    %v779 = vpop.permute.xlu0 %778
    %780 = vrot.lane.b32.xlu0 %v96, 12
    %v781 = vpop.permute.xlu0 %780
    %782 = vrot.lane.b32.xlu0 %v97, 12
    %v783 = vpop.permute.xlu0 %782
    %784 = vrot.lane.b32.xlu0 %v98, 12
    %v785 = vpop.permute.xlu0 %784
    %786 = vrot.lane.b32.xlu0 %v99, 12
    %v787 = vpop.permute.xlu0 %786
    %vm788 = vcmask 97280
    %v789 = vsel %vm788, %v775, %v777
    %v790 = vsel %vm788, %v777, %v779
    %v791 = vsel %vm788, %v779, %v781
    %v792 = vsel %vm788, %v781, %v783
    %v793 = vsel %vm788, %v783, %v785
    %v794 = vsel %vm788, %v785, %v787
    %v802 = vsel %vm788, %v787, 0.0
    %v803 = vld [vmem:[#allocation4] sm:$0xff]
    %v804 = vld [vmem:[#allocation4 + $0x8] sm:$0xff]
    %v805 = vld [vmem:[#allocation4 + $0x10] sm:$0xff]
    %v806 = vld [vmem:[#allocation4 + $0x18] sm:$0xff]
    %v807 = vld [vmem:[#allocation4 + $0x20] sm:$0xff]
    %v808 = vld [vmem:[#allocation4 + $0x28] sm:$0xff]
    %v809 = vld [vmem:[#allocation4 + $0x30] sm:$0xff]
    %v810 = vld [vmem:[#allocation4 + $0x38] sm:$0xff]
    %v811 = vld [vmem:[%s3] sm:$0xff]
    %v812 = vld [vmem:[%s3 + $0x8] sm:$0xff]
    %v813 = vld [vmem:[%s3 + $0x10] sm:$0xff]
    %v814 = vld [vmem:[%s3 + $0x18] sm:$0xff]
    %816 = vset.pattern.permute.xlu0 0
    %817 = vperm.xlu0 %816, %v811
    %v818 = vpop.permute.xlu0 %817
    %821 = vset.pattern.permute.xlu0 0
    %822 = vperm.xlu0 %821, %v812
    %v823 = vpop.permute.xlu0 %822
    %826 = vset.pattern.permute.xlu0 0
    %827 = vperm.xlu0 %826, %v813
    %v828 = vpop.permute.xlu0 %827
    %831 = vset.pattern.permute.xlu0 0
    %832 = vperm.xlu0 %831, %v814
    %v833 = vpop.permute.xlu0 %832
    %v836 = vsel %vm382, %v804, 0
    %v839 = vsel %vm382, %v806, 0
    %v842 = vsel %vm382, %v808, 0
    %v845 = vsel %vm382, %v810, 0
    %847 = vmatprep.subr.mxu0 %v529
    %848 = vmatpush1.msra.mxu0 %v528
    %849 = vmatprep.subr.mxu0 %v500
    %850 = vmatpush1.msra.mxu0 %v499
    %851 = vmatprep.subr.mxu0 %v471
    %852 = vmatpush1.msra.mxu0 %v470
    %853 = vmatprep.subr.mxu0 %v442
    %854 = vmatpush1.msra.mxu0 %v441
    %855 = vmatprep.subr.mxu0 %v413
    %856 = vmatpush1.msra.mxu0 %v412
    %857 = vmatprep.subr.mxu0 %v384
    %858 = vmatpush1.msra.mxu0 %v383
    %859 = vmatprep.subr.mxu0 %v355
    %860 = vmatpush1.msra.mxu0 %v354
    %861 = vmatprep.subr.mxu0 %v326
    %862 = vmatpush1.msra.mxu0 %v325
    %863 = vmatprep.subr.mxu0 %v297
    %864 = vmatpush1.msra.mxu0 %v296
    %865 = vmatprep.subr.mxu0 %v268
    %866 = vmatpush1.msra.mxu0 %v267
    %867 = vmatprep.subr.mxu0 %v239
    %868 = vmatpush1.msra.mxu0 %v238
    %869 = vmatprep.subr.mxu0 %v210
    %870 = vmatpush1.msra.mxu0 %v209
    %871 = vmatprep.subr.mxu0 %v181
    %872 = vmatpush1.msra.mxu0 %v180
    %873 = vmatprep.subr.mxu0 %v152
    %874 = vmatpush1.msra.mxu0 %v151
    %875 = vmatprep.subr.mxu0 %v123
    %876 = vmatpush1.msra.mxu0 %v122
    %877 = vmatprep.subr.mxu0 %v94
    %878 = vmatpush1.msra.mxu0 %v93
    %879 = vmatprep.subr.mxu0 0.0
    %880 = vmatpush2.msra.mxu0 0.0
    %881 = vmatprep.subr.mxu0 0.0
    %882 = vmatpush2.msra.mxu0 0.0
    %883 = vmatprep.subr.mxu0 0.0
    %884 = vmatpush2.msra.mxu0 0.0
    %885 = vmatprep.subr.mxu0 0.0
    %886 = vmatpush2.msra.mxu0 0.0
    %887 = vmatprep.subr.mxu0 0.0
    %888 = vmatpush2.msra.mxu0 0.0
    %889 = vmatprep.subr.mxu0 0.0
    %890 = vmatpush2.msra.mxu0 0.0
    %891 = vmatprep.subr.mxu0 0.0
    %892 = vmatpush2.msra.mxu0 0.0
    %893 = vmatprep.subr.mxu0 %v790
    %894 = vmatpush2.msra.mxu0 %v789
    %895 = vmatprep.subr.mxu0 %v761
    %896 = vmatpush2.msra.mxu0 %v760
    %897 = vmatprep.subr.mxu0 %v732
    %898 = vmatpush2.msra.mxu0 %v731
    %899 = vmatprep.subr.mxu0 %v703
    %900 = vmatpush2.msra.mxu0 %v702
    %901 = vmatprep.subr.mxu0 %v674
    %902 = vmatpush2.msra.mxu0 %v673
    %903 = vmatprep.subr.mxu0 %v645
    %904 = vmatpush2.msra.mxu0 %v644
    %905 = vmatprep.subr.mxu0 %v616
    %906 = vmatpush2.msra.mxu0 %v615
    %907 = vmatprep.subr.mxu0 %v587
    %908 = vmatpush2.msra.mxu0 %v586
    %909 = vmatprep.subr.mxu0 %v558
    %910 = vmatpush2.msra.mxu0 %v557
    %911 = vmatprep.mubr.f32.mxu0 %v836
    %912 = vmatmul.mubr.f32.gmra.mxu0 %v803
    %v913 = vpop.f32.mrf.mxu0
    %v914 = vadd.f32 %v818, %v913
    %v915 = vpop.f32.mrf.mxu0
    %v916 = vadd.f32 %v818, %v915
    %917 = vmatprep.mubr.f32.mxu0 %v839
    %918 = vmatmul.mubr.f32.gmra.mxu0 %v805
    %v919 = vpop.f32.mrf.mxu0
    %v920 = vadd.f32 %v823, %v919
    %v921 = vpop.f32.mrf.mxu0
    %v922 = vadd.f32 %v823, %v921
    %923 = vmatprep.mubr.f32.mxu0 %v842
    %924 = vmatmul.mubr.f32.gmra.mxu0 %v807
    %v925 = vpop.f32.mrf.mxu0
    %v926 = vadd.f32 %v828, %v925
    %v927 = vpop.f32.mrf.mxu0
    %v928 = vadd.f32 %v828, %v927
    %929 = vmatprep.mubr.f32.mxu0 %v845
    %930 = vmatmul.mubr.f32.gmra.mxu0 %v809
    %v931 = vpop.f32.mrf.mxu0
    %v932 = vadd.f32 %v833, %v931
    %v933 = vpop.f32.mrf.mxu0
    %v934 = vadd.f32 %v833, %v933
    %935 = vdwg.mxu0
    %936 = vmatprep.subr.mxu0 %v531
    %937 = vmatpush1.msra.mxu0 %v530
    %938 = vmatprep.subr.mxu0 %v502
    %939 = vmatpush1.msra.mxu0 %v501
    %940 = vmatprep.subr.mxu0 %v473
    %941 = vmatpush1.msra.mxu0 %v472
    %942 = vmatprep.subr.mxu0 %v444
    %943 = vmatpush1.msra.mxu0 %v443
    %944 = vmatprep.subr.mxu0 %v415
    %945 = vmatpush1.msra.mxu0 %v414
    %946 = vmatprep.subr.mxu0 %v386
    %947 = vmatpush1.msra.mxu0 %v385
    %948 = vmatprep.subr.mxu0 %v357
    %949 = vmatpush1.msra.mxu0 %v356
    %950 = vmatprep.subr.mxu0 %v328
    %951 = vmatpush1.msra.mxu0 %v327
    %952 = vmatprep.subr.mxu0 %v299
    %953 = vmatpush1.msra.mxu0 %v298
    %954 = vmatprep.subr.mxu0 %v270
    %955 = vmatpush1.msra.mxu0 %v269
    %956 = vmatprep.subr.mxu0 %v241
    %957 = vmatpush1.msra.mxu0 %v240
    %958 = vmatprep.subr.mxu0 %v212
    %959 = vmatpush1.msra.mxu0 %v211
    %960 = vmatprep.subr.mxu0 %v183
    %961 = vmatpush1.msra.mxu0 %v182
    %962 = vmatprep.subr.mxu0 %v154
    %963 = vmatpush1.msra.mxu0 %v153
    %964 = vmatprep.subr.mxu0 %v125
    %965 = vmatpush1.msra.mxu0 %v124
    %966 = vmatprep.subr.mxu0 %v96
    %967 = vmatpush1.msra.mxu0 %v95
    %968 = vmatprep.subr.mxu0 0.0
    %969 = vmatpush2.msra.mxu0 0.0
    %970 = vmatprep.subr.mxu0 0.0
    %971 = vmatpush2.msra.mxu0 0.0
    %972 = vmatprep.subr.mxu0 0.0
    %973 = vmatpush2.msra.mxu0 0.0
    %974 = vmatprep.subr.mxu0 0.0
    %975 = vmatpush2.msra.mxu0 0.0
    %976 = vmatprep.subr.mxu0 0.0
    %977 = vmatpush2.msra.mxu0 0.0
    %978 = vmatprep.subr.mxu0 0.0
    %979 = vmatpush2.msra.mxu0 0.0
    %980 = vmatprep.subr.mxu0 0.0
    %981 = vmatpush2.msra.mxu0 0.0
    %982 = vmatprep.subr.mxu0 %v792
    %983 = vmatpush2.msra.mxu0 %v791
    %984 = vmatprep.subr.mxu0 %v763
    %985 = vmatpush2.msra.mxu0 %v762
    %986 = vmatprep.subr.mxu0 %v734
    %987 = vmatpush2.msra.mxu0 %v733
    %988 = vmatprep.subr.mxu0 %v705
    %989 = vmatpush2.msra.mxu0 %v704
    %990 = vmatprep.subr.mxu0 %v676
    %991 = vmatpush2.msra.mxu0 %v675
    %992 = vmatprep.subr.mxu0 %v647
    %993 = vmatpush2.msra.mxu0 %v646
    %994 = vmatprep.subr.mxu0 %v618
    %995 = vmatpush2.msra.mxu0 %v617
    %996 = vmatprep.subr.mxu0 %v589
    %997 = vmatpush2.msra.mxu0 %v588
    %998 = vmatprep.subr.mxu0 %v560
    %999 = vmatpush2.msra.mxu0 %v559
    %1000 = vmatprep.mubr.f32.mxu0 %v836
    %1001 = vmatmul.mubr.f32.gmra.mxu0 %v803
    %v1002 = vpop.f32.mrf.mxu0
    %v1003 = vadd.f32 %v818, %v1002
    %v1004 = vpop.f32.mrf.mxu0
    %v1005 = vadd.f32 %v818, %v1004
    %1006 = vmatprep.mubr.f32.mxu0 %v839
    %1007 = vmatmul.mubr.f32.gmra.mxu0 %v805
    %v1008 = vpop.f32.mrf.mxu0
    %v1009 = vadd.f32 %v823, %v1008
    %v1010 = vpop.f32.mrf.mxu0
    %v1011 = vadd.f32 %v823, %v1010
    %1012 = vmatprep.mubr.f32.mxu0 %v842
    %1013 = vmatmul.mubr.f32.gmra.mxu0 %v807
    %v1014 = vpop.f32.mrf.mxu0
    %v1015 = vadd.f32 %v828, %v1014
    %v1016 = vpop.f32.mrf.mxu0
    %v1017 = vadd.f32 %v828, %v1016
    %1018 = vmatprep.mubr.f32.mxu0 %v845
    %1019 = vmatmul.mubr.f32.gmra.mxu0 %v809
    %v1020 = vpop.f32.mrf.mxu0
    %v1021 = vadd.f32 %v833, %v1020
    %v1022 = vpop.f32.mrf.mxu0
    %v1023 = vadd.f32 %v833, %v1022
    %1024 = vdwg.mxu0
    %1025 = vmatprep.subr.mxu0 %v533
    %1026 = vmatpush1.msra.mxu0 %v532
    %1027 = vmatprep.subr.mxu0 %v504
    %1028 = vmatpush1.msra.mxu0 %v503
    %1029 = vmatprep.subr.mxu0 %v475
    %1030 = vmatpush1.msra.mxu0 %v474
    %1031 = vmatprep.subr.mxu0 %v446
    %1032 = vmatpush1.msra.mxu0 %v445
    %1033 = vmatprep.subr.mxu0 %v417
    %1034 = vmatpush1.msra.mxu0 %v416
    %1035 = vmatprep.subr.mxu0 %v388
    %1036 = vmatpush1.msra.mxu0 %v387
    %1037 = vmatprep.subr.mxu0 %v359
    %1038 = vmatpush1.msra.mxu0 %v358
    %1039 = vmatprep.subr.mxu0 %v330
    %1040 = vmatpush1.msra.mxu0 %v329
    %1041 = vmatprep.subr.mxu0 %v301
    %1042 = vmatpush1.msra.mxu0 %v300
    %1043 = vmatprep.subr.mxu0 %v272
    %1044 = vmatpush1.msra.mxu0 %v271
    %1045 = vmatprep.subr.mxu0 %v243
    %1046 = vmatpush1.msra.mxu0 %v242
    %1047 = vmatprep.subr.mxu0 %v214
    %1048 = vmatpush1.msra.mxu0 %v213
    %1049 = vmatprep.subr.mxu0 %v185
    %1050 = vmatpush1.msra.mxu0 %v184
    %1051 = vmatprep.subr.mxu0 %v156
    %1052 = vmatpush1.msra.mxu0 %v155
    %1053 = vmatprep.subr.mxu0 %v127
    %1054 = vmatpush1.msra.mxu0 %v126
    %1055 = vmatprep.subr.mxu0 %v98
    %1056 = vmatpush1.msra.mxu0 %v97
    %1057 = vmatprep.subr.mxu0 0.0
    %1058 = vmatpush2.msra.mxu0 0.0
    %1059 = vmatprep.subr.mxu0 0.0
    %1060 = vmatpush2.msra.mxu0 0.0
    %1061 = vmatprep.subr.mxu0 0.0
    %1062 = vmatpush2.msra.mxu0 0.0
    %1063 = vmatprep.subr.mxu0 0.0
    %1064 = vmatpush2.msra.mxu0 0.0
    %1065 = vmatprep.subr.mxu0 0.0
    %1066 = vmatpush2.msra.mxu0 0.0
    %1067 = vmatprep.subr.mxu0 0.0
    %1068 = vmatpush2.msra.mxu0 0.0
    %1069 = vmatprep.subr.mxu0 0.0
    %1070 = vmatpush2.msra.mxu0 0.0
    %1071 = vmatprep.subr.mxu0 %v794
    %1072 = vmatpush2.msra.mxu0 %v793
    %1073 = vmatprep.subr.mxu0 %v765
    %1074 = vmatpush2.msra.mxu0 %v764
    %1075 = vmatprep.subr.mxu0 %v736
    %1076 = vmatpush2.msra.mxu0 %v735
    %1077 = vmatprep.subr.mxu0 %v707
    %1078 = vmatpush2.msra.mxu0 %v706
    %1079 = vmatprep.subr.mxu0 %v678
    %1080 = vmatpush2.msra.mxu0 %v677
    %1081 = vmatprep.subr.mxu0 %v649
    %1082 = vmatpush2.msra.mxu0 %v648
    %1083 = vmatprep.subr.mxu0 %v620
    %1084 = vmatpush2.msra.mxu0 %v619
    %1085 = vmatprep.subr.mxu0 %v591
    %1086 = vmatpush2.msra.mxu0 %v590
    %1087 = vmatprep.subr.mxu0 %v562
    %1088 = vmatpush2.msra.mxu0 %v561
    %1089 = vmatprep.mubr.f32.mxu0 %v836
    %1090 = vmatmul.mubr.f32.gmra.mxu0 %v803
    %v1091 = vpop.f32.mrf.mxu0
    %v1092 = vadd.f32 %v818, %v1091
    %v1093 = vpop.f32.mrf.mxu0
    %v1094 = vadd.f32 %v818, %v1093
    %1095 = vmatprep.mubr.f32.mxu0 %v839
    %1096 = vmatmul.mubr.f32.gmra.mxu0 %v805
    %v1097 = vpop.f32.mrf.mxu0
    %v1098 = vadd.f32 %v823, %v1097
    %v1099 = vpop.f32.mrf.mxu0
    %v1100 = vadd.f32 %v823, %v1099
    %1101 = vmatprep.mubr.f32.mxu0 %v842
    %1102 = vmatmul.mubr.f32.gmra.mxu0 %v807
    %v1103 = vpop.f32.mrf.mxu0
    %v1104 = vadd.f32 %v828, %v1103
    %v1105 = vpop.f32.mrf.mxu0
    %v1106 = vadd.f32 %v828, %v1105
    %1107 = vmatprep.mubr.f32.mxu0 %v845
    %1108 = vmatmul.mubr.f32.gmra.mxu0 %v809
    %v1109 = vpop.f32.mrf.mxu0
    %v1110 = vadd.f32 %v833, %v1109
    %v1111 = vpop.f32.mrf.mxu0
    %v1112 = vadd.f32 %v833, %v1111
    %1113 = vdwg.mxu0
    %1114 = vmatprep.subr.mxu0 0.0
    %1115 = vmatpush1.msra.mxu0 %v541
    %1116 = vmatprep.subr.mxu0 0.0
    %1117 = vmatpush1.msra.mxu0 %v512
    %1118 = vmatprep.subr.mxu0 0.0
    %1119 = vmatpush1.msra.mxu0 %v483
    %1120 = vmatprep.subr.mxu0 0.0
    %1121 = vmatpush1.msra.mxu0 %v454
    %1122 = vmatprep.subr.mxu0 0.0
    %1123 = vmatpush1.msra.mxu0 %v425
    %1124 = vmatprep.subr.mxu0 0.0
    %1125 = vmatpush1.msra.mxu0 %v396
    %1126 = vmatprep.subr.mxu0 0.0
    %1127 = vmatpush1.msra.mxu0 %v367
    %1128 = vmatprep.subr.mxu0 0.0
    %1129 = vmatpush1.msra.mxu0 %v338
    %1130 = vmatprep.subr.mxu0 0.0
    %1131 = vmatpush1.msra.mxu0 %v309
    %1132 = vmatprep.subr.mxu0 0.0
    %1133 = vmatpush1.msra.mxu0 %v280
    %1134 = vmatprep.subr.mxu0 0.0
    %1135 = vmatpush1.msra.mxu0 %v251
    %1136 = vmatprep.subr.mxu0 0.0
    %1137 = vmatpush1.msra.mxu0 %v222
    %1138 = vmatprep.subr.mxu0 0.0
    %1139 = vmatpush1.msra.mxu0 %v193
    %1140 = vmatprep.subr.mxu0 0.0
    %1141 = vmatpush1.msra.mxu0 %v164
    %1142 = vmatprep.subr.mxu0 0.0
    %1143 = vmatpush1.msra.mxu0 %v135
    %1144 = vmatprep.subr.mxu0 0.0
    %1145 = vmatpush1.msra.mxu0 %v99
    %1146 = vmatprep.subr.mxu0 0.0
    %1147 = vmatpush2.msra.mxu0 0.0
    %1148 = vmatprep.subr.mxu0 0.0
    %1149 = vmatpush2.msra.mxu0 0.0
    %1150 = vmatprep.subr.mxu0 0.0
    %1151 = vmatpush2.msra.mxu0 0.0
    %1152 = vmatprep.subr.mxu0 0.0
    %1153 = vmatpush2.msra.mxu0 0.0
    %1154 = vmatprep.subr.mxu0 0.0
    %1155 = vmatpush2.msra.mxu0 0.0
    %1156 = vmatprep.subr.mxu0 0.0
    %1157 = vmatpush2.msra.mxu0 0.0
    %1158 = vmatprep.subr.mxu0 0.0
    %1159 = vmatpush2.msra.mxu0 0.0
    %1160 = vmatprep.subr.mxu0 0.0
    %1161 = vmatpush2.msra.mxu0 %v802
    %1162 = vmatprep.subr.mxu0 0.0
    %1163 = vmatpush2.msra.mxu0 %v773
    %1164 = vmatprep.subr.mxu0 0.0
    %1165 = vmatpush2.msra.mxu0 %v744
    %1166 = vmatprep.subr.mxu0 0.0
    %1167 = vmatpush2.msra.mxu0 %v715
    %1168 = vmatprep.subr.mxu0 0.0
    %1169 = vmatpush2.msra.mxu0 %v686
    %1170 = vmatprep.subr.mxu0 0.0
    %1171 = vmatpush2.msra.mxu0 %v657
    %1172 = vmatprep.subr.mxu0 0.0
    %1173 = vmatpush2.msra.mxu0 %v628
    %1174 = vmatprep.subr.mxu0 0.0
    %1175 = vmatpush2.msra.mxu0 %v599
    %1176 = vmatprep.subr.mxu0 0.0
    %1177 = vmatpush2.msra.mxu0 %v570
    %1178 = vmatprep.mubr.f32.mxu0 %v836
    %1179 = vmatmul.mubr.f32.gmra.mxu0 %v803
    %v1180 = vpop.f32.mrf.mxu0
    %v1181 = vadd.f32 %v818, %v1180
    %v1182 = vpop.f32.mrf.mxu0
    %1183 = vmatprep.mubr.f32.mxu0 %v839
    %1184 = vmatmul.mubr.f32.gmra.mxu0 %v805
    %v1185 = vpop.f32.mrf.mxu0
    %v1186 = vadd.f32 %v823, %v1185
    %v1187 = vpop.f32.mrf.mxu0
    %1188 = vmatprep.mubr.f32.mxu0 %v842
    %1189 = vmatmul.mubr.f32.gmra.mxu0 %v807
    %v1190 = vpop.f32.mrf.mxu0
    %v1191 = vadd.f32 %v828, %v1190
    %v1192 = vpop.f32.mrf.mxu0
    %1193 = vmatprep.mubr.f32.mxu0 %v845
    %1194 = vmatmul.mubr.f32.gmra.mxu0 %v809
    %v1195 = vpop.f32.mrf.mxu0
    %v1196 = vadd.f32 %v833, %v1195
    %v1197 = vpop.f32.mrf.mxu0
    %1198 = vdwg.mxu0
    %v1199 = vmax.f32 %v914, 0.0
    %v1200 = vmax.f32 %v916, 0.0
    %v1201 = vmax.f32 %v1003, 0.0
    %v1202 = vmax.f32 %v1005, 0.0
    %v1203 = vmax.f32 %v1092, 0.0
    %v1204 = vmax.f32 %v1094, 0.0
    %v1205 = vmax.f32 %v1181, 0.0
    %v1206 = vmax.f32 %v920, 0.0
    %v1207 = vmax.f32 %v922, 0.0
    %v1208 = vmax.f32 %v1009, 0.0
    %v1209 = vmax.f32 %v1011, 0.0
    %v1210 = vmax.f32 %v1098, 0.0
    %v1211 = vmax.f32 %v1100, 0.0
    %v1212 = vmax.f32 %v1186, 0.0
    %v1213 = vmax.f32 %v926, 0.0
    %v1214 = vmax.f32 %v928, 0.0
    %v1215 = vmax.f32 %v1015, 0.0
    %v1216 = vmax.f32 %v1017, 0.0
    %v1217 = vmax.f32 %v1104, 0.0
    %v1218 = vmax.f32 %v1106, 0.0
    %v1219 = vmax.f32 %v1191, 0.0
    %v1220 = vmax.f32 %v932, 0.0
    %v1221 = vmax.f32 %v934, 0.0
    %v1222 = vmax.f32 %v1021, 0.0
    %v1223 = vmax.f32 %v1023, 0.0
    %v1224 = vmax.f32 %v1110, 0.0
    %v1225 = vmax.f32 %v1112, 0.0
    %v1226 = vmax.f32 %v1196, 0.0
    %v1227 = vld [vmem:[#allocation2] sm:$0xff]
    %v1229 = vlaneseq
    %v1230 = vshrl.u32 %v1229, 7
    %v1231 = vsub.s32 0, %v1230
    %v1232 = vrot.slane %v1227, %v1231
    %v1233 = vlaneseq
    %v1234 = vshrl.u32 %v1233, 7
    %v1235 = vsub.s32 1, %v1234
    %v1236 = vrot.slane %v1227, %v1235
    %v1237 = vlaneseq
    %v1238 = vshrl.u32 %v1237, 7
    %v1239 = vsub.s32 2, %v1238
    %v1240 = vrot.slane %v1227, %v1239
    %v1241 = vlaneseq
    %v1242 = vshrl.u32 %v1241, 7
    %v1243 = vsub.s32 3, %v1242
    %v1244 = vrot.slane %v1227, %v1243
    %v1245 = vlaneseq
    %v1246 = vshrl.u32 %v1245, 7
    %v1247 = vsub.s32 4, %v1246
    %v1248 = vrot.slane %v1227, %v1247
    %v1249 = vlaneseq
    %v1250 = vshrl.u32 %v1249, 7
    %v1251 = vsub.s32 5, %v1250
    %v1252 = vrot.slane %v1227, %v1251
    %v1253 = vlaneseq
    %v1254 = vshrl.u32 %v1253, 7
    %v1255 = vsub.s32 6, %v1254
    %v1256 = vrot.slane %v1227, %v1255
    %v1264 = vmul.f32 %v1199, %v1232
    %v1265 = vmul.f32 %v1200, %v1236
    %v1266 = vmul.f32 %v1201, %v1240
    %v1267 = vmul.f32 %v1202, %v1244
    %v1268 = vmul.f32 %v1203, %v1248
    %v1269 = vmul.f32 %v1204, %v1252
    %v1270 = vmul.f32 %v1205, %v1256
    %v1271 = vmul.f32 %v1206, %v1232
    %v1272 = vmul.f32 %v1207, %v1236
    %v1273 = vmul.f32 %v1208, %v1240
    %v1274 = vmul.f32 %v1209, %v1244
    %v1275 = vmul.f32 %v1210, %v1248
    %v1276 = vmul.f32 %v1211, %v1252
    %v1277 = vmul.f32 %v1212, %v1256
    %v1278 = vmul.f32 %v1213, %v1232
    %v1279 = vmul.f32 %v1214, %v1236
    %v1280 = vmul.f32 %v1215, %v1240
    %v1281 = vmul.f32 %v1216, %v1244
    %v1282 = vmul.f32 %v1217, %v1248
    %v1283 = vmul.f32 %v1218, %v1252
    %v1284 = vmul.f32 %v1219, %v1256
    %v1285 = vmul.f32 %v1220, %v1232
    %v1286 = vmul.f32 %v1221, %v1236
    %v1287 = vmul.f32 %v1222, %v1240
    %v1288 = vmul.f32 %v1223, %v1244
    %v1289 = vmul.f32 %v1224, %v1248
    %v1290 = vmul.f32 %v1225, %v1252
    %v1291 = vmul.f32 %v1226, %v1256
    %1320 = vrot.lane.b32.xlu0 %v1264, 127
    %v1321 = vpop.permute.xlu0 %1320
    %1322 = vrot.lane.b32.xlu0 %v1265, 127
    %v1323 = vpop.permute.xlu0 %1322
    %1324 = vrot.lane.b32.xlu0 %v1266, 127
    %v1325 = vpop.permute.xlu0 %1324
    %1326 = vrot.lane.b32.xlu0 %v1267, 127
    %v1327 = vpop.permute.xlu0 %1326
    %1328 = vrot.lane.b32.xlu0 %v1268, 127
    %v1329 = vpop.permute.xlu0 %1328
    %1330 = vrot.lane.b32.xlu0 %v1269, 127
    %v1331 = vpop.permute.xlu0 %1330
    %1332 = vrot.lane.b32.xlu0 %v1270, 127
    %v1333 = vpop.permute.xlu0 %1332
    %1334 = vrot.lane.b32.xlu0 %v1271, 127
    %v1335 = vpop.permute.xlu0 %1334
    %1336 = vrot.lane.b32.xlu0 %v1272, 127
    %v1337 = vpop.permute.xlu0 %1336
    %1338 = vrot.lane.b32.xlu0 %v1273, 127
    %v1339 = vpop.permute.xlu0 %1338
    %1340 = vrot.lane.b32.xlu0 %v1274, 127
    %v1341 = vpop.permute.xlu0 %1340
    %1342 = vrot.lane.b32.xlu0 %v1275, 127
    %v1343 = vpop.permute.xlu0 %1342
    %1344 = vrot.lane.b32.xlu0 %v1276, 127
    %v1345 = vpop.permute.xlu0 %1344
    %1346 = vrot.lane.b32.xlu0 %v1277, 127
    %v1347 = vpop.permute.xlu0 %1346
    %1348 = vrot.lane.b32.xlu0 %v1278, 127
    %v1349 = vpop.permute.xlu0 %1348
    %1350 = vrot.lane.b32.xlu0 %v1279, 127
    %v1351 = vpop.permute.xlu0 %1350
    %1352 = vrot.lane.b32.xlu0 %v1280, 127
    %v1353 = vpop.permute.xlu0 %1352
    %1354 = vrot.lane.b32.xlu0 %v1281, 127
    %v1355 = vpop.permute.xlu0 %1354
    %1356 = vrot.lane.b32.xlu0 %v1282, 127
    %v1357 = vpop.permute.xlu0 %1356
    %1358 = vrot.lane.b32.xlu0 %v1283, 127
    %v1359 = vpop.permute.xlu0 %1358
    %1360 = vrot.lane.b32.xlu0 %v1284, 127
    %v1361 = vpop.permute.xlu0 %1360
    %1362 = vrot.lane.b32.xlu0 %v1285, 127
    %v1363 = vpop.permute.xlu0 %1362
    %1364 = vrot.lane.b32.xlu0 %v1286, 127
    %v1365 = vpop.permute.xlu0 %1364
    %1366 = vrot.lane.b32.xlu0 %v1287, 127
    %v1367 = vpop.permute.xlu0 %1366
    %1368 = vrot.lane.b32.xlu0 %v1288, 127
    %v1369 = vpop.permute.xlu0 %1368
    %1370 = vrot.lane.b32.xlu0 %v1289, 127
    %v1371 = vpop.permute.xlu0 %1370
    %1372 = vrot.lane.b32.xlu0 %v1290, 127
    %v1373 = vpop.permute.xlu0 %1372
    %1374 = vrot.lane.b32.xlu0 %v1291, 127
    %v1375 = vpop.permute.xlu0 %1374
    %v1376 = vsel %vm121, %v1321, %v1323
    %v1377 = vsel %vm121, %v1323, %v1325
    %v1378 = vsel %vm121, %v1325, %v1327
    %v1379 = vsel %vm121, %v1327, %v1329
    %v1380 = vsel %vm121, %v1329, %v1331
    %v1381 = vsel %vm121, %v1331, %v1333
    %v1382 = vsel %vm121, %v1335, %v1337
    %v1383 = vsel %vm121, %v1337, %v1339
    %v1384 = vsel %vm121, %v1339, %v1341
    %v1385 = vsel %vm121, %v1341, %v1343
    %v1386 = vsel %vm121, %v1343, %v1345
    %v1387 = vsel %vm121, %v1345, %v1347
    %v1388 = vsel %vm121, %v1349, %v1351
    %v1389 = vsel %vm121, %v1351, %v1353
    %v1390 = vsel %vm121, %v1353, %v1355
    %v1391 = vsel %vm121, %v1355, %v1357
    %v1392 = vsel %vm121, %v1357, %v1359
    %v1393 = vsel %vm121, %v1359, %v1361
    %v1394 = vsel %vm121, %v1363, %v1365
    %v1395 = vsel %vm121, %v1365, %v1367
    %v1396 = vsel %vm121, %v1367, %v1369
    %v1397 = vsel %vm121, %v1369, %v1371
    %v1398 = vsel %vm121, %v1371, %v1373
    %v1399 = vsel %vm121, %v1373, %v1375
    %v1428 = vsel %vm121, %v1333, 0.0
    %v1429 = vsel %vm121, %v1347, 0.0
    %v1430 = vsel %vm121, %v1361, 0.0
    %v1431 = vsel %vm121, %v1375, 0.0
    %1432 = vrot.lane.b32.xlu0 %v1264, 126
    %v1433 = vpop.permute.xlu0 %1432
    %1434 = vrot.lane.b32.xlu0 %v1265, 126
    %v1435 = vpop.permute.xlu0 %1434
    %1436 = vrot.lane.b32.xlu0 %v1266, 126
    %v1437 = vpop.permute.xlu0 %1436
    %1438 = vrot.lane.b32.xlu0 %v1267, 126
    %v1439 = vpop.permute.xlu0 %1438
    %1440 = vrot.lane.b32.xlu0 %v1268, 126
    %v1441 = vpop.permute.xlu0 %1440
    %1442 = vrot.lane.b32.xlu0 %v1269, 126
    %v1443 = vpop.permute.xlu0 %1442
    %1444 = vrot.lane.b32.xlu0 %v1270, 126
    %v1445 = vpop.permute.xlu0 %1444
    %1446 = vrot.lane.b32.xlu0 %v1271, 126
    %v1447 = vpop.permute.xlu0 %1446
    %1448 = vrot.lane.b32.xlu0 %v1272, 126
    %v1449 = vpop.permute.xlu0 %1448
    %1450 = vrot.lane.b32.xlu0 %v1273, 126
    %v1451 = vpop.permute.xlu0 %1450
    %1452 = vrot.lane.b32.xlu0 %v1274, 126
    %v1453 = vpop.permute.xlu0 %1452
    %1454 = vrot.lane.b32.xlu0 %v1275, 126
    %v1455 = vpop.permute.xlu0 %1454
    %1456 = vrot.lane.b32.xlu0 %v1276, 126
    %v1457 = vpop.permute.xlu0 %1456
    %1458 = vrot.lane.b32.xlu0 %v1277, 126
    %v1459 = vpop.permute.xlu0 %1458
    %1460 = vrot.lane.b32.xlu0 %v1278, 126
    %v1461 = vpop.permute.xlu0 %1460
    %1462 = vrot.lane.b32.xlu0 %v1279, 126
    %v1463 = vpop.permute.xlu0 %1462
    %1464 = vrot.lane.b32.xlu0 %v1280, 126
    %v1465 = vpop.permute.xlu0 %1464
    %1466 = vrot.lane.b32.xlu0 %v1281, 126
    %v1467 = vpop.permute.xlu0 %1466
    %1468 = vrot.lane.b32.xlu0 %v1282, 126
    %v1469 = vpop.permute.xlu0 %1468
    %1470 = vrot.lane.b32.xlu0 %v1283, 126
    %v1471 = vpop.permute.xlu0 %1470
    %1472 = vrot.lane.b32.xlu0 %v1284, 126
    %v1473 = vpop.permute.xlu0 %1472
    %1474 = vrot.lane.b32.xlu0 %v1285, 126
    %v1475 = vpop.permute.xlu0 %1474
    %1476 = vrot.lane.b32.xlu0 %v1286, 126
    %v1477 = vpop.permute.xlu0 %1476
    %1478 = vrot.lane.b32.xlu0 %v1287, 126
    %v1479 = vpop.permute.xlu0 %1478
    %1480 = vrot.lane.b32.xlu0 %v1288, 126
    %v1481 = vpop.permute.xlu0 %1480
    %1482 = vrot.lane.b32.xlu0 %v1289, 126
    %v1483 = vpop.permute.xlu0 %1482
    %1484 = vrot.lane.b32.xlu0 %v1290, 126
    %v1485 = vpop.permute.xlu0 %1484
    %1486 = vrot.lane.b32.xlu0 %v1291, 126
    %v1487 = vpop.permute.xlu0 %1486
    %v1488 = vsel %vm150, %v1433, %v1435
    %v1489 = vsel %vm150, %v1435, %v1437
    %v1490 = vsel %vm150, %v1437, %v1439
    %v1491 = vsel %vm150, %v1439, %v1441
    %v1492 = vsel %vm150, %v1441, %v1443
    %v1493 = vsel %vm150, %v1443, %v1445
    %v1494 = vsel %vm150, %v1447, %v1449
    %v1495 = vsel %vm150, %v1449, %v1451
    %v1496 = vsel %vm150, %v1451, %v1453
    %v1497 = vsel %vm150, %v1453, %v1455
    %v1498 = vsel %vm150, %v1455, %v1457
    %v1499 = vsel %vm150, %v1457, %v1459
    %v1500 = vsel %vm150, %v1461, %v1463
    %v1501 = vsel %vm150, %v1463, %v1465
    %v1502 = vsel %vm150, %v1465, %v1467
    %v1503 = vsel %vm150, %v1467, %v1469
    %v1504 = vsel %vm150, %v1469, %v1471
    %v1505 = vsel %vm150, %v1471, %v1473
    %v1506 = vsel %vm150, %v1475, %v1477
    %v1507 = vsel %vm150, %v1477, %v1479
    %v1508 = vsel %vm150, %v1479, %v1481
    %v1509 = vsel %vm150, %v1481, %v1483
    %v1510 = vsel %vm150, %v1483, %v1485
    %v1511 = vsel %vm150, %v1485, %v1487
    %v1540 = vsel %vm150, %v1445, 0.0
    %v1541 = vsel %vm150, %v1459, 0.0
    %v1542 = vsel %vm150, %v1473, 0.0
    %v1543 = vsel %vm150, %v1487, 0.0
    %1544 = vrot.lane.b32.xlu0 %v1264, 125
    %v1545 = vpop.permute.xlu0 %1544
    %1546 = vrot.lane.b32.xlu0 %v1265, 125
    %v1547 = vpop.permute.xlu0 %1546
    %1548 = vrot.lane.b32.xlu0 %v1266, 125
    %v1549 = vpop.permute.xlu0 %1548
    %1550 = vrot.lane.b32.xlu0 %v1267, 125
    %v1551 = vpop.permute.xlu0 %1550
    %1552 = vrot.lane.b32.xlu0 %v1268, 125
    %v1553 = vpop.permute.xlu0 %1552
    %1554 = vrot.lane.b32.xlu0 %v1269, 125
    %v1555 = vpop.permute.xlu0 %1554
    %1556 = vrot.lane.b32.xlu0 %v1270, 125
    %v1557 = vpop.permute.xlu0 %1556
    %1558 = vrot.lane.b32.xlu0 %v1271, 125
    %v1559 = vpop.permute.xlu0 %1558
    %1560 = vrot.lane.b32.xlu0 %v1272, 125
    %v1561 = vpop.permute.xlu0 %1560
    %1562 = vrot.lane.b32.xlu0 %v1273, 125
    %v1563 = vpop.permute.xlu0 %1562
    %1564 = vrot.lane.b32.xlu0 %v1274, 125
    %v1565 = vpop.permute.xlu0 %1564
    %1566 = vrot.lane.b32.xlu0 %v1275, 125
    %v1567 = vpop.permute.xlu0 %1566
    %1568 = vrot.lane.b32.xlu0 %v1276, 125
    %v1569 = vpop.permute.xlu0 %1568
    %1570 = vrot.lane.b32.xlu0 %v1277, 125
    %v1571 = vpop.permute.xlu0 %1570
    %1572 = vrot.lane.b32.xlu0 %v1278, 125
    %v1573 = vpop.permute.xlu0 %1572
    %1574 = vrot.lane.b32.xlu0 %v1279, 125
    %v1575 = vpop.permute.xlu0 %1574
    %1576 = vrot.lane.b32.xlu0 %v1280, 125
    %v1577 = vpop.permute.xlu0 %1576
    %1578 = vrot.lane.b32.xlu0 %v1281, 125
    %v1579 = vpop.permute.xlu0 %1578
    %1580 = vrot.lane.b32.xlu0 %v1282, 125
    %v1581 = vpop.permute.xlu0 %1580
    %1582 = vrot.lane.b32.xlu0 %v1283, 125
    %v1583 = vpop.permute.xlu0 %1582
    %1584 = vrot.lane.b32.xlu0 %v1284, 125
    %v1585 = vpop.permute.xlu0 %1584
    %1586 = vrot.lane.b32.xlu0 %v1285, 125
    %v1587 = vpop.permute.xlu0 %1586
    %1588 = vrot.lane.b32.xlu0 %v1286, 125
    %v1589 = vpop.permute.xlu0 %1588
    %1590 = vrot.lane.b32.xlu0 %v1287, 125
    %v1591 = vpop.permute.xlu0 %1590
    %1592 = vrot.lane.b32.xlu0 %v1288, 125
    %v1593 = vpop.permute.xlu0 %1592
    %1594 = vrot.lane.b32.xlu0 %v1289, 125
    %v1595 = vpop.permute.xlu0 %1594
    %1596 = vrot.lane.b32.xlu0 %v1290, 125
    %v1597 = vpop.permute.xlu0 %1596
    %1598 = vrot.lane.b32.xlu0 %v1291, 125
    %v1599 = vpop.permute.xlu0 %1598
    %v1600 = vsel %vm179, %v1545, %v1547
    %v1601 = vsel %vm179, %v1547, %v1549
    %v1602 = vsel %vm179, %v1549, %v1551
    %v1603 = vsel %vm179, %v1551, %v1553
    %v1604 = vsel %vm179, %v1553, %v1555
    %v1605 = vsel %vm179, %v1555, %v1557
    %v1606 = vsel %vm179, %v1559, %v1561
    %v1607 = vsel %vm179, %v1561, %v1563
    %v1608 = vsel %vm179, %v1563, %v1565
    %v1609 = vsel %vm179, %v1565, %v1567
    %v1610 = vsel %vm179, %v1567, %v1569
    %v1611 = vsel %vm179, %v1569, %v1571
    %v1612 = vsel %vm179, %v1573, %v1575
    %v1613 = vsel %vm179, %v1575, %v1577
    %v1614 = vsel %vm179, %v1577, %v1579
    %v1615 = vsel %vm179, %v1579, %v1581
    %v1616 = vsel %vm179, %v1581, %v1583
    %v1617 = vsel %vm179, %v1583, %v1585
    %v1618 = vsel %vm179, %v1587, %v1589
    %v1619 = vsel %vm179, %v1589, %v1591
    %v1620 = vsel %vm179, %v1591, %v1593
    %v1621 = vsel %vm179, %v1593, %v1595
    %v1622 = vsel %vm179, %v1595, %v1597
    %v1623 = vsel %vm179, %v1597, %v1599
    %v1652 = vsel %vm179, %v1557, 0.0
    %v1653 = vsel %vm179, %v1571, 0.0
    %v1654 = vsel %vm179, %v1585, 0.0
    %v1655 = vsel %vm179, %v1599, 0.0
    %1656 = vrot.lane.b32.xlu0 %v1264, 124
    %v1657 = vpop.permute.xlu0 %1656
    %1658 = vrot.lane.b32.xlu0 %v1265, 124
    %v1659 = vpop.permute.xlu0 %1658
    %1660 = vrot.lane.b32.xlu0 %v1266, 124
    %v1661 = vpop.permute.xlu0 %1660
    %1662 = vrot.lane.b32.xlu0 %v1267, 124
    %v1663 = vpop.permute.xlu0 %1662
    %1664 = vrot.lane.b32.xlu0 %v1268, 124
    %v1665 = vpop.permute.xlu0 %1664
    %1666 = vrot.lane.b32.xlu0 %v1269, 124
    %v1667 = vpop.permute.xlu0 %1666
    %1668 = vrot.lane.b32.xlu0 %v1270, 124
    %v1669 = vpop.permute.xlu0 %1668
    %1670 = vrot.lane.b32.xlu0 %v1271, 124
    %v1671 = vpop.permute.xlu0 %1670
    %1672 = vrot.lane.b32.xlu0 %v1272, 124
    %v1673 = vpop.permute.xlu0 %1672
    %1674 = vrot.lane.b32.xlu0 %v1273, 124
    %v1675 = vpop.permute.xlu0 %1674
    %1676 = vrot.lane.b32.xlu0 %v1274, 124
    %v1677 = vpop.permute.xlu0 %1676
    %1678 = vrot.lane.b32.xlu0 %v1275, 124
    %v1679 = vpop.permute.xlu0 %1678
    %1680 = vrot.lane.b32.xlu0 %v1276, 124
    %v1681 = vpop.permute.xlu0 %1680
    %1682 = vrot.lane.b32.xlu0 %v1277, 124
    %v1683 = vpop.permute.xlu0 %1682
    %1684 = vrot.lane.b32.xlu0 %v1278, 124
    %v1685 = vpop.permute.xlu0 %1684
    %1686 = vrot.lane.b32.xlu0 %v1279, 124
    %v1687 = vpop.permute.xlu0 %1686
    %1688 = vrot.lane.b32.xlu0 %v1280, 124
    %v1689 = vpop.permute.xlu0 %1688
    %1690 = vrot.lane.b32.xlu0 %v1281, 124
    %v1691 = vpop.permute.xlu0 %1690
    %1692 = vrot.lane.b32.xlu0 %v1282, 124
    %v1693 = vpop.permute.xlu0 %1692
    %1694 = vrot.lane.b32.xlu0 %v1283, 124
    %v1695 = vpop.permute.xlu0 %1694
    %1696 = vrot.lane.b32.xlu0 %v1284, 124
    %v1697 = vpop.permute.xlu0 %1696
    %1698 = vrot.lane.b32.xlu0 %v1285, 124
    %v1699 = vpop.permute.xlu0 %1698
    %1700 = vrot.lane.b32.xlu0 %v1286, 124
    %v1701 = vpop.permute.xlu0 %1700
    %1702 = vrot.lane.b32.xlu0 %v1287, 124
    %v1703 = vpop.permute.xlu0 %1702
    %1704 = vrot.lane.b32.xlu0 %v1288, 124
    %v1705 = vpop.permute.xlu0 %1704
    %1706 = vrot.lane.b32.xlu0 %v1289, 124
    %v1707 = vpop.permute.xlu0 %1706
    %1708 = vrot.lane.b32.xlu0 %v1290, 124
    %v1709 = vpop.permute.xlu0 %1708
    %1710 = vrot.lane.b32.xlu0 %v1291, 124
    %v1711 = vpop.permute.xlu0 %1710
    %v1712 = vsel %vm208, %v1657, %v1659
    %v1713 = vsel %vm208, %v1659, %v1661
    %v1714 = vsel %vm208, %v1661, %v1663
    %v1715 = vsel %vm208, %v1663, %v1665
    %v1716 = vsel %vm208, %v1665, %v1667
    %v1717 = vsel %vm208, %v1667, %v1669
    %v1718 = vsel %vm208, %v1671, %v1673
    %v1719 = vsel %vm208, %v1673, %v1675
    %v1720 = vsel %vm208, %v1675, %v1677
    %v1721 = vsel %vm208, %v1677, %v1679
    %v1722 = vsel %vm208, %v1679, %v1681
    %v1723 = vsel %vm208, %v1681, %v1683
    %v1724 = vsel %vm208, %v1685, %v1687
    %v1725 = vsel %vm208, %v1687, %v1689
    %v1726 = vsel %vm208, %v1689, %v1691
    %v1727 = vsel %vm208, %v1691, %v1693
    %v1728 = vsel %vm208, %v1693, %v1695
    %v1729 = vsel %vm208, %v1695, %v1697
    %v1730 = vsel %vm208, %v1699, %v1701
    %v1731 = vsel %vm208, %v1701, %v1703
    %v1732 = vsel %vm208, %v1703, %v1705
    %v1733 = vsel %vm208, %v1705, %v1707
    %v1734 = vsel %vm208, %v1707, %v1709
    %v1735 = vsel %vm208, %v1709, %v1711
    %v1764 = vsel %vm208, %v1669, 0.0
    %v1765 = vsel %vm208, %v1683, 0.0
    %v1766 = vsel %vm208, %v1697, 0.0
    %v1767 = vsel %vm208, %v1711, 0.0
    %1768 = vrot.lane.b32.xlu0 %v1264, 100
    %v1769 = vpop.permute.xlu0 %1768
    %1770 = vrot.lane.b32.xlu0 %v1265, 100
    %v1771 = vpop.permute.xlu0 %1770
    %1772 = vrot.lane.b32.xlu0 %v1266, 100
    %v1773 = vpop.permute.xlu0 %1772
    %1774 = vrot.lane.b32.xlu0 %v1267, 100
    %v1775 = vpop.permute.xlu0 %1774
    %1776 = vrot.lane.b32.xlu0 %v1268, 100
    %v1777 = vpop.permute.xlu0 %1776
    %1778 = vrot.lane.b32.xlu0 %v1269, 100
    %v1779 = vpop.permute.xlu0 %1778
    %1780 = vrot.lane.b32.xlu0 %v1270, 100
    %v1781 = vpop.permute.xlu0 %1780
    %1782 = vrot.lane.b32.xlu0 %v1271, 100
    %v1783 = vpop.permute.xlu0 %1782
    %1784 = vrot.lane.b32.xlu0 %v1272, 100
    %v1785 = vpop.permute.xlu0 %1784
    %1786 = vrot.lane.b32.xlu0 %v1273, 100
    %v1787 = vpop.permute.xlu0 %1786
    %1788 = vrot.lane.b32.xlu0 %v1274, 100
    %v1789 = vpop.permute.xlu0 %1788
    %1790 = vrot.lane.b32.xlu0 %v1275, 100
    %v1791 = vpop.permute.xlu0 %1790
    %1792 = vrot.lane.b32.xlu0 %v1276, 100
    %v1793 = vpop.permute.xlu0 %1792
    %1794 = vrot.lane.b32.xlu0 %v1277, 100
    %v1795 = vpop.permute.xlu0 %1794
    %1796 = vrot.lane.b32.xlu0 %v1278, 100
    %v1797 = vpop.permute.xlu0 %1796
    %1798 = vrot.lane.b32.xlu0 %v1279, 100
    %v1799 = vpop.permute.xlu0 %1798
    %1800 = vrot.lane.b32.xlu0 %v1280, 100
    %v1801 = vpop.permute.xlu0 %1800
    %1802 = vrot.lane.b32.xlu0 %v1281, 100
    %v1803 = vpop.permute.xlu0 %1802
    %1804 = vrot.lane.b32.xlu0 %v1282, 100
    %v1805 = vpop.permute.xlu0 %1804
    %1806 = vrot.lane.b32.xlu0 %v1283, 100
    %v1807 = vpop.permute.xlu0 %1806
    %1808 = vrot.lane.b32.xlu0 %v1284, 100
    %v1809 = vpop.permute.xlu0 %1808
    %1810 = vrot.lane.b32.xlu0 %v1285, 100
    %v1811 = vpop.permute.xlu0 %1810
    %1812 = vrot.lane.b32.xlu0 %v1286, 100
    %v1813 = vpop.permute.xlu0 %1812
    %1814 = vrot.lane.b32.xlu0 %v1287, 100
    %v1815 = vpop.permute.xlu0 %1814
    %1816 = vrot.lane.b32.xlu0 %v1288, 100
    %v1817 = vpop.permute.xlu0 %1816
    %1818 = vrot.lane.b32.xlu0 %v1289, 100
    %v1819 = vpop.permute.xlu0 %1818
    %1820 = vrot.lane.b32.xlu0 %v1290, 100
    %v1821 = vpop.permute.xlu0 %1820
    %1822 = vrot.lane.b32.xlu0 %v1291, 100
    %v1823 = vpop.permute.xlu0 %1822
    %v1824 = vsel %vm237, %v1769, %v1771
    %v1825 = vsel %vm237, %v1771, %v1773
    %v1826 = vsel %vm237, %v1773, %v1775
    %v1827 = vsel %vm237, %v1775, %v1777
    %v1828 = vsel %vm237, %v1777, %v1779
    %v1829 = vsel %vm237, %v1779, %v1781
    %v1830 = vsel %vm237, %v1783, %v1785
    %v1831 = vsel %vm237, %v1785, %v1787
    %v1832 = vsel %vm237, %v1787, %v1789
    %v1833 = vsel %vm237, %v1789, %v1791
    %v1834 = vsel %vm237, %v1791, %v1793
    %v1835 = vsel %vm237, %v1793, %v1795
    %v1836 = vsel %vm237, %v1797, %v1799
    %v1837 = vsel %vm237, %v1799, %v1801
    %v1838 = vsel %vm237, %v1801, %v1803
    %v1839 = vsel %vm237, %v1803, %v1805
    %v1840 = vsel %vm237, %v1805, %v1807
    %v1841 = vsel %vm237, %v1807, %v1809
    %v1842 = vsel %vm237, %v1811, %v1813
    %v1843 = vsel %vm237, %v1813, %v1815
    %v1844 = vsel %vm237, %v1815, %v1817
    %v1845 = vsel %vm237, %v1817, %v1819
    %v1846 = vsel %vm237, %v1819, %v1821
    %v1847 = vsel %vm237, %v1821, %v1823
    %v1876 = vsel %vm237, %v1781, 0.0
    %v1877 = vsel %vm237, %v1795, 0.0
    %v1878 = vsel %vm237, %v1809, 0.0
    %v1879 = vsel %vm237, %v1823, 0.0
    %1880 = vrot.lane.b32.xlu0 %v1264, 99
    %v1881 = vpop.permute.xlu0 %1880
    %1882 = vrot.lane.b32.xlu0 %v1265, 99
    %v1883 = vpop.permute.xlu0 %1882
    %1884 = vrot.lane.b32.xlu0 %v1266, 99
    %v1885 = vpop.permute.xlu0 %1884
    %1886 = vrot.lane.b32.xlu0 %v1267, 99
    %v1887 = vpop.permute.xlu0 %1886
    %1888 = vrot.lane.b32.xlu0 %v1268, 99
    %v1889 = vpop.permute.xlu0 %1888
    %1890 = vrot.lane.b32.xlu0 %v1269, 99
    %v1891 = vpop.permute.xlu0 %1890
    %1892 = vrot.lane.b32.xlu0 %v1270, 99
    %v1893 = vpop.permute.xlu0 %1892
    %1894 = vrot.lane.b32.xlu0 %v1271, 99
    %v1895 = vpop.permute.xlu0 %1894
    %1896 = vrot.lane.b32.xlu0 %v1272, 99
    %v1897 = vpop.permute.xlu0 %1896
    %1898 = vrot.lane.b32.xlu0 %v1273, 99
    %v1899 = vpop.permute.xlu0 %1898
    %1900 = vrot.lane.b32.xlu0 %v1274, 99
    %v1901 = vpop.permute.xlu0 %1900
    %1902 = vrot.lane.b32.xlu0 %v1275, 99
    %v1903 = vpop.permute.xlu0 %1902
    %1904 = vrot.lane.b32.xlu0 %v1276, 99
    %v1905 = vpop.permute.xlu0 %1904
    %1906 = vrot.lane.b32.xlu0 %v1277, 99
    %v1907 = vpop.permute.xlu0 %1906
    %1908 = vrot.lane.b32.xlu0 %v1278, 99
    %v1909 = vpop.permute.xlu0 %1908
    %1910 = vrot.lane.b32.xlu0 %v1279, 99
    %v1911 = vpop.permute.xlu0 %1910
    %1912 = vrot.lane.b32.xlu0 %v1280, 99
    %v1913 = vpop.permute.xlu0 %1912
    %1914 = vrot.lane.b32.xlu0 %v1281, 99
    %v1915 = vpop.permute.xlu0 %1914
    %1916 = vrot.lane.b32.xlu0 %v1282, 99
    %v1917 = vpop.permute.xlu0 %1916
    %1918 = vrot.lane.b32.xlu0 %v1283, 99
    %v1919 = vpop.permute.xlu0 %1918
    %1920 = vrot.lane.b32.xlu0 %v1284, 99
    %v1921 = vpop.permute.xlu0 %1920
    %1922 = vrot.lane.b32.xlu0 %v1285, 99
    %v1923 = vpop.permute.xlu0 %1922
    %1924 = vrot.lane.b32.xlu0 %v1286, 99
    %v1925 = vpop.permute.xlu0 %1924
    %1926 = vrot.lane.b32.xlu0 %v1287, 99
    %v1927 = vpop.permute.xlu0 %1926
    %1928 = vrot.lane.b32.xlu0 %v1288, 99
    %v1929 = vpop.permute.xlu0 %1928
    %1930 = vrot.lane.b32.xlu0 %v1289, 99
    %v1931 = vpop.permute.xlu0 %1930
    %1932 = vrot.lane.b32.xlu0 %v1290, 99
    %v1933 = vpop.permute.xlu0 %1932
    %1934 = vrot.lane.b32.xlu0 %v1291, 99
    %v1935 = vpop.permute.xlu0 %1934
    %v1936 = vsel %vm266, %v1881, %v1883
    %v1937 = vsel %vm266, %v1883, %v1885
    %v1938 = vsel %vm266, %v1885, %v1887
    %v1939 = vsel %vm266, %v1887, %v1889
    %v1940 = vsel %vm266, %v1889, %v1891
    %v1941 = vsel %vm266, %v1891, %v1893
    %v1942 = vsel %vm266, %v1895, %v1897
    %v1943 = vsel %vm266, %v1897, %v1899
    %v1944 = vsel %vm266, %v1899, %v1901
    %v1945 = vsel %vm266, %v1901, %v1903
    %v1946 = vsel %vm266, %v1903, %v1905
    %v1947 = vsel %vm266, %v1905, %v1907
    %v1948 = vsel %vm266, %v1909, %v1911
    %v1949 = vsel %vm266, %v1911, %v1913
    %v1950 = vsel %vm266, %v1913, %v1915
    %v1951 = vsel %vm266, %v1915, %v1917
    %v1952 = vsel %vm266, %v1917, %v1919
    %v1953 = vsel %vm266, %v1919, %v1921
    %v1954 = vsel %vm266, %v1923, %v1925
    %v1955 = vsel %vm266, %v1925, %v1927
    %v1956 = vsel %vm266, %v1927, %v1929
    %v1957 = vsel %vm266, %v1929, %v1931
    %v1958 = vsel %vm266, %v1931, %v1933
    %v1959 = vsel %vm266, %v1933, %v1935
    %v1988 = vsel %vm266, %v1893, 0.0
    %v1989 = vsel %vm266, %v1907, 0.0
    %v1990 = vsel %vm266, %v1921, 0.0
    %v1991 = vsel %vm266, %v1935, 0.0
    %1992 = vrot.lane.b32.xlu0 %v1264, 98
    %v1993 = vpop.permute.xlu0 %1992
    %1994 = vrot.lane.b32.xlu0 %v1265, 98
    %v1995 = vpop.permute.xlu0 %1994
    %1996 = vrot.lane.b32.xlu0 %v1266, 98
    %v1997 = vpop.permute.xlu0 %1996
    %1998 = vrot.lane.b32.xlu0 %v1267, 98
    %v1999 = vpop.permute.xlu0 %1998
    %2000 = vrot.lane.b32.xlu0 %v1268, 98
    %v2001 = vpop.permute.xlu0 %2000
    %2002 = vrot.lane.b32.xlu0 %v1269, 98
    %v2003 = vpop.permute.xlu0 %2002
    %2004 = vrot.lane.b32.xlu0 %v1270, 98
    %v2005 = vpop.permute.xlu0 %2004
    %2006 = vrot.lane.b32.xlu0 %v1271, 98
    %v2007 = vpop.permute.xlu0 %2006
    %2008 = vrot.lane.b32.xlu0 %v1272, 98
    %v2009 = vpop.permute.xlu0 %2008
    %2010 = vrot.lane.b32.xlu0 %v1273, 98
    %v2011 = vpop.permute.xlu0 %2010
    %2012 = vrot.lane.b32.xlu0 %v1274, 98
    %v2013 = vpop.permute.xlu0 %2012
    %2014 = vrot.lane.b32.xlu0 %v1275, 98
    %v2015 = vpop.permute.xlu0 %2014
    %2016 = vrot.lane.b32.xlu0 %v1276, 98
    %v2017 = vpop.permute.xlu0 %2016
    %2018 = vrot.lane.b32.xlu0 %v1277, 98
    %v2019 = vpop.permute.xlu0 %2018
    %2020 = vrot.lane.b32.xlu0 %v1278, 98
    %v2021 = vpop.permute.xlu0 %2020
    %2022 = vrot.lane.b32.xlu0 %v1279, 98
    %v2023 = vpop.permute.xlu0 %2022
    %2024 = vrot.lane.b32.xlu0 %v1280, 98
    %v2025 = vpop.permute.xlu0 %2024
    %2026 = vrot.lane.b32.xlu0 %v1281, 98
    %v2027 = vpop.permute.xlu0 %2026
    %2028 = vrot.lane.b32.xlu0 %v1282, 98
    %v2029 = vpop.permute.xlu0 %2028
    %2030 = vrot.lane.b32.xlu0 %v1283, 98
    %v2031 = vpop.permute.xlu0 %2030
    %2032 = vrot.lane.b32.xlu0 %v1284, 98
    %v2033 = vpop.permute.xlu0 %2032
    %2034 = vrot.lane.b32.xlu0 %v1285, 98
    %v2035 = vpop.permute.xlu0 %2034
    %2036 = vrot.lane.b32.xlu0 %v1286, 98
    %v2037 = vpop.permute.xlu0 %2036
    %2038 = vrot.lane.b32.xlu0 %v1287, 98
    %v2039 = vpop.permute.xlu0 %2038
    %2040 = vrot.lane.b32.xlu0 %v1288, 98
    %v2041 = vpop.permute.xlu0 %2040
    %2042 = vrot.lane.b32.xlu0 %v1289, 98
    %v2043 = vpop.permute.xlu0 %2042
    %2044 = vrot.lane.b32.xlu0 %v1290, 98
    %v2045 = vpop.permute.xlu0 %2044
    %2046 = vrot.lane.b32.xlu0 %v1291, 98
    %v2047 = vpop.permute.xlu0 %2046
    %v2048 = vsel %vm295, %v1993, %v1995
    %v2049 = vsel %vm295, %v1995, %v1997
    %v2050 = vsel %vm295, %v1997, %v1999
    %v2051 = vsel %vm295, %v1999, %v2001
    %v2052 = vsel %vm295, %v2001, %v2003
    %v2053 = vsel %vm295, %v2003, %v2005
    %v2054 = vsel %vm295, %v2007, %v2009
    %v2055 = vsel %vm295, %v2009, %v2011
    %v2056 = vsel %vm295, %v2011, %v2013
    %v2057 = vsel %vm295, %v2013, %v2015
    %v2058 = vsel %vm295, %v2015, %v2017
    %v2059 = vsel %vm295, %v2017, %v2019
    %v2060 = vsel %vm295, %v2021, %v2023
    %v2061 = vsel %vm295, %v2023, %v2025
    %v2062 = vsel %vm295, %v2025, %v2027
    %v2063 = vsel %vm295, %v2027, %v2029
    %v2064 = vsel %vm295, %v2029, %v2031
    %v2065 = vsel %vm295, %v2031, %v2033
    %v2066 = vsel %vm295, %v2035, %v2037
    %v2067 = vsel %vm295, %v2037, %v2039
    %v2068 = vsel %vm295, %v2039, %v2041
    %v2069 = vsel %vm295, %v2041, %v2043
    %v2070 = vsel %vm295, %v2043, %v2045
    %v2071 = vsel %vm295, %v2045, %v2047
    %v2100 = vsel %vm295, %v2005, 0.0
    %v2101 = vsel %vm295, %v2019, 0.0
    %v2102 = vsel %vm295, %v2033, 0.0
    %v2103 = vsel %vm295, %v2047, 0.0
    %2104 = vrot.lane.b32.xlu0 %v1264, 97
    %v2105 = vpop.permute.xlu0 %2104
    %2106 = vrot.lane.b32.xlu0 %v1265, 97
    %v2107 = vpop.permute.xlu0 %2106
    %2108 = vrot.lane.b32.xlu0 %v1266, 97
    %v2109 = vpop.permute.xlu0 %2108
    %2110 = vrot.lane.b32.xlu0 %v1267, 97
    %v2111 = vpop.permute.xlu0 %2110
    %2112 = vrot.lane.b32.xlu0 %v1268, 97
    %v2113 = vpop.permute.xlu0 %2112
    %2114 = vrot.lane.b32.xlu0 %v1269, 97
    %v2115 = vpop.permute.xlu0 %2114
    %2116 = vrot.lane.b32.xlu0 %v1270, 97
    %v2117 = vpop.permute.xlu0 %2116
    %2118 = vrot.lane.b32.xlu0 %v1271, 97
    %v2119 = vpop.permute.xlu0 %2118
    %2120 = vrot.lane.b32.xlu0 %v1272, 97
    %v2121 = vpop.permute.xlu0 %2120
    %2122 = vrot.lane.b32.xlu0 %v1273, 97
    %v2123 = vpop.permute.xlu0 %2122
    %2124 = vrot.lane.b32.xlu0 %v1274, 97
    %v2125 = vpop.permute.xlu0 %2124
    %2126 = vrot.lane.b32.xlu0 %v1275, 97
    %v2127 = vpop.permute.xlu0 %2126
    %2128 = vrot.lane.b32.xlu0 %v1276, 97
    %v2129 = vpop.permute.xlu0 %2128
    %2130 = vrot.lane.b32.xlu0 %v1277, 97
    %v2131 = vpop.permute.xlu0 %2130
    %2132 = vrot.lane.b32.xlu0 %v1278, 97
    %v2133 = vpop.permute.xlu0 %2132
    %2134 = vrot.lane.b32.xlu0 %v1279, 97
    %v2135 = vpop.permute.xlu0 %2134
    %2136 = vrot.lane.b32.xlu0 %v1280, 97
    %v2137 = vpop.permute.xlu0 %2136
    %2138 = vrot.lane.b32.xlu0 %v1281, 97
    %v2139 = vpop.permute.xlu0 %2138
    %2140 = vrot.lane.b32.xlu0 %v1282, 97
    %v2141 = vpop.permute.xlu0 %2140
    %2142 = vrot.lane.b32.xlu0 %v1283, 97
    %v2143 = vpop.permute.xlu0 %2142
    %2144 = vrot.lane.b32.xlu0 %v1284, 97
    %v2145 = vpop.permute.xlu0 %2144
    %2146 = vrot.lane.b32.xlu0 %v1285, 97
    %v2147 = vpop.permute.xlu0 %2146
    %2148 = vrot.lane.b32.xlu0 %v1286, 97
    %v2149 = vpop.permute.xlu0 %2148
    %2150 = vrot.lane.b32.xlu0 %v1287, 97
    %v2151 = vpop.permute.xlu0 %2150
    %2152 = vrot.lane.b32.xlu0 %v1288, 97
    %v2153 = vpop.permute.xlu0 %2152
    %2154 = vrot.lane.b32.xlu0 %v1289, 97
    %v2155 = vpop.permute.xlu0 %2154
    %2156 = vrot.lane.b32.xlu0 %v1290, 97
    %v2157 = vpop.permute.xlu0 %2156
    %2158 = vrot.lane.b32.xlu0 %v1291, 97
    %v2159 = vpop.permute.xlu0 %2158
    %v2160 = vsel %vm324, %v2105, %v2107
    %v2161 = vsel %vm324, %v2107, %v2109
    %v2162 = vsel %vm324, %v2109, %v2111
    %v2163 = vsel %vm324, %v2111, %v2113
    %v2164 = vsel %vm324, %v2113, %v2115
    %v2165 = vsel %vm324, %v2115, %v2117
    %v2166 = vsel %vm324, %v2119, %v2121
    %v2167 = vsel %vm324, %v2121, %v2123
    %v2168 = vsel %vm324, %v2123, %v2125
    %v2169 = vsel %vm324, %v2125, %v2127
    %v2170 = vsel %vm324, %v2127, %v2129
    %v2171 = vsel %vm324, %v2129, %v2131
    %v2172 = vsel %vm324, %v2133, %v2135
    %v2173 = vsel %vm324, %v2135, %v2137
    %v2174 = vsel %vm324, %v2137, %v2139
    %v2175 = vsel %vm324, %v2139, %v2141
    %v2176 = vsel %vm324, %v2141, %v2143
    %v2177 = vsel %vm324, %v2143, %v2145
    %v2178 = vsel %vm324, %v2147, %v2149
    %v2179 = vsel %vm324, %v2149, %v2151
    %v2180 = vsel %vm324, %v2151, %v2153
    %v2181 = vsel %vm324, %v2153, %v2155
    %v2182 = vsel %vm324, %v2155, %v2157
    %v2183 = vsel %vm324, %v2157, %v2159
    %v2212 = vsel %vm324, %v2117, 0.0
    %v2213 = vsel %vm324, %v2131, 0.0
    %v2214 = vsel %vm324, %v2145, 0.0
    %v2215 = vsel %vm324, %v2159, 0.0
    %2216 = vrot.lane.b32.xlu0 %v1264, 96
    %v2217 = vpop.permute.xlu0 %2216
    %2218 = vrot.lane.b32.xlu0 %v1265, 96
    %v2219 = vpop.permute.xlu0 %2218
    %2220 = vrot.lane.b32.xlu0 %v1266, 96
    %v2221 = vpop.permute.xlu0 %2220
    %2222 = vrot.lane.b32.xlu0 %v1267, 96
    %v2223 = vpop.permute.xlu0 %2222
    %2224 = vrot.lane.b32.xlu0 %v1268, 96
    %v2225 = vpop.permute.xlu0 %2224
    %2226 = vrot.lane.b32.xlu0 %v1269, 96
    %v2227 = vpop.permute.xlu0 %2226
    %2228 = vrot.lane.b32.xlu0 %v1270, 96
    %v2229 = vpop.permute.xlu0 %2228
    %2230 = vrot.lane.b32.xlu0 %v1271, 96
    %v2231 = vpop.permute.xlu0 %2230
    %2232 = vrot.lane.b32.xlu0 %v1272, 96
    %v2233 = vpop.permute.xlu0 %2232
    %2234 = vrot.lane.b32.xlu0 %v1273, 96
    %v2235 = vpop.permute.xlu0 %2234
    %2236 = vrot.lane.b32.xlu0 %v1274, 96
    %v2237 = vpop.permute.xlu0 %2236
    %2238 = vrot.lane.b32.xlu0 %v1275, 96
    %v2239 = vpop.permute.xlu0 %2238
    %2240 = vrot.lane.b32.xlu0 %v1276, 96
    %v2241 = vpop.permute.xlu0 %2240
    %2242 = vrot.lane.b32.xlu0 %v1277, 96
    %v2243 = vpop.permute.xlu0 %2242
    %2244 = vrot.lane.b32.xlu0 %v1278, 96
    %v2245 = vpop.permute.xlu0 %2244
    %2246 = vrot.lane.b32.xlu0 %v1279, 96
    %v2247 = vpop.permute.xlu0 %2246
    %2248 = vrot.lane.b32.xlu0 %v1280, 96
    %v2249 = vpop.permute.xlu0 %2248
    %2250 = vrot.lane.b32.xlu0 %v1281, 96
    %v2251 = vpop.permute.xlu0 %2250
    %2252 = vrot.lane.b32.xlu0 %v1282, 96
    %v2253 = vpop.permute.xlu0 %2252
    %2254 = vrot.lane.b32.xlu0 %v1283, 96
    %v2255 = vpop.permute.xlu0 %2254
    %2256 = vrot.lane.b32.xlu0 %v1284, 96
    %v2257 = vpop.permute.xlu0 %2256
    %2258 = vrot.lane.b32.xlu0 %v1285, 96
    %v2259 = vpop.permute.xlu0 %2258
    %2260 = vrot.lane.b32.xlu0 %v1286, 96
    %v2261 = vpop.permute.xlu0 %2260
    %2262 = vrot.lane.b32.xlu0 %v1287, 96
    %v2263 = vpop.permute.xlu0 %2262
    %2264 = vrot.lane.b32.xlu0 %v1288, 96
    %v2265 = vpop.permute.xlu0 %2264
    %2266 = vrot.lane.b32.xlu0 %v1289, 96
    %v2267 = vpop.permute.xlu0 %2266
    %2268 = vrot.lane.b32.xlu0 %v1290, 96
    %v2269 = vpop.permute.xlu0 %2268
    %2270 = vrot.lane.b32.xlu0 %v1291, 96
    %v2271 = vpop.permute.xlu0 %2270
    %v2272 = vsel %vm353, %v2217, %v2219
    %v2273 = vsel %vm353, %v2219, %v2221
    %v2274 = vsel %vm353, %v2221, %v2223
    %v2275 = vsel %vm353, %v2223, %v2225
    %v2276 = vsel %vm353, %v2225, %v2227
    %v2277 = vsel %vm353, %v2227, %v2229
    %v2278 = vsel %vm353, %v2231, %v2233
    %v2279 = vsel %vm353, %v2233, %v2235
    %v2280 = vsel %vm353, %v2235, %v2237
    %v2281 = vsel %vm353, %v2237, %v2239
    %v2282 = vsel %vm353, %v2239, %v2241
    %v2283 = vsel %vm353, %v2241, %v2243
    %v2284 = vsel %vm353, %v2245, %v2247
    %v2285 = vsel %vm353, %v2247, %v2249
    %v2286 = vsel %vm353, %v2249, %v2251
    %v2287 = vsel %vm353, %v2251, %v2253
    %v2288 = vsel %vm353, %v2253, %v2255
    %v2289 = vsel %vm353, %v2255, %v2257
    %v2290 = vsel %vm353, %v2259, %v2261
    %v2291 = vsel %vm353, %v2261, %v2263
    %v2292 = vsel %vm353, %v2263, %v2265
    %v2293 = vsel %vm353, %v2265, %v2267
    %v2294 = vsel %vm353, %v2267, %v2269
    %v2295 = vsel %vm353, %v2269, %v2271
    %v2324 = vsel %vm353, %v2229, 0.0
    %v2325 = vsel %vm353, %v2243, 0.0
    %v2326 = vsel %vm353, %v2257, 0.0
    %v2327 = vsel %vm353, %v2271, 0.0
    %2328 = vrot.lane.b32.xlu0 %v1264, 72
    %v2329 = vpop.permute.xlu0 %2328
    %2330 = vrot.lane.b32.xlu0 %v1265, 72
    %v2331 = vpop.permute.xlu0 %2330
    %2332 = vrot.lane.b32.xlu0 %v1266, 72
    %v2333 = vpop.permute.xlu0 %2332
    %2334 = vrot.lane.b32.xlu0 %v1267, 72
    %v2335 = vpop.permute.xlu0 %2334
    %2336 = vrot.lane.b32.xlu0 %v1268, 72
    %v2337 = vpop.permute.xlu0 %2336
    %2338 = vrot.lane.b32.xlu0 %v1269, 72
    %v2339 = vpop.permute.xlu0 %2338
    %2340 = vrot.lane.b32.xlu0 %v1270, 72
    %v2341 = vpop.permute.xlu0 %2340
    %2342 = vrot.lane.b32.xlu0 %v1271, 72
    %v2343 = vpop.permute.xlu0 %2342
    %2344 = vrot.lane.b32.xlu0 %v1272, 72
    %v2345 = vpop.permute.xlu0 %2344
    %2346 = vrot.lane.b32.xlu0 %v1273, 72
    %v2347 = vpop.permute.xlu0 %2346
    %2348 = vrot.lane.b32.xlu0 %v1274, 72
    %v2349 = vpop.permute.xlu0 %2348
    %2350 = vrot.lane.b32.xlu0 %v1275, 72
    %v2351 = vpop.permute.xlu0 %2350
    %2352 = vrot.lane.b32.xlu0 %v1276, 72
    %v2353 = vpop.permute.xlu0 %2352
    %2354 = vrot.lane.b32.xlu0 %v1277, 72
    %v2355 = vpop.permute.xlu0 %2354
    %2356 = vrot.lane.b32.xlu0 %v1278, 72
    %v2357 = vpop.permute.xlu0 %2356
    %2358 = vrot.lane.b32.xlu0 %v1279, 72
    %v2359 = vpop.permute.xlu0 %2358
    %2360 = vrot.lane.b32.xlu0 %v1280, 72
    %v2361 = vpop.permute.xlu0 %2360
    %2362 = vrot.lane.b32.xlu0 %v1281, 72
    %v2363 = vpop.permute.xlu0 %2362
    %2364 = vrot.lane.b32.xlu0 %v1282, 72
    %v2365 = vpop.permute.xlu0 %2364
    %2366 = vrot.lane.b32.xlu0 %v1283, 72
    %v2367 = vpop.permute.xlu0 %2366
    %2368 = vrot.lane.b32.xlu0 %v1284, 72
    %v2369 = vpop.permute.xlu0 %2368
    %2370 = vrot.lane.b32.xlu0 %v1285, 72
    %v2371 = vpop.permute.xlu0 %2370
    %2372 = vrot.lane.b32.xlu0 %v1286, 72
    %v2373 = vpop.permute.xlu0 %2372
    %2374 = vrot.lane.b32.xlu0 %v1287, 72
    %v2375 = vpop.permute.xlu0 %2374
    %2376 = vrot.lane.b32.xlu0 %v1288, 72
    %v2377 = vpop.permute.xlu0 %2376
    %2378 = vrot.lane.b32.xlu0 %v1289, 72
    %v2379 = vpop.permute.xlu0 %2378
    %2380 = vrot.lane.b32.xlu0 %v1290, 72
    %v2381 = vpop.permute.xlu0 %2380
    %2382 = vrot.lane.b32.xlu0 %v1291, 72
    %v2383 = vpop.permute.xlu0 %2382
    %v2384 = vsel %vm382, %v2329, %v2331
    %v2385 = vsel %vm382, %v2331, %v2333
    %v2386 = vsel %vm382, %v2333, %v2335
    %v2387 = vsel %vm382, %v2335, %v2337
    %v2388 = vsel %vm382, %v2337, %v2339
    %v2389 = vsel %vm382, %v2339, %v2341
    %v2390 = vsel %vm382, %v2343, %v2345
    %v2391 = vsel %vm382, %v2345, %v2347
    %v2392 = vsel %vm382, %v2347, %v2349
    %v2393 = vsel %vm382, %v2349, %v2351
    %v2394 = vsel %vm382, %v2351, %v2353
    %v2395 = vsel %vm382, %v2353, %v2355
    %v2396 = vsel %vm382, %v2357, %v2359
    %v2397 = vsel %vm382, %v2359, %v2361
    %v2398 = vsel %vm382, %v2361, %v2363
    %v2399 = vsel %vm382, %v2363, %v2365
    %v2400 = vsel %vm382, %v2365, %v2367
    %v2401 = vsel %vm382, %v2367, %v2369
    %v2402 = vsel %vm382, %v2371, %v2373
    %v2403 = vsel %vm382, %v2373, %v2375
    %v2404 = vsel %vm382, %v2375, %v2377
    %v2405 = vsel %vm382, %v2377, %v2379
    %v2406 = vsel %vm382, %v2379, %v2381
    %v2407 = vsel %vm382, %v2381, %v2383
    %v2436 = vsel %vm382, %v2341, 0.0
    %v2437 = vsel %vm382, %v2355, 0.0
    %v2438 = vsel %vm382, %v2369, 0.0
    %v2439 = vsel %vm382, %v2383, 0.0
    %2440 = vrot.lane.b32.xlu0 %v1264, 71
    %v2441 = vpop.permute.xlu0 %2440
    %2442 = vrot.lane.b32.xlu0 %v1265, 71
    %v2443 = vpop.permute.xlu0 %2442
    %2444 = vrot.lane.b32.xlu0 %v1266, 71
    %v2445 = vpop.permute.xlu0 %2444
    %2446 = vrot.lane.b32.xlu0 %v1267, 71
    %v2447 = vpop.permute.xlu0 %2446
    %2448 = vrot.lane.b32.xlu0 %v1268, 71
    %v2449 = vpop.permute.xlu0 %2448
    %2450 = vrot.lane.b32.xlu0 %v1269, 71
    %v2451 = vpop.permute.xlu0 %2450
    %2452 = vrot.lane.b32.xlu0 %v1270, 71
    %v2453 = vpop.permute.xlu0 %2452
    %2454 = vrot.lane.b32.xlu0 %v1271, 71
    %v2455 = vpop.permute.xlu0 %2454
    %2456 = vrot.lane.b32.xlu0 %v1272, 71
    %v2457 = vpop.permute.xlu0 %2456
    %2458 = vrot.lane.b32.xlu0 %v1273, 71
    %v2459 = vpop.permute.xlu0 %2458
    %2460 = vrot.lane.b32.xlu0 %v1274, 71
    %v2461 = vpop.permute.xlu0 %2460
    %2462 = vrot.lane.b32.xlu0 %v1275, 71
    %v2463 = vpop.permute.xlu0 %2462
    %2464 = vrot.lane.b32.xlu0 %v1276, 71
    %v2465 = vpop.permute.xlu0 %2464
    %2466 = vrot.lane.b32.xlu0 %v1277, 71
    %v2467 = vpop.permute.xlu0 %2466
    %2468 = vrot.lane.b32.xlu0 %v1278, 71
    %v2469 = vpop.permute.xlu0 %2468
    %2470 = vrot.lane.b32.xlu0 %v1279, 71
    %v2471 = vpop.permute.xlu0 %2470
    %2472 = vrot.lane.b32.xlu0 %v1280, 71
    %v2473 = vpop.permute.xlu0 %2472
    %2474 = vrot.lane.b32.xlu0 %v1281, 71
    %v2475 = vpop.permute.xlu0 %2474
    %2476 = vrot.lane.b32.xlu0 %v1282, 71
    %v2477 = vpop.permute.xlu0 %2476
    %2478 = vrot.lane.b32.xlu0 %v1283, 71
    %v2479 = vpop.permute.xlu0 %2478
    %2480 = vrot.lane.b32.xlu0 %v1284, 71
    %v2481 = vpop.permute.xlu0 %2480
    %2482 = vrot.lane.b32.xlu0 %v1285, 71
    %v2483 = vpop.permute.xlu0 %2482
    %2484 = vrot.lane.b32.xlu0 %v1286, 71
    %v2485 = vpop.permute.xlu0 %2484
    %2486 = vrot.lane.b32.xlu0 %v1287, 71
    %v2487 = vpop.permute.xlu0 %2486
    %2488 = vrot.lane.b32.xlu0 %v1288, 71
    %v2489 = vpop.permute.xlu0 %2488
    %2490 = vrot.lane.b32.xlu0 %v1289, 71
    %v2491 = vpop.permute.xlu0 %2490
    %2492 = vrot.lane.b32.xlu0 %v1290, 71
    %v2493 = vpop.permute.xlu0 %2492
    %2494 = vrot.lane.b32.xlu0 %v1291, 71
    %v2495 = vpop.permute.xlu0 %2494
    %v2496 = vsel %vm411, %v2441, %v2443
    %v2497 = vsel %vm411, %v2443, %v2445
    %v2498 = vsel %vm411, %v2445, %v2447
    %v2499 = vsel %vm411, %v2447, %v2449
    %v2500 = vsel %vm411, %v2449, %v2451
    %v2501 = vsel %vm411, %v2451, %v2453
    %v2502 = vsel %vm411, %v2455, %v2457
    %v2503 = vsel %vm411, %v2457, %v2459
    %v2504 = vsel %vm411, %v2459, %v2461
    %v2505 = vsel %vm411, %v2461, %v2463
    %v2506 = vsel %vm411, %v2463, %v2465
    %v2507 = vsel %vm411, %v2465, %v2467
    %v2508 = vsel %vm411, %v2469, %v2471
    %v2509 = vsel %vm411, %v2471, %v2473
    %v2510 = vsel %vm411, %v2473, %v2475
    %v2511 = vsel %vm411, %v2475, %v2477
    %v2512 = vsel %vm411, %v2477, %v2479
    %v2513 = vsel %vm411, %v2479, %v2481
    %v2514 = vsel %vm411, %v2483, %v2485
    %v2515 = vsel %vm411, %v2485, %v2487
    %v2516 = vsel %vm411, %v2487, %v2489
    %v2517 = vsel %vm411, %v2489, %v2491
    %v2518 = vsel %vm411, %v2491, %v2493
    %v2519 = vsel %vm411, %v2493, %v2495
    %v2548 = vsel %vm411, %v2453, 0.0
    %v2549 = vsel %vm411, %v2467, 0.0
    %v2550 = vsel %vm411, %v2481, 0.0
    %v2551 = vsel %vm411, %v2495, 0.0
    %2552 = vrot.lane.b32.xlu0 %v1264, 70
    %v2553 = vpop.permute.xlu0 %2552
    %2554 = vrot.lane.b32.xlu0 %v1265, 70
    %v2555 = vpop.permute.xlu0 %2554
    %2556 = vrot.lane.b32.xlu0 %v1266, 70
    %v2557 = vpop.permute.xlu0 %2556
    %2558 = vrot.lane.b32.xlu0 %v1267, 70
    %v2559 = vpop.permute.xlu0 %2558
    %2560 = vrot.lane.b32.xlu0 %v1268, 70
    %v2561 = vpop.permute.xlu0 %2560
    %2562 = vrot.lane.b32.xlu0 %v1269, 70
    %v2563 = vpop.permute.xlu0 %2562
    %2564 = vrot.lane.b32.xlu0 %v1270, 70
    %v2565 = vpop.permute.xlu0 %2564
    %2566 = vrot.lane.b32.xlu0 %v1271, 70
    %v2567 = vpop.permute.xlu0 %2566
    %2568 = vrot.lane.b32.xlu0 %v1272, 70
    %v2569 = vpop.permute.xlu0 %2568
    %2570 = vrot.lane.b32.xlu0 %v1273, 70
    %v2571 = vpop.permute.xlu0 %2570
    %2572 = vrot.lane.b32.xlu0 %v1274, 70
    %v2573 = vpop.permute.xlu0 %2572
    %2574 = vrot.lane.b32.xlu0 %v1275, 70
    %v2575 = vpop.permute.xlu0 %2574
    %2576 = vrot.lane.b32.xlu0 %v1276, 70
    %v2577 = vpop.permute.xlu0 %2576
    %2578 = vrot.lane.b32.xlu0 %v1277, 70
    %v2579 = vpop.permute.xlu0 %2578
    %2580 = vrot.lane.b32.xlu0 %v1278, 70
    %v2581 = vpop.permute.xlu0 %2580
    %2582 = vrot.lane.b32.xlu0 %v1279, 70
    %v2583 = vpop.permute.xlu0 %2582
    %2584 = vrot.lane.b32.xlu0 %v1280, 70
    %v2585 = vpop.permute.xlu0 %2584
    %2586 = vrot.lane.b32.xlu0 %v1281, 70
    %v2587 = vpop.permute.xlu0 %2586
    %2588 = vrot.lane.b32.xlu0 %v1282, 70
    %v2589 = vpop.permute.xlu0 %2588
    %2590 = vrot.lane.b32.xlu0 %v1283, 70
    %v2591 = vpop.permute.xlu0 %2590
    %2592 = vrot.lane.b32.xlu0 %v1284, 70
    %v2593 = vpop.permute.xlu0 %2592
    %2594 = vrot.lane.b32.xlu0 %v1285, 70
    %v2595 = vpop.permute.xlu0 %2594
    %2596 = vrot.lane.b32.xlu0 %v1286, 70
    %v2597 = vpop.permute.xlu0 %2596
    %2598 = vrot.lane.b32.xlu0 %v1287, 70
    %v2599 = vpop.permute.xlu0 %2598
    %2600 = vrot.lane.b32.xlu0 %v1288, 70
    %v2601 = vpop.permute.xlu0 %2600
    %2602 = vrot.lane.b32.xlu0 %v1289, 70
    %v2603 = vpop.permute.xlu0 %2602
    %2604 = vrot.lane.b32.xlu0 %v1290, 70
    %v2605 = vpop.permute.xlu0 %2604
    %2606 = vrot.lane.b32.xlu0 %v1291, 70
    %v2607 = vpop.permute.xlu0 %2606
    %v2608 = vsel %vm440, %v2553, %v2555
    %v2609 = vsel %vm440, %v2555, %v2557
    %v2610 = vsel %vm440, %v2557, %v2559
    %v2611 = vsel %vm440, %v2559, %v2561
    %v2612 = vsel %vm440, %v2561, %v2563
    %v2613 = vsel %vm440, %v2563, %v2565
    %v2614 = vsel %vm440, %v2567, %v2569
    %v2615 = vsel %vm440, %v2569, %v2571
    %v2616 = vsel %vm440, %v2571, %v2573
    %v2617 = vsel %vm440, %v2573, %v2575
    %v2618 = vsel %vm440, %v2575, %v2577
    %v2619 = vsel %vm440, %v2577, %v2579
    %v2620 = vsel %vm440, %v2581, %v2583
    %v2621 = vsel %vm440, %v2583, %v2585
    %v2622 = vsel %vm440, %v2585, %v2587
    %v2623 = vsel %vm440, %v2587, %v2589
    %v2624 = vsel %vm440, %v2589, %v2591
    %v2625 = vsel %vm440, %v2591, %v2593
    %v2626 = vsel %vm440, %v2595, %v2597
    %v2627 = vsel %vm440, %v2597, %v2599
    %v2628 = vsel %vm440, %v2599, %v2601
    %v2629 = vsel %vm440, %v2601, %v2603
    %v2630 = vsel %vm440, %v2603, %v2605
    %v2631 = vsel %vm440, %v2605, %v2607
    %v2660 = vsel %vm440, %v2565, 0.0
    %v2661 = vsel %vm440, %v2579, 0.0
    %v2662 = vsel %vm440, %v2593, 0.0
    %v2663 = vsel %vm440, %v2607, 0.0
    %2664 = vrot.lane.b32.xlu0 %v1264, 69
    %v2665 = vpop.permute.xlu0 %2664
    %2666 = vrot.lane.b32.xlu0 %v1265, 69
    %v2667 = vpop.permute.xlu0 %2666
    %2668 = vrot.lane.b32.xlu0 %v1266, 69
    %v2669 = vpop.permute.xlu0 %2668
    %2670 = vrot.lane.b32.xlu0 %v1267, 69
    %v2671 = vpop.permute.xlu0 %2670
    %2672 = vrot.lane.b32.xlu0 %v1268, 69
    %v2673 = vpop.permute.xlu0 %2672
    %2674 = vrot.lane.b32.xlu0 %v1269, 69
    %v2675 = vpop.permute.xlu0 %2674
    %2676 = vrot.lane.b32.xlu0 %v1270, 69
    %v2677 = vpop.permute.xlu0 %2676
    %2678 = vrot.lane.b32.xlu0 %v1271, 69
    %v2679 = vpop.permute.xlu0 %2678
    %2680 = vrot.lane.b32.xlu0 %v1272, 69
    %v2681 = vpop.permute.xlu0 %2680
    %2682 = vrot.lane.b32.xlu0 %v1273, 69
    %v2683 = vpop.permute.xlu0 %2682
    %2684 = vrot.lane.b32.xlu0 %v1274, 69
    %v2685 = vpop.permute.xlu0 %2684
    %2686 = vrot.lane.b32.xlu0 %v1275, 69
    %v2687 = vpop.permute.xlu0 %2686
    %2688 = vrot.lane.b32.xlu0 %v1276, 69
    %v2689 = vpop.permute.xlu0 %2688
    %2690 = vrot.lane.b32.xlu0 %v1277, 69
    %v2691 = vpop.permute.xlu0 %2690
    %2692 = vrot.lane.b32.xlu0 %v1278, 69
    %v2693 = vpop.permute.xlu0 %2692
    %2694 = vrot.lane.b32.xlu0 %v1279, 69
    %v2695 = vpop.permute.xlu0 %2694
    %2696 = vrot.lane.b32.xlu0 %v1280, 69
    %v2697 = vpop.permute.xlu0 %2696
    %2698 = vrot.lane.b32.xlu0 %v1281, 69
    %v2699 = vpop.permute.xlu0 %2698
    %2700 = vrot.lane.b32.xlu0 %v1282, 69
    %v2701 = vpop.permute.xlu0 %2700
    %2702 = vrot.lane.b32.xlu0 %v1283, 69
    %v2703 = vpop.permute.xlu0 %2702
    %2704 = vrot.lane.b32.xlu0 %v1284, 69
    %v2705 = vpop.permute.xlu0 %2704
    %2706 = vrot.lane.b32.xlu0 %v1285, 69
    %v2707 = vpop.permute.xlu0 %2706
    %2708 = vrot.lane.b32.xlu0 %v1286, 69
    %v2709 = vpop.permute.xlu0 %2708
    %2710 = vrot.lane.b32.xlu0 %v1287, 69
    %v2711 = vpop.permute.xlu0 %2710
    %2712 = vrot.lane.b32.xlu0 %v1288, 69
    %v2713 = vpop.permute.xlu0 %2712
    %2714 = vrot.lane.b32.xlu0 %v1289, 69
    %v2715 = vpop.permute.xlu0 %2714
    %2716 = vrot.lane.b32.xlu0 %v1290, 69
    %v2717 = vpop.permute.xlu0 %2716
    %2718 = vrot.lane.b32.xlu0 %v1291, 69
    %v2719 = vpop.permute.xlu0 %2718
    %v2720 = vsel %vm469, %v2665, %v2667
    %v2721 = vsel %vm469, %v2667, %v2669
    %v2722 = vsel %vm469, %v2669, %v2671
    %v2723 = vsel %vm469, %v2671, %v2673
    %v2724 = vsel %vm469, %v2673, %v2675
    %v2725 = vsel %vm469, %v2675, %v2677
    %v2726 = vsel %vm469, %v2679, %v2681
    %v2727 = vsel %vm469, %v2681, %v2683
    %v2728 = vsel %vm469, %v2683, %v2685
    %v2729 = vsel %vm469, %v2685, %v2687
    %v2730 = vsel %vm469, %v2687, %v2689
    %v2731 = vsel %vm469, %v2689, %v2691
    %v2732 = vsel %vm469, %v2693, %v2695
    %v2733 = vsel %vm469, %v2695, %v2697
    %v2734 = vsel %vm469, %v2697, %v2699
    %v2735 = vsel %vm469, %v2699, %v2701
    %v2736 = vsel %vm469, %v2701, %v2703
    %v2737 = vsel %vm469, %v2703, %v2705
    %v2738 = vsel %vm469, %v2707, %v2709
    %v2739 = vsel %vm469, %v2709, %v2711
    %v2740 = vsel %vm469, %v2711, %v2713
    %v2741 = vsel %vm469, %v2713, %v2715
    %v2742 = vsel %vm469, %v2715, %v2717
    %v2743 = vsel %vm469, %v2717, %v2719
    %v2772 = vsel %vm469, %v2677, 0.0
    %v2773 = vsel %vm469, %v2691, 0.0
    %v2774 = vsel %vm469, %v2705, 0.0
    %v2775 = vsel %vm469, %v2719, 0.0
    %2776 = vrot.lane.b32.xlu0 %v1264, 68
    %v2777 = vpop.permute.xlu0 %2776
    %2778 = vrot.lane.b32.xlu0 %v1265, 68
    %v2779 = vpop.permute.xlu0 %2778
    %2780 = vrot.lane.b32.xlu0 %v1266, 68
    %v2781 = vpop.permute.xlu0 %2780
    %2782 = vrot.lane.b32.xlu0 %v1267, 68
    %v2783 = vpop.permute.xlu0 %2782
    %2784 = vrot.lane.b32.xlu0 %v1268, 68
    %v2785 = vpop.permute.xlu0 %2784
    %2786 = vrot.lane.b32.xlu0 %v1269, 68
    %v2787 = vpop.permute.xlu0 %2786
    %2788 = vrot.lane.b32.xlu0 %v1270, 68
    %v2789 = vpop.permute.xlu0 %2788
    %2790 = vrot.lane.b32.xlu0 %v1271, 68
    %v2791 = vpop.permute.xlu0 %2790
    %2792 = vrot.lane.b32.xlu0 %v1272, 68
    %v2793 = vpop.permute.xlu0 %2792
    %2794 = vrot.lane.b32.xlu0 %v1273, 68
    %v2795 = vpop.permute.xlu0 %2794
    %2796 = vrot.lane.b32.xlu0 %v1274, 68
    %v2797 = vpop.permute.xlu0 %2796
    %2798 = vrot.lane.b32.xlu0 %v1275, 68
    %v2799 = vpop.permute.xlu0 %2798
    %2800 = vrot.lane.b32.xlu0 %v1276, 68
    %v2801 = vpop.permute.xlu0 %2800
    %2802 = vrot.lane.b32.xlu0 %v1277, 68
    %v2803 = vpop.permute.xlu0 %2802
    %2804 = vrot.lane.b32.xlu0 %v1278, 68
    %v2805 = vpop.permute.xlu0 %2804
    %2806 = vrot.lane.b32.xlu0 %v1279, 68
    %v2807 = vpop.permute.xlu0 %2806
    %2808 = vrot.lane.b32.xlu0 %v1280, 68
    %v2809 = vpop.permute.xlu0 %2808
    %2810 = vrot.lane.b32.xlu0 %v1281, 68
    %v2811 = vpop.permute.xlu0 %2810
    %2812 = vrot.lane.b32.xlu0 %v1282, 68
    %v2813 = vpop.permute.xlu0 %2812
    %2814 = vrot.lane.b32.xlu0 %v1283, 68
    %v2815 = vpop.permute.xlu0 %2814
    %2816 = vrot.lane.b32.xlu0 %v1284, 68
    %v2817 = vpop.permute.xlu0 %2816
    %2818 = vrot.lane.b32.xlu0 %v1285, 68
    %v2819 = vpop.permute.xlu0 %2818
    %2820 = vrot.lane.b32.xlu0 %v1286, 68
    %v2821 = vpop.permute.xlu0 %2820
    %2822 = vrot.lane.b32.xlu0 %v1287, 68
    %v2823 = vpop.permute.xlu0 %2822
    %2824 = vrot.lane.b32.xlu0 %v1288, 68
    %v2825 = vpop.permute.xlu0 %2824
    %2826 = vrot.lane.b32.xlu0 %v1289, 68
    %v2827 = vpop.permute.xlu0 %2826
    %2828 = vrot.lane.b32.xlu0 %v1290, 68
    %v2829 = vpop.permute.xlu0 %2828
    %2830 = vrot.lane.b32.xlu0 %v1291, 68
    %v2831 = vpop.permute.xlu0 %2830
    %v2832 = vsel %vm498, %v2777, %v2779
    %v2833 = vsel %vm498, %v2779, %v2781
    %v2834 = vsel %vm498, %v2781, %v2783
    %v2835 = vsel %vm498, %v2783, %v2785
    %v2836 = vsel %vm498, %v2785, %v2787
    %v2837 = vsel %vm498, %v2787, %v2789
    %v2838 = vsel %vm498, %v2791, %v2793
    %v2839 = vsel %vm498, %v2793, %v2795
    %v2840 = vsel %vm498, %v2795, %v2797
    %v2841 = vsel %vm498, %v2797, %v2799
    %v2842 = vsel %vm498, %v2799, %v2801
    %v2843 = vsel %vm498, %v2801, %v2803
    %v2844 = vsel %vm498, %v2805, %v2807
    %v2845 = vsel %vm498, %v2807, %v2809
    %v2846 = vsel %vm498, %v2809, %v2811
    %v2847 = vsel %vm498, %v2811, %v2813
    %v2848 = vsel %vm498, %v2813, %v2815
    %v2849 = vsel %vm498, %v2815, %v2817
    %v2850 = vsel %vm498, %v2819, %v2821
    %v2851 = vsel %vm498, %v2821, %v2823
    %v2852 = vsel %vm498, %v2823, %v2825
    %v2853 = vsel %vm498, %v2825, %v2827
    %v2854 = vsel %vm498, %v2827, %v2829
    %v2855 = vsel %vm498, %v2829, %v2831
    %v2884 = vsel %vm498, %v2789, 0.0
    %v2885 = vsel %vm498, %v2803, 0.0
    %v2886 = vsel %vm498, %v2817, 0.0
    %v2887 = vsel %vm498, %v2831, 0.0
    %2888 = vrot.lane.b32.xlu0 %v1264, 44
    %v2889 = vpop.permute.xlu0 %2888
    %2890 = vrot.lane.b32.xlu0 %v1265, 44
    %v2891 = vpop.permute.xlu0 %2890
    %2892 = vrot.lane.b32.xlu0 %v1266, 44
    %v2893 = vpop.permute.xlu0 %2892
    %2894 = vrot.lane.b32.xlu0 %v1267, 44
    %v2895 = vpop.permute.xlu0 %2894
    %2896 = vrot.lane.b32.xlu0 %v1268, 44
    %v2897 = vpop.permute.xlu0 %2896
    %2898 = vrot.lane.b32.xlu0 %v1269, 44
    %v2899 = vpop.permute.xlu0 %2898
    %2900 = vrot.lane.b32.xlu0 %v1270, 44
    %v2901 = vpop.permute.xlu0 %2900
    %2902 = vrot.lane.b32.xlu0 %v1271, 44
    %v2903 = vpop.permute.xlu0 %2902
    %2904 = vrot.lane.b32.xlu0 %v1272, 44
    %v2905 = vpop.permute.xlu0 %2904
    %2906 = vrot.lane.b32.xlu0 %v1273, 44
    %v2907 = vpop.permute.xlu0 %2906
    %2908 = vrot.lane.b32.xlu0 %v1274, 44
    %v2909 = vpop.permute.xlu0 %2908
    %2910 = vrot.lane.b32.xlu0 %v1275, 44
    %v2911 = vpop.permute.xlu0 %2910
    %2912 = vrot.lane.b32.xlu0 %v1276, 44
    %v2913 = vpop.permute.xlu0 %2912
    %2914 = vrot.lane.b32.xlu0 %v1277, 44
    %v2915 = vpop.permute.xlu0 %2914
    %2916 = vrot.lane.b32.xlu0 %v1278, 44
    %v2917 = vpop.permute.xlu0 %2916
    %2918 = vrot.lane.b32.xlu0 %v1279, 44
    %v2919 = vpop.permute.xlu0 %2918
    %2920 = vrot.lane.b32.xlu0 %v1280, 44
    %v2921 = vpop.permute.xlu0 %2920
    %2922 = vrot.lane.b32.xlu0 %v1281, 44
    %v2923 = vpop.permute.xlu0 %2922
    %2924 = vrot.lane.b32.xlu0 %v1282, 44
    %v2925 = vpop.permute.xlu0 %2924
    %2926 = vrot.lane.b32.xlu0 %v1283, 44
    %v2927 = vpop.permute.xlu0 %2926
    %2928 = vrot.lane.b32.xlu0 %v1284, 44
    %v2929 = vpop.permute.xlu0 %2928
    %2930 = vrot.lane.b32.xlu0 %v1285, 44
    %v2931 = vpop.permute.xlu0 %2930
    %2932 = vrot.lane.b32.xlu0 %v1286, 44
    %v2933 = vpop.permute.xlu0 %2932
    %2934 = vrot.lane.b32.xlu0 %v1287, 44
    %v2935 = vpop.permute.xlu0 %2934
    %2936 = vrot.lane.b32.xlu0 %v1288, 44
    %v2937 = vpop.permute.xlu0 %2936
    %2938 = vrot.lane.b32.xlu0 %v1289, 44
    %v2939 = vpop.permute.xlu0 %2938
    %2940 = vrot.lane.b32.xlu0 %v1290, 44
    %v2941 = vpop.permute.xlu0 %2940
    %2942 = vrot.lane.b32.xlu0 %v1291, 44
    %v2943 = vpop.permute.xlu0 %2942
    %v2944 = vsel %vm527, %v2889, %v2891
    %v2945 = vsel %vm527, %v2891, %v2893
    %v2946 = vsel %vm527, %v2893, %v2895
    %v2947 = vsel %vm527, %v2895, %v2897
    %v2948 = vsel %vm527, %v2897, %v2899
    %v2949 = vsel %vm527, %v2899, %v2901
    %v2950 = vsel %vm527, %v2903, %v2905
    %v2951 = vsel %vm527, %v2905, %v2907
    %v2952 = vsel %vm527, %v2907, %v2909
    %v2953 = vsel %vm527, %v2909, %v2911
    %v2954 = vsel %vm527, %v2911, %v2913
    %v2955 = vsel %vm527, %v2913, %v2915
    %v2956 = vsel %vm527, %v2917, %v2919
    %v2957 = vsel %vm527, %v2919, %v2921
    %v2958 = vsel %vm527, %v2921, %v2923
    %v2959 = vsel %vm527, %v2923, %v2925
    %v2960 = vsel %vm527, %v2925, %v2927
    %v2961 = vsel %vm527, %v2927, %v2929
    %v2962 = vsel %vm527, %v2931, %v2933
    %v2963 = vsel %vm527, %v2933, %v2935
    %v2964 = vsel %vm527, %v2935, %v2937
    %v2965 = vsel %vm527, %v2937, %v2939
    %v2966 = vsel %vm527, %v2939, %v2941
    %v2967 = vsel %vm527, %v2941, %v2943
    %v2996 = vsel %vm527, %v2901, 0.0
    %v2997 = vsel %vm527, %v2915, 0.0
    %v2998 = vsel %vm527, %v2929, 0.0
    %v2999 = vsel %vm527, %v2943, 0.0
    %3000 = vrot.lane.b32.xlu0 %v1264, 43
    %v3001 = vpop.permute.xlu0 %3000
    %3002 = vrot.lane.b32.xlu0 %v1265, 43
    %v3003 = vpop.permute.xlu0 %3002
    %3004 = vrot.lane.b32.xlu0 %v1266, 43
    %v3005 = vpop.permute.xlu0 %3004
    %3006 = vrot.lane.b32.xlu0 %v1267, 43
    %v3007 = vpop.permute.xlu0 %3006
    %3008 = vrot.lane.b32.xlu0 %v1268, 43
    %v3009 = vpop.permute.xlu0 %3008
    %3010 = vrot.lane.b32.xlu0 %v1269, 43
    %v3011 = vpop.permute.xlu0 %3010
    %3012 = vrot.lane.b32.xlu0 %v1270, 43
    %v3013 = vpop.permute.xlu0 %3012
    %3014 = vrot.lane.b32.xlu0 %v1271, 43
    %v3015 = vpop.permute.xlu0 %3014
    %3016 = vrot.lane.b32.xlu0 %v1272, 43
    %v3017 = vpop.permute.xlu0 %3016
    %3018 = vrot.lane.b32.xlu0 %v1273, 43
    %v3019 = vpop.permute.xlu0 %3018
    %3020 = vrot.lane.b32.xlu0 %v1274, 43
    %v3021 = vpop.permute.xlu0 %3020
    %3022 = vrot.lane.b32.xlu0 %v1275, 43
    %v3023 = vpop.permute.xlu0 %3022
    %3024 = vrot.lane.b32.xlu0 %v1276, 43
    %v3025 = vpop.permute.xlu0 %3024
    %3026 = vrot.lane.b32.xlu0 %v1277, 43
    %v3027 = vpop.permute.xlu0 %3026
    %3028 = vrot.lane.b32.xlu0 %v1278, 43
    %v3029 = vpop.permute.xlu0 %3028
    %3030 = vrot.lane.b32.xlu0 %v1279, 43
    %v3031 = vpop.permute.xlu0 %3030
    %3032 = vrot.lane.b32.xlu0 %v1280, 43
    %v3033 = vpop.permute.xlu0 %3032
    %3034 = vrot.lane.b32.xlu0 %v1281, 43
    %v3035 = vpop.permute.xlu0 %3034
    %3036 = vrot.lane.b32.xlu0 %v1282, 43
    %v3037 = vpop.permute.xlu0 %3036
    %3038 = vrot.lane.b32.xlu0 %v1283, 43
    %v3039 = vpop.permute.xlu0 %3038
    %3040 = vrot.lane.b32.xlu0 %v1284, 43
    %v3041 = vpop.permute.xlu0 %3040
    %3042 = vrot.lane.b32.xlu0 %v1285, 43
    %v3043 = vpop.permute.xlu0 %3042
    %3044 = vrot.lane.b32.xlu0 %v1286, 43
    %v3045 = vpop.permute.xlu0 %3044
    %3046 = vrot.lane.b32.xlu0 %v1287, 43
    %v3047 = vpop.permute.xlu0 %3046
    %3048 = vrot.lane.b32.xlu0 %v1288, 43
    %v3049 = vpop.permute.xlu0 %3048
    %3050 = vrot.lane.b32.xlu0 %v1289, 43
    %v3051 = vpop.permute.xlu0 %3050
    %3052 = vrot.lane.b32.xlu0 %v1290, 43
    %v3053 = vpop.permute.xlu0 %3052
    %3054 = vrot.lane.b32.xlu0 %v1291, 43
    %v3055 = vpop.permute.xlu0 %3054
    %v3056 = vsel %vm556, %v3001, %v3003
    %v3057 = vsel %vm556, %v3003, %v3005
    %v3058 = vsel %vm556, %v3005, %v3007
    %v3059 = vsel %vm556, %v3007, %v3009
    %v3060 = vsel %vm556, %v3009, %v3011
    %v3061 = vsel %vm556, %v3011, %v3013
    %v3062 = vsel %vm556, %v3015, %v3017
    %v3063 = vsel %vm556, %v3017, %v3019
    %v3064 = vsel %vm556, %v3019, %v3021
    %v3065 = vsel %vm556, %v3021, %v3023
    %v3066 = vsel %vm556, %v3023, %v3025
    %v3067 = vsel %vm556, %v3025, %v3027
    %v3068 = vsel %vm556, %v3029, %v3031
    %v3069 = vsel %vm556, %v3031, %v3033
    %v3070 = vsel %vm556, %v3033, %v3035
    %v3071 = vsel %vm556, %v3035, %v3037
    %v3072 = vsel %vm556, %v3037, %v3039
    %v3073 = vsel %vm556, %v3039, %v3041
    %v3074 = vsel %vm556, %v3043, %v3045
    %v3075 = vsel %vm556, %v3045, %v3047
    %v3076 = vsel %vm556, %v3047, %v3049
    %v3077 = vsel %vm556, %v3049, %v3051
    %v3078 = vsel %vm556, %v3051, %v3053
    %v3079 = vsel %vm556, %v3053, %v3055
    %v3108 = vsel %vm556, %v3013, 0.0
    %v3109 = vsel %vm556, %v3027, 0.0
    %v3110 = vsel %vm556, %v3041, 0.0
    %v3111 = vsel %vm556, %v3055, 0.0
    %3112 = vrot.lane.b32.xlu0 %v1264, 42
    %v3113 = vpop.permute.xlu0 %3112
    %3114 = vrot.lane.b32.xlu0 %v1265, 42
    %v3115 = vpop.permute.xlu0 %3114
    %3116 = vrot.lane.b32.xlu0 %v1266, 42
    %v3117 = vpop.permute.xlu0 %3116
    %3118 = vrot.lane.b32.xlu0 %v1267, 42
    %v3119 = vpop.permute.xlu0 %3118
    %3120 = vrot.lane.b32.xlu0 %v1268, 42
    %v3121 = vpop.permute.xlu0 %3120
    %3122 = vrot.lane.b32.xlu0 %v1269, 42
    %v3123 = vpop.permute.xlu0 %3122
    %3124 = vrot.lane.b32.xlu0 %v1270, 42
    %v3125 = vpop.permute.xlu0 %3124
    %3126 = vrot.lane.b32.xlu0 %v1271, 42
    %v3127 = vpop.permute.xlu0 %3126
    %3128 = vrot.lane.b32.xlu0 %v1272, 42
    %v3129 = vpop.permute.xlu0 %3128
    %3130 = vrot.lane.b32.xlu0 %v1273, 42
    %v3131 = vpop.permute.xlu0 %3130
    %3132 = vrot.lane.b32.xlu0 %v1274, 42
    %v3133 = vpop.permute.xlu0 %3132
    %3134 = vrot.lane.b32.xlu0 %v1275, 42
    %v3135 = vpop.permute.xlu0 %3134
    %3136 = vrot.lane.b32.xlu0 %v1276, 42
    %v3137 = vpop.permute.xlu0 %3136
    %3138 = vrot.lane.b32.xlu0 %v1277, 42
    %v3139 = vpop.permute.xlu0 %3138
    %3140 = vrot.lane.b32.xlu0 %v1278, 42
    %v3141 = vpop.permute.xlu0 %3140
    %3142 = vrot.lane.b32.xlu0 %v1279, 42
    %v3143 = vpop.permute.xlu0 %3142
    %3144 = vrot.lane.b32.xlu0 %v1280, 42
    %v3145 = vpop.permute.xlu0 %3144
    %3146 = vrot.lane.b32.xlu0 %v1281, 42
    %v3147 = vpop.permute.xlu0 %3146
    %3148 = vrot.lane.b32.xlu0 %v1282, 42
    %v3149 = vpop.permute.xlu0 %3148
    %3150 = vrot.lane.b32.xlu0 %v1283, 42
    %v3151 = vpop.permute.xlu0 %3150
    %3152 = vrot.lane.b32.xlu0 %v1284, 42
    %v3153 = vpop.permute.xlu0 %3152
    %3154 = vrot.lane.b32.xlu0 %v1285, 42
    %v3155 = vpop.permute.xlu0 %3154
    %3156 = vrot.lane.b32.xlu0 %v1286, 42
    %v3157 = vpop.permute.xlu0 %3156
    %3158 = vrot.lane.b32.xlu0 %v1287, 42
    %v3159 = vpop.permute.xlu0 %3158
    %3160 = vrot.lane.b32.xlu0 %v1288, 42
    %v3161 = vpop.permute.xlu0 %3160
    %3162 = vrot.lane.b32.xlu0 %v1289, 42
    %v3163 = vpop.permute.xlu0 %3162
    %3164 = vrot.lane.b32.xlu0 %v1290, 42
    %v3165 = vpop.permute.xlu0 %3164
    %3166 = vrot.lane.b32.xlu0 %v1291, 42
    %v3167 = vpop.permute.xlu0 %3166
    %v3168 = vsel %vm585, %v3113, %v3115
    %v3169 = vsel %vm585, %v3115, %v3117
    %v3170 = vsel %vm585, %v3117, %v3119
    %v3171 = vsel %vm585, %v3119, %v3121
    %v3172 = vsel %vm585, %v3121, %v3123
    %v3173 = vsel %vm585, %v3123, %v3125
    %v3174 = vsel %vm585, %v3127, %v3129
    %v3175 = vsel %vm585, %v3129, %v3131
    %v3176 = vsel %vm585, %v3131, %v3133
    %v3177 = vsel %vm585, %v3133, %v3135
    %v3178 = vsel %vm585, %v3135, %v3137
    %v3179 = vsel %vm585, %v3137, %v3139
    %v3180 = vsel %vm585, %v3141, %v3143
    %v3181 = vsel %vm585, %v3143, %v3145
    %v3182 = vsel %vm585, %v3145, %v3147
    %v3183 = vsel %vm585, %v3147, %v3149
    %v3184 = vsel %vm585, %v3149, %v3151
    %v3185 = vsel %vm585, %v3151, %v3153
    %v3186 = vsel %vm585, %v3155, %v3157
    %v3187 = vsel %vm585, %v3157, %v3159
    %v3188 = vsel %vm585, %v3159, %v3161
    %v3189 = vsel %vm585, %v3161, %v3163
    %v3190 = vsel %vm585, %v3163, %v3165
    %v3191 = vsel %vm585, %v3165, %v3167
    %v3220 = vsel %vm585, %v3125, 0.0
    %v3221 = vsel %vm585, %v3139, 0.0
    %v3222 = vsel %vm585, %v3153, 0.0
    %v3223 = vsel %vm585, %v3167, 0.0
    %3224 = vrot.lane.b32.xlu0 %v1264, 41
    %v3225 = vpop.permute.xlu0 %3224
    %3226 = vrot.lane.b32.xlu0 %v1265, 41
    %v3227 = vpop.permute.xlu0 %3226
    %3228 = vrot.lane.b32.xlu0 %v1266, 41
    %v3229 = vpop.permute.xlu0 %3228
    %3230 = vrot.lane.b32.xlu0 %v1267, 41
    %v3231 = vpop.permute.xlu0 %3230
    %3232 = vrot.lane.b32.xlu0 %v1268, 41
    %v3233 = vpop.permute.xlu0 %3232
    %3234 = vrot.lane.b32.xlu0 %v1269, 41
    %v3235 = vpop.permute.xlu0 %3234
    %3236 = vrot.lane.b32.xlu0 %v1270, 41
    %v3237 = vpop.permute.xlu0 %3236
    %3238 = vrot.lane.b32.xlu0 %v1271, 41
    %v3239 = vpop.permute.xlu0 %3238
    %3240 = vrot.lane.b32.xlu0 %v1272, 41
    %v3241 = vpop.permute.xlu0 %3240
    %3242 = vrot.lane.b32.xlu0 %v1273, 41
    %v3243 = vpop.permute.xlu0 %3242
    %3244 = vrot.lane.b32.xlu0 %v1274, 41
    %v3245 = vpop.permute.xlu0 %3244
    %3246 = vrot.lane.b32.xlu0 %v1275, 41
    %v3247 = vpop.permute.xlu0 %3246
    %3248 = vrot.lane.b32.xlu0 %v1276, 41
    %v3249 = vpop.permute.xlu0 %3248
    %3250 = vrot.lane.b32.xlu0 %v1277, 41
    %v3251 = vpop.permute.xlu0 %3250
    %3252 = vrot.lane.b32.xlu0 %v1278, 41
    %v3253 = vpop.permute.xlu0 %3252
    %3254 = vrot.lane.b32.xlu0 %v1279, 41
    %v3255 = vpop.permute.xlu0 %3254
    %3256 = vrot.lane.b32.xlu0 %v1280, 41
    %v3257 = vpop.permute.xlu0 %3256
    %3258 = vrot.lane.b32.xlu0 %v1281, 41
    %v3259 = vpop.permute.xlu0 %3258
    %3260 = vrot.lane.b32.xlu0 %v1282, 41
    %v3261 = vpop.permute.xlu0 %3260
    %3262 = vrot.lane.b32.xlu0 %v1283, 41
    %v3263 = vpop.permute.xlu0 %3262
    %3264 = vrot.lane.b32.xlu0 %v1284, 41
    %v3265 = vpop.permute.xlu0 %3264
    %3266 = vrot.lane.b32.xlu0 %v1285, 41
    %v3267 = vpop.permute.xlu0 %3266
    %3268 = vrot.lane.b32.xlu0 %v1286, 41
    %v3269 = vpop.permute.xlu0 %3268
    %3270 = vrot.lane.b32.xlu0 %v1287, 41
    %v3271 = vpop.permute.xlu0 %3270
    %3272 = vrot.lane.b32.xlu0 %v1288, 41
    %v3273 = vpop.permute.xlu0 %3272
    %3274 = vrot.lane.b32.xlu0 %v1289, 41
    %v3275 = vpop.permute.xlu0 %3274
    %3276 = vrot.lane.b32.xlu0 %v1290, 41
    %v3277 = vpop.permute.xlu0 %3276
    %3278 = vrot.lane.b32.xlu0 %v1291, 41
    %v3279 = vpop.permute.xlu0 %3278
    %v3280 = vsel %vm614, %v3225, %v3227
    %v3281 = vsel %vm614, %v3227, %v3229
    %v3282 = vsel %vm614, %v3229, %v3231
    %v3283 = vsel %vm614, %v3231, %v3233
    %v3284 = vsel %vm614, %v3233, %v3235
    %v3285 = vsel %vm614, %v3235, %v3237
    %v3286 = vsel %vm614, %v3239, %v3241
    %v3287 = vsel %vm614, %v3241, %v3243
    %v3288 = vsel %vm614, %v3243, %v3245
    %v3289 = vsel %vm614, %v3245, %v3247
    %v3290 = vsel %vm614, %v3247, %v3249
    %v3291 = vsel %vm614, %v3249, %v3251
    %v3292 = vsel %vm614, %v3253, %v3255
    %v3293 = vsel %vm614, %v3255, %v3257
    %v3294 = vsel %vm614, %v3257, %v3259
    %v3295 = vsel %vm614, %v3259, %v3261
    %v3296 = vsel %vm614, %v3261, %v3263
    %v3297 = vsel %vm614, %v3263, %v3265
    %v3298 = vsel %vm614, %v3267, %v3269
    %v3299 = vsel %vm614, %v3269, %v3271
    %v3300 = vsel %vm614, %v3271, %v3273
    %v3301 = vsel %vm614, %v3273, %v3275
    %v3302 = vsel %vm614, %v3275, %v3277
    %v3303 = vsel %vm614, %v3277, %v3279
    %v3332 = vsel %vm614, %v3237, 0.0
    %v3333 = vsel %vm614, %v3251, 0.0
    %v3334 = vsel %vm614, %v3265, 0.0
    %v3335 = vsel %vm614, %v3279, 0.0
    %3336 = vrot.lane.b32.xlu0 %v1264, 40
    %v3337 = vpop.permute.xlu0 %3336
    %3338 = vrot.lane.b32.xlu0 %v1265, 40
    %v3339 = vpop.permute.xlu0 %3338
    %3340 = vrot.lane.b32.xlu0 %v1266, 40
    %v3341 = vpop.permute.xlu0 %3340
    %3342 = vrot.lane.b32.xlu0 %v1267, 40
    %v3343 = vpop.permute.xlu0 %3342
    %3344 = vrot.lane.b32.xlu0 %v1268, 40
    %v3345 = vpop.permute.xlu0 %3344
    %3346 = vrot.lane.b32.xlu0 %v1269, 40
    %v3347 = vpop.permute.xlu0 %3346
    %3348 = vrot.lane.b32.xlu0 %v1270, 40
    %v3349 = vpop.permute.xlu0 %3348
    %3350 = vrot.lane.b32.xlu0 %v1271, 40
    %v3351 = vpop.permute.xlu0 %3350
    %3352 = vrot.lane.b32.xlu0 %v1272, 40
    %v3353 = vpop.permute.xlu0 %3352
    %3354 = vrot.lane.b32.xlu0 %v1273, 40
    %v3355 = vpop.permute.xlu0 %3354
    %3356 = vrot.lane.b32.xlu0 %v1274, 40
    %v3357 = vpop.permute.xlu0 %3356
    %3358 = vrot.lane.b32.xlu0 %v1275, 40
    %v3359 = vpop.permute.xlu0 %3358
    %3360 = vrot.lane.b32.xlu0 %v1276, 40
    %v3361 = vpop.permute.xlu0 %3360
    %3362 = vrot.lane.b32.xlu0 %v1277, 40
    %v3363 = vpop.permute.xlu0 %3362
    %3364 = vrot.lane.b32.xlu0 %v1278, 40
    %v3365 = vpop.permute.xlu0 %3364
    %3366 = vrot.lane.b32.xlu0 %v1279, 40
    %v3367 = vpop.permute.xlu0 %3366
    %3368 = vrot.lane.b32.xlu0 %v1280, 40
    %v3369 = vpop.permute.xlu0 %3368
    %3370 = vrot.lane.b32.xlu0 %v1281, 40
    %v3371 = vpop.permute.xlu0 %3370
    %3372 = vrot.lane.b32.xlu0 %v1282, 40
    %v3373 = vpop.permute.xlu0 %3372
    %3374 = vrot.lane.b32.xlu0 %v1283, 40
    %v3375 = vpop.permute.xlu0 %3374
    %3376 = vrot.lane.b32.xlu0 %v1284, 40
    %v3377 = vpop.permute.xlu0 %3376
    %3378 = vrot.lane.b32.xlu0 %v1285, 40
    %v3379 = vpop.permute.xlu0 %3378
    %3380 = vrot.lane.b32.xlu0 %v1286, 40
    %v3381 = vpop.permute.xlu0 %3380
    %3382 = vrot.lane.b32.xlu0 %v1287, 40
    %v3383 = vpop.permute.xlu0 %3382
    %3384 = vrot.lane.b32.xlu0 %v1288, 40
    %v3385 = vpop.permute.xlu0 %3384
    %3386 = vrot.lane.b32.xlu0 %v1289, 40
    %v3387 = vpop.permute.xlu0 %3386
    %3388 = vrot.lane.b32.xlu0 %v1290, 40
    %v3389 = vpop.permute.xlu0 %3388
    %3390 = vrot.lane.b32.xlu0 %v1291, 40
    %v3391 = vpop.permute.xlu0 %3390
    %v3392 = vsel %vm643, %v3337, %v3339
    %v3393 = vsel %vm643, %v3339, %v3341
    %v3394 = vsel %vm643, %v3341, %v3343
    %v3395 = vsel %vm643, %v3343, %v3345
    %v3396 = vsel %vm643, %v3345, %v3347
    %v3397 = vsel %vm643, %v3347, %v3349
    %v3398 = vsel %vm643, %v3351, %v3353
    %v3399 = vsel %vm643, %v3353, %v3355
    %v3400 = vsel %vm643, %v3355, %v3357
    %v3401 = vsel %vm643, %v3357, %v3359
    %v3402 = vsel %vm643, %v3359, %v3361
    %v3403 = vsel %vm643, %v3361, %v3363
    %v3404 = vsel %vm643, %v3365, %v3367
    %v3405 = vsel %vm643, %v3367, %v3369
    %v3406 = vsel %vm643, %v3369, %v3371
    %v3407 = vsel %vm643, %v3371, %v3373
    %v3408 = vsel %vm643, %v3373, %v3375
    %v3409 = vsel %vm643, %v3375, %v3377
    %v3410 = vsel %vm643, %v3379, %v3381
    %v3411 = vsel %vm643, %v3381, %v3383
    %v3412 = vsel %vm643, %v3383, %v3385
    %v3413 = vsel %vm643, %v3385, %v3387
    %v3414 = vsel %vm643, %v3387, %v3389
    %v3415 = vsel %vm643, %v3389, %v3391
    %v3444 = vsel %vm643, %v3349, 0.0
    %v3445 = vsel %vm643, %v3363, 0.0
    %v3446 = vsel %vm643, %v3377, 0.0
    %v3447 = vsel %vm643, %v3391, 0.0
    %3448 = vrot.lane.b32.xlu0 %v1264, 16
    %v3449 = vpop.permute.xlu0 %3448
    %3450 = vrot.lane.b32.xlu0 %v1265, 16
    %v3451 = vpop.permute.xlu0 %3450
    %3452 = vrot.lane.b32.xlu0 %v1266, 16
    %v3453 = vpop.permute.xlu0 %3452
    %3454 = vrot.lane.b32.xlu0 %v1267, 16
    %v3455 = vpop.permute.xlu0 %3454
    %3456 = vrot.lane.b32.xlu0 %v1268, 16
    %v3457 = vpop.permute.xlu0 %3456
    %3458 = vrot.lane.b32.xlu0 %v1269, 16
    %v3459 = vpop.permute.xlu0 %3458
    %3460 = vrot.lane.b32.xlu0 %v1270, 16
    %v3461 = vpop.permute.xlu0 %3460
    %3462 = vrot.lane.b32.xlu0 %v1271, 16
    %v3463 = vpop.permute.xlu0 %3462
    %3464 = vrot.lane.b32.xlu0 %v1272, 16
    %v3465 = vpop.permute.xlu0 %3464
    %3466 = vrot.lane.b32.xlu0 %v1273, 16
    %v3467 = vpop.permute.xlu0 %3466
    %3468 = vrot.lane.b32.xlu0 %v1274, 16
    %v3469 = vpop.permute.xlu0 %3468
    %3470 = vrot.lane.b32.xlu0 %v1275, 16
    %v3471 = vpop.permute.xlu0 %3470
    %3472 = vrot.lane.b32.xlu0 %v1276, 16
    %v3473 = vpop.permute.xlu0 %3472
    %3474 = vrot.lane.b32.xlu0 %v1277, 16
    %v3475 = vpop.permute.xlu0 %3474
    %3476 = vrot.lane.b32.xlu0 %v1278, 16
    %v3477 = vpop.permute.xlu0 %3476
    %3478 = vrot.lane.b32.xlu0 %v1279, 16
    %v3479 = vpop.permute.xlu0 %3478
    %3480 = vrot.lane.b32.xlu0 %v1280, 16
    %v3481 = vpop.permute.xlu0 %3480
    %3482 = vrot.lane.b32.xlu0 %v1281, 16
    %v3483 = vpop.permute.xlu0 %3482
    %3484 = vrot.lane.b32.xlu0 %v1282, 16
    %v3485 = vpop.permute.xlu0 %3484
    %3486 = vrot.lane.b32.xlu0 %v1283, 16
    %v3487 = vpop.permute.xlu0 %3486
    %3488 = vrot.lane.b32.xlu0 %v1284, 16
    %v3489 = vpop.permute.xlu0 %3488
    %3490 = vrot.lane.b32.xlu0 %v1285, 16
    %v3491 = vpop.permute.xlu0 %3490
    %3492 = vrot.lane.b32.xlu0 %v1286, 16
    %v3493 = vpop.permute.xlu0 %3492
    %3494 = vrot.lane.b32.xlu0 %v1287, 16
    %v3495 = vpop.permute.xlu0 %3494
    %3496 = vrot.lane.b32.xlu0 %v1288, 16
    %v3497 = vpop.permute.xlu0 %3496
    %3498 = vrot.lane.b32.xlu0 %v1289, 16
    %v3499 = vpop.permute.xlu0 %3498
    %3500 = vrot.lane.b32.xlu0 %v1290, 16
    %v3501 = vpop.permute.xlu0 %3500
    %3502 = vrot.lane.b32.xlu0 %v1291, 16
    %v3503 = vpop.permute.xlu0 %3502
    %v3504 = vsel %vm672, %v3449, %v3451
    %v3505 = vsel %vm672, %v3451, %v3453
    %v3506 = vsel %vm672, %v3453, %v3455
    %v3507 = vsel %vm672, %v3455, %v3457
    %v3508 = vsel %vm672, %v3457, %v3459
    %v3509 = vsel %vm672, %v3459, %v3461
    %v3510 = vsel %vm672, %v3463, %v3465
    %v3511 = vsel %vm672, %v3465, %v3467
    %v3512 = vsel %vm672, %v3467, %v3469
    %v3513 = vsel %vm672, %v3469, %v3471
    %v3514 = vsel %vm672, %v3471, %v3473
    %v3515 = vsel %vm672, %v3473, %v3475
    %v3516 = vsel %vm672, %v3477, %v3479
    %v3517 = vsel %vm672, %v3479, %v3481
    %v3518 = vsel %vm672, %v3481, %v3483
    %v3519 = vsel %vm672, %v3483, %v3485
    %v3520 = vsel %vm672, %v3485, %v3487
    %v3521 = vsel %vm672, %v3487, %v3489
    %v3522 = vsel %vm672, %v3491, %v3493
    %v3523 = vsel %vm672, %v3493, %v3495
    %v3524 = vsel %vm672, %v3495, %v3497
    %v3525 = vsel %vm672, %v3497, %v3499
    %v3526 = vsel %vm672, %v3499, %v3501
    %v3527 = vsel %vm672, %v3501, %v3503
    %v3556 = vsel %vm672, %v3461, 0.0
    %v3557 = vsel %vm672, %v3475, 0.0
    %v3558 = vsel %vm672, %v3489, 0.0
    %v3559 = vsel %vm672, %v3503, 0.0
    %3560 = vrot.lane.b32.xlu0 %v1264, 15
    %v3561 = vpop.permute.xlu0 %3560
    %3562 = vrot.lane.b32.xlu0 %v1265, 15
    %v3563 = vpop.permute.xlu0 %3562
    %3564 = vrot.lane.b32.xlu0 %v1266, 15
    %v3565 = vpop.permute.xlu0 %3564
    %3566 = vrot.lane.b32.xlu0 %v1267, 15
    %v3567 = vpop.permute.xlu0 %3566
    %3568 = vrot.lane.b32.xlu0 %v1268, 15
    %v3569 = vpop.permute.xlu0 %3568
    %3570 = vrot.lane.b32.xlu0 %v1269, 15
    %v3571 = vpop.permute.xlu0 %3570
    %3572 = vrot.lane.b32.xlu0 %v1270, 15
    %v3573 = vpop.permute.xlu0 %3572
    %3574 = vrot.lane.b32.xlu0 %v1271, 15
    %v3575 = vpop.permute.xlu0 %3574
    %3576 = vrot.lane.b32.xlu0 %v1272, 15
    %v3577 = vpop.permute.xlu0 %3576
    %3578 = vrot.lane.b32.xlu0 %v1273, 15
    %v3579 = vpop.permute.xlu0 %3578
    %3580 = vrot.lane.b32.xlu0 %v1274, 15
    %v3581 = vpop.permute.xlu0 %3580
    %3582 = vrot.lane.b32.xlu0 %v1275, 15
    %v3583 = vpop.permute.xlu0 %3582
    %3584 = vrot.lane.b32.xlu0 %v1276, 15
    %v3585 = vpop.permute.xlu0 %3584
    %3586 = vrot.lane.b32.xlu0 %v1277, 15
    %v3587 = vpop.permute.xlu0 %3586
    %3588 = vrot.lane.b32.xlu0 %v1278, 15
    %v3589 = vpop.permute.xlu0 %3588
    %3590 = vrot.lane.b32.xlu0 %v1279, 15
    %v3591 = vpop.permute.xlu0 %3590
    %3592 = vrot.lane.b32.xlu0 %v1280, 15
    %v3593 = vpop.permute.xlu0 %3592
    %3594 = vrot.lane.b32.xlu0 %v1281, 15
    %v3595 = vpop.permute.xlu0 %3594
    %3596 = vrot.lane.b32.xlu0 %v1282, 15
    %v3597 = vpop.permute.xlu0 %3596
    %3598 = vrot.lane.b32.xlu0 %v1283, 15
    %v3599 = vpop.permute.xlu0 %3598
    %3600 = vrot.lane.b32.xlu0 %v1284, 15
    %v3601 = vpop.permute.xlu0 %3600
    %3602 = vrot.lane.b32.xlu0 %v1285, 15
    %v3603 = vpop.permute.xlu0 %3602
    %3604 = vrot.lane.b32.xlu0 %v1286, 15
    %v3605 = vpop.permute.xlu0 %3604
    %3606 = vrot.lane.b32.xlu0 %v1287, 15
    %v3607 = vpop.permute.xlu0 %3606
    %3608 = vrot.lane.b32.xlu0 %v1288, 15
    %v3609 = vpop.permute.xlu0 %3608
    %3610 = vrot.lane.b32.xlu0 %v1289, 15
    %v3611 = vpop.permute.xlu0 %3610
    %3612 = vrot.lane.b32.xlu0 %v1290, 15
    %v3613 = vpop.permute.xlu0 %3612
    %3614 = vrot.lane.b32.xlu0 %v1291, 15
    %v3615 = vpop.permute.xlu0 %3614
    %v3616 = vsel %vm701, %v3561, %v3563
    %v3617 = vsel %vm701, %v3563, %v3565
    %v3618 = vsel %vm701, %v3565, %v3567
    %v3619 = vsel %vm701, %v3567, %v3569
    %v3620 = vsel %vm701, %v3569, %v3571
    %v3621 = vsel %vm701, %v3571, %v3573
    %v3622 = vsel %vm701, %v3575, %v3577
    %v3623 = vsel %vm701, %v3577, %v3579
    %v3624 = vsel %vm701, %v3579, %v3581
    %v3625 = vsel %vm701, %v3581, %v3583
    %v3626 = vsel %vm701, %v3583, %v3585
    %v3627 = vsel %vm701, %v3585, %v3587
    %v3628 = vsel %vm701, %v3589, %v3591
    %v3629 = vsel %vm701, %v3591, %v3593
    %v3630 = vsel %vm701, %v3593, %v3595
    %v3631 = vsel %vm701, %v3595, %v3597
    %v3632 = vsel %vm701, %v3597, %v3599
    %v3633 = vsel %vm701, %v3599, %v3601
    %v3634 = vsel %vm701, %v3603, %v3605
    %v3635 = vsel %vm701, %v3605, %v3607
    %v3636 = vsel %vm701, %v3607, %v3609
    %v3637 = vsel %vm701, %v3609, %v3611
    %v3638 = vsel %vm701, %v3611, %v3613
    %v3639 = vsel %vm701, %v3613, %v3615
    %v3668 = vsel %vm701, %v3573, 0.0
    %v3669 = vsel %vm701, %v3587, 0.0
    %v3670 = vsel %vm701, %v3601, 0.0
    %v3671 = vsel %vm701, %v3615, 0.0
    %3672 = vrot.lane.b32.xlu0 %v1264, 14
    %v3673 = vpop.permute.xlu0 %3672
    %3674 = vrot.lane.b32.xlu0 %v1265, 14
    %v3675 = vpop.permute.xlu0 %3674
    %3676 = vrot.lane.b32.xlu0 %v1266, 14
    %v3677 = vpop.permute.xlu0 %3676
    %3678 = vrot.lane.b32.xlu0 %v1267, 14
    %v3679 = vpop.permute.xlu0 %3678
    %3680 = vrot.lane.b32.xlu0 %v1268, 14
    %v3681 = vpop.permute.xlu0 %3680
    %3682 = vrot.lane.b32.xlu0 %v1269, 14
    %v3683 = vpop.permute.xlu0 %3682
    %3684 = vrot.lane.b32.xlu0 %v1270, 14
    %v3685 = vpop.permute.xlu0 %3684
    %3686 = vrot.lane.b32.xlu0 %v1271, 14
    %v3687 = vpop.permute.xlu0 %3686
    %3688 = vrot.lane.b32.xlu0 %v1272, 14
    %v3689 = vpop.permute.xlu0 %3688
    %3690 = vrot.lane.b32.xlu0 %v1273, 14
    %v3691 = vpop.permute.xlu0 %3690
    %3692 = vrot.lane.b32.xlu0 %v1274, 14
    %v3693 = vpop.permute.xlu0 %3692
    %3694 = vrot.lane.b32.xlu0 %v1275, 14
    %v3695 = vpop.permute.xlu0 %3694
    %3696 = vrot.lane.b32.xlu0 %v1276, 14
    %v3697 = vpop.permute.xlu0 %3696
    %3698 = vrot.lane.b32.xlu0 %v1277, 14
    %v3699 = vpop.permute.xlu0 %3698
    %3700 = vrot.lane.b32.xlu0 %v1278, 14
    %v3701 = vpop.permute.xlu0 %3700
    %3702 = vrot.lane.b32.xlu0 %v1279, 14
    %v3703 = vpop.permute.xlu0 %3702
    %3704 = vrot.lane.b32.xlu0 %v1280, 14
    %v3705 = vpop.permute.xlu0 %3704
    %3706 = vrot.lane.b32.xlu0 %v1281, 14
    %v3707 = vpop.permute.xlu0 %3706
    %3708 = vrot.lane.b32.xlu0 %v1282, 14
    %v3709 = vpop.permute.xlu0 %3708
    %3710 = vrot.lane.b32.xlu0 %v1283, 14
    %v3711 = vpop.permute.xlu0 %3710
    %3712 = vrot.lane.b32.xlu0 %v1284, 14
    %v3713 = vpop.permute.xlu0 %3712
    %3714 = vrot.lane.b32.xlu0 %v1285, 14
    %v3715 = vpop.permute.xlu0 %3714
    %3716 = vrot.lane.b32.xlu0 %v1286, 14
    %v3717 = vpop.permute.xlu0 %3716
    %3718 = vrot.lane.b32.xlu0 %v1287, 14
    %v3719 = vpop.permute.xlu0 %3718
    %3720 = vrot.lane.b32.xlu0 %v1288, 14
    %v3721 = vpop.permute.xlu0 %3720
    %3722 = vrot.lane.b32.xlu0 %v1289, 14
    %v3723 = vpop.permute.xlu0 %3722
    %3724 = vrot.lane.b32.xlu0 %v1290, 14
    %v3725 = vpop.permute.xlu0 %3724
    %3726 = vrot.lane.b32.xlu0 %v1291, 14
    %v3727 = vpop.permute.xlu0 %3726
    %v3728 = vsel %vm730, %v3673, %v3675
    %v3729 = vsel %vm730, %v3675, %v3677
    %v3730 = vsel %vm730, %v3677, %v3679
    %v3731 = vsel %vm730, %v3679, %v3681
    %v3732 = vsel %vm730, %v3681, %v3683
    %v3733 = vsel %vm730, %v3683, %v3685
    %v3734 = vsel %vm730, %v3687, %v3689
    %v3735 = vsel %vm730, %v3689, %v3691
    %v3736 = vsel %vm730, %v3691, %v3693
    %v3737 = vsel %vm730, %v3693, %v3695
    %v3738 = vsel %vm730, %v3695, %v3697
    %v3739 = vsel %vm730, %v3697, %v3699
    %v3740 = vsel %vm730, %v3701, %v3703
    %v3741 = vsel %vm730, %v3703, %v3705
    %v3742 = vsel %vm730, %v3705, %v3707
    %v3743 = vsel %vm730, %v3707, %v3709
    %v3744 = vsel %vm730, %v3709, %v3711
    %v3745 = vsel %vm730, %v3711, %v3713
    %v3746 = vsel %vm730, %v3715, %v3717
    %v3747 = vsel %vm730, %v3717, %v3719
    %v3748 = vsel %vm730, %v3719, %v3721
    %v3749 = vsel %vm730, %v3721, %v3723
    %v3750 = vsel %vm730, %v3723, %v3725
    %v3751 = vsel %vm730, %v3725, %v3727
    %v3780 = vsel %vm730, %v3685, 0.0
    %v3781 = vsel %vm730, %v3699, 0.0
    %v3782 = vsel %vm730, %v3713, 0.0
    %v3783 = vsel %vm730, %v3727, 0.0
    %3784 = vrot.lane.b32.xlu0 %v1264, 13
    %v3785 = vpop.permute.xlu0 %3784
    %3786 = vrot.lane.b32.xlu0 %v1265, 13
    %v3787 = vpop.permute.xlu0 %3786
    %3788 = vrot.lane.b32.xlu0 %v1266, 13
    %v3789 = vpop.permute.xlu0 %3788
    %3790 = vrot.lane.b32.xlu0 %v1267, 13
    %v3791 = vpop.permute.xlu0 %3790
    %3792 = vrot.lane.b32.xlu0 %v1268, 13
    %v3793 = vpop.permute.xlu0 %3792
    %3794 = vrot.lane.b32.xlu0 %v1269, 13
    %v3795 = vpop.permute.xlu0 %3794
    %3796 = vrot.lane.b32.xlu0 %v1270, 13
    %v3797 = vpop.permute.xlu0 %3796
    %3798 = vrot.lane.b32.xlu0 %v1271, 13
    %v3799 = vpop.permute.xlu0 %3798
    %3800 = vrot.lane.b32.xlu0 %v1272, 13
    %v3801 = vpop.permute.xlu0 %3800
    %3802 = vrot.lane.b32.xlu0 %v1273, 13
    %v3803 = vpop.permute.xlu0 %3802
    %3804 = vrot.lane.b32.xlu0 %v1274, 13
    %v3805 = vpop.permute.xlu0 %3804
    %3806 = vrot.lane.b32.xlu0 %v1275, 13
    %v3807 = vpop.permute.xlu0 %3806
    %3808 = vrot.lane.b32.xlu0 %v1276, 13
    %v3809 = vpop.permute.xlu0 %3808
    %3810 = vrot.lane.b32.xlu0 %v1277, 13
    %v3811 = vpop.permute.xlu0 %3810
    %3812 = vrot.lane.b32.xlu0 %v1278, 13
    %v3813 = vpop.permute.xlu0 %3812
    %3814 = vrot.lane.b32.xlu0 %v1279, 13
    %v3815 = vpop.permute.xlu0 %3814
    %3816 = vrot.lane.b32.xlu0 %v1280, 13
    %v3817 = vpop.permute.xlu0 %3816
    %3818 = vrot.lane.b32.xlu0 %v1281, 13
    %v3819 = vpop.permute.xlu0 %3818
    %3820 = vrot.lane.b32.xlu0 %v1282, 13
    %v3821 = vpop.permute.xlu0 %3820
    %3822 = vrot.lane.b32.xlu0 %v1283, 13
    %v3823 = vpop.permute.xlu0 %3822
    %3824 = vrot.lane.b32.xlu0 %v1284, 13
    %v3825 = vpop.permute.xlu0 %3824
    %3826 = vrot.lane.b32.xlu0 %v1285, 13
    %v3827 = vpop.permute.xlu0 %3826
    %3828 = vrot.lane.b32.xlu0 %v1286, 13
    %v3829 = vpop.permute.xlu0 %3828
    %3830 = vrot.lane.b32.xlu0 %v1287, 13
    %v3831 = vpop.permute.xlu0 %3830
    %3832 = vrot.lane.b32.xlu0 %v1288, 13
    %v3833 = vpop.permute.xlu0 %3832
    %3834 = vrot.lane.b32.xlu0 %v1289, 13
    %v3835 = vpop.permute.xlu0 %3834
    %3836 = vrot.lane.b32.xlu0 %v1290, 13
    %v3837 = vpop.permute.xlu0 %3836
    %3838 = vrot.lane.b32.xlu0 %v1291, 13
    %v3839 = vpop.permute.xlu0 %3838
    %v3840 = vsel %vm759, %v3785, %v3787
    %v3841 = vsel %vm759, %v3787, %v3789
    %v3842 = vsel %vm759, %v3789, %v3791
    %v3843 = vsel %vm759, %v3791, %v3793
    %v3844 = vsel %vm759, %v3793, %v3795
    %v3845 = vsel %vm759, %v3795, %v3797
    %v3846 = vsel %vm759, %v3799, %v3801
    %v3847 = vsel %vm759, %v3801, %v3803
    %v3848 = vsel %vm759, %v3803, %v3805
    %v3849 = vsel %vm759, %v3805, %v3807
    %v3850 = vsel %vm759, %v3807, %v3809
    %v3851 = vsel %vm759, %v3809, %v3811
    %v3852 = vsel %vm759, %v3813, %v3815
    %v3853 = vsel %vm759, %v3815, %v3817
    %v3854 = vsel %vm759, %v3817, %v3819
    %v3855 = vsel %vm759, %v3819, %v3821
    %v3856 = vsel %vm759, %v3821, %v3823
    %v3857 = vsel %vm759, %v3823, %v3825
    %v3858 = vsel %vm759, %v3827, %v3829
    %v3859 = vsel %vm759, %v3829, %v3831
    %v3860 = vsel %vm759, %v3831, %v3833
    %v3861 = vsel %vm759, %v3833, %v3835
    %v3862 = vsel %vm759, %v3835, %v3837
    %v3863 = vsel %vm759, %v3837, %v3839
    %v3892 = vsel %vm759, %v3797, 0.0
    %v3893 = vsel %vm759, %v3811, 0.0
    %v3894 = vsel %vm759, %v3825, 0.0
    %v3895 = vsel %vm759, %v3839, 0.0
    %3896 = vrot.lane.b32.xlu0 %v1264, 12
    %v3897 = vpop.permute.xlu0 %3896
    %3898 = vrot.lane.b32.xlu0 %v1265, 12
    %v3899 = vpop.permute.xlu0 %3898
    %3900 = vrot.lane.b32.xlu0 %v1266, 12
    %v3901 = vpop.permute.xlu0 %3900
    %3902 = vrot.lane.b32.xlu0 %v1267, 12
    %v3903 = vpop.permute.xlu0 %3902
    %3904 = vrot.lane.b32.xlu0 %v1268, 12
    %v3905 = vpop.permute.xlu0 %3904
    %3906 = vrot.lane.b32.xlu0 %v1269, 12
    %v3907 = vpop.permute.xlu0 %3906
    %3908 = vrot.lane.b32.xlu0 %v1270, 12
    %v3909 = vpop.permute.xlu0 %3908
    %3910 = vrot.lane.b32.xlu0 %v1271, 12
    %v3911 = vpop.permute.xlu0 %3910
    %3912 = vrot.lane.b32.xlu0 %v1272, 12
    %v3913 = vpop.permute.xlu0 %3912
    %3914 = vrot.lane.b32.xlu0 %v1273, 12
    %v3915 = vpop.permute.xlu0 %3914
    %3916 = vrot.lane.b32.xlu0 %v1274, 12
    %v3917 = vpop.permute.xlu0 %3916
    %3918 = vrot.lane.b32.xlu0 %v1275, 12
    %v3919 = vpop.permute.xlu0 %3918
    %3920 = vrot.lane.b32.xlu0 %v1276, 12
    %v3921 = vpop.permute.xlu0 %3920
    %3922 = vrot.lane.b32.xlu0 %v1277, 12
    %v3923 = vpop.permute.xlu0 %3922
    %3924 = vrot.lane.b32.xlu0 %v1278, 12
    %v3925 = vpop.permute.xlu0 %3924
    %3926 = vrot.lane.b32.xlu0 %v1279, 12
    %v3927 = vpop.permute.xlu0 %3926
    %3928 = vrot.lane.b32.xlu0 %v1280, 12
    %v3929 = vpop.permute.xlu0 %3928
    %3930 = vrot.lane.b32.xlu0 %v1281, 12
    %v3931 = vpop.permute.xlu0 %3930
    %3932 = vrot.lane.b32.xlu0 %v1282, 12
    %v3933 = vpop.permute.xlu0 %3932
    %3934 = vrot.lane.b32.xlu0 %v1283, 12
    %v3935 = vpop.permute.xlu0 %3934
    %3936 = vrot.lane.b32.xlu0 %v1284, 12
    %v3937 = vpop.permute.xlu0 %3936
    %3938 = vrot.lane.b32.xlu0 %v1285, 12
    %v3939 = vpop.permute.xlu0 %3938
    %3940 = vrot.lane.b32.xlu0 %v1286, 12
    %v3941 = vpop.permute.xlu0 %3940
    %3942 = vrot.lane.b32.xlu0 %v1287, 12
    %v3943 = vpop.permute.xlu0 %3942
    %3944 = vrot.lane.b32.xlu0 %v1288, 12
    %v3945 = vpop.permute.xlu0 %3944
    %3946 = vrot.lane.b32.xlu0 %v1289, 12
    %v3947 = vpop.permute.xlu0 %3946
    %3948 = vrot.lane.b32.xlu0 %v1290, 12
    %v3949 = vpop.permute.xlu0 %3948
    %3950 = vrot.lane.b32.xlu0 %v1291, 12
    %v3951 = vpop.permute.xlu0 %3950
    %v3952 = vsel %vm788, %v3897, %v3899
    %v3953 = vsel %vm788, %v3899, %v3901
    %v3954 = vsel %vm788, %v3901, %v3903
    %v3955 = vsel %vm788, %v3903, %v3905
    %v3956 = vsel %vm788, %v3905, %v3907
    %v3957 = vsel %vm788, %v3907, %v3909
    %v3958 = vsel %vm788, %v3911, %v3913
    %v3959 = vsel %vm788, %v3913, %v3915
    %v3960 = vsel %vm788, %v3915, %v3917
    %v3961 = vsel %vm788, %v3917, %v3919
    %v3962 = vsel %vm788, %v3919, %v3921
    %v3963 = vsel %vm788, %v3921, %v3923
    %v3964 = vsel %vm788, %v3925, %v3927
    %v3965 = vsel %vm788, %v3927, %v3929
    %v3966 = vsel %vm788, %v3929, %v3931
    %v3967 = vsel %vm788, %v3931, %v3933
    %v3968 = vsel %vm788, %v3933, %v3935
    %v3969 = vsel %vm788, %v3935, %v3937
    %v3970 = vsel %vm788, %v3939, %v3941
    %v3971 = vsel %vm788, %v3941, %v3943
    %v3972 = vsel %vm788, %v3943, %v3945
    %v3973 = vsel %vm788, %v3945, %v3947
    %v3974 = vsel %vm788, %v3947, %v3949
    %v3975 = vsel %vm788, %v3949, %v3951
    %v4004 = vsel %vm788, %v3909, 0.0
    %v4005 = vsel %vm788, %v3923, 0.0
    %v4006 = vsel %vm788, %v3937, 0.0
    %v4007 = vsel %vm788, %v3951, 0.0
    %v4008 = vld [vmem:[#allocation6] sm:$0xff]
    %v4009 = vld [vmem:[#allocation6 + $0x8] sm:$0xff]
    %v4010 = vld [vmem:[#allocation6 + $0x10] sm:$0xff]
    %v4011 = vld [vmem:[#allocation6 + $0x18] sm:$0xff]
    %v4012 = vld [vmem:[#allocation6 + $0x20] sm:$0xff]
    %v4013 = vld [vmem:[#allocation6 + $0x28] sm:$0xff]
    %v4014 = vld [vmem:[#allocation6 + $0x30] sm:$0xff]
    %v4015 = vld [vmem:[#allocation6 + $0x38] sm:$0xff]
    %v4016 = vld [vmem:[#allocation6 + $0x40] sm:$0xff]
    %v4017 = vld [vmem:[#allocation6 + $0x48] sm:$0xff]
    %v4018 = vld [vmem:[#allocation6 + $0x50] sm:$0xff]
    %v4019 = vld [vmem:[#allocation6 + $0x58] sm:$0xff]
    %v4020 = vld [vmem:[#allocation6 + $0x60] sm:$0xff]
    %v4021 = vld [vmem:[#allocation6 + $0x68] sm:$0xff]
    %v4022 = vld [vmem:[#allocation6 + $0x70] sm:$0xff]
    %v4023 = vld [vmem:[#allocation6 + $0x78] sm:$0xff]
    %v4024 = vld [vmem:[#allocation6 + $0x80] sm:$0xff]
    %v4025 = vld [vmem:[#allocation6 + $0x88] sm:$0xff]
    %v4026 = vld [vmem:[#allocation6 + $0x90] sm:$0xff]
    %v4027 = vld [vmem:[#allocation6 + $0x98] sm:$0xff]
    %v4028 = vld [vmem:[#allocation6 + $0xa0] sm:$0xff]
    %v4029 = vld [vmem:[#allocation6 + $0xa8] sm:$0xff]
    %v4030 = vld [vmem:[#allocation6 + $0xb0] sm:$0xff]
    %v4031 = vld [vmem:[#allocation6 + $0xb8] sm:$0xff]
    %v4032 = vld [vmem:[#allocation6 + $0xc0] sm:$0xff]
    %v4033 = vld [vmem:[#allocation6 + $0xc8] sm:$0xff]
    %v4034 = vld [vmem:[#allocation6 + $0xd0] sm:$0xff]
    %v4035 = vld [vmem:[#allocation6 + $0xd8] sm:$0xff]
    %v4036 = vld [vmem:[#allocation6 + $0xe0] sm:$0xff]
    %v4037 = vld [vmem:[#allocation6 + $0xe8] sm:$0xff]
    %v4038 = vld [vmem:[#allocation6 + $0xf0] sm:$0xff]
    %v4039 = vld [vmem:[#allocation6 + $0xf8] sm:$0xff]
    %v4040 = vld [vmem:[#allocation6 + $0x100] sm:$0xff]
    %v4041 = vld [vmem:[#allocation6 + $0x108] sm:$0xff]
    %v4042 = vld [vmem:[#allocation6 + $0x110] sm:$0xff]
    %v4043 = vld [vmem:[#allocation6 + $0x118] sm:$0xff]
    %v4044 = vld [vmem:[#allocation6 + $0x120] sm:$0xff]
    %v4045 = vld [vmem:[#allocation6 + $0x128] sm:$0xff]
    %v4046 = vld [vmem:[#allocation6 + $0x130] sm:$0xff]
    %v4047 = vld [vmem:[#allocation6 + $0x138] sm:$0xff]
    %v4048 = vld [vmem:[#allocation6 + $0x140] sm:$0xff]
    %v4049 = vld [vmem:[#allocation6 + $0x148] sm:$0xff]
    %v4050 = vld [vmem:[#allocation6 + $0x150] sm:$0xff]
    %v4051 = vld [vmem:[#allocation6 + $0x158] sm:$0xff]
    %v4052 = vld [vmem:[#allocation6 + $0x160] sm:$0xff]
    %v4053 = vld [vmem:[#allocation6 + $0x168] sm:$0xff]
    %v4054 = vld [vmem:[#allocation6 + $0x170] sm:$0xff]
    %v4055 = vld [vmem:[#allocation6 + $0x178] sm:$0xff]
    %v4056 = vld [vmem:[#allocation6 + $0x180] sm:$0xff]
    %v4057 = vld [vmem:[#allocation6 + $0x188] sm:$0xff]
    %v4058 = vld [vmem:[#allocation6 + $0x190] sm:$0xff]
    %v4059 = vld [vmem:[#allocation6 + $0x198] sm:$0xff]
    %v4060 = vld [vmem:[#allocation6 + $0x1a0] sm:$0xff]
    %v4061 = vld [vmem:[#allocation6 + $0x1a8] sm:$0xff]
    %v4062 = vld [vmem:[#allocation6 + $0x1b0] sm:$0xff]
    %v4063 = vld [vmem:[#allocation6 + $0x1b8] sm:$0xff]
    %v4064 = vld [vmem:[%s5] sm:$0xff]
    %v4065 = vld [vmem:[%s5 + $0x8] sm:$0xff]
    %v4066 = vld [vmem:[%s5 + $0x10] sm:$0xff]
    %v4067 = vld [vmem:[%s5 + $0x18] sm:$0xff]
    %v4068 = vld [vmem:[%s5 + $0x20] sm:$0xff]
    %v4069 = vld [vmem:[%s5 + $0x28] sm:$0xff]
    %v4070 = vld [vmem:[%s5 + $0x30] sm:$0xff]
    %v4071 = vld [vmem:[%s5 + $0x38] sm:$0xff]
    %4073 = vset.pattern.permute.xlu0 0
    %4074 = vperm.xlu0 %4073, %v4064
    %v4075 = vpop.permute.xlu0 %4074
    %4078 = vset.pattern.permute.xlu0 0
    %4079 = vperm.xlu0 %4078, %v4065
    %v4080 = vpop.permute.xlu0 %4079
    %4083 = vset.pattern.permute.xlu0 0
    %4084 = vperm.xlu0 %4083, %v4066
    %v4085 = vpop.permute.xlu0 %4084
    %4088 = vset.pattern.permute.xlu0 0
    %4089 = vperm.xlu0 %4088, %v4067
    %v4090 = vpop.permute.xlu0 %4089
    %4093 = vset.pattern.permute.xlu0 0
    %4094 = vperm.xlu0 %4093, %v4068
    %v4095 = vpop.permute.xlu0 %4094
    %4098 = vset.pattern.permute.xlu0 0
    %4099 = vperm.xlu0 %4098, %v4069
    %v4100 = vpop.permute.xlu0 %4099
    %4103 = vset.pattern.permute.xlu0 0
    %4104 = vperm.xlu0 %4103, %v4070
    %v4105 = vpop.permute.xlu0 %4104
    %4108 = vset.pattern.permute.xlu0 0
    %4109 = vperm.xlu0 %4108, %v4071
    %v4110 = vpop.permute.xlu0 %4109
    %vm4112 = vcmask 261120
    %v4114 = vsel %vm4112, %v4014, 0
    %v4117 = vsel %vm4112, %v4021, 0
    %v4120 = vsel %vm4112, %v4028, 0
    %v4123 = vsel %vm4112, %v4035, 0
    %v4126 = vsel %vm4112, %v4042, 0
    %v4129 = vsel %vm4112, %v4049, 0
    %v4132 = vsel %vm4112, %v4056, 0
    %v4135 = vsel %vm4112, %v4063, 0
    %4137 = vmatprep.subr.mxu0 %v1619
    %4138 = vmatpush1.msra.mxu0 %v1618
    %4139 = vmatprep.subr.mxu0 %v1613
    %4140 = vmatpush1.msra.mxu0 %v1612
    %4141 = vmatprep.subr.mxu0 %v1607
    %4142 = vmatpush1.msra.mxu0 %v1606
    %4143 = vmatprep.subr.mxu0 %v1601
    %4144 = vmatpush1.msra.mxu0 %v1600
    %4145 = vmatprep.subr.mxu0 %v1507
    %4146 = vmatpush1.msra.mxu0 %v1506
    %4147 = vmatprep.subr.mxu0 %v1501
    %4148 = vmatpush1.msra.mxu0 %v1500
    %4149 = vmatprep.subr.mxu0 %v1495
    %4150 = vmatpush1.msra.mxu0 %v1494
    %4151 = vmatprep.subr.mxu0 %v1489
    %4152 = vmatpush1.msra.mxu0 %v1488
    %4153 = vmatprep.subr.mxu0 %v1395
    %4154 = vmatpush1.msra.mxu0 %v1394
    %4155 = vmatprep.subr.mxu0 %v1389
    %4156 = vmatpush1.msra.mxu0 %v1388
    %4157 = vmatprep.subr.mxu0 %v1383
    %4158 = vmatpush1.msra.mxu0 %v1382
    %4159 = vmatprep.subr.mxu0 %v1377
    %4160 = vmatpush1.msra.mxu0 %v1376
    %4161 = vmatprep.subr.mxu0 %v1286
    %4162 = vmatpush1.msra.mxu0 %v1285
    %4163 = vmatprep.subr.mxu0 %v1279
    %4164 = vmatpush1.msra.mxu0 %v1278
    %4165 = vmatprep.subr.mxu0 %v1272
    %4166 = vmatpush1.msra.mxu0 %v1271
    %4167 = vmatprep.subr.mxu0 %v1265
    %4168 = vmatpush1.msra.mxu0 %v1264
    %4169 = vmatprep.subr.mxu0 %v2067
    %4170 = vmatpush2.msra.mxu0 %v2066
    %4171 = vmatprep.subr.mxu0 %v2061
    %4172 = vmatpush2.msra.mxu0 %v2060
    %4173 = vmatprep.subr.mxu0 %v2055
    %4174 = vmatpush2.msra.mxu0 %v2054
    %4175 = vmatprep.subr.mxu0 %v2049
    %4176 = vmatpush2.msra.mxu0 %v2048
    %4177 = vmatprep.subr.mxu0 %v1955
    %4178 = vmatpush2.msra.mxu0 %v1954
    %4179 = vmatprep.subr.mxu0 %v1949
    %4180 = vmatpush2.msra.mxu0 %v1948
    %4181 = vmatprep.subr.mxu0 %v1943
    %4182 = vmatpush2.msra.mxu0 %v1942
    %4183 = vmatprep.subr.mxu0 %v1937
    %4184 = vmatpush2.msra.mxu0 %v1936
    %4185 = vmatprep.subr.mxu0 %v1843
    %4186 = vmatpush2.msra.mxu0 %v1842
    %4187 = vmatprep.subr.mxu0 %v1837
    %4188 = vmatpush2.msra.mxu0 %v1836
    %4189 = vmatprep.subr.mxu0 %v1831
    %4190 = vmatpush2.msra.mxu0 %v1830
    %4191 = vmatprep.subr.mxu0 %v1825
    %4192 = vmatpush2.msra.mxu0 %v1824
    %4193 = vmatprep.subr.mxu0 %v1731
    %4194 = vmatpush2.msra.mxu0 %v1730
    %4195 = vmatprep.subr.mxu0 %v1725
    %4196 = vmatpush2.msra.mxu0 %v1724
    %4197 = vmatprep.subr.mxu0 %v1719
    %4198 = vmatpush2.msra.mxu0 %v1718
    %4199 = vmatprep.subr.mxu0 %v1713
    %4200 = vmatpush2.msra.mxu0 %v1712
    %4201 = vmatprep.mubr.f32.mxu0 %v4009
    %4202 = vmatmul.mubr.f32.gmra.mxu0 %v4008
    %v4203 = vpop.f32.mrf.mxu0
    %v4204 = vadd.f32 %v4075, %v4203
    %v4205 = vpop.f32.mrf.mxu0
    %v4206 = vadd.f32 %v4075, %v4205
    %4207 = vmatprep.mubr.f32.mxu0 %v4016
    %4208 = vmatmul.mubr.f32.gmra.mxu0 %v4015
    %v4209 = vpop.f32.mrf.mxu0
    %v4210 = vadd.f32 %v4080, %v4209
    %v4211 = vpop.f32.mrf.mxu0
    %v4212 = vadd.f32 %v4080, %v4211
    %4213 = vmatprep.mubr.f32.mxu0 %v4023
    %4214 = vmatmul.mubr.f32.gmra.mxu0 %v4022
    %v4215 = vpop.f32.mrf.mxu0
    %v4216 = vadd.f32 %v4085, %v4215
    %v4217 = vpop.f32.mrf.mxu0
    %v4218 = vadd.f32 %v4085, %v4217
    %4219 = vmatprep.mubr.f32.mxu0 %v4030
    %4220 = vmatmul.mubr.f32.gmra.mxu0 %v4029
    %v4221 = vpop.f32.mrf.mxu0
    %v4222 = vadd.f32 %v4090, %v4221
    %v4223 = vpop.f32.mrf.mxu0
    %v4224 = vadd.f32 %v4090, %v4223
    %4225 = vmatprep.mubr.f32.mxu0 %v4037
    %4226 = vmatmul.mubr.f32.gmra.mxu0 %v4036
    %v4227 = vpop.f32.mrf.mxu0
    %v4228 = vadd.f32 %v4095, %v4227
    %v4229 = vpop.f32.mrf.mxu0
    %v4230 = vadd.f32 %v4095, %v4229
    %4231 = vmatprep.mubr.f32.mxu0 %v4044
    %4232 = vmatmul.mubr.f32.gmra.mxu0 %v4043
    %v4233 = vpop.f32.mrf.mxu0
    %v4234 = vadd.f32 %v4100, %v4233
    %v4235 = vpop.f32.mrf.mxu0
    %v4236 = vadd.f32 %v4100, %v4235
    %4237 = vmatprep.mubr.f32.mxu0 %v4051
    %4238 = vmatmul.mubr.f32.gmra.mxu0 %v4050
    %v4239 = vpop.f32.mrf.mxu0
    %v4240 = vadd.f32 %v4105, %v4239
    %v4241 = vpop.f32.mrf.mxu0
    %v4242 = vadd.f32 %v4105, %v4241
    %4243 = vmatprep.mubr.f32.mxu0 %v4058
    %4244 = vmatmul.mubr.f32.gmra.mxu0 %v4057
    %v4245 = vpop.f32.mrf.mxu0
    %v4246 = vadd.f32 %v4110, %v4245
    %v4247 = vpop.f32.mrf.mxu0
    %v4248 = vadd.f32 %v4110, %v4247
    %4249 = vdwg.mxu0
    %4250 = vmatprep.subr.mxu0 %v2515
    %4251 = vmatpush1.msra.mxu0 %v2514
    %4252 = vmatprep.subr.mxu0 %v2509
    %4253 = vmatpush1.msra.mxu0 %v2508
    %4254 = vmatprep.subr.mxu0 %v2503
    %4255 = vmatpush1.msra.mxu0 %v2502
    %4256 = vmatprep.subr.mxu0 %v2497
    %4257 = vmatpush1.msra.mxu0 %v2496
    %4258 = vmatprep.subr.mxu0 %v2403
    %4259 = vmatpush1.msra.mxu0 %v2402
    %4260 = vmatprep.subr.mxu0 %v2397
    %4261 = vmatpush1.msra.mxu0 %v2396
    %4262 = vmatprep.subr.mxu0 %v2391
    %4263 = vmatpush1.msra.mxu0 %v2390
    %4264 = vmatprep.subr.mxu0 %v2385
    %4265 = vmatpush1.msra.mxu0 %v2384
    %4266 = vmatprep.subr.mxu0 %v2291
    %4267 = vmatpush1.msra.mxu0 %v2290
    %4268 = vmatprep.subr.mxu0 %v2285
    %4269 = vmatpush1.msra.mxu0 %v2284
    %4270 = vmatprep.subr.mxu0 %v2279
    %4271 = vmatpush1.msra.mxu0 %v2278
    %4272 = vmatprep.subr.mxu0 %v2273
    %4273 = vmatpush1.msra.mxu0 %v2272
    %4274 = vmatprep.subr.mxu0 %v2179
    %4275 = vmatpush1.msra.mxu0 %v2178
    %4276 = vmatprep.subr.mxu0 %v2173
    %4277 = vmatpush1.msra.mxu0 %v2172
    %4278 = vmatprep.subr.mxu0 %v2167
    %4279 = vmatpush1.msra.mxu0 %v2166
    %4280 = vmatprep.subr.mxu0 %v2161
    %4281 = vmatpush1.msra.mxu0 %v2160
    %4282 = vmatprep.subr.mxu0 %v2963
    %4283 = vmatpush2.msra.mxu0 %v2962
    %4284 = vmatprep.subr.mxu0 %v2957
    %4285 = vmatpush2.msra.mxu0 %v2956
    %4286 = vmatprep.subr.mxu0 %v2951
    %4287 = vmatpush2.msra.mxu0 %v2950
    %4288 = vmatprep.subr.mxu0 %v2945
    %4289 = vmatpush2.msra.mxu0 %v2944
    %4290 = vmatprep.subr.mxu0 %v2851
    %4291 = vmatpush2.msra.mxu0 %v2850
    %4292 = vmatprep.subr.mxu0 %v2845
    %4293 = vmatpush2.msra.mxu0 %v2844
    %4294 = vmatprep.subr.mxu0 %v2839
    %4295 = vmatpush2.msra.mxu0 %v2838
    %4296 = vmatprep.subr.mxu0 %v2833
    %4297 = vmatpush2.msra.mxu0 %v2832
    %4298 = vmatprep.subr.mxu0 %v2739
    %4299 = vmatpush2.msra.mxu0 %v2738
    %4300 = vmatprep.subr.mxu0 %v2733
    %4301 = vmatpush2.msra.mxu0 %v2732
    %4302 = vmatprep.subr.mxu0 %v2727
    %4303 = vmatpush2.msra.mxu0 %v2726
    %4304 = vmatprep.subr.mxu0 %v2721
    %4305 = vmatpush2.msra.mxu0 %v2720
    %4306 = vmatprep.subr.mxu0 %v2627
    %4307 = vmatpush2.msra.mxu0 %v2626
    %4308 = vmatprep.subr.mxu0 %v2621
    %4309 = vmatpush2.msra.mxu0 %v2620
    %4310 = vmatprep.subr.mxu0 %v2615
    %4311 = vmatpush2.msra.mxu0 %v2614
    %4312 = vmatprep.subr.mxu0 %v2609
    %4313 = vmatpush2.msra.mxu0 %v2608
    %4314 = vmatprep.mubr.f32.mxu0 %v4011
    %4315 = vmatmul.mubr.f32.gmra.mxu0 %v4010
    %v4316 = vpop.f32.mrf.mxu0
    %v4317 = vadd.f32 %v4204, %v4316
    %v4318 = vpop.f32.mrf.mxu0
    %v4319 = vadd.f32 %v4206, %v4318
    %4320 = vmatprep.mubr.f32.mxu0 %v4018
    %4321 = vmatmul.mubr.f32.gmra.mxu0 %v4017
    %v4322 = vpop.f32.mrf.mxu0
    %v4323 = vadd.f32 %v4210, %v4322
    %v4324 = vpop.f32.mrf.mxu0
    %v4325 = vadd.f32 %v4212, %v4324
    %4326 = vmatprep.mubr.f32.mxu0 %v4025
    %4327 = vmatmul.mubr.f32.gmra.mxu0 %v4024
    %v4328 = vpop.f32.mrf.mxu0
    %v4329 = vadd.f32 %v4216, %v4328
    %v4330 = vpop.f32.mrf.mxu0
    %v4331 = vadd.f32 %v4218, %v4330
    %4332 = vmatprep.mubr.f32.mxu0 %v4032
    %4333 = vmatmul.mubr.f32.gmra.mxu0 %v4031
    %v4334 = vpop.f32.mrf.mxu0
    %v4335 = vadd.f32 %v4222, %v4334
    %v4336 = vpop.f32.mrf.mxu0
    %v4337 = vadd.f32 %v4224, %v4336
    %4338 = vmatprep.mubr.f32.mxu0 %v4039
    %4339 = vmatmul.mubr.f32.gmra.mxu0 %v4038
    %v4340 = vpop.f32.mrf.mxu0
    %v4341 = vadd.f32 %v4228, %v4340
    %v4342 = vpop.f32.mrf.mxu0
    %v4343 = vadd.f32 %v4230, %v4342
    %4344 = vmatprep.mubr.f32.mxu0 %v4046
    %4345 = vmatmul.mubr.f32.gmra.mxu0 %v4045
    %v4346 = vpop.f32.mrf.mxu0
    %v4347 = vadd.f32 %v4234, %v4346
    %v4348 = vpop.f32.mrf.mxu0
    %v4349 = vadd.f32 %v4236, %v4348
    %4350 = vmatprep.mubr.f32.mxu0 %v4053
    %4351 = vmatmul.mubr.f32.gmra.mxu0 %v4052
    %v4352 = vpop.f32.mrf.mxu0
    %v4353 = vadd.f32 %v4240, %v4352
    %v4354 = vpop.f32.mrf.mxu0
    %v4355 = vadd.f32 %v4242, %v4354
    %4356 = vmatprep.mubr.f32.mxu0 %v4060
    %4357 = vmatmul.mubr.f32.gmra.mxu0 %v4059
    %v4358 = vpop.f32.mrf.mxu0
    %v4359 = vadd.f32 %v4246, %v4358
    %v4360 = vpop.f32.mrf.mxu0
    %v4361 = vadd.f32 %v4248, %v4360
    %4362 = vdwg.mxu0
    %4363 = vmatprep.subr.mxu0 %v3411
    %4364 = vmatpush1.msra.mxu0 %v3410
    %4365 = vmatprep.subr.mxu0 %v3405
    %4366 = vmatpush1.msra.mxu0 %v3404
    %4367 = vmatprep.subr.mxu0 %v3399
    %4368 = vmatpush1.msra.mxu0 %v3398
    %4369 = vmatprep.subr.mxu0 %v3393
    %4370 = vmatpush1.msra.mxu0 %v3392
    %4371 = vmatprep.subr.mxu0 %v3299
    %4372 = vmatpush1.msra.mxu0 %v3298
    %4373 = vmatprep.subr.mxu0 %v3293
    %4374 = vmatpush1.msra.mxu0 %v3292
    %4375 = vmatprep.subr.mxu0 %v3287
    %4376 = vmatpush1.msra.mxu0 %v3286
    %4377 = vmatprep.subr.mxu0 %v3281
    %4378 = vmatpush1.msra.mxu0 %v3280
    %4379 = vmatprep.subr.mxu0 %v3187
    %4380 = vmatpush1.msra.mxu0 %v3186
    %4381 = vmatprep.subr.mxu0 %v3181
    %4382 = vmatpush1.msra.mxu0 %v3180
    %4383 = vmatprep.subr.mxu0 %v3175
    %4384 = vmatpush1.msra.mxu0 %v3174
    %4385 = vmatprep.subr.mxu0 %v3169
    %4386 = vmatpush1.msra.mxu0 %v3168
    %4387 = vmatprep.subr.mxu0 %v3075
    %4388 = vmatpush1.msra.mxu0 %v3074
    %4389 = vmatprep.subr.mxu0 %v3069
    %4390 = vmatpush1.msra.mxu0 %v3068
    %4391 = vmatprep.subr.mxu0 %v3063
    %4392 = vmatpush1.msra.mxu0 %v3062
    %4393 = vmatprep.subr.mxu0 %v3057
    %4394 = vmatpush1.msra.mxu0 %v3056
    %4395 = vmatprep.subr.mxu0 %v3859
    %4396 = vmatpush2.msra.mxu0 %v3858
    %4397 = vmatprep.subr.mxu0 %v3853
    %4398 = vmatpush2.msra.mxu0 %v3852
    %4399 = vmatprep.subr.mxu0 %v3847
    %4400 = vmatpush2.msra.mxu0 %v3846
    %4401 = vmatprep.subr.mxu0 %v3841
    %4402 = vmatpush2.msra.mxu0 %v3840
    %4403 = vmatprep.subr.mxu0 %v3747
    %4404 = vmatpush2.msra.mxu0 %v3746
    %4405 = vmatprep.subr.mxu0 %v3741
    %4406 = vmatpush2.msra.mxu0 %v3740
    %4407 = vmatprep.subr.mxu0 %v3735
    %4408 = vmatpush2.msra.mxu0 %v3734
    %4409 = vmatprep.subr.mxu0 %v3729
    %4410 = vmatpush2.msra.mxu0 %v3728
    %4411 = vmatprep.subr.mxu0 %v3635
    %4412 = vmatpush2.msra.mxu0 %v3634
    %4413 = vmatprep.subr.mxu0 %v3629
    %4414 = vmatpush2.msra.mxu0 %v3628
    %4415 = vmatprep.subr.mxu0 %v3623
    %4416 = vmatpush2.msra.mxu0 %v3622
    %4417 = vmatprep.subr.mxu0 %v3617
    %4418 = vmatpush2.msra.mxu0 %v3616
    %4419 = vmatprep.subr.mxu0 %v3523
    %4420 = vmatpush2.msra.mxu0 %v3522
    %4421 = vmatprep.subr.mxu0 %v3517
    %4422 = vmatpush2.msra.mxu0 %v3516
    %4423 = vmatprep.subr.mxu0 %v3511
    %4424 = vmatpush2.msra.mxu0 %v3510
    %4425 = vmatprep.subr.mxu0 %v3505
    %4426 = vmatpush2.msra.mxu0 %v3504
    %4427 = vmatprep.mubr.f32.mxu0 %v4013
    %4428 = vmatmul.mubr.f32.gmra.mxu0 %v4012
    %v4429 = vpop.f32.mrf.mxu0
    %v4430 = vadd.f32 %v4317, %v4429
    %v4431 = vpop.f32.mrf.mxu0
    %v4432 = vadd.f32 %v4319, %v4431
    %4433 = vmatprep.mubr.f32.mxu0 %v4020
    %4434 = vmatmul.mubr.f32.gmra.mxu0 %v4019
    %v4435 = vpop.f32.mrf.mxu0
    %v4436 = vadd.f32 %v4323, %v4435
    %v4437 = vpop.f32.mrf.mxu0
    %v4438 = vadd.f32 %v4325, %v4437
    %4439 = vmatprep.mubr.f32.mxu0 %v4027
    %4440 = vmatmul.mubr.f32.gmra.mxu0 %v4026
    %v4441 = vpop.f32.mrf.mxu0
    %v4442 = vadd.f32 %v4329, %v4441
    %v4443 = vpop.f32.mrf.mxu0
    %v4444 = vadd.f32 %v4331, %v4443
    %4445 = vmatprep.mubr.f32.mxu0 %v4034
    %4446 = vmatmul.mubr.f32.gmra.mxu0 %v4033
    %v4447 = vpop.f32.mrf.mxu0
    %v4448 = vadd.f32 %v4335, %v4447
    %v4449 = vpop.f32.mrf.mxu0
    %v4450 = vadd.f32 %v4337, %v4449
    %4451 = vmatprep.mubr.f32.mxu0 %v4041
    %4452 = vmatmul.mubr.f32.gmra.mxu0 %v4040
    %v4453 = vpop.f32.mrf.mxu0
    %v4454 = vadd.f32 %v4341, %v4453
    %v4455 = vpop.f32.mrf.mxu0
    %v4456 = vadd.f32 %v4343, %v4455
    %4457 = vmatprep.mubr.f32.mxu0 %v4048
    %4458 = vmatmul.mubr.f32.gmra.mxu0 %v4047
    %v4459 = vpop.f32.mrf.mxu0
    %v4460 = vadd.f32 %v4347, %v4459
    %v4461 = vpop.f32.mrf.mxu0
    %v4462 = vadd.f32 %v4349, %v4461
    %4463 = vmatprep.mubr.f32.mxu0 %v4055
    %4464 = vmatmul.mubr.f32.gmra.mxu0 %v4054
    %v4465 = vpop.f32.mrf.mxu0
    %v4466 = vadd.f32 %v4353, %v4465
    %v4467 = vpop.f32.mrf.mxu0
    %v4468 = vadd.f32 %v4355, %v4467
    %4469 = vmatprep.mubr.f32.mxu0 %v4062
    %4470 = vmatmul.mubr.f32.gmra.mxu0 %v4061
    %v4471 = vpop.f32.mrf.mxu0
    %v4472 = vadd.f32 %v4359, %v4471
    %v4473 = vpop.f32.mrf.mxu0
    %v4474 = vadd.f32 %v4361, %v4473
    %4475 = vdwg.mxu0
    %4476 = vmatprep.subr.mxu0 0.0
    %4477 = vmatpush1.msra.mxu0 0.0
    %4478 = vmatprep.subr.mxu0 0.0
    %4479 = vmatpush1.msra.mxu0 0.0
    %4480 = vmatprep.subr.mxu0 0.0
    %4481 = vmatpush1.msra.mxu0 0.0
    %4482 = vmatprep.subr.mxu0 0.0
    %4483 = vmatpush1.msra.mxu0 0.0
    %4484 = vmatprep.subr.mxu0 0.0
    %4485 = vmatpush1.msra.mxu0 0.0
    %4486 = vmatprep.subr.mxu0 0.0
    %4487 = vmatpush1.msra.mxu0 0.0
    %4488 = vmatprep.subr.mxu0 0.0
    %4489 = vmatpush1.msra.mxu0 0.0
    %4490 = vmatprep.subr.mxu0 0.0
    %4491 = vmatpush1.msra.mxu0 0.0
    %4492 = vmatprep.subr.mxu0 0.0
    %4493 = vmatpush1.msra.mxu0 0.0
    %4494 = vmatprep.subr.mxu0 0.0
    %4495 = vmatpush1.msra.mxu0 0.0
    %4496 = vmatprep.subr.mxu0 0.0
    %4497 = vmatpush1.msra.mxu0 0.0
    %4498 = vmatprep.subr.mxu0 0.0
    %4499 = vmatpush1.msra.mxu0 0.0
    %4500 = vmatprep.subr.mxu0 %v3971
    %4501 = vmatpush1.msra.mxu0 %v3970
    %4502 = vmatprep.subr.mxu0 %v3965
    %4503 = vmatpush1.msra.mxu0 %v3964
    %4504 = vmatprep.subr.mxu0 %v3959
    %4505 = vmatpush1.msra.mxu0 %v3958
    %4506 = vmatprep.subr.mxu0 %v3953
    %4507 = vmatpush1.msra.mxu0 %v3952
    %4508 = vmatprep.subr.mxu0 0.0
    %4509 = vmatpush2.msra.mxu0 0.0
    %4510 = vmatprep.subr.mxu0 0.0
    %4511 = vmatpush2.msra.mxu0 0.0
    %4512 = vmatprep.subr.mxu0 0.0
    %4513 = vmatpush2.msra.mxu0 0.0
    %4514 = vmatprep.subr.mxu0 0.0
    %4515 = vmatpush2.msra.mxu0 0.0
    %4516 = vmatprep.subr.mxu0 0.0
    %4517 = vmatpush2.msra.mxu0 0.0
    %4518 = vmatprep.subr.mxu0 0.0
    %4519 = vmatpush2.msra.mxu0 0.0
    %4520 = vmatprep.subr.mxu0 0.0
    %4521 = vmatpush2.msra.mxu0 0.0
    %4522 = vmatprep.subr.mxu0 0.0
    %4523 = vmatpush2.msra.mxu0 0.0
    %4524 = vmatprep.subr.mxu0 0.0
    %4525 = vmatpush2.msra.mxu0 0.0
    %4526 = vmatprep.subr.mxu0 0.0
    %4527 = vmatpush2.msra.mxu0 0.0
    %4528 = vmatprep.subr.mxu0 0.0
    %4529 = vmatpush2.msra.mxu0 0.0
    %4530 = vmatprep.subr.mxu0 0.0
    %4531 = vmatpush2.msra.mxu0 0.0
    %4532 = vmatprep.subr.mxu0 0.0
    %4533 = vmatpush2.msra.mxu0 0.0
    %4534 = vmatprep.subr.mxu0 0.0
    %4535 = vmatpush2.msra.mxu0 0.0
    %4536 = vmatprep.subr.mxu0 0.0
    %4537 = vmatpush2.msra.mxu0 0.0
    %4538 = vmatprep.subr.mxu0 0.0
    %4539 = vmatpush2.msra.mxu0 0.0
    %4540 = vmatprep.mubr.f32.mxu0 0.0
    %4541 = vmatmul.mubr.f32.gmra.mxu0 %v4114
    %v4542 = vpop.f32.mrf.mxu0
    %v4543 = vadd.f32 %v4430, %v4542
    %v4544 = vpop.f32.mrf.mxu0
    %v4545 = vadd.f32 %v4432, %v4544
    %4546 = vmatprep.mubr.f32.mxu0 0.0
    %4547 = vmatmul.mubr.f32.gmra.mxu0 %v4117
    %v4548 = vpop.f32.mrf.mxu0
    %v4549 = vadd.f32 %v4436, %v4548
    %v4550 = vpop.f32.mrf.mxu0
    %v4551 = vadd.f32 %v4438, %v4550
    %4552 = vmatprep.mubr.f32.mxu0 0.0
    %4553 = vmatmul.mubr.f32.gmra.mxu0 %v4120
    %v4554 = vpop.f32.mrf.mxu0
    %v4555 = vadd.f32 %v4442, %v4554
    %v4556 = vpop.f32.mrf.mxu0
    %v4557 = vadd.f32 %v4444, %v4556
    %4558 = vmatprep.mubr.f32.mxu0 0.0
    %4559 = vmatmul.mubr.f32.gmra.mxu0 %v4123
    %v4560 = vpop.f32.mrf.mxu0
    %v4561 = vadd.f32 %v4448, %v4560
    %v4562 = vpop.f32.mrf.mxu0
    %v4563 = vadd.f32 %v4450, %v4562
    %4564 = vmatprep.mubr.f32.mxu0 0.0
    %4565 = vmatmul.mubr.f32.gmra.mxu0 %v4126
    %v4566 = vpop.f32.mrf.mxu0
    %v4567 = vadd.f32 %v4454, %v4566
    %v4568 = vpop.f32.mrf.mxu0
    %v4569 = vadd.f32 %v4456, %v4568
    %4570 = vmatprep.mubr.f32.mxu0 0.0
    %4571 = vmatmul.mubr.f32.gmra.mxu0 %v4129
    %v4572 = vpop.f32.mrf.mxu0
    %v4573 = vadd.f32 %v4460, %v4572
    %v4574 = vpop.f32.mrf.mxu0
    %v4575 = vadd.f32 %v4462, %v4574
    %4576 = vmatprep.mubr.f32.mxu0 0.0
    %4577 = vmatmul.mubr.f32.gmra.mxu0 %v4132
    %v4578 = vpop.f32.mrf.mxu0
    %v4579 = vadd.f32 %v4466, %v4578
    %v4580 = vpop.f32.mrf.mxu0
    %v4581 = vadd.f32 %v4468, %v4580
    %4582 = vmatprep.mubr.f32.mxu0 0.0
    %4583 = vmatmul.mubr.f32.gmra.mxu0 %v4135
    %v4584 = vpop.f32.mrf.mxu0
    %v4585 = vadd.f32 %v4472, %v4584
    %v4586 = vpop.f32.mrf.mxu0
    %v4587 = vadd.f32 %v4474, %v4586
    %4588 = vdwg.mxu0
    %4589 = vmatprep.subr.mxu0 %v1621
    %4590 = vmatpush1.msra.mxu0 %v1620
    %4591 = vmatprep.subr.mxu0 %v1615
    %4592 = vmatpush1.msra.mxu0 %v1614
    %4593 = vmatprep.subr.mxu0 %v1609
    %4594 = vmatpush1.msra.mxu0 %v1608
    %4595 = vmatprep.subr.mxu0 %v1603
    %4596 = vmatpush1.msra.mxu0 %v1602
    %4597 = vmatprep.subr.mxu0 %v1509
    %4598 = vmatpush1.msra.mxu0 %v1508
    %4599 = vmatprep.subr.mxu0 %v1503
    %4600 = vmatpush1.msra.mxu0 %v1502
    %4601 = vmatprep.subr.mxu0 %v1497
    %4602 = vmatpush1.msra.mxu0 %v1496
    %4603 = vmatprep.subr.mxu0 %v1491
    %4604 = vmatpush1.msra.mxu0 %v1490
    %4605 = vmatprep.subr.mxu0 %v1397
    %4606 = vmatpush1.msra.mxu0 %v1396
    %4607 = vmatprep.subr.mxu0 %v1391
    %4608 = vmatpush1.msra.mxu0 %v1390
    %4609 = vmatprep.subr.mxu0 %v1385
    %4610 = vmatpush1.msra.mxu0 %v1384
    %4611 = vmatprep.subr.mxu0 %v1379
    %4612 = vmatpush1.msra.mxu0 %v1378
    %4613 = vmatprep.subr.mxu0 %v1288
    %4614 = vmatpush1.msra.mxu0 %v1287
    %4615 = vmatprep.subr.mxu0 %v1281
    %4616 = vmatpush1.msra.mxu0 %v1280
    %4617 = vmatprep.subr.mxu0 %v1274
    %4618 = vmatpush1.msra.mxu0 %v1273
    %4619 = vmatprep.subr.mxu0 %v1267
    %4620 = vmatpush1.msra.mxu0 %v1266
    %4621 = vmatprep.subr.mxu0 %v2069
    %4622 = vmatpush2.msra.mxu0 %v2068
    %4623 = vmatprep.subr.mxu0 %v2063
    %4624 = vmatpush2.msra.mxu0 %v2062
    %4625 = vmatprep.subr.mxu0 %v2057
    %4626 = vmatpush2.msra.mxu0 %v2056
    %4627 = vmatprep.subr.mxu0 %v2051
    %4628 = vmatpush2.msra.mxu0 %v2050
    %4629 = vmatprep.subr.mxu0 %v1957
    %4630 = vmatpush2.msra.mxu0 %v1956
    %4631 = vmatprep.subr.mxu0 %v1951
    %4632 = vmatpush2.msra.mxu0 %v1950
    %4633 = vmatprep.subr.mxu0 %v1945
    %4634 = vmatpush2.msra.mxu0 %v1944
    %4635 = vmatprep.subr.mxu0 %v1939
    %4636 = vmatpush2.msra.mxu0 %v1938
    %4637 = vmatprep.subr.mxu0 %v1845
    %4638 = vmatpush2.msra.mxu0 %v1844
    %4639 = vmatprep.subr.mxu0 %v1839
    %4640 = vmatpush2.msra.mxu0 %v1838
    %4641 = vmatprep.subr.mxu0 %v1833
    %4642 = vmatpush2.msra.mxu0 %v1832
    %4643 = vmatprep.subr.mxu0 %v1827
    %4644 = vmatpush2.msra.mxu0 %v1826
    %4645 = vmatprep.subr.mxu0 %v1733
    %4646 = vmatpush2.msra.mxu0 %v1732
    %4647 = vmatprep.subr.mxu0 %v1727
    %4648 = vmatpush2.msra.mxu0 %v1726
    %4649 = vmatprep.subr.mxu0 %v1721
    %4650 = vmatpush2.msra.mxu0 %v1720
    %4651 = vmatprep.subr.mxu0 %v1715
    %4652 = vmatpush2.msra.mxu0 %v1714
    %4653 = vmatprep.mubr.f32.mxu0 %v4009
    %4654 = vmatmul.mubr.f32.gmra.mxu0 %v4008
    %v4655 = vpop.f32.mrf.mxu0
    %v4656 = vadd.f32 %v4075, %v4655
    %v4657 = vpop.f32.mrf.mxu0
    %v4658 = vadd.f32 %v4075, %v4657
    %4659 = vmatprep.mubr.f32.mxu0 %v4016
    %4660 = vmatmul.mubr.f32.gmra.mxu0 %v4015
    %v4661 = vpop.f32.mrf.mxu0
    %v4662 = vadd.f32 %v4080, %v4661
    %v4663 = vpop.f32.mrf.mxu0
    %v4664 = vadd.f32 %v4080, %v4663
    %4665 = vmatprep.mubr.f32.mxu0 %v4023
    %4666 = vmatmul.mubr.f32.gmra.mxu0 %v4022
    %v4667 = vpop.f32.mrf.mxu0
    %v4668 = vadd.f32 %v4085, %v4667
    %v4669 = vpop.f32.mrf.mxu0
    %v4670 = vadd.f32 %v4085, %v4669
    %4671 = vmatprep.mubr.f32.mxu0 %v4030
    %4672 = vmatmul.mubr.f32.gmra.mxu0 %v4029
    %v4673 = vpop.f32.mrf.mxu0
    %v4674 = vadd.f32 %v4090, %v4673
    %v4675 = vpop.f32.mrf.mxu0
    %v4676 = vadd.f32 %v4090, %v4675
    %4677 = vmatprep.mubr.f32.mxu0 %v4037
    %4678 = vmatmul.mubr.f32.gmra.mxu0 %v4036
    %v4679 = vpop.f32.mrf.mxu0
    %v4680 = vadd.f32 %v4095, %v4679
    %v4681 = vpop.f32.mrf.mxu0
    %v4682 = vadd.f32 %v4095, %v4681
    %4683 = vmatprep.mubr.f32.mxu0 %v4044
    %4684 = vmatmul.mubr.f32.gmra.mxu0 %v4043
    %v4685 = vpop.f32.mrf.mxu0
    %v4686 = vadd.f32 %v4100, %v4685
    %v4687 = vpop.f32.mrf.mxu0
    %v4688 = vadd.f32 %v4100, %v4687
    %4689 = vmatprep.mubr.f32.mxu0 %v4051
    %4690 = vmatmul.mubr.f32.gmra.mxu0 %v4050
    %v4691 = vpop.f32.mrf.mxu0
    %v4692 = vadd.f32 %v4105, %v4691
    %v4693 = vpop.f32.mrf.mxu0
    %v4694 = vadd.f32 %v4105, %v4693
    %4695 = vmatprep.mubr.f32.mxu0 %v4058
    %4696 = vmatmul.mubr.f32.gmra.mxu0 %v4057
    %v4697 = vpop.f32.mrf.mxu0
    %v4698 = vadd.f32 %v4110, %v4697
    %v4699 = vpop.f32.mrf.mxu0
    %v4700 = vadd.f32 %v4110, %v4699
    %4701 = vdwg.mxu0
    %4702 = vmatprep.subr.mxu0 %v2517
    %4703 = vmatpush1.msra.mxu0 %v2516
    %4704 = vmatprep.subr.mxu0 %v2511
    %4705 = vmatpush1.msra.mxu0 %v2510
    %4706 = vmatprep.subr.mxu0 %v2505
    %4707 = vmatpush1.msra.mxu0 %v2504
    %4708 = vmatprep.subr.mxu0 %v2499
    %4709 = vmatpush1.msra.mxu0 %v2498
    %4710 = vmatprep.subr.mxu0 %v2405
    %4711 = vmatpush1.msra.mxu0 %v2404
    %4712 = vmatprep.subr.mxu0 %v2399
    %4713 = vmatpush1.msra.mxu0 %v2398
    %4714 = vmatprep.subr.mxu0 %v2393
    %4715 = vmatpush1.msra.mxu0 %v2392
    %4716 = vmatprep.subr.mxu0 %v2387
    %4717 = vmatpush1.msra.mxu0 %v2386
    %4718 = vmatprep.subr.mxu0 %v2293
    %4719 = vmatpush1.msra.mxu0 %v2292
    %4720 = vmatprep.subr.mxu0 %v2287
    %4721 = vmatpush1.msra.mxu0 %v2286
    %4722 = vmatprep.subr.mxu0 %v2281
    %4723 = vmatpush1.msra.mxu0 %v2280
    %4724 = vmatprep.subr.mxu0 %v2275
    %4725 = vmatpush1.msra.mxu0 %v2274
    %4726 = vmatprep.subr.mxu0 %v2181
    %4727 = vmatpush1.msra.mxu0 %v2180
    %4728 = vmatprep.subr.mxu0 %v2175
    %4729 = vmatpush1.msra.mxu0 %v2174
    %4730 = vmatprep.subr.mxu0 %v2169
    %4731 = vmatpush1.msra.mxu0 %v2168
    %4732 = vmatprep.subr.mxu0 %v2163
    %4733 = vmatpush1.msra.mxu0 %v2162
    %4734 = vmatprep.subr.mxu0 %v2965
    %4735 = vmatpush2.msra.mxu0 %v2964
    %4736 = vmatprep.subr.mxu0 %v2959
    %4737 = vmatpush2.msra.mxu0 %v2958
    %4738 = vmatprep.subr.mxu0 %v2953
    %4739 = vmatpush2.msra.mxu0 %v2952
    %4740 = vmatprep.subr.mxu0 %v2947
    %4741 = vmatpush2.msra.mxu0 %v2946
    %4742 = vmatprep.subr.mxu0 %v2853
    %4743 = vmatpush2.msra.mxu0 %v2852
    %4744 = vmatprep.subr.mxu0 %v2847
    %4745 = vmatpush2.msra.mxu0 %v2846
    %4746 = vmatprep.subr.mxu0 %v2841
    %4747 = vmatpush2.msra.mxu0 %v2840
    %4748 = vmatprep.subr.mxu0 %v2835
    %4749 = vmatpush2.msra.mxu0 %v2834
    %4750 = vmatprep.subr.mxu0 %v2741
    %4751 = vmatpush2.msra.mxu0 %v2740
    %4752 = vmatprep.subr.mxu0 %v2735
    %4753 = vmatpush2.msra.mxu0 %v2734
    %4754 = vmatprep.subr.mxu0 %v2729
    %4755 = vmatpush2.msra.mxu0 %v2728
    %4756 = vmatprep.subr.mxu0 %v2723
    %4757 = vmatpush2.msra.mxu0 %v2722
    %4758 = vmatprep.subr.mxu0 %v2629
    %4759 = vmatpush2.msra.mxu0 %v2628
    %4760 = vmatprep.subr.mxu0 %v2623
    %4761 = vmatpush2.msra.mxu0 %v2622
    %4762 = vmatprep.subr.mxu0 %v2617
    %4763 = vmatpush2.msra.mxu0 %v2616
    %4764 = vmatprep.subr.mxu0 %v2611
    %4765 = vmatpush2.msra.mxu0 %v2610
    %4766 = vmatprep.mubr.f32.mxu0 %v4011
    %4767 = vmatmul.mubr.f32.gmra.mxu0 %v4010
    %v4768 = vpop.f32.mrf.mxu0
    %v4769 = vadd.f32 %v4656, %v4768
    %v4770 = vpop.f32.mrf.mxu0
    %v4771 = vadd.f32 %v4658, %v4770
    %4772 = vmatprep.mubr.f32.mxu0 %v4018
    %4773 = vmatmul.mubr.f32.gmra.mxu0 %v4017
    %v4774 = vpop.f32.mrf.mxu0
    %v4775 = vadd.f32 %v4662, %v4774
    %v4776 = vpop.f32.mrf.mxu0
    %v4777 = vadd.f32 %v4664, %v4776
    %4778 = vmatprep.mubr.f32.mxu0 %v4025
    %4779 = vmatmul.mubr.f32.gmra.mxu0 %v4024
    %v4780 = vpop.f32.mrf.mxu0
    %v4781 = vadd.f32 %v4668, %v4780
    %v4782 = vpop.f32.mrf.mxu0
    %v4783 = vadd.f32 %v4670, %v4782
    %4784 = vmatprep.mubr.f32.mxu0 %v4032
    %4785 = vmatmul.mubr.f32.gmra.mxu0 %v4031
    %v4786 = vpop.f32.mrf.mxu0
    %v4787 = vadd.f32 %v4674, %v4786
    %v4788 = vpop.f32.mrf.mxu0
    %v4789 = vadd.f32 %v4676, %v4788
    %4790 = vmatprep.mubr.f32.mxu0 %v4039
    %4791 = vmatmul.mubr.f32.gmra.mxu0 %v4038
    %v4792 = vpop.f32.mrf.mxu0
    %v4793 = vadd.f32 %v4680, %v4792
    %v4794 = vpop.f32.mrf.mxu0
    %v4795 = vadd.f32 %v4682, %v4794
    %4796 = vmatprep.mubr.f32.mxu0 %v4046
    %4797 = vmatmul.mubr.f32.gmra.mxu0 %v4045
    %v4798 = vpop.f32.mrf.mxu0
    %v4799 = vadd.f32 %v4686, %v4798
    %v4800 = vpop.f32.mrf.mxu0
    %v4801 = vadd.f32 %v4688, %v4800
    %4802 = vmatprep.mubr.f32.mxu0 %v4053
    %4803 = vmatmul.mubr.f32.gmra.mxu0 %v4052
    %v4804 = vpop.f32.mrf.mxu0
    %v4805 = vadd.f32 %v4692, %v4804
    %v4806 = vpop.f32.mrf.mxu0
    %v4807 = vadd.f32 %v4694, %v4806
    %4808 = vmatprep.mubr.f32.mxu0 %v4060
    %4809 = vmatmul.mubr.f32.gmra.mxu0 %v4059
    %v4810 = vpop.f32.mrf.mxu0
    %v4811 = vadd.f32 %v4698, %v4810
    %v4812 = vpop.f32.mrf.mxu0
    %v4813 = vadd.f32 %v4700, %v4812
    %4814 = vdwg.mxu0
    %4815 = vmatprep.subr.mxu0 %v3413
    %4816 = vmatpush1.msra.mxu0 %v3412
    %4817 = vmatprep.subr.mxu0 %v3407
    %4818 = vmatpush1.msra.mxu0 %v3406
    %4819 = vmatprep.subr.mxu0 %v3401
    %4820 = vmatpush1.msra.mxu0 %v3400
    %4821 = vmatprep.subr.mxu0 %v3395
    %4822 = vmatpush1.msra.mxu0 %v3394
    %4823 = vmatprep.subr.mxu0 %v3301
    %4824 = vmatpush1.msra.mxu0 %v3300
    %4825 = vmatprep.subr.mxu0 %v3295
    %4826 = vmatpush1.msra.mxu0 %v3294
    %4827 = vmatprep.subr.mxu0 %v3289
    %4828 = vmatpush1.msra.mxu0 %v3288
    %4829 = vmatprep.subr.mxu0 %v3283
    %4830 = vmatpush1.msra.mxu0 %v3282
    %4831 = vmatprep.subr.mxu0 %v3189
    %4832 = vmatpush1.msra.mxu0 %v3188
    %4833 = vmatprep.subr.mxu0 %v3183
    %4834 = vmatpush1.msra.mxu0 %v3182
    %4835 = vmatprep.subr.mxu0 %v3177
    %4836 = vmatpush1.msra.mxu0 %v3176
    %4837 = vmatprep.subr.mxu0 %v3171
    %4838 = vmatpush1.msra.mxu0 %v3170
    %4839 = vmatprep.subr.mxu0 %v3077
    %4840 = vmatpush1.msra.mxu0 %v3076
    %4841 = vmatprep.subr.mxu0 %v3071
    %4842 = vmatpush1.msra.mxu0 %v3070
    %4843 = vmatprep.subr.mxu0 %v3065
    %4844 = vmatpush1.msra.mxu0 %v3064
    %4845 = vmatprep.subr.mxu0 %v3059
    %4846 = vmatpush1.msra.mxu0 %v3058
    %4847 = vmatprep.subr.mxu0 %v3861
    %4848 = vmatpush2.msra.mxu0 %v3860
    %4849 = vmatprep.subr.mxu0 %v3855
    %4850 = vmatpush2.msra.mxu0 %v3854
    %4851 = vmatprep.subr.mxu0 %v3849
    %4852 = vmatpush2.msra.mxu0 %v3848
    %4853 = vmatprep.subr.mxu0 %v3843
    %4854 = vmatpush2.msra.mxu0 %v3842
    %4855 = vmatprep.subr.mxu0 %v3749
    %4856 = vmatpush2.msra.mxu0 %v3748
    %4857 = vmatprep.subr.mxu0 %v3743
    %4858 = vmatpush2.msra.mxu0 %v3742
    %4859 = vmatprep.subr.mxu0 %v3737
    %4860 = vmatpush2.msra.mxu0 %v3736
    %4861 = vmatprep.subr.mxu0 %v3731
    %4862 = vmatpush2.msra.mxu0 %v3730
    %4863 = vmatprep.subr.mxu0 %v3637
    %4864 = vmatpush2.msra.mxu0 %v3636
    %4865 = vmatprep.subr.mxu0 %v3631
    %4866 = vmatpush2.msra.mxu0 %v3630
    %4867 = vmatprep.subr.mxu0 %v3625
    %4868 = vmatpush2.msra.mxu0 %v3624
    %4869 = vmatprep.subr.mxu0 %v3619
    %4870 = vmatpush2.msra.mxu0 %v3618
    %4871 = vmatprep.subr.mxu0 %v3525
    %4872 = vmatpush2.msra.mxu0 %v3524
    %4873 = vmatprep.subr.mxu0 %v3519
    %4874 = vmatpush2.msra.mxu0 %v3518
    %4875 = vmatprep.subr.mxu0 %v3513
    %4876 = vmatpush2.msra.mxu0 %v3512
    %4877 = vmatprep.subr.mxu0 %v3507
    %4878 = vmatpush2.msra.mxu0 %v3506
    %4879 = vmatprep.mubr.f32.mxu0 %v4013
    %4880 = vmatmul.mubr.f32.gmra.mxu0 %v4012
    %v4881 = vpop.f32.mrf.mxu0
    %v4882 = vadd.f32 %v4769, %v4881
    %v4883 = vpop.f32.mrf.mxu0
    %v4884 = vadd.f32 %v4771, %v4883
    %4885 = vmatprep.mubr.f32.mxu0 %v4020
    %4886 = vmatmul.mubr.f32.gmra.mxu0 %v4019
    %v4887 = vpop.f32.mrf.mxu0
    %v4888 = vadd.f32 %v4775, %v4887
    %v4889 = vpop.f32.mrf.mxu0
    %v4890 = vadd.f32 %v4777, %v4889
    %4891 = vmatprep.mubr.f32.mxu0 %v4027
    %4892 = vmatmul.mubr.f32.gmra.mxu0 %v4026
    %v4893 = vpop.f32.mrf.mxu0
    %v4894 = vadd.f32 %v4781, %v4893
    %v4895 = vpop.f32.mrf.mxu0
    %v4896 = vadd.f32 %v4783, %v4895
    %4897 = vmatprep.mubr.f32.mxu0 %v4034
    %4898 = vmatmul.mubr.f32.gmra.mxu0 %v4033
    %v4899 = vpop.f32.mrf.mxu0
    %v4900 = vadd.f32 %v4787, %v4899
    %v4901 = vpop.f32.mrf.mxu0
    %v4902 = vadd.f32 %v4789, %v4901
    %4903 = vmatprep.mubr.f32.mxu0 %v4041
    %4904 = vmatmul.mubr.f32.gmra.mxu0 %v4040
    %v4905 = vpop.f32.mrf.mxu0
    %v4906 = vadd.f32 %v4793, %v4905
    %v4907 = vpop.f32.mrf.mxu0
    %v4908 = vadd.f32 %v4795, %v4907
    %4909 = vmatprep.mubr.f32.mxu0 %v4048
    %4910 = vmatmul.mubr.f32.gmra.mxu0 %v4047
    %v4911 = vpop.f32.mrf.mxu0
    %v4912 = vadd.f32 %v4799, %v4911
    %v4913 = vpop.f32.mrf.mxu0
    %v4914 = vadd.f32 %v4801, %v4913
    %4915 = vmatprep.mubr.f32.mxu0 %v4055
    %4916 = vmatmul.mubr.f32.gmra.mxu0 %v4054
    %v4917 = vpop.f32.mrf.mxu0
    %v4918 = vadd.f32 %v4805, %v4917
    %v4919 = vpop.f32.mrf.mxu0
    %v4920 = vadd.f32 %v4807, %v4919
    %4921 = vmatprep.mubr.f32.mxu0 %v4062
    %4922 = vmatmul.mubr.f32.gmra.mxu0 %v4061
    %v4923 = vpop.f32.mrf.mxu0
    %v4924 = vadd.f32 %v4811, %v4923
    %v4925 = vpop.f32.mrf.mxu0
    %v4926 = vadd.f32 %v4813, %v4925
    %4927 = vdwg.mxu0
    %4928 = vmatprep.subr.mxu0 0.0
    %4929 = vmatpush1.msra.mxu0 0.0
    %4930 = vmatprep.subr.mxu0 0.0
    %4931 = vmatpush1.msra.mxu0 0.0
    %4932 = vmatprep.subr.mxu0 0.0
    %4933 = vmatpush1.msra.mxu0 0.0
    %4934 = vmatprep.subr.mxu0 0.0
    %4935 = vmatpush1.msra.mxu0 0.0
    %4936 = vmatprep.subr.mxu0 0.0
    %4937 = vmatpush1.msra.mxu0 0.0
    %4938 = vmatprep.subr.mxu0 0.0
    %4939 = vmatpush1.msra.mxu0 0.0
    %4940 = vmatprep.subr.mxu0 0.0
    %4941 = vmatpush1.msra.mxu0 0.0
    %4942 = vmatprep.subr.mxu0 0.0
    %4943 = vmatpush1.msra.mxu0 0.0
    %4944 = vmatprep.subr.mxu0 0.0
    %4945 = vmatpush1.msra.mxu0 0.0
    %4946 = vmatprep.subr.mxu0 0.0
    %4947 = vmatpush1.msra.mxu0 0.0
    %4948 = vmatprep.subr.mxu0 0.0
    %4949 = vmatpush1.msra.mxu0 0.0
    %4950 = vmatprep.subr.mxu0 0.0
    %4951 = vmatpush1.msra.mxu0 0.0
    %4952 = vmatprep.subr.mxu0 %v3973
    %4953 = vmatpush1.msra.mxu0 %v3972
    %4954 = vmatprep.subr.mxu0 %v3967
    %4955 = vmatpush1.msra.mxu0 %v3966
    %4956 = vmatprep.subr.mxu0 %v3961
    %4957 = vmatpush1.msra.mxu0 %v3960
    %4958 = vmatprep.subr.mxu0 %v3955
    %4959 = vmatpush1.msra.mxu0 %v3954
    %4960 = vmatprep.subr.mxu0 0.0
    %4961 = vmatpush2.msra.mxu0 0.0
    %4962 = vmatprep.subr.mxu0 0.0
    %4963 = vmatpush2.msra.mxu0 0.0
    %4964 = vmatprep.subr.mxu0 0.0
    %4965 = vmatpush2.msra.mxu0 0.0
    %4966 = vmatprep.subr.mxu0 0.0
    %4967 = vmatpush2.msra.mxu0 0.0
    %4968 = vmatprep.subr.mxu0 0.0
    %4969 = vmatpush2.msra.mxu0 0.0
    %4970 = vmatprep.subr.mxu0 0.0
    %4971 = vmatpush2.msra.mxu0 0.0
    %4972 = vmatprep.subr.mxu0 0.0
    %4973 = vmatpush2.msra.mxu0 0.0
    %4974 = vmatprep.subr.mxu0 0.0
    %4975 = vmatpush2.msra.mxu0 0.0
    %4976 = vmatprep.subr.mxu0 0.0
    %4977 = vmatpush2.msra.mxu0 0.0
    %4978 = vmatprep.subr.mxu0 0.0
    %4979 = vmatpush2.msra.mxu0 0.0
    %4980 = vmatprep.subr.mxu0 0.0
    %4981 = vmatpush2.msra.mxu0 0.0
    %4982 = vmatprep.subr.mxu0 0.0
    %4983 = vmatpush2.msra.mxu0 0.0
    %4984 = vmatprep.subr.mxu0 0.0
    %4985 = vmatpush2.msra.mxu0 0.0
    %4986 = vmatprep.subr.mxu0 0.0
    %4987 = vmatpush2.msra.mxu0 0.0
    %4988 = vmatprep.subr.mxu0 0.0
    %4989 = vmatpush2.msra.mxu0 0.0
    %4990 = vmatprep.subr.mxu0 0.0
    %4991 = vmatpush2.msra.mxu0 0.0
    %4992 = vmatprep.mubr.f32.mxu0 0.0
    %4993 = vmatmul.mubr.f32.gmra.mxu0 %v4114
    %v4994 = vpop.f32.mrf.mxu0
    %v4995 = vadd.f32 %v4882, %v4994
    %v4996 = vpop.f32.mrf.mxu0
    %v4997 = vadd.f32 %v4884, %v4996
    %4998 = vmatprep.mubr.f32.mxu0 0.0
    %4999 = vmatmul.mubr.f32.gmra.mxu0 %v4117
    %v5000 = vpop.f32.mrf.mxu0
    %v5001 = vadd.f32 %v4888, %v5000
    %v5002 = vpop.f32.mrf.mxu0
    %v5003 = vadd.f32 %v4890, %v5002
    %5004 = vmatprep.mubr.f32.mxu0 0.0
    %5005 = vmatmul.mubr.f32.gmra.mxu0 %v4120
    %v5006 = vpop.f32.mrf.mxu0
    %v5007 = vadd.f32 %v4894, %v5006
    %v5008 = vpop.f32.mrf.mxu0
    %v5009 = vadd.f32 %v4896, %v5008
    %5010 = vmatprep.mubr.f32.mxu0 0.0
    %5011 = vmatmul.mubr.f32.gmra.mxu0 %v4123
    %v5012 = vpop.f32.mrf.mxu0
    %v5013 = vadd.f32 %v4900, %v5012
    %v5014 = vpop.f32.mrf.mxu0
    %v5015 = vadd.f32 %v4902, %v5014
    %5016 = vmatprep.mubr.f32.mxu0 0.0
    %5017 = vmatmul.mubr.f32.gmra.mxu0 %v4126
    %v5018 = vpop.f32.mrf.mxu0
    %v5019 = vadd.f32 %v4906, %v5018
    %v5020 = vpop.f32.mrf.mxu0
    %v5021 = vadd.f32 %v4908, %v5020
    %5022 = vmatprep.mubr.f32.mxu0 0.0
    %5023 = vmatmul.mubr.f32.gmra.mxu0 %v4129
    %v5024 = vpop.f32.mrf.mxu0
    %v5025 = vadd.f32 %v4912, %v5024
    %v5026 = vpop.f32.mrf.mxu0
    %v5027 = vadd.f32 %v4914, %v5026
    %5028 = vmatprep.mubr.f32.mxu0 0.0
    %5029 = vmatmul.mubr.f32.gmra.mxu0 %v4132
    %v5030 = vpop.f32.mrf.mxu0
    %v5031 = vadd.f32 %v4918, %v5030
    %v5032 = vpop.f32.mrf.mxu0
    %v5033 = vadd.f32 %v4920, %v5032
    %5034 = vmatprep.mubr.f32.mxu0 0.0
    %5035 = vmatmul.mubr.f32.gmra.mxu0 %v4135
    %v5036 = vpop.f32.mrf.mxu0
    %v5037 = vadd.f32 %v4924, %v5036
    %v5038 = vpop.f32.mrf.mxu0
    %v5039 = vadd.f32 %v4926, %v5038
    %5040 = vdwg.mxu0
    %5041 = vmatprep.subr.mxu0 %v1623
    %5042 = vmatpush1.msra.mxu0 %v1622
    %5043 = vmatprep.subr.mxu0 %v1617
    %5044 = vmatpush1.msra.mxu0 %v1616
    %5045 = vmatprep.subr.mxu0 %v1611
    %5046 = vmatpush1.msra.mxu0 %v1610
    %5047 = vmatprep.subr.mxu0 %v1605
    %5048 = vmatpush1.msra.mxu0 %v1604
    %5049 = vmatprep.subr.mxu0 %v1511
    %5050 = vmatpush1.msra.mxu0 %v1510
    %5051 = vmatprep.subr.mxu0 %v1505
    %5052 = vmatpush1.msra.mxu0 %v1504
    %5053 = vmatprep.subr.mxu0 %v1499
    %5054 = vmatpush1.msra.mxu0 %v1498
    %5055 = vmatprep.subr.mxu0 %v1493
    %5056 = vmatpush1.msra.mxu0 %v1492
    %5057 = vmatprep.subr.mxu0 %v1399
    %5058 = vmatpush1.msra.mxu0 %v1398
    %5059 = vmatprep.subr.mxu0 %v1393
    %5060 = vmatpush1.msra.mxu0 %v1392
    %5061 = vmatprep.subr.mxu0 %v1387
    %5062 = vmatpush1.msra.mxu0 %v1386
    %5063 = vmatprep.subr.mxu0 %v1381
    %5064 = vmatpush1.msra.mxu0 %v1380
    %5065 = vmatprep.subr.mxu0 %v1290
    %5066 = vmatpush1.msra.mxu0 %v1289
    %5067 = vmatprep.subr.mxu0 %v1283
    %5068 = vmatpush1.msra.mxu0 %v1282
    %5069 = vmatprep.subr.mxu0 %v1276
    %5070 = vmatpush1.msra.mxu0 %v1275
    %5071 = vmatprep.subr.mxu0 %v1269
    %5072 = vmatpush1.msra.mxu0 %v1268
    %5073 = vmatprep.subr.mxu0 %v2071
    %5074 = vmatpush2.msra.mxu0 %v2070
    %5075 = vmatprep.subr.mxu0 %v2065
    %5076 = vmatpush2.msra.mxu0 %v2064
    %5077 = vmatprep.subr.mxu0 %v2059
    %5078 = vmatpush2.msra.mxu0 %v2058
    %5079 = vmatprep.subr.mxu0 %v2053
    %5080 = vmatpush2.msra.mxu0 %v2052
    %5081 = vmatprep.subr.mxu0 %v1959
    %5082 = vmatpush2.msra.mxu0 %v1958
    %5083 = vmatprep.subr.mxu0 %v1953
    %5084 = vmatpush2.msra.mxu0 %v1952
    %5085 = vmatprep.subr.mxu0 %v1947
    %5086 = vmatpush2.msra.mxu0 %v1946
    %5087 = vmatprep.subr.mxu0 %v1941
    %5088 = vmatpush2.msra.mxu0 %v1940
    %5089 = vmatprep.subr.mxu0 %v1847
    %5090 = vmatpush2.msra.mxu0 %v1846
    %5091 = vmatprep.subr.mxu0 %v1841
    %5092 = vmatpush2.msra.mxu0 %v1840
    %5093 = vmatprep.subr.mxu0 %v1835
    %5094 = vmatpush2.msra.mxu0 %v1834
    %5095 = vmatprep.subr.mxu0 %v1829
    %5096 = vmatpush2.msra.mxu0 %v1828
    %5097 = vmatprep.subr.mxu0 %v1735
    %5098 = vmatpush2.msra.mxu0 %v1734
    %5099 = vmatprep.subr.mxu0 %v1729
    %5100 = vmatpush2.msra.mxu0 %v1728
    %5101 = vmatprep.subr.mxu0 %v1723
    %5102 = vmatpush2.msra.mxu0 %v1722
    %5103 = vmatprep.subr.mxu0 %v1717
    %5104 = vmatpush2.msra.mxu0 %v1716
    %5105 = vmatprep.mubr.f32.mxu0 %v4009
    %5106 = vmatmul.mubr.f32.gmra.mxu0 %v4008
    %v5107 = vpop.f32.mrf.mxu0
    %v5108 = vadd.f32 %v4075, %v5107
    %v5109 = vpop.f32.mrf.mxu0
    %v5110 = vadd.f32 %v4075, %v5109
    %5111 = vmatprep.mubr.f32.mxu0 %v4016
    %5112 = vmatmul.mubr.f32.gmra.mxu0 %v4015
    %v5113 = vpop.f32.mrf.mxu0
    %v5114 = vadd.f32 %v4080, %v5113
    %v5115 = vpop.f32.mrf.mxu0
    %v5116 = vadd.f32 %v4080, %v5115
    %5117 = vmatprep.mubr.f32.mxu0 %v4023
    %5118 = vmatmul.mubr.f32.gmra.mxu0 %v4022
    %v5119 = vpop.f32.mrf.mxu0
    %v5120 = vadd.f32 %v4085, %v5119
    %v5121 = vpop.f32.mrf.mxu0
    %v5122 = vadd.f32 %v4085, %v5121
    %5123 = vmatprep.mubr.f32.mxu0 %v4030
    %5124 = vmatmul.mubr.f32.gmra.mxu0 %v4029
    %v5125 = vpop.f32.mrf.mxu0
    %v5126 = vadd.f32 %v4090, %v5125
    %v5127 = vpop.f32.mrf.mxu0
    %v5128 = vadd.f32 %v4090, %v5127
    %5129 = vmatprep.mubr.f32.mxu0 %v4037
    %5130 = vmatmul.mubr.f32.gmra.mxu0 %v4036
    %v5131 = vpop.f32.mrf.mxu0
    %v5132 = vadd.f32 %v4095, %v5131
    %v5133 = vpop.f32.mrf.mxu0
    %v5134 = vadd.f32 %v4095, %v5133
    %5135 = vmatprep.mubr.f32.mxu0 %v4044
    %5136 = vmatmul.mubr.f32.gmra.mxu0 %v4043
    %v5137 = vpop.f32.mrf.mxu0
    %v5138 = vadd.f32 %v4100, %v5137
    %v5139 = vpop.f32.mrf.mxu0
    %v5140 = vadd.f32 %v4100, %v5139
    %5141 = vmatprep.mubr.f32.mxu0 %v4051
    %5142 = vmatmul.mubr.f32.gmra.mxu0 %v4050
    %v5143 = vpop.f32.mrf.mxu0
    %v5144 = vadd.f32 %v4105, %v5143
    %v5145 = vpop.f32.mrf.mxu0
    %v5146 = vadd.f32 %v4105, %v5145
    %5147 = vmatprep.mubr.f32.mxu0 %v4058
    %5148 = vmatmul.mubr.f32.gmra.mxu0 %v4057
    %v5149 = vpop.f32.mrf.mxu0
    %v5150 = vadd.f32 %v4110, %v5149
    %v5151 = vpop.f32.mrf.mxu0
    %v5152 = vadd.f32 %v4110, %v5151
    %5153 = vdwg.mxu0
    %5154 = vmatprep.subr.mxu0 %v2519
    %5155 = vmatpush1.msra.mxu0 %v2518
    %5156 = vmatprep.subr.mxu0 %v2513
    %5157 = vmatpush1.msra.mxu0 %v2512
    %5158 = vmatprep.subr.mxu0 %v2507
    %5159 = vmatpush1.msra.mxu0 %v2506
    %5160 = vmatprep.subr.mxu0 %v2501
    %5161 = vmatpush1.msra.mxu0 %v2500
    %5162 = vmatprep.subr.mxu0 %v2407
    %5163 = vmatpush1.msra.mxu0 %v2406
    %5164 = vmatprep.subr.mxu0 %v2401
    %5165 = vmatpush1.msra.mxu0 %v2400
    %5166 = vmatprep.subr.mxu0 %v2395
    %5167 = vmatpush1.msra.mxu0 %v2394
    %5168 = vmatprep.subr.mxu0 %v2389
    %5169 = vmatpush1.msra.mxu0 %v2388
    %5170 = vmatprep.subr.mxu0 %v2295
    %5171 = vmatpush1.msra.mxu0 %v2294
    %5172 = vmatprep.subr.mxu0 %v2289
    %5173 = vmatpush1.msra.mxu0 %v2288
    %5174 = vmatprep.subr.mxu0 %v2283
    %5175 = vmatpush1.msra.mxu0 %v2282
    %5176 = vmatprep.subr.mxu0 %v2277
    %5177 = vmatpush1.msra.mxu0 %v2276
    %5178 = vmatprep.subr.mxu0 %v2183
    %5179 = vmatpush1.msra.mxu0 %v2182
    %5180 = vmatprep.subr.mxu0 %v2177
    %5181 = vmatpush1.msra.mxu0 %v2176
    %5182 = vmatprep.subr.mxu0 %v2171
    %5183 = vmatpush1.msra.mxu0 %v2170
    %5184 = vmatprep.subr.mxu0 %v2165
    %5185 = vmatpush1.msra.mxu0 %v2164
    %5186 = vmatprep.subr.mxu0 %v2967
    %5187 = vmatpush2.msra.mxu0 %v2966
    %5188 = vmatprep.subr.mxu0 %v2961
    %5189 = vmatpush2.msra.mxu0 %v2960
    %5190 = vmatprep.subr.mxu0 %v2955
    %5191 = vmatpush2.msra.mxu0 %v2954
    %5192 = vmatprep.subr.mxu0 %v2949
    %5193 = vmatpush2.msra.mxu0 %v2948
    %5194 = vmatprep.subr.mxu0 %v2855
    %5195 = vmatpush2.msra.mxu0 %v2854
    %5196 = vmatprep.subr.mxu0 %v2849
    %5197 = vmatpush2.msra.mxu0 %v2848
    %5198 = vmatprep.subr.mxu0 %v2843
    %5199 = vmatpush2.msra.mxu0 %v2842
    %5200 = vmatprep.subr.mxu0 %v2837
    %5201 = vmatpush2.msra.mxu0 %v2836
    %5202 = vmatprep.subr.mxu0 %v2743
    %5203 = vmatpush2.msra.mxu0 %v2742
    %5204 = vmatprep.subr.mxu0 %v2737
    %5205 = vmatpush2.msra.mxu0 %v2736
    %5206 = vmatprep.subr.mxu0 %v2731
    %5207 = vmatpush2.msra.mxu0 %v2730
    %5208 = vmatprep.subr.mxu0 %v2725
    %5209 = vmatpush2.msra.mxu0 %v2724
    %5210 = vmatprep.subr.mxu0 %v2631
    %5211 = vmatpush2.msra.mxu0 %v2630
    %5212 = vmatprep.subr.mxu0 %v2625
    %5213 = vmatpush2.msra.mxu0 %v2624
    %5214 = vmatprep.subr.mxu0 %v2619
    %5215 = vmatpush2.msra.mxu0 %v2618
    %5216 = vmatprep.subr.mxu0 %v2613
    %5217 = vmatpush2.msra.mxu0 %v2612
    %5218 = vmatprep.mubr.f32.mxu0 %v4011
    %5219 = vmatmul.mubr.f32.gmra.mxu0 %v4010
    %v5220 = vpop.f32.mrf.mxu0
    %v5221 = vadd.f32 %v5108, %v5220
    %v5222 = vpop.f32.mrf.mxu0
    %v5223 = vadd.f32 %v5110, %v5222
    %5224 = vmatprep.mubr.f32.mxu0 %v4018
    %5225 = vmatmul.mubr.f32.gmra.mxu0 %v4017
    %v5226 = vpop.f32.mrf.mxu0
    %v5227 = vadd.f32 %v5114, %v5226
    %v5228 = vpop.f32.mrf.mxu0
    %v5229 = vadd.f32 %v5116, %v5228
    %5230 = vmatprep.mubr.f32.mxu0 %v4025
    %5231 = vmatmul.mubr.f32.gmra.mxu0 %v4024
    %v5232 = vpop.f32.mrf.mxu0
    %v5233 = vadd.f32 %v5120, %v5232
    %v5234 = vpop.f32.mrf.mxu0
    %v5235 = vadd.f32 %v5122, %v5234
    %5236 = vmatprep.mubr.f32.mxu0 %v4032
    %5237 = vmatmul.mubr.f32.gmra.mxu0 %v4031
    %v5238 = vpop.f32.mrf.mxu0
    %v5239 = vadd.f32 %v5126, %v5238
    %v5240 = vpop.f32.mrf.mxu0
    %v5241 = vadd.f32 %v5128, %v5240
    %5242 = vmatprep.mubr.f32.mxu0 %v4039
    %5243 = vmatmul.mubr.f32.gmra.mxu0 %v4038
    %v5244 = vpop.f32.mrf.mxu0
    %v5245 = vadd.f32 %v5132, %v5244
    %v5246 = vpop.f32.mrf.mxu0
    %v5247 = vadd.f32 %v5134, %v5246
    %5248 = vmatprep.mubr.f32.mxu0 %v4046
    %5249 = vmatmul.mubr.f32.gmra.mxu0 %v4045
    %v5250 = vpop.f32.mrf.mxu0
    %v5251 = vadd.f32 %v5138, %v5250
    %v5252 = vpop.f32.mrf.mxu0
    %v5253 = vadd.f32 %v5140, %v5252
    %5254 = vmatprep.mubr.f32.mxu0 %v4053
    %5255 = vmatmul.mubr.f32.gmra.mxu0 %v4052
    %v5256 = vpop.f32.mrf.mxu0
    %v5257 = vadd.f32 %v5144, %v5256
    %v5258 = vpop.f32.mrf.mxu0
    %v5259 = vadd.f32 %v5146, %v5258
    %5260 = vmatprep.mubr.f32.mxu0 %v4060
    %5261 = vmatmul.mubr.f32.gmra.mxu0 %v4059
    %v5262 = vpop.f32.mrf.mxu0
    %v5263 = vadd.f32 %v5150, %v5262
    %v5264 = vpop.f32.mrf.mxu0
    %v5265 = vadd.f32 %v5152, %v5264
    %5266 = vdwg.mxu0
    %5267 = vmatprep.subr.mxu0 %v3415
    %5268 = vmatpush1.msra.mxu0 %v3414
    %5269 = vmatprep.subr.mxu0 %v3409
    %5270 = vmatpush1.msra.mxu0 %v3408
    %5271 = vmatprep.subr.mxu0 %v3403
    %5272 = vmatpush1.msra.mxu0 %v3402
    %5273 = vmatprep.subr.mxu0 %v3397
    %5274 = vmatpush1.msra.mxu0 %v3396
    %5275 = vmatprep.subr.mxu0 %v3303
    %5276 = vmatpush1.msra.mxu0 %v3302
    %5277 = vmatprep.subr.mxu0 %v3297
    %5278 = vmatpush1.msra.mxu0 %v3296
    %5279 = vmatprep.subr.mxu0 %v3291
    %5280 = vmatpush1.msra.mxu0 %v3290
    %5281 = vmatprep.subr.mxu0 %v3285
    %5282 = vmatpush1.msra.mxu0 %v3284
    %5283 = vmatprep.subr.mxu0 %v3191
    %5284 = vmatpush1.msra.mxu0 %v3190
    %5285 = vmatprep.subr.mxu0 %v3185
    %5286 = vmatpush1.msra.mxu0 %v3184
    %5287 = vmatprep.subr.mxu0 %v3179
    %5288 = vmatpush1.msra.mxu0 %v3178
    %5289 = vmatprep.subr.mxu0 %v3173
    %5290 = vmatpush1.msra.mxu0 %v3172
    %5291 = vmatprep.subr.mxu0 %v3079
    %5292 = vmatpush1.msra.mxu0 %v3078
    %5293 = vmatprep.subr.mxu0 %v3073
    %5294 = vmatpush1.msra.mxu0 %v3072
    %5295 = vmatprep.subr.mxu0 %v3067
    %5296 = vmatpush1.msra.mxu0 %v3066
    %5297 = vmatprep.subr.mxu0 %v3061
    %5298 = vmatpush1.msra.mxu0 %v3060
    %5299 = vmatprep.subr.mxu0 %v3863
    %5300 = vmatpush2.msra.mxu0 %v3862
    %5301 = vmatprep.subr.mxu0 %v3857
    %5302 = vmatpush2.msra.mxu0 %v3856
    %5303 = vmatprep.subr.mxu0 %v3851
    %5304 = vmatpush2.msra.mxu0 %v3850
    %5305 = vmatprep.subr.mxu0 %v3845
    %5306 = vmatpush2.msra.mxu0 %v3844
    %5307 = vmatprep.subr.mxu0 %v3751
    %5308 = vmatpush2.msra.mxu0 %v3750
    %5309 = vmatprep.subr.mxu0 %v3745
    %5310 = vmatpush2.msra.mxu0 %v3744
    %5311 = vmatprep.subr.mxu0 %v3739
    %5312 = vmatpush2.msra.mxu0 %v3738
    %5313 = vmatprep.subr.mxu0 %v3733
    %5314 = vmatpush2.msra.mxu0 %v3732
    %5315 = vmatprep.subr.mxu0 %v3639
    %5316 = vmatpush2.msra.mxu0 %v3638
    %5317 = vmatprep.subr.mxu0 %v3633
    %5318 = vmatpush2.msra.mxu0 %v3632
    %5319 = vmatprep.subr.mxu0 %v3627
    %5320 = vmatpush2.msra.mxu0 %v3626
    %5321 = vmatprep.subr.mxu0 %v3621
    %5322 = vmatpush2.msra.mxu0 %v3620
    %5323 = vmatprep.subr.mxu0 %v3527
    %5324 = vmatpush2.msra.mxu0 %v3526
    %5325 = vmatprep.subr.mxu0 %v3521
    %5326 = vmatpush2.msra.mxu0 %v3520
    %5327 = vmatprep.subr.mxu0 %v3515
    %5328 = vmatpush2.msra.mxu0 %v3514
    %5329 = vmatprep.subr.mxu0 %v3509
    %5330 = vmatpush2.msra.mxu0 %v3508
    %5331 = vmatprep.mubr.f32.mxu0 %v4013
    %5332 = vmatmul.mubr.f32.gmra.mxu0 %v4012
    %v5333 = vpop.f32.mrf.mxu0
    %v5334 = vadd.f32 %v5221, %v5333
    %v5335 = vpop.f32.mrf.mxu0
    %v5336 = vadd.f32 %v5223, %v5335
    %5337 = vmatprep.mubr.f32.mxu0 %v4020
    %5338 = vmatmul.mubr.f32.gmra.mxu0 %v4019
    %v5339 = vpop.f32.mrf.mxu0
    %v5340 = vadd.f32 %v5227, %v5339
    %v5341 = vpop.f32.mrf.mxu0
    %v5342 = vadd.f32 %v5229, %v5341
    %5343 = vmatprep.mubr.f32.mxu0 %v4027
    %5344 = vmatmul.mubr.f32.gmra.mxu0 %v4026
    %v5345 = vpop.f32.mrf.mxu0
    %v5346 = vadd.f32 %v5233, %v5345
    %v5347 = vpop.f32.mrf.mxu0
    %v5348 = vadd.f32 %v5235, %v5347
    %5349 = vmatprep.mubr.f32.mxu0 %v4034
    %5350 = vmatmul.mubr.f32.gmra.mxu0 %v4033
    %v5351 = vpop.f32.mrf.mxu0
    %v5352 = vadd.f32 %v5239, %v5351
    %v5353 = vpop.f32.mrf.mxu0
    %v5354 = vadd.f32 %v5241, %v5353
    %5355 = vmatprep.mubr.f32.mxu0 %v4041
    %5356 = vmatmul.mubr.f32.gmra.mxu0 %v4040
    %v5357 = vpop.f32.mrf.mxu0
    %v5358 = vadd.f32 %v5245, %v5357
    %v5359 = vpop.f32.mrf.mxu0
    %v5360 = vadd.f32 %v5247, %v5359
    %5361 = vmatprep.mubr.f32.mxu0 %v4048
    %5362 = vmatmul.mubr.f32.gmra.mxu0 %v4047
    %v5363 = vpop.f32.mrf.mxu0
    %v5364 = vadd.f32 %v5251, %v5363
    %v5365 = vpop.f32.mrf.mxu0
    %v5366 = vadd.f32 %v5253, %v5365
    %5367 = vmatprep.mubr.f32.mxu0 %v4055
    %5368 = vmatmul.mubr.f32.gmra.mxu0 %v4054
    %v5369 = vpop.f32.mrf.mxu0
    %v5370 = vadd.f32 %v5257, %v5369
    %v5371 = vpop.f32.mrf.mxu0
    %v5372 = vadd.f32 %v5259, %v5371
    %5373 = vmatprep.mubr.f32.mxu0 %v4062
    %5374 = vmatmul.mubr.f32.gmra.mxu0 %v4061
    %v5375 = vpop.f32.mrf.mxu0
    %v5376 = vadd.f32 %v5263, %v5375
    %v5377 = vpop.f32.mrf.mxu0
    %v5378 = vadd.f32 %v5265, %v5377
    %5379 = vdwg.mxu0
    %5380 = vmatprep.subr.mxu0 0.0
    %5381 = vmatpush1.msra.mxu0 0.0
    %5382 = vmatprep.subr.mxu0 0.0
    %5383 = vmatpush1.msra.mxu0 0.0
    %5384 = vmatprep.subr.mxu0 0.0
    %5385 = vmatpush1.msra.mxu0 0.0
    %5386 = vmatprep.subr.mxu0 0.0
    %5387 = vmatpush1.msra.mxu0 0.0
    %5388 = vmatprep.subr.mxu0 0.0
    %5389 = vmatpush1.msra.mxu0 0.0
    %5390 = vmatprep.subr.mxu0 0.0
    %5391 = vmatpush1.msra.mxu0 0.0
    %5392 = vmatprep.subr.mxu0 0.0
    %5393 = vmatpush1.msra.mxu0 0.0
    %5394 = vmatprep.subr.mxu0 0.0
    %5395 = vmatpush1.msra.mxu0 0.0
    %5396 = vmatprep.subr.mxu0 0.0
    %5397 = vmatpush1.msra.mxu0 0.0
    %5398 = vmatprep.subr.mxu0 0.0
    %5399 = vmatpush1.msra.mxu0 0.0
    %5400 = vmatprep.subr.mxu0 0.0
    %5401 = vmatpush1.msra.mxu0 0.0
    %5402 = vmatprep.subr.mxu0 0.0
    %5403 = vmatpush1.msra.mxu0 0.0
    %5404 = vmatprep.subr.mxu0 %v3975
    %5405 = vmatpush1.msra.mxu0 %v3974
    %5406 = vmatprep.subr.mxu0 %v3969
    %5407 = vmatpush1.msra.mxu0 %v3968
    %5408 = vmatprep.subr.mxu0 %v3963
    %5409 = vmatpush1.msra.mxu0 %v3962
    %5410 = vmatprep.subr.mxu0 %v3957
    %5411 = vmatpush1.msra.mxu0 %v3956
    %5412 = vmatprep.subr.mxu0 0.0
    %5413 = vmatpush2.msra.mxu0 0.0
    %5414 = vmatprep.subr.mxu0 0.0
    %5415 = vmatpush2.msra.mxu0 0.0
    %5416 = vmatprep.subr.mxu0 0.0
    %5417 = vmatpush2.msra.mxu0 0.0
    %5418 = vmatprep.subr.mxu0 0.0
    %5419 = vmatpush2.msra.mxu0 0.0
    %5420 = vmatprep.subr.mxu0 0.0
    %5421 = vmatpush2.msra.mxu0 0.0
    %5422 = vmatprep.subr.mxu0 0.0
    %5423 = vmatpush2.msra.mxu0 0.0
    %5424 = vmatprep.subr.mxu0 0.0
    %5425 = vmatpush2.msra.mxu0 0.0
    %5426 = vmatprep.subr.mxu0 0.0
    %5427 = vmatpush2.msra.mxu0 0.0
    %5428 = vmatprep.subr.mxu0 0.0
    %5429 = vmatpush2.msra.mxu0 0.0
    %5430 = vmatprep.subr.mxu0 0.0
    %5431 = vmatpush2.msra.mxu0 0.0
    %5432 = vmatprep.subr.mxu0 0.0
    %5433 = vmatpush2.msra.mxu0 0.0
    %5434 = vmatprep.subr.mxu0 0.0
    %5435 = vmatpush2.msra.mxu0 0.0
    %5436 = vmatprep.subr.mxu0 0.0
    %5437 = vmatpush2.msra.mxu0 0.0
    %5438 = vmatprep.subr.mxu0 0.0
    %5439 = vmatpush2.msra.mxu0 0.0
    %5440 = vmatprep.subr.mxu0 0.0
    %5441 = vmatpush2.msra.mxu0 0.0
    %5442 = vmatprep.subr.mxu0 0.0
    %5443 = vmatpush2.msra.mxu0 0.0
    %5444 = vmatprep.mubr.f32.mxu0 0.0
    %5445 = vmatmul.mubr.f32.gmra.mxu0 %v4114
    %v5446 = vpop.f32.mrf.mxu0
    %v5447 = vadd.f32 %v5334, %v5446
    %v5448 = vpop.f32.mrf.mxu0
    %v5449 = vadd.f32 %v5336, %v5448
    %5450 = vmatprep.mubr.f32.mxu0 0.0
    %5451 = vmatmul.mubr.f32.gmra.mxu0 %v4117
    %v5452 = vpop.f32.mrf.mxu0
    %v5453 = vadd.f32 %v5340, %v5452
    %v5454 = vpop.f32.mrf.mxu0
    %v5455 = vadd.f32 %v5342, %v5454
    %5456 = vmatprep.mubr.f32.mxu0 0.0
    %5457 = vmatmul.mubr.f32.gmra.mxu0 %v4120
    %v5458 = vpop.f32.mrf.mxu0
    %v5459 = vadd.f32 %v5346, %v5458
    %v5460 = vpop.f32.mrf.mxu0
    %v5461 = vadd.f32 %v5348, %v5460
    %5462 = vmatprep.mubr.f32.mxu0 0.0
    %5463 = vmatmul.mubr.f32.gmra.mxu0 %v4123
    %v5464 = vpop.f32.mrf.mxu0
    %v5465 = vadd.f32 %v5352, %v5464
    %v5466 = vpop.f32.mrf.mxu0
    %v5467 = vadd.f32 %v5354, %v5466
    %5468 = vmatprep.mubr.f32.mxu0 0.0
    %5469 = vmatmul.mubr.f32.gmra.mxu0 %v4126
    %v5470 = vpop.f32.mrf.mxu0
    %v5471 = vadd.f32 %v5358, %v5470
    %v5472 = vpop.f32.mrf.mxu0
    %v5473 = vadd.f32 %v5360, %v5472
    %5474 = vmatprep.mubr.f32.mxu0 0.0
    %5475 = vmatmul.mubr.f32.gmra.mxu0 %v4129
    %v5476 = vpop.f32.mrf.mxu0
    %v5477 = vadd.f32 %v5364, %v5476
    %v5478 = vpop.f32.mrf.mxu0
    %v5479 = vadd.f32 %v5366, %v5478
    %5480 = vmatprep.mubr.f32.mxu0 0.0
    %5481 = vmatmul.mubr.f32.gmra.mxu0 %v4132
    %v5482 = vpop.f32.mrf.mxu0
    %v5483 = vadd.f32 %v5370, %v5482
    %v5484 = vpop.f32.mrf.mxu0
    %v5485 = vadd.f32 %v5372, %v5484
    %5486 = vmatprep.mubr.f32.mxu0 0.0
    %5487 = vmatmul.mubr.f32.gmra.mxu0 %v4135
    %v5488 = vpop.f32.mrf.mxu0
    %v5489 = vadd.f32 %v5376, %v5488
    %v5490 = vpop.f32.mrf.mxu0
    %v5491 = vadd.f32 %v5378, %v5490
    %5492 = vdwg.mxu0
    %5493 = vmatprep.subr.mxu0 0.0
    %5494 = vmatpush1.msra.mxu0 %v1655
    %5495 = vmatprep.subr.mxu0 0.0
    %5496 = vmatpush1.msra.mxu0 %v1654
    %5497 = vmatprep.subr.mxu0 0.0
    %5498 = vmatpush1.msra.mxu0 %v1653
    %5499 = vmatprep.subr.mxu0 0.0
    %5500 = vmatpush1.msra.mxu0 %v1652
    %5501 = vmatprep.subr.mxu0 0.0
    %5502 = vmatpush1.msra.mxu0 %v1543
    %5503 = vmatprep.subr.mxu0 0.0
    %5504 = vmatpush1.msra.mxu0 %v1542
    %5505 = vmatprep.subr.mxu0 0.0
    %5506 = vmatpush1.msra.mxu0 %v1541
    %5507 = vmatprep.subr.mxu0 0.0
    %5508 = vmatpush1.msra.mxu0 %v1540
    %5509 = vmatprep.subr.mxu0 0.0
    %5510 = vmatpush1.msra.mxu0 %v1431
    %5511 = vmatprep.subr.mxu0 0.0
    %5512 = vmatpush1.msra.mxu0 %v1430
    %5513 = vmatprep.subr.mxu0 0.0
    %5514 = vmatpush1.msra.mxu0 %v1429
    %5515 = vmatprep.subr.mxu0 0.0
    %5516 = vmatpush1.msra.mxu0 %v1428
    %5517 = vmatprep.subr.mxu0 0.0
    %5518 = vmatpush1.msra.mxu0 %v1291
    %5519 = vmatprep.subr.mxu0 0.0
    %5520 = vmatpush1.msra.mxu0 %v1284
    %5521 = vmatprep.subr.mxu0 0.0
    %5522 = vmatpush1.msra.mxu0 %v1277
    %5523 = vmatprep.subr.mxu0 0.0
    %5524 = vmatpush1.msra.mxu0 %v1270
    %5525 = vmatprep.subr.mxu0 0.0
    %5526 = vmatpush2.msra.mxu0 %v2103
    %5527 = vmatprep.subr.mxu0 0.0
    %5528 = vmatpush2.msra.mxu0 %v2102
    %5529 = vmatprep.subr.mxu0 0.0
    %5530 = vmatpush2.msra.mxu0 %v2101
    %5531 = vmatprep.subr.mxu0 0.0
    %5532 = vmatpush2.msra.mxu0 %v2100
    %5533 = vmatprep.subr.mxu0 0.0
    %5534 = vmatpush2.msra.mxu0 %v1991
    %5535 = vmatprep.subr.mxu0 0.0
    %5536 = vmatpush2.msra.mxu0 %v1990
    %5537 = vmatprep.subr.mxu0 0.0
    %5538 = vmatpush2.msra.mxu0 %v1989
    %5539 = vmatprep.subr.mxu0 0.0
    %5540 = vmatpush2.msra.mxu0 %v1988
    %5541 = vmatprep.subr.mxu0 0.0
    %5542 = vmatpush2.msra.mxu0 %v1879
    %5543 = vmatprep.subr.mxu0 0.0
    %5544 = vmatpush2.msra.mxu0 %v1878
    %5545 = vmatprep.subr.mxu0 0.0
    %5546 = vmatpush2.msra.mxu0 %v1877
    %5547 = vmatprep.subr.mxu0 0.0
    %5548 = vmatpush2.msra.mxu0 %v1876
    %5549 = vmatprep.subr.mxu0 0.0
    %5550 = vmatpush2.msra.mxu0 %v1767
    %5551 = vmatprep.subr.mxu0 0.0
    %5552 = vmatpush2.msra.mxu0 %v1766
    %5553 = vmatprep.subr.mxu0 0.0
    %5554 = vmatpush2.msra.mxu0 %v1765
    %5555 = vmatprep.subr.mxu0 0.0
    %5556 = vmatpush2.msra.mxu0 %v1764
    %5557 = vmatprep.mubr.f32.mxu0 %v4009
    %5558 = vmatmul.mubr.f32.gmra.mxu0 %v4008
    %v5559 = vpop.f32.mrf.mxu0
    %v5560 = vadd.f32 %v4075, %v5559
    %v5561 = vpop.f32.mrf.mxu0
    %5562 = vmatprep.mubr.f32.mxu0 %v4016
    %5563 = vmatmul.mubr.f32.gmra.mxu0 %v4015
    %v5564 = vpop.f32.mrf.mxu0
    %v5565 = vadd.f32 %v4080, %v5564
    %v5566 = vpop.f32.mrf.mxu0
    %5567 = vmatprep.mubr.f32.mxu0 %v4023
    %5568 = vmatmul.mubr.f32.gmra.mxu0 %v4022
    %v5569 = vpop.f32.mrf.mxu0
    %v5570 = vadd.f32 %v4085, %v5569
    %v5571 = vpop.f32.mrf.mxu0
    %5572 = vmatprep.mubr.f32.mxu0 %v4030
    %5573 = vmatmul.mubr.f32.gmra.mxu0 %v4029
    %v5574 = vpop.f32.mrf.mxu0
    %v5575 = vadd.f32 %v4090, %v5574
    %v5576 = vpop.f32.mrf.mxu0
    %5577 = vmatprep.mubr.f32.mxu0 %v4037
    %5578 = vmatmul.mubr.f32.gmra.mxu0 %v4036
    %v5579 = vpop.f32.mrf.mxu0
    %v5580 = vadd.f32 %v4095, %v5579
    %v5581 = vpop.f32.mrf.mxu0
    %5582 = vmatprep.mubr.f32.mxu0 %v4044
    %5583 = vmatmul.mubr.f32.gmra.mxu0 %v4043
    %v5584 = vpop.f32.mrf.mxu0
    %v5585 = vadd.f32 %v4100, %v5584
    %v5586 = vpop.f32.mrf.mxu0
    %5587 = vmatprep.mubr.f32.mxu0 %v4051
    %5588 = vmatmul.mubr.f32.gmra.mxu0 %v4050
    %v5589 = vpop.f32.mrf.mxu0
    %v5590 = vadd.f32 %v4105, %v5589
    %v5591 = vpop.f32.mrf.mxu0
    %5592 = vmatprep.mubr.f32.mxu0 %v4058
    %5593 = vmatmul.mubr.f32.gmra.mxu0 %v4057
    %v5594 = vpop.f32.mrf.mxu0
    %v5595 = vadd.f32 %v4110, %v5594
    %v5596 = vpop.f32.mrf.mxu0
    %5597 = vdwg.mxu0
    %5598 = vmatprep.subr.mxu0 0.0
    %5599 = vmatpush1.msra.mxu0 %v2551
    %5600 = vmatprep.subr.mxu0 0.0
    %5601 = vmatpush1.msra.mxu0 %v2550
    %5602 = vmatprep.subr.mxu0 0.0
    %5603 = vmatpush1.msra.mxu0 %v2549
    %5604 = vmatprep.subr.mxu0 0.0
    %5605 = vmatpush1.msra.mxu0 %v2548
    %5606 = vmatprep.subr.mxu0 0.0
    %5607 = vmatpush1.msra.mxu0 %v2439
    %5608 = vmatprep.subr.mxu0 0.0
    %5609 = vmatpush1.msra.mxu0 %v2438
    %5610 = vmatprep.subr.mxu0 0.0
    %5611 = vmatpush1.msra.mxu0 %v2437
    %5612 = vmatprep.subr.mxu0 0.0
    %5613 = vmatpush1.msra.mxu0 %v2436
    %5614 = vmatprep.subr.mxu0 0.0
    %5615 = vmatpush1.msra.mxu0 %v2327
    %5616 = vmatprep.subr.mxu0 0.0
    %5617 = vmatpush1.msra.mxu0 %v2326
    %5618 = vmatprep.subr.mxu0 0.0
    %5619 = vmatpush1.msra.mxu0 %v2325
    %5620 = vmatprep.subr.mxu0 0.0
    %5621 = vmatpush1.msra.mxu0 %v2324
    %5622 = vmatprep.subr.mxu0 0.0
    %5623 = vmatpush1.msra.mxu0 %v2215
    %5624 = vmatprep.subr.mxu0 0.0
    %5625 = vmatpush1.msra.mxu0 %v2214
    %5626 = vmatprep.subr.mxu0 0.0
    %5627 = vmatpush1.msra.mxu0 %v2213
    %5628 = vmatprep.subr.mxu0 0.0
    %5629 = vmatpush1.msra.mxu0 %v2212
    %5630 = vmatprep.subr.mxu0 0.0
    %5631 = vmatpush2.msra.mxu0 %v2999
    %5632 = vmatprep.subr.mxu0 0.0
    %5633 = vmatpush2.msra.mxu0 %v2998
    %5634 = vmatprep.subr.mxu0 0.0
    %5635 = vmatpush2.msra.mxu0 %v2997
    %5636 = vmatprep.subr.mxu0 0.0
    %5637 = vmatpush2.msra.mxu0 %v2996
    %5638 = vmatprep.subr.mxu0 0.0
    %5639 = vmatpush2.msra.mxu0 %v2887
    %5640 = vmatprep.subr.mxu0 0.0
    %5641 = vmatpush2.msra.mxu0 %v2886
    %5642 = vmatprep.subr.mxu0 0.0
    %5643 = vmatpush2.msra.mxu0 %v2885
    %5644 = vmatprep.subr.mxu0 0.0
    %5645 = vmatpush2.msra.mxu0 %v2884
    %5646 = vmatprep.subr.mxu0 0.0
    %5647 = vmatpush2.msra.mxu0 %v2775
    %5648 = vmatprep.subr.mxu0 0.0
    %5649 = vmatpush2.msra.mxu0 %v2774
    %5650 = vmatprep.subr.mxu0 0.0
    %5651 = vmatpush2.msra.mxu0 %v2773
    %5652 = vmatprep.subr.mxu0 0.0
    %5653 = vmatpush2.msra.mxu0 %v2772
    %5654 = vmatprep.subr.mxu0 0.0
    %5655 = vmatpush2.msra.mxu0 %v2663
    %5656 = vmatprep.subr.mxu0 0.0
    %5657 = vmatpush2.msra.mxu0 %v2662
    %5658 = vmatprep.subr.mxu0 0.0
    %5659 = vmatpush2.msra.mxu0 %v2661
    %5660 = vmatprep.subr.mxu0 0.0
    %5661 = vmatpush2.msra.mxu0 %v2660
    %5662 = vmatprep.mubr.f32.mxu0 %v4011
    %5663 = vmatmul.mubr.f32.gmra.mxu0 %v4010
    %v5664 = vpop.f32.mrf.mxu0
    %v5665 = vadd.f32 %v5560, %v5664
    %v5666 = vpop.f32.mrf.mxu0
    %5667 = vmatprep.mubr.f32.mxu0 %v4018
    %5668 = vmatmul.mubr.f32.gmra.mxu0 %v4017
    %v5669 = vpop.f32.mrf.mxu0
    %v5670 = vadd.f32 %v5565, %v5669
    %v5671 = vpop.f32.mrf.mxu0
    %5672 = vmatprep.mubr.f32.mxu0 %v4025
    %5673 = vmatmul.mubr.f32.gmra.mxu0 %v4024
    %v5674 = vpop.f32.mrf.mxu0
    %v5675 = vadd.f32 %v5570, %v5674
    %v5676 = vpop.f32.mrf.mxu0
    %5677 = vmatprep.mubr.f32.mxu0 %v4032
    %5678 = vmatmul.mubr.f32.gmra.mxu0 %v4031
    %v5679 = vpop.f32.mrf.mxu0
    %v5680 = vadd.f32 %v5575, %v5679
    %v5681 = vpop.f32.mrf.mxu0
    %5682 = vmatprep.mubr.f32.mxu0 %v4039
    %5683 = vmatmul.mubr.f32.gmra.mxu0 %v4038
    %v5684 = vpop.f32.mrf.mxu0
    %v5685 = vadd.f32 %v5580, %v5684
    %v5686 = vpop.f32.mrf.mxu0
    %5687 = vmatprep.mubr.f32.mxu0 %v4046
    %5688 = vmatmul.mubr.f32.gmra.mxu0 %v4045
    %v5689 = vpop.f32.mrf.mxu0
    %v5690 = vadd.f32 %v5585, %v5689
    %v5691 = vpop.f32.mrf.mxu0
    %5692 = vmatprep.mubr.f32.mxu0 %v4053
    %5693 = vmatmul.mubr.f32.gmra.mxu0 %v4052
    %v5694 = vpop.f32.mrf.mxu0
    %v5695 = vadd.f32 %v5590, %v5694
    %v5696 = vpop.f32.mrf.mxu0
    %5697 = vmatprep.mubr.f32.mxu0 %v4060
    %5698 = vmatmul.mubr.f32.gmra.mxu0 %v4059
    %v5699 = vpop.f32.mrf.mxu0
    %v5700 = vadd.f32 %v5595, %v5699
    %v5701 = vpop.f32.mrf.mxu0
    %5702 = vdwg.mxu0
    %5703 = vmatprep.subr.mxu0 0.0
    %5704 = vmatpush1.msra.mxu0 %v3447
    %5705 = vmatprep.subr.mxu0 0.0
    %5706 = vmatpush1.msra.mxu0 %v3446
    %5707 = vmatprep.subr.mxu0 0.0
    %5708 = vmatpush1.msra.mxu0 %v3445
    %5709 = vmatprep.subr.mxu0 0.0
    %5710 = vmatpush1.msra.mxu0 %v3444
    %5711 = vmatprep.subr.mxu0 0.0
    %5712 = vmatpush1.msra.mxu0 %v3335
    %5713 = vmatprep.subr.mxu0 0.0
    %5714 = vmatpush1.msra.mxu0 %v3334
    %5715 = vmatprep.subr.mxu0 0.0
    %5716 = vmatpush1.msra.mxu0 %v3333
    %5717 = vmatprep.subr.mxu0 0.0
    %5718 = vmatpush1.msra.mxu0 %v3332
    %5719 = vmatprep.subr.mxu0 0.0
    %5720 = vmatpush1.msra.mxu0 %v3223
    %5721 = vmatprep.subr.mxu0 0.0
    %5722 = vmatpush1.msra.mxu0 %v3222
    %5723 = vmatprep.subr.mxu0 0.0
    %5724 = vmatpush1.msra.mxu0 %v3221
    %5725 = vmatprep.subr.mxu0 0.0
    %5726 = vmatpush1.msra.mxu0 %v3220
    %5727 = vmatprep.subr.mxu0 0.0
    %5728 = vmatpush1.msra.mxu0 %v3111
    %5729 = vmatprep.subr.mxu0 0.0
    %5730 = vmatpush1.msra.mxu0 %v3110
    %5731 = vmatprep.subr.mxu0 0.0
    %5732 = vmatpush1.msra.mxu0 %v3109
    %5733 = vmatprep.subr.mxu0 0.0
    %5734 = vmatpush1.msra.mxu0 %v3108
    %5735 = vmatprep.subr.mxu0 0.0
    %5736 = vmatpush2.msra.mxu0 %v3895
    %5737 = vmatprep.subr.mxu0 0.0
    %5738 = vmatpush2.msra.mxu0 %v3894
    %5739 = vmatprep.subr.mxu0 0.0
    %5740 = vmatpush2.msra.mxu0 %v3893
    %5741 = vmatprep.subr.mxu0 0.0
    %5742 = vmatpush2.msra.mxu0 %v3892
    %5743 = vmatprep.subr.mxu0 0.0
    %5744 = vmatpush2.msra.mxu0 %v3783
    %5745 = vmatprep.subr.mxu0 0.0
    %5746 = vmatpush2.msra.mxu0 %v3782
    %5747 = vmatprep.subr.mxu0 0.0
    %5748 = vmatpush2.msra.mxu0 %v3781
    %5749 = vmatprep.subr.mxu0 0.0
    %5750 = vmatpush2.msra.mxu0 %v3780
    %5751 = vmatprep.subr.mxu0 0.0
    %5752 = vmatpush2.msra.mxu0 %v3671
    %5753 = vmatprep.subr.mxu0 0.0
    %5754 = vmatpush2.msra.mxu0 %v3670
    %5755 = vmatprep.subr.mxu0 0.0
    %5756 = vmatpush2.msra.mxu0 %v3669
    %5757 = vmatprep.subr.mxu0 0.0
    %5758 = vmatpush2.msra.mxu0 %v3668
    %5759 = vmatprep.subr.mxu0 0.0
    %5760 = vmatpush2.msra.mxu0 %v3559
    %5761 = vmatprep.subr.mxu0 0.0
    %5762 = vmatpush2.msra.mxu0 %v3558
    %5763 = vmatprep.subr.mxu0 0.0
    %5764 = vmatpush2.msra.mxu0 %v3557
    %5765 = vmatprep.subr.mxu0 0.0
    %5766 = vmatpush2.msra.mxu0 %v3556
    %5767 = vmatprep.mubr.f32.mxu0 %v4013
    %5768 = vmatmul.mubr.f32.gmra.mxu0 %v4012
    %v5769 = vpop.f32.mrf.mxu0
    %v5770 = vadd.f32 %v5665, %v5769
    %v5771 = vpop.f32.mrf.mxu0
    %5772 = vmatprep.mubr.f32.mxu0 %v4020
    %5773 = vmatmul.mubr.f32.gmra.mxu0 %v4019
    %v5774 = vpop.f32.mrf.mxu0
    %v5775 = vadd.f32 %v5670, %v5774
    %v5776 = vpop.f32.mrf.mxu0
    %5777 = vmatprep.mubr.f32.mxu0 %v4027
    %5778 = vmatmul.mubr.f32.gmra.mxu0 %v4026
    %v5779 = vpop.f32.mrf.mxu0
    %v5780 = vadd.f32 %v5675, %v5779
    %v5781 = vpop.f32.mrf.mxu0
    %5782 = vmatprep.mubr.f32.mxu0 %v4034
    %5783 = vmatmul.mubr.f32.gmra.mxu0 %v4033
    %v5784 = vpop.f32.mrf.mxu0
    %v5785 = vadd.f32 %v5680, %v5784
    %v5786 = vpop.f32.mrf.mxu0
    %5787 = vmatprep.mubr.f32.mxu0 %v4041
    %5788 = vmatmul.mubr.f32.gmra.mxu0 %v4040
    %v5789 = vpop.f32.mrf.mxu0
    %v5790 = vadd.f32 %v5685, %v5789
    %v5791 = vpop.f32.mrf.mxu0
    %5792 = vmatprep.mubr.f32.mxu0 %v4048
    %5793 = vmatmul.mubr.f32.gmra.mxu0 %v4047
    %v5794 = vpop.f32.mrf.mxu0
    %v5795 = vadd.f32 %v5690, %v5794
    %v5796 = vpop.f32.mrf.mxu0
    %5797 = vmatprep.mubr.f32.mxu0 %v4055
    %5798 = vmatmul.mubr.f32.gmra.mxu0 %v4054
    %v5799 = vpop.f32.mrf.mxu0
    %v5800 = vadd.f32 %v5695, %v5799
    %v5801 = vpop.f32.mrf.mxu0
    %5802 = vmatprep.mubr.f32.mxu0 %v4062
    %5803 = vmatmul.mubr.f32.gmra.mxu0 %v4061
    %v5804 = vpop.f32.mrf.mxu0
    %v5805 = vadd.f32 %v5700, %v5804
    %v5806 = vpop.f32.mrf.mxu0
    %5807 = vdwg.mxu0
    %5808 = vmatprep.subr.mxu0 0.0
    %5809 = vmatpush1.msra.mxu0 0.0
    %5810 = vmatprep.subr.mxu0 0.0
    %5811 = vmatpush1.msra.mxu0 0.0
    %5812 = vmatprep.subr.mxu0 0.0
    %5813 = vmatpush1.msra.mxu0 0.0
    %5814 = vmatprep.subr.mxu0 0.0
    %5815 = vmatpush1.msra.mxu0 0.0
    %5816 = vmatprep.subr.mxu0 0.0
    %5817 = vmatpush1.msra.mxu0 0.0
    %5818 = vmatprep.subr.mxu0 0.0
    %5819 = vmatpush1.msra.mxu0 0.0
    %5820 = vmatprep.subr.mxu0 0.0
    %5821 = vmatpush1.msra.mxu0 0.0
    %5822 = vmatprep.subr.mxu0 0.0
    %5823 = vmatpush1.msra.mxu0 0.0
    %5824 = vmatprep.subr.mxu0 0.0
    %5825 = vmatpush1.msra.mxu0 0.0
    %5826 = vmatprep.subr.mxu0 0.0
    %5827 = vmatpush1.msra.mxu0 0.0
    %5828 = vmatprep.subr.mxu0 0.0
    %5829 = vmatpush1.msra.mxu0 0.0
    %5830 = vmatprep.subr.mxu0 0.0
    %5831 = vmatpush1.msra.mxu0 0.0
    %5832 = vmatprep.subr.mxu0 0.0
    %5833 = vmatpush1.msra.mxu0 %v4007
    %5834 = vmatprep.subr.mxu0 0.0
    %5835 = vmatpush1.msra.mxu0 %v4006
    %5836 = vmatprep.subr.mxu0 0.0
    %5837 = vmatpush1.msra.mxu0 %v4005
    %5838 = vmatprep.subr.mxu0 0.0
    %5839 = vmatpush1.msra.mxu0 %v4004
    %5840 = vmatprep.subr.mxu0 0.0
    %5841 = vmatpush2.msra.mxu0 0.0
    %5842 = vmatprep.subr.mxu0 0.0
    %5843 = vmatpush2.msra.mxu0 0.0
    %5844 = vmatprep.subr.mxu0 0.0
    %5845 = vmatpush2.msra.mxu0 0.0
    %5846 = vmatprep.subr.mxu0 0.0
    %5847 = vmatpush2.msra.mxu0 0.0
    %5848 = vmatprep.subr.mxu0 0.0
    %5849 = vmatpush2.msra.mxu0 0.0
    %5850 = vmatprep.subr.mxu0 0.0
    %5851 = vmatpush2.msra.mxu0 0.0
    %5852 = vmatprep.subr.mxu0 0.0
    %5853 = vmatpush2.msra.mxu0 0.0
    %5854 = vmatprep.subr.mxu0 0.0
    %5855 = vmatpush2.msra.mxu0 0.0
    %5856 = vmatprep.subr.mxu0 0.0
    %5857 = vmatpush2.msra.mxu0 0.0
    %5858 = vmatprep.subr.mxu0 0.0
    %5859 = vmatpush2.msra.mxu0 0.0
    %5860 = vmatprep.subr.mxu0 0.0
    %5861 = vmatpush2.msra.mxu0 0.0
    %5862 = vmatprep.subr.mxu0 0.0
    %5863 = vmatpush2.msra.mxu0 0.0
    %5864 = vmatprep.subr.mxu0 0.0
    %5865 = vmatpush2.msra.mxu0 0.0
    %5866 = vmatprep.subr.mxu0 0.0
    %5867 = vmatpush2.msra.mxu0 0.0
    %5868 = vmatprep.subr.mxu0 0.0
    %5869 = vmatpush2.msra.mxu0 0.0
    %5870 = vmatprep.subr.mxu0 0.0
    %5871 = vmatpush2.msra.mxu0 0.0
    %5872 = vmatprep.mubr.f32.mxu0 0.0
    %5873 = vmatmul.mubr.f32.gmra.mxu0 %v4114
    %v5874 = vpop.f32.mrf.mxu0
    %v5875 = vadd.f32 %v5770, %v5874
    %v5876 = vpop.f32.mrf.mxu0
    %5877 = vmatprep.mubr.f32.mxu0 0.0
    %5878 = vmatmul.mubr.f32.gmra.mxu0 %v4117
    %v5879 = vpop.f32.mrf.mxu0
    %v5880 = vadd.f32 %v5775, %v5879
    %v5881 = vpop.f32.mrf.mxu0
    %5882 = vmatprep.mubr.f32.mxu0 0.0
    %5883 = vmatmul.mubr.f32.gmra.mxu0 %v4120
    %v5884 = vpop.f32.mrf.mxu0
    %v5885 = vadd.f32 %v5780, %v5884
    %v5886 = vpop.f32.mrf.mxu0
    %5887 = vmatprep.mubr.f32.mxu0 0.0
    %5888 = vmatmul.mubr.f32.gmra.mxu0 %v4123
    %v5889 = vpop.f32.mrf.mxu0
    %v5890 = vadd.f32 %v5785, %v5889
    %v5891 = vpop.f32.mrf.mxu0
    %5892 = vmatprep.mubr.f32.mxu0 0.0
    %5893 = vmatmul.mubr.f32.gmra.mxu0 %v4126
    %v5894 = vpop.f32.mrf.mxu0
    %v5895 = vadd.f32 %v5790, %v5894
    %v5896 = vpop.f32.mrf.mxu0
    %5897 = vmatprep.mubr.f32.mxu0 0.0
    %5898 = vmatmul.mubr.f32.gmra.mxu0 %v4129
    %v5899 = vpop.f32.mrf.mxu0
    %v5900 = vadd.f32 %v5795, %v5899
    %v5901 = vpop.f32.mrf.mxu0
    %5902 = vmatprep.mubr.f32.mxu0 0.0
    %5903 = vmatmul.mubr.f32.gmra.mxu0 %v4132
    %v5904 = vpop.f32.mrf.mxu0
    %v5905 = vadd.f32 %v5800, %v5904
    %v5906 = vpop.f32.mrf.mxu0
    %5907 = vmatprep.mubr.f32.mxu0 0.0
    %5908 = vmatmul.mubr.f32.gmra.mxu0 %v4135
    %v5909 = vpop.f32.mrf.mxu0
    %v5910 = vadd.f32 %v5805, %v5909
    %v5911 = vpop.f32.mrf.mxu0
    %5912 = vdwg.mxu0
    %v5913 = vmax.f32 %v4543, 0.0
    %v5914 = vmax.f32 %v4545, 0.0
    %v5915 = vmax.f32 %v4995, 0.0
    %v5916 = vmax.f32 %v4997, 0.0
    %v5917 = vmax.f32 %v5447, 0.0
    %v5918 = vmax.f32 %v5449, 0.0
    %v5919 = vmax.f32 %v5875, 0.0
    %v5920 = vmax.f32 %v4549, 0.0
    %v5921 = vmax.f32 %v4551, 0.0
    %v5922 = vmax.f32 %v5001, 0.0
    %v5923 = vmax.f32 %v5003, 0.0
    %v5924 = vmax.f32 %v5453, 0.0
    %v5925 = vmax.f32 %v5455, 0.0
    %v5926 = vmax.f32 %v5880, 0.0
    %v5927 = vmax.f32 %v4555, 0.0
    %v5928 = vmax.f32 %v4557, 0.0
    %v5929 = vmax.f32 %v5007, 0.0
    %v5930 = vmax.f32 %v5009, 0.0
    %v5931 = vmax.f32 %v5459, 0.0
    %v5932 = vmax.f32 %v5461, 0.0
    %v5933 = vmax.f32 %v5885, 0.0
    %v5934 = vmax.f32 %v4561, 0.0
    %v5935 = vmax.f32 %v4563, 0.0
    %v5936 = vmax.f32 %v5013, 0.0
    %v5937 = vmax.f32 %v5015, 0.0
    %v5938 = vmax.f32 %v5465, 0.0
    %v5939 = vmax.f32 %v5467, 0.0
    %v5940 = vmax.f32 %v5890, 0.0
    %v5941 = vmax.f32 %v4567, 0.0
    %v5942 = vmax.f32 %v4569, 0.0
    %v5943 = vmax.f32 %v5019, 0.0
    %v5944 = vmax.f32 %v5021, 0.0
    %v5945 = vmax.f32 %v5471, 0.0
    %v5946 = vmax.f32 %v5473, 0.0
    %v5947 = vmax.f32 %v5895, 0.0
    %v5948 = vmax.f32 %v4573, 0.0
    %v5949 = vmax.f32 %v4575, 0.0
    %v5950 = vmax.f32 %v5025, 0.0
    %v5951 = vmax.f32 %v5027, 0.0
    %v5952 = vmax.f32 %v5477, 0.0
    %v5953 = vmax.f32 %v5479, 0.0
    %v5954 = vmax.f32 %v5900, 0.0
    %v5955 = vmax.f32 %v4579, 0.0
    %v5956 = vmax.f32 %v4581, 0.0
    %v5957 = vmax.f32 %v5031, 0.0
    %v5958 = vmax.f32 %v5033, 0.0
    %v5959 = vmax.f32 %v5483, 0.0
    %v5960 = vmax.f32 %v5485, 0.0
    %v5961 = vmax.f32 %v5905, 0.0
    %v5962 = vmax.f32 %v4585, 0.0
    %v5963 = vmax.f32 %v4587, 0.0
    %v5964 = vmax.f32 %v5037, 0.0
    %v5965 = vmax.f32 %v5039, 0.0
    %v5966 = vmax.f32 %v5489, 0.0
    %v5967 = vmax.f32 %v5491, 0.0
    %v5968 = vmax.f32 %v5910, 0.0
    %v5969 = vld [vmem:[#allocation7] sm:$0xff]
    %v5970 = vld [vmem:[#allocation7 + $0x8] sm:$0xff]
    %v5971 = vld [vmem:[#allocation7 + $0x10] sm:$0xff]
    %v5972 = vld [vmem:[#allocation7 + $0x18] sm:$0xff]
    %v5973 = vld [vmem:[#allocation7 + $0x20] sm:$0xff]
    %v5974 = vld [vmem:[#allocation7 + $0x28] sm:$0xff]
    %v5975 = vld [vmem:[#allocation7 + $0x30] sm:$0xff]
    %v5976 = vld [vmem:[#allocation7 + $0x38] sm:$0xff]
    %v5977 = vld [vmem:[#allocation7 + $0x40] sm:$0xff]
    %v5978 = vld [vmem:[#allocation7 + $0x48] sm:$0xff]
    %v5979 = vld [vmem:[#allocation7 + $0x50] sm:$0xff]
    %v5980 = vld [vmem:[#allocation7 + $0x58] sm:$0xff]
    %v5981 = vld [vmem:[#allocation7 + $0x60] sm:$0xff]
    %v5982 = vld [vmem:[#allocation7 + $0x68] sm:$0xff]
    %v5983 = vld [vmem:[#allocation7 + $0x70] sm:$0xff]
    %v5984 = vld [vmem:[#allocation7 + $0x78] sm:$0xff]
    %v5985 = vld [vmem:[#allocation7 + $0x80] sm:$0xff]
    %v5986 = vld [vmem:[#allocation7 + $0x88] sm:$0xff]
    %v5987 = vld [vmem:[#allocation7 + $0x90] sm:$0xff]
    %v5988 = vld [vmem:[#allocation7 + $0x98] sm:$0xff]
    %v5989 = vld [vmem:[#allocation7 + $0xa0] sm:$0xff]
    %v5990 = vld [vmem:[#allocation7 + $0xa8] sm:$0xff]
    %v5991 = vld [vmem:[#allocation7 + $0xb0] sm:$0xff]
    %v5992 = vld [vmem:[#allocation7 + $0xb8] sm:$0xff]
    %v5993 = vld [vmem:[#allocation7 + $0xc0] sm:$0xff]
    %v5994 = vld [vmem:[#allocation7 + $0xc8] sm:$0xff]
    %v5995 = vld [vmem:[#allocation7 + $0xd0] sm:$0xff]
    %v5996 = vld [vmem:[#allocation7 + $0xd8] sm:$0xff]
    %v5997 = vld [vmem:[#allocation7 + $0xe0] sm:$0xff]
    %v5998 = vld [vmem:[#allocation7 + $0xe8] sm:$0xff]
    %v5999 = vld [vmem:[#allocation7 + $0xf0] sm:$0xff]
    %v6000 = vld [vmem:[#allocation7 + $0xf8] sm:$0xff]
    %v6001 = vld [vmem:[#allocation7 + $0x100] sm:$0xff]
    %v6002 = vld [vmem:[#allocation7 + $0x108] sm:$0xff]
    %v6003 = vld [vmem:[#allocation7 + $0x110] sm:$0xff]
    %v6004 = vld [vmem:[#allocation7 + $0x118] sm:$0xff]
    %v6005 = vld [vmem:[#allocation7 + $0x120] sm:$0xff]
    %v6006 = vld [vmem:[#allocation7 + $0x128] sm:$0xff]
    %v6007 = vld [vmem:[#allocation7 + $0x130] sm:$0xff]
    %v6008 = vld [vmem:[#allocation7 + $0x138] sm:$0xff]
    %v6009 = vld [vmem:[#allocation7 + $0x140] sm:$0xff]
    %v6010 = vld [vmem:[#allocation7 + $0x148] sm:$0xff]
    %v6011 = vld [vmem:[#allocation7 + $0x150] sm:$0xff]
    %v6012 = vld [vmem:[#allocation7 + $0x158] sm:$0xff]
    %v6013 = vld [vmem:[#allocation7 + $0x160] sm:$0xff]
    %v6014 = vld [vmem:[#allocation7 + $0x168] sm:$0xff]
    %v6015 = vld [vmem:[#allocation7 + $0x170] sm:$0xff]
    %v6016 = vld [vmem:[#allocation7 + $0x178] sm:$0xff]
    %v6017 = vld [vmem:[#allocation7 + $0x180] sm:$0xff]
    %v6018 = vld [vmem:[#allocation7 + $0x188] sm:$0xff]
    %v6019 = vld [vmem:[#allocation7 + $0x190] sm:$0xff]
    %v6020 = vld [vmem:[#allocation7 + $0x198] sm:$0xff]
    %v6021 = vld [vmem:[#allocation7 + $0x1a0] sm:$0xff]
    %v6022 = vld [vmem:[#allocation7 + $0x1a8] sm:$0xff]
    %v6023 = vld [vmem:[#allocation7 + $0x1b0] sm:$0xff]
    %v6024 = vld [vmem:[#allocation7 + $0x1b8] sm:$0xff]
    %v6025 = vld [vmem:[#allocation7 + $0x1c0] sm:$0xff]
    %v6026 = vld [vmem:[#allocation7 + $0x1c8] sm:$0xff]
    %v6027 = vld [vmem:[#allocation7 + $0x1d0] sm:$0xff]
    %v6028 = vld [vmem:[#allocation7 + $0x1d8] sm:$0xff]
    %v6029 = vld [vmem:[#allocation7 + $0x1e0] sm:$0xff]
    %v6030 = vld [vmem:[#allocation7 + $0x1e8] sm:$0xff]
    %v6031 = vld [vmem:[#allocation7 + $0x1f0] sm:$0xff]
    %v6032 = vld [vmem:[#allocation7 + $0x1f8] sm:$0xff]
    %v6033 = vld [vmem:[#allocation7 + $0x200] sm:$0xff]
    %v6034 = vld [vmem:[#allocation7 + $0x208] sm:$0xff]
    %v6035 = vld [vmem:[#allocation7 + $0x210] sm:$0xff]
    %v6036 = vld [vmem:[#allocation7 + $0x218] sm:$0xff]
    %v6037 = vld [vmem:[#allocation7 + $0x220] sm:$0xff]
    %v6038 = vld [vmem:[#allocation7 + $0x228] sm:$0xff]
    %v6039 = vld [vmem:[#allocation7 + $0x230] sm:$0xff]
    %v6040 = vld [vmem:[#allocation7 + $0x238] sm:$0xff]
    %v6041 = vld [vmem:[#allocation7 + $0x240] sm:$0xff]
    %v6042 = vld [vmem:[#allocation7 + $0x248] sm:$0xff]
    %v6043 = vld [vmem:[#allocation7 + $0x250] sm:$0xff]
    %v6044 = vld [vmem:[#allocation7 + $0x258] sm:$0xff]
    %v6045 = vld [vmem:[#allocation7 + $0x260] sm:$0xff]
    %v6046 = vld [vmem:[#allocation7 + $0x268] sm:$0xff]
    %v6047 = vld [vmem:[#allocation7 + $0x270] sm:$0xff]
    %v6048 = vld [vmem:[#allocation7 + $0x278] sm:$0xff]
    %v6049 = vld [vmem:[#allocation7 + $0x280] sm:$0xff]
    %v6050 = vld [vmem:[#allocation7 + $0x288] sm:$0xff]
    %v6051 = vld [vmem:[#allocation7 + $0x290] sm:$0xff]
    %v6052 = vld [vmem:[#allocation7 + $0x298] sm:$0xff]
    %v6053 = vld [vmem:[#allocation7 + $0x2a0] sm:$0xff]
    %v6054 = vld [vmem:[#allocation7 + $0x2a8] sm:$0xff]
    %v6055 = vld [vmem:[#allocation7 + $0x2b0] sm:$0xff]
    %v6056 = vld [vmem:[#allocation7 + $0x2b8] sm:$0xff]
    %v6057 = vld [vmem:[#allocation7 + $0x2c0] sm:$0xff]
    %v6058 = vld [vmem:[#allocation7 + $0x2c8] sm:$0xff]
    %v6059 = vld [vmem:[#allocation7 + $0x2d0] sm:$0xff]
    %v6060 = vld [vmem:[#allocation7 + $0x2d8] sm:$0xff]
    %v6061 = vld [vmem:[#allocation7 + $0x2e0] sm:$0xff]
    %v6062 = vld [vmem:[#allocation7 + $0x2e8] sm:$0xff]
    %v6063 = vld [vmem:[#allocation7 + $0x2f0] sm:$0xff]
    %v6064 = vld [vmem:[#allocation7 + $0x2f8] sm:$0xff]
    %v6065 = vld [vmem:[#allocation7 + $0x300] sm:$0xff]
    %v6066 = vld [vmem:[#allocation7 + $0x308] sm:$0xff]
    %v6067 = vld [vmem:[#allocation7 + $0x310] sm:$0xff]
    %v6068 = vld [vmem:[#allocation7 + $0x318] sm:$0xff]
    %v6069 = vld [vmem:[#allocation7 + $0x320] sm:$0xff]
    %v6070 = vld [vmem:[#allocation7 + $0x328] sm:$0xff]
    %v6071 = vld [vmem:[#allocation7 + $0x330] sm:$0xff]
    %v6072 = vld [vmem:[#allocation7 + $0x338] sm:$0xff]
    %v6073 = vld [vmem:[#allocation7 + $0x340] sm:$0xff]
    %v6074 = vld [vmem:[#allocation7 + $0x348] sm:$0xff]
    %v6075 = vld [vmem:[#allocation7 + $0x350] sm:$0xff]
    %v6076 = vld [vmem:[#allocation7 + $0x358] sm:$0xff]
    %v6077 = vld [vmem:[#allocation7 + $0x360] sm:$0xff]
    %v6078 = vld [vmem:[#allocation7 + $0x368] sm:$0xff]
    %v6079 = vld [vmem:[#allocation7 + $0x370] sm:$0xff]
    %v6080 = vld [vmem:[#allocation7 + $0x378] sm:$0xff]
    %s6081 = scalar_lea.vmem [#allocation7], 896
    %v6082 = vld [vmem:[%s6081] sm:$0xff]
    %v6083 = vld [vmem:[%s6081 + $0x8] sm:$0xff]
    %v6084 = vld [vmem:[%s6081 + $0x10] sm:$0xff]
    %v6085 = vld [vmem:[%s6081 + $0x18] sm:$0xff]
    %v6086 = vld [vmem:[%s6081 + $0x20] sm:$0xff]
    %v6087 = vld [vmem:[%s6081 + $0x28] sm:$0xff]
    %v6088 = vld [vmem:[%s6081 + $0x30] sm:$0xff]
    %v6089 = vld [vmem:[%s6081 + $0x38] sm:$0xff]
    %v6090 = vld [vmem:[%s6081 + $0x40] sm:$0xff]
    %v6091 = vld [vmem:[%s6081 + $0x48] sm:$0xff]
    %v6092 = vld [vmem:[%s6081 + $0x50] sm:$0xff]
    %v6093 = vld [vmem:[%s6081 + $0x58] sm:$0xff]
    %v6094 = vld [vmem:[%s6081 + $0x60] sm:$0xff]
    %v6095 = vld [vmem:[%s6081 + $0x68] sm:$0xff]
    %v6096 = vld [vmem:[%s6081 + $0x70] sm:$0xff]
    %v6097 = vld [vmem:[%s6081 + $0x78] sm:$0xff]
    %v6098 = vld [vmem:[%s6081 + $0x80] sm:$0xff]
    %v6099 = vld [vmem:[%s6081 + $0x88] sm:$0xff]
    %v6100 = vld [vmem:[%s6081 + $0x90] sm:$0xff]
    %v6101 = vld [vmem:[%s6081 + $0x98] sm:$0xff]
    %v6102 = vld [vmem:[%s6081 + $0xa0] sm:$0xff]
    %v6103 = vld [vmem:[%s6081 + $0xa8] sm:$0xff]
    %v6104 = vld [vmem:[%s6081 + $0xb0] sm:$0xff]
    %v6105 = vld [vmem:[%s6081 + $0xb8] sm:$0xff]
    %v6106 = vld [vmem:[%s6081 + $0xc0] sm:$0xff]
    %v6107 = vld [vmem:[%s6081 + $0xc8] sm:$0xff]
    %v6108 = vld [vmem:[%s6081 + $0xd0] sm:$0xff]
    %v6109 = vld [vmem:[%s6081 + $0xd8] sm:$0xff]
    %v6110 = vld [vmem:[%s6081 + $0xe0] sm:$0xff]
    %v6111 = vld [vmem:[%s6081 + $0xe8] sm:$0xff]
    %v6112 = vld [vmem:[%s6081 + $0xf0] sm:$0xff]
    %v6113 = vld [vmem:[%s6081 + $0xf8] sm:$0xff]
    %v6114 = vld [vmem:[%s6081 + $0x100] sm:$0xff]
    %v6115 = vld [vmem:[%s6081 + $0x108] sm:$0xff]
    %v6116 = vld [vmem:[%s6081 + $0x110] sm:$0xff]
    %v6117 = vld [vmem:[%s6081 + $0x118] sm:$0xff]
    %v6118 = vld [vmem:[%s6081 + $0x120] sm:$0xff]
    %v6119 = vld [vmem:[%s6081 + $0x128] sm:$0xff]
    %v6120 = vld [vmem:[%s6081 + $0x130] sm:$0xff]
    %v6121 = vld [vmem:[%s6081 + $0x138] sm:$0xff]
    %v6122 = vld [vmem:[%s6081 + $0x140] sm:$0xff]
    %v6123 = vld [vmem:[%s6081 + $0x148] sm:$0xff]
    %v6124 = vld [vmem:[%s6081 + $0x150] sm:$0xff]
    %v6125 = vld [vmem:[%s6081 + $0x158] sm:$0xff]
    %v6126 = vld [vmem:[%s6081 + $0x160] sm:$0xff]
    %v6127 = vld [vmem:[%s6081 + $0x168] sm:$0xff]
    %v6128 = vld [vmem:[%s6081 + $0x170] sm:$0xff]
    %v6129 = vld [vmem:[%s6081 + $0x178] sm:$0xff]
    %v6130 = vld [vmem:[%s6081 + $0x180] sm:$0xff]
    %v6131 = vld [vmem:[%s6081 + $0x188] sm:$0xff]
    %v6132 = vld [vmem:[%s6081 + $0x190] sm:$0xff]
    %v6133 = vld [vmem:[%s6081 + $0x198] sm:$0xff]
    %v6134 = vld [vmem:[%s6081 + $0x1a0] sm:$0xff]
    %v6135 = vld [vmem:[%s6081 + $0x1a8] sm:$0xff]
    %v6136 = vld [vmem:[%s6081 + $0x1b0] sm:$0xff]
    %v6137 = vld [vmem:[%s6081 + $0x1b8] sm:$0xff]
    %v6138 = vld [vmem:[%s6081 + $0x1c0] sm:$0xff]
    %v6139 = vld [vmem:[%s6081 + $0x1c8] sm:$0xff]
    %v6140 = vld [vmem:[%s6081 + $0x1d0] sm:$0xff]
    %v6141 = vld [vmem:[%s6081 + $0x1d8] sm:$0xff]
    %v6142 = vld [vmem:[%s6081 + $0x1e0] sm:$0xff]
    %v6143 = vld [vmem:[%s6081 + $0x1e8] sm:$0xff]
    %v6144 = vld [vmem:[%s6081 + $0x1f0] sm:$0xff]
    %v6145 = vld [vmem:[%s6081 + $0x1f8] sm:$0xff]
    %v6146 = vld [vmem:[%s6081 + $0x200] sm:$0xff]
    %v6147 = vld [vmem:[%s6081 + $0x208] sm:$0xff]
    %v6148 = vld [vmem:[%s6081 + $0x210] sm:$0xff]
    %v6149 = vld [vmem:[%s6081 + $0x218] sm:$0xff]
    %v6150 = vld [vmem:[%s6081 + $0x220] sm:$0xff]
    %v6151 = vld [vmem:[%s6081 + $0x228] sm:$0xff]
    %v6152 = vld [vmem:[%s6081 + $0x230] sm:$0xff]
    %v6153 = vld [vmem:[%s6081 + $0x238] sm:$0xff]
    %v6154 = vld [vmem:[%s6081 + $0x240] sm:$0xff]
    %v6155 = vld [vmem:[%s6081 + $0x248] sm:$0xff]
    %v6156 = vld [vmem:[%s6081 + $0x250] sm:$0xff]
    %v6157 = vld [vmem:[%s6081 + $0x258] sm:$0xff]
    %v6158 = vld [vmem:[%s6081 + $0x260] sm:$0xff]
    %v6159 = vld [vmem:[%s6081 + $0x268] sm:$0xff]
    %v6160 = vld [vmem:[%s6081 + $0x270] sm:$0xff]
    %v6161 = vld [vmem:[%s6081 + $0x278] sm:$0xff]
    %v6162 = vld [vmem:[%s6081 + $0x280] sm:$0xff]
    %v6163 = vld [vmem:[%s6081 + $0x288] sm:$0xff]
    %v6164 = vld [vmem:[%s6081 + $0x290] sm:$0xff]
    %v6165 = vld [vmem:[%s6081 + $0x298] sm:$0xff]
    %v6166 = vld [vmem:[%s6081 + $0x2a0] sm:$0xff]
    %v6167 = vld [vmem:[%s6081 + $0x2a8] sm:$0xff]
    %v6168 = vld [vmem:[%s6081 + $0x2b0] sm:$0xff]
    %v6169 = vld [vmem:[%s6081 + $0x2b8] sm:$0xff]
    %v6170 = vld [vmem:[%s6081 + $0x2c0] sm:$0xff]
    %v6171 = vld [vmem:[%s6081 + $0x2c8] sm:$0xff]
    %v6172 = vld [vmem:[%s6081 + $0x2d0] sm:$0xff]
    %v6173 = vld [vmem:[%s6081 + $0x2d8] sm:$0xff]
    %v6174 = vld [vmem:[%s6081 + $0x2e0] sm:$0xff]
    %v6175 = vld [vmem:[%s6081 + $0x2e8] sm:$0xff]
    %v6176 = vld [vmem:[%s6081 + $0x2f0] sm:$0xff]
    %v6177 = vld [vmem:[%s6081 + $0x2f8] sm:$0xff]
    %v6178 = vld [vmem:[%s6081 + $0x300] sm:$0xff]
    %v6179 = vld [vmem:[%s6081 + $0x308] sm:$0xff]
    %v6180 = vld [vmem:[%s6081 + $0x310] sm:$0xff]
    %v6181 = vld [vmem:[%s6081 + $0x318] sm:$0xff]
    %v6182 = vld [vmem:[%s6081 + $0x320] sm:$0xff]
    %v6183 = vld [vmem:[%s6081 + $0x328] sm:$0xff]
    %v6184 = vld [vmem:[%s6081 + $0x330] sm:$0xff]
    %v6185 = vld [vmem:[%s6081 + $0x338] sm:$0xff]
    %v6186 = vld [vmem:[%s6081 + $0x340] sm:$0xff]
    %v6187 = vld [vmem:[%s6081 + $0x348] sm:$0xff]
    %v6188 = vld [vmem:[%s6081 + $0x350] sm:$0xff]
    %v6189 = vld [vmem:[%s6081 + $0x358] sm:$0xff]
    %v6190 = vld [vmem:[%s6081 + $0x360] sm:$0xff]
    %v6191 = vld [vmem:[%s6081 + $0x368] sm:$0xff]
    %v6192 = vld [vmem:[%s6081 + $0x370] sm:$0xff]
    %v6193 = vld [vmem:[%s6081 + $0x378] sm:$0xff]
    %6194 = vmatprep.subr.mxu0 0.0
    %6195 = vmatpush1.msra.mxu0 %v6097
    %6196 = vmatprep.subr.mxu0 0.0
    %6197 = vmatpush1.msra.mxu0 %v6096
    %6198 = vmatprep.subr.mxu0 0.0
    %6199 = vmatpush1.msra.mxu0 %v6095
    %6200 = vmatprep.subr.mxu0 0.0
    %6201 = vmatpush1.msra.mxu0 %v6094
    %6202 = vmatprep.subr.mxu0 0.0
    %6203 = vmatpush1.msra.mxu0 %v6093
    %6204 = vmatprep.subr.mxu0 0.0
    %6205 = vmatpush1.msra.mxu0 %v6092
    %6206 = vmatprep.subr.mxu0 0.0
    %6207 = vmatpush1.msra.mxu0 %v6091
    %6208 = vmatprep.subr.mxu0 0.0
    %6209 = vmatpush1.msra.mxu0 %v6090
    %6210 = vmatprep.subr.mxu0 0.0
    %6211 = vmatpush1.msra.mxu0 %v6089
    %6212 = vmatprep.subr.mxu0 0.0
    %6213 = vmatpush1.msra.mxu0 %v6088
    %6214 = vmatprep.subr.mxu0 0.0
    %6215 = vmatpush1.msra.mxu0 %v6087
    %6216 = vmatprep.subr.mxu0 0.0
    %6217 = vmatpush1.msra.mxu0 %v6086
    %6218 = vmatprep.subr.mxu0 0.0
    %6219 = vmatpush1.msra.mxu0 %v6085
    %6220 = vmatprep.subr.mxu0 0.0
    %6221 = vmatpush1.msra.mxu0 %v6084
    %6222 = vmatprep.subr.mxu0 0.0
    %6223 = vmatpush1.msra.mxu0 %v6083
    %6224 = vmatprep.subr.mxu0 0.0
    %6225 = vmatpush1.msra.mxu0 %v6082
    %6226 = vmatprep.subr.mxu0 0.0
    %6227 = vmatpush2.msra.mxu0 %v6113
    %6228 = vmatprep.subr.mxu0 0.0
    %6229 = vmatpush2.msra.mxu0 %v6112
    %6230 = vmatprep.subr.mxu0 0.0
    %6231 = vmatpush2.msra.mxu0 %v6111
    %6232 = vmatprep.subr.mxu0 0.0
    %6233 = vmatpush2.msra.mxu0 %v6110
    %6234 = vmatprep.subr.mxu0 0.0
    %6235 = vmatpush2.msra.mxu0 %v6109
    %6236 = vmatprep.subr.mxu0 0.0
    %6237 = vmatpush2.msra.mxu0 %v6108
    %6238 = vmatprep.subr.mxu0 0.0
    %6239 = vmatpush2.msra.mxu0 %v6107
    %6240 = vmatprep.subr.mxu0 0.0
    %6241 = vmatpush2.msra.mxu0 %v6106
    %6242 = vmatprep.subr.mxu0 0.0
    %6243 = vmatpush2.msra.mxu0 %v6105
    %6244 = vmatprep.subr.mxu0 0.0
    %6245 = vmatpush2.msra.mxu0 %v6104
    %6246 = vmatprep.subr.mxu0 0.0
    %6247 = vmatpush2.msra.mxu0 %v6103
    %6248 = vmatprep.subr.mxu0 0.0
    %6249 = vmatpush2.msra.mxu0 %v6102
    %6250 = vmatprep.subr.mxu0 0.0
    %6251 = vmatpush2.msra.mxu0 %v6101
    %6252 = vmatprep.subr.mxu0 0.0
    %6253 = vmatpush2.msra.mxu0 %v6100
    %6254 = vmatprep.subr.mxu0 0.0
    %6255 = vmatpush2.msra.mxu0 %v6099
    %6256 = vmatprep.subr.mxu0 0.0
    %6257 = vmatpush2.msra.mxu0 %v6098
    %6258 = vmatprep.mubr.f32.mxu0 %v5921
    %6259 = vmatmul.mubr.f32.gmra.mxu0 %v5920
    %v6260 = vpop.f32.mrf.mxu0
    %v6261 = vadd.f32 0.0, %v6260
    %v6262 = vpop.f32.mrf.mxu0
    %6263 = vdwg.mxu0
    %6264 = vmatprep.subr.mxu0 0.0
    %6265 = vmatpush1.msra.mxu0 %v6129
    %6266 = vmatprep.subr.mxu0 0.0
    %6267 = vmatpush1.msra.mxu0 %v6128
    %6268 = vmatprep.subr.mxu0 0.0
    %6269 = vmatpush1.msra.mxu0 %v6127
    %6270 = vmatprep.subr.mxu0 0.0
    %6271 = vmatpush1.msra.mxu0 %v6126
    %6272 = vmatprep.subr.mxu0 0.0
    %6273 = vmatpush1.msra.mxu0 %v6125
    %6274 = vmatprep.subr.mxu0 0.0
    %6275 = vmatpush1.msra.mxu0 %v6124
    %6276 = vmatprep.subr.mxu0 0.0
    %6277 = vmatpush1.msra.mxu0 %v6123
    %6278 = vmatprep.subr.mxu0 0.0
    %6279 = vmatpush1.msra.mxu0 %v6122
    %6280 = vmatprep.subr.mxu0 0.0
    %6281 = vmatpush1.msra.mxu0 %v6121
    %6282 = vmatprep.subr.mxu0 0.0
    %6283 = vmatpush1.msra.mxu0 %v6120
    %6284 = vmatprep.subr.mxu0 0.0
    %6285 = vmatpush1.msra.mxu0 %v6119
    %6286 = vmatprep.subr.mxu0 0.0
    %6287 = vmatpush1.msra.mxu0 %v6118
    %6288 = vmatprep.subr.mxu0 0.0
    %6289 = vmatpush1.msra.mxu0 %v6117
    %6290 = vmatprep.subr.mxu0 0.0
    %6291 = vmatpush1.msra.mxu0 %v6116
    %6292 = vmatprep.subr.mxu0 0.0
    %6293 = vmatpush1.msra.mxu0 %v6115
    %6294 = vmatprep.subr.mxu0 0.0
    %6295 = vmatpush1.msra.mxu0 %v6114
    %6296 = vmatprep.subr.mxu0 0.0
    %6297 = vmatpush2.msra.mxu0 %v6145
    %6298 = vmatprep.subr.mxu0 0.0
    %6299 = vmatpush2.msra.mxu0 %v6144
    %6300 = vmatprep.subr.mxu0 0.0
    %6301 = vmatpush2.msra.mxu0 %v6143
    %6302 = vmatprep.subr.mxu0 0.0
    %6303 = vmatpush2.msra.mxu0 %v6142
    %6304 = vmatprep.subr.mxu0 0.0
    %6305 = vmatpush2.msra.mxu0 %v6141
    %6306 = vmatprep.subr.mxu0 0.0
    %6307 = vmatpush2.msra.mxu0 %v6140
    %6308 = vmatprep.subr.mxu0 0.0
    %6309 = vmatpush2.msra.mxu0 %v6139
    %6310 = vmatprep.subr.mxu0 0.0
    %6311 = vmatpush2.msra.mxu0 %v6138
    %6312 = vmatprep.subr.mxu0 0.0
    %6313 = vmatpush2.msra.mxu0 %v6137
    %6314 = vmatprep.subr.mxu0 0.0
    %6315 = vmatpush2.msra.mxu0 %v6136
    %6316 = vmatprep.subr.mxu0 0.0
    %6317 = vmatpush2.msra.mxu0 %v6135
    %6318 = vmatprep.subr.mxu0 0.0
    %6319 = vmatpush2.msra.mxu0 %v6134
    %6320 = vmatprep.subr.mxu0 0.0
    %6321 = vmatpush2.msra.mxu0 %v6133
    %6322 = vmatprep.subr.mxu0 0.0
    %6323 = vmatpush2.msra.mxu0 %v6132
    %6324 = vmatprep.subr.mxu0 0.0
    %6325 = vmatpush2.msra.mxu0 %v6131
    %6326 = vmatprep.subr.mxu0 0.0
    %6327 = vmatpush2.msra.mxu0 %v6130
    %6328 = vmatprep.mubr.f32.mxu0 %v5923
    %6329 = vmatmul.mubr.f32.gmra.mxu0 %v5922
    %v6330 = vpop.f32.mrf.mxu0
    %v6331 = vadd.f32 %v6261, %v6330
    %v6332 = vpop.f32.mrf.mxu0
    %6333 = vdwg.mxu0
    %6334 = vmatprep.subr.mxu0 0.0
    %6335 = vmatpush1.msra.mxu0 %v6161
    %6336 = vmatprep.subr.mxu0 0.0
    %6337 = vmatpush1.msra.mxu0 %v6160
    %6338 = vmatprep.subr.mxu0 0.0
    %6339 = vmatpush1.msra.mxu0 %v6159
    %6340 = vmatprep.subr.mxu0 0.0
    %6341 = vmatpush1.msra.mxu0 %v6158
    %6342 = vmatprep.subr.mxu0 0.0
    %6343 = vmatpush1.msra.mxu0 %v6157
    %6344 = vmatprep.subr.mxu0 0.0
    %6345 = vmatpush1.msra.mxu0 %v6156
    %6346 = vmatprep.subr.mxu0 0.0
    %6347 = vmatpush1.msra.mxu0 %v6155
    %6348 = vmatprep.subr.mxu0 0.0
    %6349 = vmatpush1.msra.mxu0 %v6154
    %6350 = vmatprep.subr.mxu0 0.0
    %6351 = vmatpush1.msra.mxu0 %v6153
    %6352 = vmatprep.subr.mxu0 0.0
    %6353 = vmatpush1.msra.mxu0 %v6152
    %6354 = vmatprep.subr.mxu0 0.0
    %6355 = vmatpush1.msra.mxu0 %v6151
    %6356 = vmatprep.subr.mxu0 0.0
    %6357 = vmatpush1.msra.mxu0 %v6150
    %6358 = vmatprep.subr.mxu0 0.0
    %6359 = vmatpush1.msra.mxu0 %v6149
    %6360 = vmatprep.subr.mxu0 0.0
    %6361 = vmatpush1.msra.mxu0 %v6148
    %6362 = vmatprep.subr.mxu0 0.0
    %6363 = vmatpush1.msra.mxu0 %v6147
    %6364 = vmatprep.subr.mxu0 0.0
    %6365 = vmatpush1.msra.mxu0 %v6146
    %6366 = vmatprep.subr.mxu0 0.0
    %6367 = vmatpush2.msra.mxu0 %v6177
    %6368 = vmatprep.subr.mxu0 0.0
    %6369 = vmatpush2.msra.mxu0 %v6176
    %6370 = vmatprep.subr.mxu0 0.0
    %6371 = vmatpush2.msra.mxu0 %v6175
    %6372 = vmatprep.subr.mxu0 0.0
    %6373 = vmatpush2.msra.mxu0 %v6174
    %6374 = vmatprep.subr.mxu0 0.0
    %6375 = vmatpush2.msra.mxu0 %v6173
    %6376 = vmatprep.subr.mxu0 0.0
    %6377 = vmatpush2.msra.mxu0 %v6172
    %6378 = vmatprep.subr.mxu0 0.0
    %6379 = vmatpush2.msra.mxu0 %v6171
    %6380 = vmatprep.subr.mxu0 0.0
    %6381 = vmatpush2.msra.mxu0 %v6170
    %6382 = vmatprep.subr.mxu0 0.0
    %6383 = vmatpush2.msra.mxu0 %v6169
    %6384 = vmatprep.subr.mxu0 0.0
    %6385 = vmatpush2.msra.mxu0 %v6168
    %6386 = vmatprep.subr.mxu0 0.0
    %6387 = vmatpush2.msra.mxu0 %v6167
    %6388 = vmatprep.subr.mxu0 0.0
    %6389 = vmatpush2.msra.mxu0 %v6166
    %6390 = vmatprep.subr.mxu0 0.0
    %6391 = vmatpush2.msra.mxu0 %v6165
    %6392 = vmatprep.subr.mxu0 0.0
    %6393 = vmatpush2.msra.mxu0 %v6164
    %6394 = vmatprep.subr.mxu0 0.0
    %6395 = vmatpush2.msra.mxu0 %v6163
    %6396 = vmatprep.subr.mxu0 0.0
    %6397 = vmatpush2.msra.mxu0 %v6162
    %6398 = vmatprep.mubr.f32.mxu0 %v5925
    %6399 = vmatmul.mubr.f32.gmra.mxu0 %v5924
    %v6400 = vpop.f32.mrf.mxu0
    %v6401 = vadd.f32 %v6331, %v6400
    %v6402 = vpop.f32.mrf.mxu0
    %6403 = vdwg.mxu0
    %6404 = vmatprep.subr.mxu0 0.0
    %6405 = vmatpush1.msra.mxu0 %v6193
    %6406 = vmatprep.subr.mxu0 0.0
    %6407 = vmatpush1.msra.mxu0 %v6192
    %6408 = vmatprep.subr.mxu0 0.0
    %6409 = vmatpush1.msra.mxu0 %v6191
    %6410 = vmatprep.subr.mxu0 0.0
    %6411 = vmatpush1.msra.mxu0 %v6190
    %6412 = vmatprep.subr.mxu0 0.0
    %6413 = vmatpush1.msra.mxu0 %v6189
    %6414 = vmatprep.subr.mxu0 0.0
    %6415 = vmatpush1.msra.mxu0 %v6188
    %6416 = vmatprep.subr.mxu0 0.0
    %6417 = vmatpush1.msra.mxu0 %v6187
    %6418 = vmatprep.subr.mxu0 0.0
    %6419 = vmatpush1.msra.mxu0 %v6186
    %6420 = vmatprep.subr.mxu0 0.0
    %6421 = vmatpush1.msra.mxu0 %v6185
    %6422 = vmatprep.subr.mxu0 0.0
    %6423 = vmatpush1.msra.mxu0 %v6184
    %6424 = vmatprep.subr.mxu0 0.0
    %6425 = vmatpush1.msra.mxu0 %v6183
    %6426 = vmatprep.subr.mxu0 0.0
    %6427 = vmatpush1.msra.mxu0 %v6182
    %6428 = vmatprep.subr.mxu0 0.0
    %6429 = vmatpush1.msra.mxu0 %v6181
    %6430 = vmatprep.subr.mxu0 0.0
    %6431 = vmatpush1.msra.mxu0 %v6180
    %6432 = vmatprep.subr.mxu0 0.0
    %6433 = vmatpush1.msra.mxu0 %v6179
    %6434 = vmatprep.subr.mxu0 0.0
    %6435 = vmatpush1.msra.mxu0 %v6178
    %6436 = vmatprep.subr.mxu0 0.0
    %6437 = vmatpush2.msra.mxu0 0.0
    %6438 = vmatprep.subr.mxu0 0.0
    %6439 = vmatpush2.msra.mxu0 0.0
    %6440 = vmatprep.subr.mxu0 0.0
    %6441 = vmatpush2.msra.mxu0 0.0
    %6442 = vmatprep.subr.mxu0 0.0
    %6443 = vmatpush2.msra.mxu0 0.0
    %6444 = vmatprep.subr.mxu0 0.0
    %6445 = vmatpush2.msra.mxu0 0.0
    %6446 = vmatprep.subr.mxu0 0.0
    %6447 = vmatpush2.msra.mxu0 0.0
    %6448 = vmatprep.subr.mxu0 0.0
    %6449 = vmatpush2.msra.mxu0 0.0
    %6450 = vmatprep.subr.mxu0 0.0
    %6451 = vmatpush2.msra.mxu0 0.0
    %6452 = vmatprep.subr.mxu0 0.0
    %6453 = vmatpush2.msra.mxu0 0.0
    %6454 = vmatprep.subr.mxu0 0.0
    %6455 = vmatpush2.msra.mxu0 0.0
    %6456 = vmatprep.subr.mxu0 0.0
    %6457 = vmatpush2.msra.mxu0 0.0
    %6458 = vmatprep.subr.mxu0 0.0
    %6459 = vmatpush2.msra.mxu0 0.0
    %6460 = vmatprep.subr.mxu0 0.0
    %6461 = vmatpush2.msra.mxu0 0.0
    %6462 = vmatprep.subr.mxu0 0.0
    %6463 = vmatpush2.msra.mxu0 0.0
    %6464 = vmatprep.subr.mxu0 0.0
    %6465 = vmatpush2.msra.mxu0 0.0
    %6466 = vmatprep.subr.mxu0 0.0
    %6467 = vmatpush2.msra.mxu0 0.0
    %6468 = vmatprep.mubr.f32.mxu0 0.0
    %6469 = vmatmul.mubr.f32.gmra.mxu0 %v5926
    %v6470 = vpop.f32.mrf.mxu0
    %v6471 = vadd.f32 %v6401, %v6470
    %v6472 = vpop.f32.mrf.mxu0
    %6473 = vdwg.mxu0
    %6474 = vmatprep.subr.mxu0 0.0
    %6475 = vmatpush1.msra.mxu0 %v5984
    %6476 = vmatprep.subr.mxu0 0.0
    %6477 = vmatpush1.msra.mxu0 %v5983
    %6478 = vmatprep.subr.mxu0 0.0
    %6479 = vmatpush1.msra.mxu0 %v5982
    %6480 = vmatprep.subr.mxu0 0.0
    %6481 = vmatpush1.msra.mxu0 %v5981
    %6482 = vmatprep.subr.mxu0 0.0
    %6483 = vmatpush1.msra.mxu0 %v5980
    %6484 = vmatprep.subr.mxu0 0.0
    %6485 = vmatpush1.msra.mxu0 %v5979
    %6486 = vmatprep.subr.mxu0 0.0
    %6487 = vmatpush1.msra.mxu0 %v5978
    %6488 = vmatprep.subr.mxu0 0.0
    %6489 = vmatpush1.msra.mxu0 %v5977
    %6490 = vmatprep.subr.mxu0 0.0
    %6491 = vmatpush1.msra.mxu0 %v5976
    %6492 = vmatprep.subr.mxu0 0.0
    %6493 = vmatpush1.msra.mxu0 %v5975
    %6494 = vmatprep.subr.mxu0 0.0
    %6495 = vmatpush1.msra.mxu0 %v5974
    %6496 = vmatprep.subr.mxu0 0.0
    %6497 = vmatpush1.msra.mxu0 %v5973
    %6498 = vmatprep.subr.mxu0 0.0
    %6499 = vmatpush1.msra.mxu0 %v5972
    %6500 = vmatprep.subr.mxu0 0.0
    %6501 = vmatpush1.msra.mxu0 %v5971
    %6502 = vmatprep.subr.mxu0 0.0
    %6503 = vmatpush1.msra.mxu0 %v5970
    %6504 = vmatprep.subr.mxu0 0.0
    %6505 = vmatpush1.msra.mxu0 %v5969
    %6506 = vmatprep.subr.mxu0 0.0
    %6507 = vmatpush2.msra.mxu0 %v6000
    %6508 = vmatprep.subr.mxu0 0.0
    %6509 = vmatpush2.msra.mxu0 %v5999
    %6510 = vmatprep.subr.mxu0 0.0
    %6511 = vmatpush2.msra.mxu0 %v5998
    %6512 = vmatprep.subr.mxu0 0.0
    %6513 = vmatpush2.msra.mxu0 %v5997
    %6514 = vmatprep.subr.mxu0 0.0
    %6515 = vmatpush2.msra.mxu0 %v5996
    %6516 = vmatprep.subr.mxu0 0.0
    %6517 = vmatpush2.msra.mxu0 %v5995
    %6518 = vmatprep.subr.mxu0 0.0
    %6519 = vmatpush2.msra.mxu0 %v5994
    %6520 = vmatprep.subr.mxu0 0.0
    %6521 = vmatpush2.msra.mxu0 %v5993
    %6522 = vmatprep.subr.mxu0 0.0
    %6523 = vmatpush2.msra.mxu0 %v5992
    %6524 = vmatprep.subr.mxu0 0.0
    %6525 = vmatpush2.msra.mxu0 %v5991
    %6526 = vmatprep.subr.mxu0 0.0
    %6527 = vmatpush2.msra.mxu0 %v5990
    %6528 = vmatprep.subr.mxu0 0.0
    %6529 = vmatpush2.msra.mxu0 %v5989
    %6530 = vmatprep.subr.mxu0 0.0
    %6531 = vmatpush2.msra.mxu0 %v5988
    %6532 = vmatprep.subr.mxu0 0.0
    %6533 = vmatpush2.msra.mxu0 %v5987
    %6534 = vmatprep.subr.mxu0 0.0
    %6535 = vmatpush2.msra.mxu0 %v5986
    %6536 = vmatprep.subr.mxu0 0.0
    %6537 = vmatpush2.msra.mxu0 %v5985
    %6538 = vmatprep.mubr.f32.mxu0 %v5914
    %6539 = vmatmul.mubr.f32.gmra.mxu0 %v5913
    %v6540 = vpop.f32.mrf.mxu0
    %v6541 = vadd.f32 %v6471, %v6540
    %v6542 = vpop.f32.mrf.mxu0
    %6543 = vdwg.mxu0
    %6544 = vmatprep.subr.mxu0 0.0
    %6545 = vmatpush1.msra.mxu0 %v6016
    %6546 = vmatprep.subr.mxu0 0.0
    %6547 = vmatpush1.msra.mxu0 %v6015
    %6548 = vmatprep.subr.mxu0 0.0
    %6549 = vmatpush1.msra.mxu0 %v6014
    %6550 = vmatprep.subr.mxu0 0.0
    %6551 = vmatpush1.msra.mxu0 %v6013
    %6552 = vmatprep.subr.mxu0 0.0
    %6553 = vmatpush1.msra.mxu0 %v6012
    %6554 = vmatprep.subr.mxu0 0.0
    %6555 = vmatpush1.msra.mxu0 %v6011
    %6556 = vmatprep.subr.mxu0 0.0
    %6557 = vmatpush1.msra.mxu0 %v6010
    %6558 = vmatprep.subr.mxu0 0.0
    %6559 = vmatpush1.msra.mxu0 %v6009
    %6560 = vmatprep.subr.mxu0 0.0
    %6561 = vmatpush1.msra.mxu0 %v6008
    %6562 = vmatprep.subr.mxu0 0.0
    %6563 = vmatpush1.msra.mxu0 %v6007
    %6564 = vmatprep.subr.mxu0 0.0
    %6565 = vmatpush1.msra.mxu0 %v6006
    %6566 = vmatprep.subr.mxu0 0.0
    %6567 = vmatpush1.msra.mxu0 %v6005
    %6568 = vmatprep.subr.mxu0 0.0
    %6569 = vmatpush1.msra.mxu0 %v6004
    %6570 = vmatprep.subr.mxu0 0.0
    %6571 = vmatpush1.msra.mxu0 %v6003
    %6572 = vmatprep.subr.mxu0 0.0
    %6573 = vmatpush1.msra.mxu0 %v6002
    %6574 = vmatprep.subr.mxu0 0.0
    %6575 = vmatpush1.msra.mxu0 %v6001
    %6576 = vmatprep.subr.mxu0 0.0
    %6577 = vmatpush2.msra.mxu0 %v6032
    %6578 = vmatprep.subr.mxu0 0.0
    %6579 = vmatpush2.msra.mxu0 %v6031
    %6580 = vmatprep.subr.mxu0 0.0
    %6581 = vmatpush2.msra.mxu0 %v6030
    %6582 = vmatprep.subr.mxu0 0.0
    %6583 = vmatpush2.msra.mxu0 %v6029
    %6584 = vmatprep.subr.mxu0 0.0
    %6585 = vmatpush2.msra.mxu0 %v6028
    %6586 = vmatprep.subr.mxu0 0.0
    %6587 = vmatpush2.msra.mxu0 %v6027
    %6588 = vmatprep.subr.mxu0 0.0
    %6589 = vmatpush2.msra.mxu0 %v6026
    %6590 = vmatprep.subr.mxu0 0.0
    %6591 = vmatpush2.msra.mxu0 %v6025
    %6592 = vmatprep.subr.mxu0 0.0
    %6593 = vmatpush2.msra.mxu0 %v6024
    %6594 = vmatprep.subr.mxu0 0.0
    %6595 = vmatpush2.msra.mxu0 %v6023
    %6596 = vmatprep.subr.mxu0 0.0
    %6597 = vmatpush2.msra.mxu0 %v6022
    %6598 = vmatprep.subr.mxu0 0.0
    %6599 = vmatpush2.msra.mxu0 %v6021
    %6600 = vmatprep.subr.mxu0 0.0
    %6601 = vmatpush2.msra.mxu0 %v6020
    %6602 = vmatprep.subr.mxu0 0.0
    %6603 = vmatpush2.msra.mxu0 %v6019
    %6604 = vmatprep.subr.mxu0 0.0
    %6605 = vmatpush2.msra.mxu0 %v6018
    %6606 = vmatprep.subr.mxu0 0.0
    %6607 = vmatpush2.msra.mxu0 %v6017
    %6608 = vmatprep.mubr.f32.mxu0 %v5916
    %6609 = vmatmul.mubr.f32.gmra.mxu0 %v5915
    %v6610 = vpop.f32.mrf.mxu0
    %v6611 = vadd.f32 %v6541, %v6610
    %v6612 = vpop.f32.mrf.mxu0
    %6613 = vdwg.mxu0
    %6614 = vmatprep.subr.mxu0 0.0
    %6615 = vmatpush1.msra.mxu0 %v6048
    %6616 = vmatprep.subr.mxu0 0.0
    %6617 = vmatpush1.msra.mxu0 %v6047
    %6618 = vmatprep.subr.mxu0 0.0
    %6619 = vmatpush1.msra.mxu0 %v6046
    %6620 = vmatprep.subr.mxu0 0.0
    %6621 = vmatpush1.msra.mxu0 %v6045
    %6622 = vmatprep.subr.mxu0 0.0
    %6623 = vmatpush1.msra.mxu0 %v6044
    %6624 = vmatprep.subr.mxu0 0.0
    %6625 = vmatpush1.msra.mxu0 %v6043
    %6626 = vmatprep.subr.mxu0 0.0
    %6627 = vmatpush1.msra.mxu0 %v6042
    %6628 = vmatprep.subr.mxu0 0.0
    %6629 = vmatpush1.msra.mxu0 %v6041
    %6630 = vmatprep.subr.mxu0 0.0
    %6631 = vmatpush1.msra.mxu0 %v6040
    %6632 = vmatprep.subr.mxu0 0.0
    %6633 = vmatpush1.msra.mxu0 %v6039
    %6634 = vmatprep.subr.mxu0 0.0
    %6635 = vmatpush1.msra.mxu0 %v6038
    %6636 = vmatprep.subr.mxu0 0.0
    %6637 = vmatpush1.msra.mxu0 %v6037
    %6638 = vmatprep.subr.mxu0 0.0
    %6639 = vmatpush1.msra.mxu0 %v6036
    %6640 = vmatprep.subr.mxu0 0.0
    %6641 = vmatpush1.msra.mxu0 %v6035
    %6642 = vmatprep.subr.mxu0 0.0
    %6643 = vmatpush1.msra.mxu0 %v6034
    %6644 = vmatprep.subr.mxu0 0.0
    %6645 = vmatpush1.msra.mxu0 %v6033
    %6646 = vmatprep.subr.mxu0 0.0
    %6647 = vmatpush2.msra.mxu0 %v6064
    %6648 = vmatprep.subr.mxu0 0.0
    %6649 = vmatpush2.msra.mxu0 %v6063
    %6650 = vmatprep.subr.mxu0 0.0
    %6651 = vmatpush2.msra.mxu0 %v6062
    %6652 = vmatprep.subr.mxu0 0.0
    %6653 = vmatpush2.msra.mxu0 %v6061
    %6654 = vmatprep.subr.mxu0 0.0
    %6655 = vmatpush2.msra.mxu0 %v6060
    %6656 = vmatprep.subr.mxu0 0.0
    %6657 = vmatpush2.msra.mxu0 %v6059
    %6658 = vmatprep.subr.mxu0 0.0
    %6659 = vmatpush2.msra.mxu0 %v6058
    %6660 = vmatprep.subr.mxu0 0.0
    %6661 = vmatpush2.msra.mxu0 %v6057
    %6662 = vmatprep.subr.mxu0 0.0
    %6663 = vmatpush2.msra.mxu0 %v6056
    %6664 = vmatprep.subr.mxu0 0.0
    %6665 = vmatpush2.msra.mxu0 %v6055
    %6666 = vmatprep.subr.mxu0 0.0
    %6667 = vmatpush2.msra.mxu0 %v6054
    %6668 = vmatprep.subr.mxu0 0.0
    %6669 = vmatpush2.msra.mxu0 %v6053
    %6670 = vmatprep.subr.mxu0 0.0
    %6671 = vmatpush2.msra.mxu0 %v6052
    %6672 = vmatprep.subr.mxu0 0.0
    %6673 = vmatpush2.msra.mxu0 %v6051
    %6674 = vmatprep.subr.mxu0 0.0
    %6675 = vmatpush2.msra.mxu0 %v6050
    %6676 = vmatprep.subr.mxu0 0.0
    %6677 = vmatpush2.msra.mxu0 %v6049
    %6678 = vmatprep.mubr.f32.mxu0 %v5918
    %6679 = vmatmul.mubr.f32.gmra.mxu0 %v5917
    %v6680 = vpop.f32.mrf.mxu0
    %v6681 = vadd.f32 %v6611, %v6680
    %v6682 = vpop.f32.mrf.mxu0
    %6683 = vdwg.mxu0
    %6684 = vmatprep.subr.mxu0 0.0
    %6685 = vmatpush1.msra.mxu0 %v6080
    %6686 = vmatprep.subr.mxu0 0.0
    %6687 = vmatpush1.msra.mxu0 %v6079
    %6688 = vmatprep.subr.mxu0 0.0
    %6689 = vmatpush1.msra.mxu0 %v6078
    %6690 = vmatprep.subr.mxu0 0.0
    %6691 = vmatpush1.msra.mxu0 %v6077
    %6692 = vmatprep.subr.mxu0 0.0
    %6693 = vmatpush1.msra.mxu0 %v6076
    %6694 = vmatprep.subr.mxu0 0.0
    %6695 = vmatpush1.msra.mxu0 %v6075
    %6696 = vmatprep.subr.mxu0 0.0
    %6697 = vmatpush1.msra.mxu0 %v6074
    %6698 = vmatprep.subr.mxu0 0.0
    %6699 = vmatpush1.msra.mxu0 %v6073
    %6700 = vmatprep.subr.mxu0 0.0
    %6701 = vmatpush1.msra.mxu0 %v6072
    %6702 = vmatprep.subr.mxu0 0.0
    %6703 = vmatpush1.msra.mxu0 %v6071
    %6704 = vmatprep.subr.mxu0 0.0
    %6705 = vmatpush1.msra.mxu0 %v6070
    %6706 = vmatprep.subr.mxu0 0.0
    %6707 = vmatpush1.msra.mxu0 %v6069
    %6708 = vmatprep.subr.mxu0 0.0
    %6709 = vmatpush1.msra.mxu0 %v6068
    %6710 = vmatprep.subr.mxu0 0.0
    %6711 = vmatpush1.msra.mxu0 %v6067
    %6712 = vmatprep.subr.mxu0 0.0
    %6713 = vmatpush1.msra.mxu0 %v6066
    %6714 = vmatprep.subr.mxu0 0.0
    %6715 = vmatpush1.msra.mxu0 %v6065
    %6716 = vmatprep.subr.mxu0 0.0
    %6717 = vmatpush2.msra.mxu0 0.0
    %6718 = vmatprep.subr.mxu0 0.0
    %6719 = vmatpush2.msra.mxu0 0.0
    %6720 = vmatprep.subr.mxu0 0.0
    %6721 = vmatpush2.msra.mxu0 0.0
    %6722 = vmatprep.subr.mxu0 0.0
    %6723 = vmatpush2.msra.mxu0 0.0
    %6724 = vmatprep.subr.mxu0 0.0
    %6725 = vmatpush2.msra.mxu0 0.0
    %6726 = vmatprep.subr.mxu0 0.0
    %6727 = vmatpush2.msra.mxu0 0.0
    %6728 = vmatprep.subr.mxu0 0.0
    %6729 = vmatpush2.msra.mxu0 0.0
    %6730 = vmatprep.subr.mxu0 0.0
    %6731 = vmatpush2.msra.mxu0 0.0
    %6732 = vmatprep.subr.mxu0 0.0
    %6733 = vmatpush2.msra.mxu0 0.0
    %6734 = vmatprep.subr.mxu0 0.0
    %6735 = vmatpush2.msra.mxu0 0.0
    %6736 = vmatprep.subr.mxu0 0.0
    %6737 = vmatpush2.msra.mxu0 0.0
    %6738 = vmatprep.subr.mxu0 0.0
    %6739 = vmatpush2.msra.mxu0 0.0
    %6740 = vmatprep.subr.mxu0 0.0
    %6741 = vmatpush2.msra.mxu0 0.0
    %6742 = vmatprep.subr.mxu0 0.0
    %6743 = vmatpush2.msra.mxu0 0.0
    %6744 = vmatprep.subr.mxu0 0.0
    %6745 = vmatpush2.msra.mxu0 0.0
    %6746 = vmatprep.subr.mxu0 0.0
    %6747 = vmatpush2.msra.mxu0 0.0
    %6748 = vmatprep.mubr.f32.mxu0 0.0
    %6749 = vmatmul.mubr.f32.gmra.mxu0 %v5919
    %v6750 = vpop.f32.mrf.mxu0
    %v6751 = vadd.f32 %v6681, %v6750
    %v6752 = vpop.f32.mrf.mxu0
    %6753 = vdwg.mxu0
    %s6754 = scalar_lea.vmem [#allocation7], 1792
    %v6755 = vld [vmem:[%s6754] sm:$0xff]
    %v6756 = vld [vmem:[%s6754 + $0x8] sm:$0xff]
    %v6757 = vld [vmem:[%s6754 + $0x10] sm:$0xff]
    %v6758 = vld [vmem:[%s6754 + $0x18] sm:$0xff]
    %v6759 = vld [vmem:[%s6754 + $0x20] sm:$0xff]
    %v6760 = vld [vmem:[%s6754 + $0x28] sm:$0xff]
    %v6761 = vld [vmem:[%s6754 + $0x30] sm:$0xff]
    %v6762 = vld [vmem:[%s6754 + $0x38] sm:$0xff]
    %v6763 = vld [vmem:[%s6754 + $0x40] sm:$0xff]
    %v6764 = vld [vmem:[%s6754 + $0x48] sm:$0xff]
    %v6765 = vld [vmem:[%s6754 + $0x50] sm:$0xff]
    %v6766 = vld [vmem:[%s6754 + $0x58] sm:$0xff]
    %v6767 = vld [vmem:[%s6754 + $0x60] sm:$0xff]
    %v6768 = vld [vmem:[%s6754 + $0x68] sm:$0xff]
    %v6769 = vld [vmem:[%s6754 + $0x70] sm:$0xff]
    %v6770 = vld [vmem:[%s6754 + $0x78] sm:$0xff]
    %v6771 = vld [vmem:[%s6754 + $0x80] sm:$0xff]
    %v6772 = vld [vmem:[%s6754 + $0x88] sm:$0xff]
    %v6773 = vld [vmem:[%s6754 + $0x90] sm:$0xff]
    %v6774 = vld [vmem:[%s6754 + $0x98] sm:$0xff]
    %v6775 = vld [vmem:[%s6754 + $0xa0] sm:$0xff]
    %v6776 = vld [vmem:[%s6754 + $0xa8] sm:$0xff]
    %v6777 = vld [vmem:[%s6754 + $0xb0] sm:$0xff]
    %v6778 = vld [vmem:[%s6754 + $0xb8] sm:$0xff]
    %v6779 = vld [vmem:[%s6754 + $0xc0] sm:$0xff]
    %v6780 = vld [vmem:[%s6754 + $0xc8] sm:$0xff]
    %v6781 = vld [vmem:[%s6754 + $0xd0] sm:$0xff]
    %v6782 = vld [vmem:[%s6754 + $0xd8] sm:$0xff]
    %v6783 = vld [vmem:[%s6754 + $0xe0] sm:$0xff]
    %v6784 = vld [vmem:[%s6754 + $0xe8] sm:$0xff]
    %v6785 = vld [vmem:[%s6754 + $0xf0] sm:$0xff]
    %v6786 = vld [vmem:[%s6754 + $0xf8] sm:$0xff]
    %v6787 = vld [vmem:[%s6754 + $0x100] sm:$0xff]
    %v6788 = vld [vmem:[%s6754 + $0x108] sm:$0xff]
    %v6789 = vld [vmem:[%s6754 + $0x110] sm:$0xff]
    %v6790 = vld [vmem:[%s6754 + $0x118] sm:$0xff]
    %v6791 = vld [vmem:[%s6754 + $0x120] sm:$0xff]
    %v6792 = vld [vmem:[%s6754 + $0x128] sm:$0xff]
    %v6793 = vld [vmem:[%s6754 + $0x130] sm:$0xff]
    %v6794 = vld [vmem:[%s6754 + $0x138] sm:$0xff]
    %v6795 = vld [vmem:[%s6754 + $0x140] sm:$0xff]
    %v6796 = vld [vmem:[%s6754 + $0x148] sm:$0xff]
    %v6797 = vld [vmem:[%s6754 + $0x150] sm:$0xff]
    %v6798 = vld [vmem:[%s6754 + $0x158] sm:$0xff]
    %v6799 = vld [vmem:[%s6754 + $0x160] sm:$0xff]
    %v6800 = vld [vmem:[%s6754 + $0x168] sm:$0xff]
    %v6801 = vld [vmem:[%s6754 + $0x170] sm:$0xff]
    %v6802 = vld [vmem:[%s6754 + $0x178] sm:$0xff]
    %v6803 = vld [vmem:[%s6754 + $0x180] sm:$0xff]
    %v6804 = vld [vmem:[%s6754 + $0x188] sm:$0xff]
    %v6805 = vld [vmem:[%s6754 + $0x190] sm:$0xff]
    %v6806 = vld [vmem:[%s6754 + $0x198] sm:$0xff]
    %v6807 = vld [vmem:[%s6754 + $0x1a0] sm:$0xff]
    %v6808 = vld [vmem:[%s6754 + $0x1a8] sm:$0xff]
    %v6809 = vld [vmem:[%s6754 + $0x1b0] sm:$0xff]
    %v6810 = vld [vmem:[%s6754 + $0x1b8] sm:$0xff]
    %v6811 = vld [vmem:[%s6754 + $0x1c0] sm:$0xff]
    %v6812 = vld [vmem:[%s6754 + $0x1c8] sm:$0xff]
    %v6813 = vld [vmem:[%s6754 + $0x1d0] sm:$0xff]
    %v6814 = vld [vmem:[%s6754 + $0x1d8] sm:$0xff]
    %v6815 = vld [vmem:[%s6754 + $0x1e0] sm:$0xff]
    %v6816 = vld [vmem:[%s6754 + $0x1e8] sm:$0xff]
    %v6817 = vld [vmem:[%s6754 + $0x1f0] sm:$0xff]
    %v6818 = vld [vmem:[%s6754 + $0x1f8] sm:$0xff]
    %v6819 = vld [vmem:[%s6754 + $0x200] sm:$0xff]
    %v6820 = vld [vmem:[%s6754 + $0x208] sm:$0xff]
    %v6821 = vld [vmem:[%s6754 + $0x210] sm:$0xff]
    %v6822 = vld [vmem:[%s6754 + $0x218] sm:$0xff]
    %v6823 = vld [vmem:[%s6754 + $0x220] sm:$0xff]
    %v6824 = vld [vmem:[%s6754 + $0x228] sm:$0xff]
    %v6825 = vld [vmem:[%s6754 + $0x230] sm:$0xff]
    %v6826 = vld [vmem:[%s6754 + $0x238] sm:$0xff]
    %v6827 = vld [vmem:[%s6754 + $0x240] sm:$0xff]
    %v6828 = vld [vmem:[%s6754 + $0x248] sm:$0xff]
    %v6829 = vld [vmem:[%s6754 + $0x250] sm:$0xff]
    %v6830 = vld [vmem:[%s6754 + $0x258] sm:$0xff]
    %v6831 = vld [vmem:[%s6754 + $0x260] sm:$0xff]
    %v6832 = vld [vmem:[%s6754 + $0x268] sm:$0xff]
    %v6833 = vld [vmem:[%s6754 + $0x270] sm:$0xff]
    %v6834 = vld [vmem:[%s6754 + $0x278] sm:$0xff]
    %v6835 = vld [vmem:[%s6754 + $0x280] sm:$0xff]
    %v6836 = vld [vmem:[%s6754 + $0x288] sm:$0xff]
    %v6837 = vld [vmem:[%s6754 + $0x290] sm:$0xff]
    %v6838 = vld [vmem:[%s6754 + $0x298] sm:$0xff]
    %v6839 = vld [vmem:[%s6754 + $0x2a0] sm:$0xff]
    %v6840 = vld [vmem:[%s6754 + $0x2a8] sm:$0xff]
    %v6841 = vld [vmem:[%s6754 + $0x2b0] sm:$0xff]
    %v6842 = vld [vmem:[%s6754 + $0x2b8] sm:$0xff]
    %v6843 = vld [vmem:[%s6754 + $0x2c0] sm:$0xff]
    %v6844 = vld [vmem:[%s6754 + $0x2c8] sm:$0xff]
    %v6845 = vld [vmem:[%s6754 + $0x2d0] sm:$0xff]
    %v6846 = vld [vmem:[%s6754 + $0x2d8] sm:$0xff]
    %v6847 = vld [vmem:[%s6754 + $0x2e0] sm:$0xff]
    %v6848 = vld [vmem:[%s6754 + $0x2e8] sm:$0xff]
    %v6849 = vld [vmem:[%s6754 + $0x2f0] sm:$0xff]
    %v6850 = vld [vmem:[%s6754 + $0x2f8] sm:$0xff]
    %v6851 = vld [vmem:[%s6754 + $0x300] sm:$0xff]
    %v6852 = vld [vmem:[%s6754 + $0x308] sm:$0xff]
    %v6853 = vld [vmem:[%s6754 + $0x310] sm:$0xff]
    %v6854 = vld [vmem:[%s6754 + $0x318] sm:$0xff]
    %v6855 = vld [vmem:[%s6754 + $0x320] sm:$0xff]
    %v6856 = vld [vmem:[%s6754 + $0x328] sm:$0xff]
    %v6857 = vld [vmem:[%s6754 + $0x330] sm:$0xff]
    %v6858 = vld [vmem:[%s6754 + $0x338] sm:$0xff]
    %v6859 = vld [vmem:[%s6754 + $0x340] sm:$0xff]
    %v6860 = vld [vmem:[%s6754 + $0x348] sm:$0xff]
    %v6861 = vld [vmem:[%s6754 + $0x350] sm:$0xff]
    %v6862 = vld [vmem:[%s6754 + $0x358] sm:$0xff]
    %v6863 = vld [vmem:[%s6754 + $0x360] sm:$0xff]
    %v6864 = vld [vmem:[%s6754 + $0x368] sm:$0xff]
    %v6865 = vld [vmem:[%s6754 + $0x370] sm:$0xff]
    %v6866 = vld [vmem:[%s6754 + $0x378] sm:$0xff]
    %6867 = vmatprep.subr.mxu0 0.0
    %6868 = vmatpush1.msra.mxu0 %v6770
    %6869 = vmatprep.subr.mxu0 0.0
    %6870 = vmatpush1.msra.mxu0 %v6769
    %6871 = vmatprep.subr.mxu0 0.0
    %6872 = vmatpush1.msra.mxu0 %v6768
    %6873 = vmatprep.subr.mxu0 0.0
    %6874 = vmatpush1.msra.mxu0 %v6767
    %6875 = vmatprep.subr.mxu0 0.0
    %6876 = vmatpush1.msra.mxu0 %v6766
    %6877 = vmatprep.subr.mxu0 0.0
    %6878 = vmatpush1.msra.mxu0 %v6765
    %6879 = vmatprep.subr.mxu0 0.0
    %6880 = vmatpush1.msra.mxu0 %v6764
    %6881 = vmatprep.subr.mxu0 0.0
    %6882 = vmatpush1.msra.mxu0 %v6763
    %6883 = vmatprep.subr.mxu0 0.0
    %6884 = vmatpush1.msra.mxu0 %v6762
    %6885 = vmatprep.subr.mxu0 0.0
    %6886 = vmatpush1.msra.mxu0 %v6761
    %6887 = vmatprep.subr.mxu0 0.0
    %6888 = vmatpush1.msra.mxu0 %v6760
    %6889 = vmatprep.subr.mxu0 0.0
    %6890 = vmatpush1.msra.mxu0 %v6759
    %6891 = vmatprep.subr.mxu0 0.0
    %6892 = vmatpush1.msra.mxu0 %v6758
    %6893 = vmatprep.subr.mxu0 0.0
    %6894 = vmatpush1.msra.mxu0 %v6757
    %6895 = vmatprep.subr.mxu0 0.0
    %6896 = vmatpush1.msra.mxu0 %v6756
    %6897 = vmatprep.subr.mxu0 0.0
    %6898 = vmatpush1.msra.mxu0 %v6755
    %6899 = vmatprep.subr.mxu0 0.0
    %6900 = vmatpush2.msra.mxu0 %v6786
    %6901 = vmatprep.subr.mxu0 0.0
    %6902 = vmatpush2.msra.mxu0 %v6785
    %6903 = vmatprep.subr.mxu0 0.0
    %6904 = vmatpush2.msra.mxu0 %v6784
    %6905 = vmatprep.subr.mxu0 0.0
    %6906 = vmatpush2.msra.mxu0 %v6783
    %6907 = vmatprep.subr.mxu0 0.0
    %6908 = vmatpush2.msra.mxu0 %v6782
    %6909 = vmatprep.subr.mxu0 0.0
    %6910 = vmatpush2.msra.mxu0 %v6781
    %6911 = vmatprep.subr.mxu0 0.0
    %6912 = vmatpush2.msra.mxu0 %v6780
    %6913 = vmatprep.subr.mxu0 0.0
    %6914 = vmatpush2.msra.mxu0 %v6779
    %6915 = vmatprep.subr.mxu0 0.0
    %6916 = vmatpush2.msra.mxu0 %v6778
    %6917 = vmatprep.subr.mxu0 0.0
    %6918 = vmatpush2.msra.mxu0 %v6777
    %6919 = vmatprep.subr.mxu0 0.0
    %6920 = vmatpush2.msra.mxu0 %v6776
    %6921 = vmatprep.subr.mxu0 0.0
    %6922 = vmatpush2.msra.mxu0 %v6775
    %6923 = vmatprep.subr.mxu0 0.0
    %6924 = vmatpush2.msra.mxu0 %v6774
    %6925 = vmatprep.subr.mxu0 0.0
    %6926 = vmatpush2.msra.mxu0 %v6773
    %6927 = vmatprep.subr.mxu0 0.0
    %6928 = vmatpush2.msra.mxu0 %v6772
    %6929 = vmatprep.subr.mxu0 0.0
    %6930 = vmatpush2.msra.mxu0 %v6771
    %6931 = vmatprep.mubr.f32.mxu0 %v5928
    %6932 = vmatmul.mubr.f32.gmra.mxu0 %v5927
    %v6933 = vpop.f32.mrf.mxu0
    %v6934 = vadd.f32 0.0, %v6933
    %v6935 = vpop.f32.mrf.mxu0
    %6936 = vdwg.mxu0
    %6937 = vmatprep.subr.mxu0 0.0
    %6938 = vmatpush1.msra.mxu0 %v6802
    %6939 = vmatprep.subr.mxu0 0.0
    %6940 = vmatpush1.msra.mxu0 %v6801
    %6941 = vmatprep.subr.mxu0 0.0
    %6942 = vmatpush1.msra.mxu0 %v6800
    %6943 = vmatprep.subr.mxu0 0.0
    %6944 = vmatpush1.msra.mxu0 %v6799
    %6945 = vmatprep.subr.mxu0 0.0
    %6946 = vmatpush1.msra.mxu0 %v6798
    %6947 = vmatprep.subr.mxu0 0.0
    %6948 = vmatpush1.msra.mxu0 %v6797
    %6949 = vmatprep.subr.mxu0 0.0
    %6950 = vmatpush1.msra.mxu0 %v6796
    %6951 = vmatprep.subr.mxu0 0.0
    %6952 = vmatpush1.msra.mxu0 %v6795
    %6953 = vmatprep.subr.mxu0 0.0
    %6954 = vmatpush1.msra.mxu0 %v6794
    %6955 = vmatprep.subr.mxu0 0.0
    %6956 = vmatpush1.msra.mxu0 %v6793
    %6957 = vmatprep.subr.mxu0 0.0
    %6958 = vmatpush1.msra.mxu0 %v6792
    %6959 = vmatprep.subr.mxu0 0.0
    %6960 = vmatpush1.msra.mxu0 %v6791
    %6961 = vmatprep.subr.mxu0 0.0
    %6962 = vmatpush1.msra.mxu0 %v6790
    %6963 = vmatprep.subr.mxu0 0.0
    %6964 = vmatpush1.msra.mxu0 %v6789
    %6965 = vmatprep.subr.mxu0 0.0
    %6966 = vmatpush1.msra.mxu0 %v6788
    %6967 = vmatprep.subr.mxu0 0.0
    %6968 = vmatpush1.msra.mxu0 %v6787
    %6969 = vmatprep.subr.mxu0 0.0
    %6970 = vmatpush2.msra.mxu0 %v6818
    %6971 = vmatprep.subr.mxu0 0.0
    %6972 = vmatpush2.msra.mxu0 %v6817
    %6973 = vmatprep.subr.mxu0 0.0
    %6974 = vmatpush2.msra.mxu0 %v6816
    %6975 = vmatprep.subr.mxu0 0.0
    %6976 = vmatpush2.msra.mxu0 %v6815
    %6977 = vmatprep.subr.mxu0 0.0
    %6978 = vmatpush2.msra.mxu0 %v6814
    %6979 = vmatprep.subr.mxu0 0.0
    %6980 = vmatpush2.msra.mxu0 %v6813
    %6981 = vmatprep.subr.mxu0 0.0
    %6982 = vmatpush2.msra.mxu0 %v6812
    %6983 = vmatprep.subr.mxu0 0.0
    %6984 = vmatpush2.msra.mxu0 %v6811
    %6985 = vmatprep.subr.mxu0 0.0
    %6986 = vmatpush2.msra.mxu0 %v6810
    %6987 = vmatprep.subr.mxu0 0.0
    %6988 = vmatpush2.msra.mxu0 %v6809
    %6989 = vmatprep.subr.mxu0 0.0
    %6990 = vmatpush2.msra.mxu0 %v6808
    %6991 = vmatprep.subr.mxu0 0.0
    %6992 = vmatpush2.msra.mxu0 %v6807
    %6993 = vmatprep.subr.mxu0 0.0
    %6994 = vmatpush2.msra.mxu0 %v6806
    %6995 = vmatprep.subr.mxu0 0.0
    %6996 = vmatpush2.msra.mxu0 %v6805
    %6997 = vmatprep.subr.mxu0 0.0
    %6998 = vmatpush2.msra.mxu0 %v6804
    %6999 = vmatprep.subr.mxu0 0.0
    %7000 = vmatpush2.msra.mxu0 %v6803
    %7001 = vmatprep.mubr.f32.mxu0 %v5930
    %7002 = vmatmul.mubr.f32.gmra.mxu0 %v5929
    %v7003 = vpop.f32.mrf.mxu0
    %v7004 = vadd.f32 %v6934, %v7003
    %v7005 = vpop.f32.mrf.mxu0
    %7006 = vdwg.mxu0
    %7007 = vmatprep.subr.mxu0 0.0
    %7008 = vmatpush1.msra.mxu0 %v6834
    %7009 = vmatprep.subr.mxu0 0.0
    %7010 = vmatpush1.msra.mxu0 %v6833
    %7011 = vmatprep.subr.mxu0 0.0
    %7012 = vmatpush1.msra.mxu0 %v6832
    %7013 = vmatprep.subr.mxu0 0.0
    %7014 = vmatpush1.msra.mxu0 %v6831
    %7015 = vmatprep.subr.mxu0 0.0
    %7016 = vmatpush1.msra.mxu0 %v6830
    %7017 = vmatprep.subr.mxu0 0.0
    %7018 = vmatpush1.msra.mxu0 %v6829
    %7019 = vmatprep.subr.mxu0 0.0
    %7020 = vmatpush1.msra.mxu0 %v6828
    %7021 = vmatprep.subr.mxu0 0.0
    %7022 = vmatpush1.msra.mxu0 %v6827
    %7023 = vmatprep.subr.mxu0 0.0
    %7024 = vmatpush1.msra.mxu0 %v6826
    %7025 = vmatprep.subr.mxu0 0.0
    %7026 = vmatpush1.msra.mxu0 %v6825
    %7027 = vmatprep.subr.mxu0 0.0
    %7028 = vmatpush1.msra.mxu0 %v6824
    %7029 = vmatprep.subr.mxu0 0.0
    %7030 = vmatpush1.msra.mxu0 %v6823
    %7031 = vmatprep.subr.mxu0 0.0
    %7032 = vmatpush1.msra.mxu0 %v6822
    %7033 = vmatprep.subr.mxu0 0.0
    %7034 = vmatpush1.msra.mxu0 %v6821
    %7035 = vmatprep.subr.mxu0 0.0
    %7036 = vmatpush1.msra.mxu0 %v6820
    %7037 = vmatprep.subr.mxu0 0.0
    %7038 = vmatpush1.msra.mxu0 %v6819
    %7039 = vmatprep.subr.mxu0 0.0
    %7040 = vmatpush2.msra.mxu0 %v6850
    %7041 = vmatprep.subr.mxu0 0.0
    %7042 = vmatpush2.msra.mxu0 %v6849
    %7043 = vmatprep.subr.mxu0 0.0
    %7044 = vmatpush2.msra.mxu0 %v6848
    %7045 = vmatprep.subr.mxu0 0.0
    %7046 = vmatpush2.msra.mxu0 %v6847
    %7047 = vmatprep.subr.mxu0 0.0
    %7048 = vmatpush2.msra.mxu0 %v6846
    %7049 = vmatprep.subr.mxu0 0.0
    %7050 = vmatpush2.msra.mxu0 %v6845
    %7051 = vmatprep.subr.mxu0 0.0
    %7052 = vmatpush2.msra.mxu0 %v6844
    %7053 = vmatprep.subr.mxu0 0.0
    %7054 = vmatpush2.msra.mxu0 %v6843
    %7055 = vmatprep.subr.mxu0 0.0
    %7056 = vmatpush2.msra.mxu0 %v6842
    %7057 = vmatprep.subr.mxu0 0.0
    %7058 = vmatpush2.msra.mxu0 %v6841
    %7059 = vmatprep.subr.mxu0 0.0
    %7060 = vmatpush2.msra.mxu0 %v6840
    %7061 = vmatprep.subr.mxu0 0.0
    %7062 = vmatpush2.msra.mxu0 %v6839
    %7063 = vmatprep.subr.mxu0 0.0
    %7064 = vmatpush2.msra.mxu0 %v6838
    %7065 = vmatprep.subr.mxu0 0.0
    %7066 = vmatpush2.msra.mxu0 %v6837
    %7067 = vmatprep.subr.mxu0 0.0
    %7068 = vmatpush2.msra.mxu0 %v6836
    %7069 = vmatprep.subr.mxu0 0.0
    %7070 = vmatpush2.msra.mxu0 %v6835
    %7071 = vmatprep.mubr.f32.mxu0 %v5932
    %7072 = vmatmul.mubr.f32.gmra.mxu0 %v5931
    %v7073 = vpop.f32.mrf.mxu0
    %v7074 = vadd.f32 %v7004, %v7073
    %v7075 = vpop.f32.mrf.mxu0
    %7076 = vdwg.mxu0
    %7077 = vmatprep.subr.mxu0 0.0
    %7078 = vmatpush1.msra.mxu0 %v6866
    %7079 = vmatprep.subr.mxu0 0.0
    %7080 = vmatpush1.msra.mxu0 %v6865
    %7081 = vmatprep.subr.mxu0 0.0
    %7082 = vmatpush1.msra.mxu0 %v6864
    %7083 = vmatprep.subr.mxu0 0.0
    %7084 = vmatpush1.msra.mxu0 %v6863
    %7085 = vmatprep.subr.mxu0 0.0
    %7086 = vmatpush1.msra.mxu0 %v6862
    %7087 = vmatprep.subr.mxu0 0.0
    %7088 = vmatpush1.msra.mxu0 %v6861
    %7089 = vmatprep.subr.mxu0 0.0
    %7090 = vmatpush1.msra.mxu0 %v6860
    %7091 = vmatprep.subr.mxu0 0.0
    %7092 = vmatpush1.msra.mxu0 %v6859
    %7093 = vmatprep.subr.mxu0 0.0
    %7094 = vmatpush1.msra.mxu0 %v6858
    %7095 = vmatprep.subr.mxu0 0.0
    %7096 = vmatpush1.msra.mxu0 %v6857
    %7097 = vmatprep.subr.mxu0 0.0
    %7098 = vmatpush1.msra.mxu0 %v6856
    %7099 = vmatprep.subr.mxu0 0.0
    %7100 = vmatpush1.msra.mxu0 %v6855
    %7101 = vmatprep.subr.mxu0 0.0
    %7102 = vmatpush1.msra.mxu0 %v6854
    %7103 = vmatprep.subr.mxu0 0.0
    %7104 = vmatpush1.msra.mxu0 %v6853
    %7105 = vmatprep.subr.mxu0 0.0
    %7106 = vmatpush1.msra.mxu0 %v6852
    %7107 = vmatprep.subr.mxu0 0.0
    %7108 = vmatpush1.msra.mxu0 %v6851
    %7109 = vmatprep.subr.mxu0 0.0
    %7110 = vmatpush2.msra.mxu0 0.0
    %7111 = vmatprep.subr.mxu0 0.0
    %7112 = vmatpush2.msra.mxu0 0.0
    %7113 = vmatprep.subr.mxu0 0.0
    %7114 = vmatpush2.msra.mxu0 0.0
    %7115 = vmatprep.subr.mxu0 0.0
    %7116 = vmatpush2.msra.mxu0 0.0
    %7117 = vmatprep.subr.mxu0 0.0
    %7118 = vmatpush2.msra.mxu0 0.0
    %7119 = vmatprep.subr.mxu0 0.0
    %7120 = vmatpush2.msra.mxu0 0.0
    %7121 = vmatprep.subr.mxu0 0.0
    %7122 = vmatpush2.msra.mxu0 0.0
    %7123 = vmatprep.subr.mxu0 0.0
    %7124 = vmatpush2.msra.mxu0 0.0
    %7125 = vmatprep.subr.mxu0 0.0
    %7126 = vmatpush2.msra.mxu0 0.0
    %7127 = vmatprep.subr.mxu0 0.0
    %7128 = vmatpush2.msra.mxu0 0.0
    %7129 = vmatprep.subr.mxu0 0.0
    %7130 = vmatpush2.msra.mxu0 0.0
    %7131 = vmatprep.subr.mxu0 0.0
    %7132 = vmatpush2.msra.mxu0 0.0
    %7133 = vmatprep.subr.mxu0 0.0
    %7134 = vmatpush2.msra.mxu0 0.0
    %7135 = vmatprep.subr.mxu0 0.0
    %7136 = vmatpush2.msra.mxu0 0.0
    %7137 = vmatprep.subr.mxu0 0.0
    %7138 = vmatpush2.msra.mxu0 0.0
    %7139 = vmatprep.subr.mxu0 0.0
    %7140 = vmatpush2.msra.mxu0 0.0
    %7141 = vmatprep.mubr.f32.mxu0 0.0
    %7142 = vmatmul.mubr.f32.gmra.mxu0 %v5933
    %v7143 = vpop.f32.mrf.mxu0
    %v7144 = vadd.f32 %v7074, %v7143
    %v7145 = vpop.f32.mrf.mxu0
    %7146 = vdwg.mxu0
    %v7147 = vadd.f32 %v6751, %v7144
    %s7148 = scalar_lea.vmem [#allocation7], 2688
    %v7149 = vld [vmem:[%s7148] sm:$0xff]
    %v7150 = vld [vmem:[%s7148 + $0x8] sm:$0xff]
    %v7151 = vld [vmem:[%s7148 + $0x10] sm:$0xff]
    %v7152 = vld [vmem:[%s7148 + $0x18] sm:$0xff]
    %v7153 = vld [vmem:[%s7148 + $0x20] sm:$0xff]
    %v7154 = vld [vmem:[%s7148 + $0x28] sm:$0xff]
    %v7155 = vld [vmem:[%s7148 + $0x30] sm:$0xff]
    %v7156 = vld [vmem:[%s7148 + $0x38] sm:$0xff]
    %v7157 = vld [vmem:[%s7148 + $0x40] sm:$0xff]
    %v7158 = vld [vmem:[%s7148 + $0x48] sm:$0xff]
    %v7159 = vld [vmem:[%s7148 + $0x50] sm:$0xff]
    %v7160 = vld [vmem:[%s7148 + $0x58] sm:$0xff]
    %v7161 = vld [vmem:[%s7148 + $0x60] sm:$0xff]
    %v7162 = vld [vmem:[%s7148 + $0x68] sm:$0xff]
    %v7163 = vld [vmem:[%s7148 + $0x70] sm:$0xff]
    %v7164 = vld [vmem:[%s7148 + $0x78] sm:$0xff]
    %v7165 = vld [vmem:[%s7148 + $0x80] sm:$0xff]
    %v7166 = vld [vmem:[%s7148 + $0x88] sm:$0xff]
    %v7167 = vld [vmem:[%s7148 + $0x90] sm:$0xff]
    %v7168 = vld [vmem:[%s7148 + $0x98] sm:$0xff]
    %v7169 = vld [vmem:[%s7148 + $0xa0] sm:$0xff]
    %v7170 = vld [vmem:[%s7148 + $0xa8] sm:$0xff]
    %v7171 = vld [vmem:[%s7148 + $0xb0] sm:$0xff]
    %v7172 = vld [vmem:[%s7148 + $0xb8] sm:$0xff]
    %v7173 = vld [vmem:[%s7148 + $0xc0] sm:$0xff]
    %v7174 = vld [vmem:[%s7148 + $0xc8] sm:$0xff]
    %v7175 = vld [vmem:[%s7148 + $0xd0] sm:$0xff]
    %v7176 = vld [vmem:[%s7148 + $0xd8] sm:$0xff]
    %v7177 = vld [vmem:[%s7148 + $0xe0] sm:$0xff]
    %v7178 = vld [vmem:[%s7148 + $0xe8] sm:$0xff]
    %v7179 = vld [vmem:[%s7148 + $0xf0] sm:$0xff]
    %v7180 = vld [vmem:[%s7148 + $0xf8] sm:$0xff]
    %v7181 = vld [vmem:[%s7148 + $0x100] sm:$0xff]
    %v7182 = vld [vmem:[%s7148 + $0x108] sm:$0xff]
    %v7183 = vld [vmem:[%s7148 + $0x110] sm:$0xff]
    %v7184 = vld [vmem:[%s7148 + $0x118] sm:$0xff]
    %v7185 = vld [vmem:[%s7148 + $0x120] sm:$0xff]
    %v7186 = vld [vmem:[%s7148 + $0x128] sm:$0xff]
    %v7187 = vld [vmem:[%s7148 + $0x130] sm:$0xff]
    %v7188 = vld [vmem:[%s7148 + $0x138] sm:$0xff]
    %v7189 = vld [vmem:[%s7148 + $0x140] sm:$0xff]
    %v7190 = vld [vmem:[%s7148 + $0x148] sm:$0xff]
    %v7191 = vld [vmem:[%s7148 + $0x150] sm:$0xff]
    %v7192 = vld [vmem:[%s7148 + $0x158] sm:$0xff]
    %v7193 = vld [vmem:[%s7148 + $0x160] sm:$0xff]
    %v7194 = vld [vmem:[%s7148 + $0x168] sm:$0xff]
    %v7195 = vld [vmem:[%s7148 + $0x170] sm:$0xff]
    %v7196 = vld [vmem:[%s7148 + $0x178] sm:$0xff]
    %v7197 = vld [vmem:[%s7148 + $0x180] sm:$0xff]
    %v7198 = vld [vmem:[%s7148 + $0x188] sm:$0xff]
    %v7199 = vld [vmem:[%s7148 + $0x190] sm:$0xff]
    %v7200 = vld [vmem:[%s7148 + $0x198] sm:$0xff]
    %v7201 = vld [vmem:[%s7148 + $0x1a0] sm:$0xff]
    %v7202 = vld [vmem:[%s7148 + $0x1a8] sm:$0xff]
    %v7203 = vld [vmem:[%s7148 + $0x1b0] sm:$0xff]
    %v7204 = vld [vmem:[%s7148 + $0x1b8] sm:$0xff]
    %v7205 = vld [vmem:[%s7148 + $0x1c0] sm:$0xff]
    %v7206 = vld [vmem:[%s7148 + $0x1c8] sm:$0xff]
    %v7207 = vld [vmem:[%s7148 + $0x1d0] sm:$0xff]
    %v7208 = vld [vmem:[%s7148 + $0x1d8] sm:$0xff]
    %v7209 = vld [vmem:[%s7148 + $0x1e0] sm:$0xff]
    %v7210 = vld [vmem:[%s7148 + $0x1e8] sm:$0xff]
    %v7211 = vld [vmem:[%s7148 + $0x1f0] sm:$0xff]
    %v7212 = vld [vmem:[%s7148 + $0x1f8] sm:$0xff]
    %v7213 = vld [vmem:[%s7148 + $0x200] sm:$0xff]
    %v7214 = vld [vmem:[%s7148 + $0x208] sm:$0xff]
    %v7215 = vld [vmem:[%s7148 + $0x210] sm:$0xff]
    %v7216 = vld [vmem:[%s7148 + $0x218] sm:$0xff]
    %v7217 = vld [vmem:[%s7148 + $0x220] sm:$0xff]
    %v7218 = vld [vmem:[%s7148 + $0x228] sm:$0xff]
    %v7219 = vld [vmem:[%s7148 + $0x230] sm:$0xff]
    %v7220 = vld [vmem:[%s7148 + $0x238] sm:$0xff]
    %v7221 = vld [vmem:[%s7148 + $0x240] sm:$0xff]
    %v7222 = vld [vmem:[%s7148 + $0x248] sm:$0xff]
    %v7223 = vld [vmem:[%s7148 + $0x250] sm:$0xff]
    %v7224 = vld [vmem:[%s7148 + $0x258] sm:$0xff]
    %v7225 = vld [vmem:[%s7148 + $0x260] sm:$0xff]
    %v7226 = vld [vmem:[%s7148 + $0x268] sm:$0xff]
    %v7227 = vld [vmem:[%s7148 + $0x270] sm:$0xff]
    %v7228 = vld [vmem:[%s7148 + $0x278] sm:$0xff]
    %v7229 = vld [vmem:[%s7148 + $0x280] sm:$0xff]
    %v7230 = vld [vmem:[%s7148 + $0x288] sm:$0xff]
    %v7231 = vld [vmem:[%s7148 + $0x290] sm:$0xff]
    %v7232 = vld [vmem:[%s7148 + $0x298] sm:$0xff]
    %v7233 = vld [vmem:[%s7148 + $0x2a0] sm:$0xff]
    %v7234 = vld [vmem:[%s7148 + $0x2a8] sm:$0xff]
    %v7235 = vld [vmem:[%s7148 + $0x2b0] sm:$0xff]
    %v7236 = vld [vmem:[%s7148 + $0x2b8] sm:$0xff]
    %v7237 = vld [vmem:[%s7148 + $0x2c0] sm:$0xff]
    %v7238 = vld [vmem:[%s7148 + $0x2c8] sm:$0xff]
    %v7239 = vld [vmem:[%s7148 + $0x2d0] sm:$0xff]
    %v7240 = vld [vmem:[%s7148 + $0x2d8] sm:$0xff]
    %v7241 = vld [vmem:[%s7148 + $0x2e0] sm:$0xff]
    %v7242 = vld [vmem:[%s7148 + $0x2e8] sm:$0xff]
    %v7243 = vld [vmem:[%s7148 + $0x2f0] sm:$0xff]
    %v7244 = vld [vmem:[%s7148 + $0x2f8] sm:$0xff]
    %v7245 = vld [vmem:[%s7148 + $0x300] sm:$0xff]
    %v7246 = vld [vmem:[%s7148 + $0x308] sm:$0xff]
    %v7247 = vld [vmem:[%s7148 + $0x310] sm:$0xff]
    %v7248 = vld [vmem:[%s7148 + $0x318] sm:$0xff]
    %v7249 = vld [vmem:[%s7148 + $0x320] sm:$0xff]
    %v7250 = vld [vmem:[%s7148 + $0x328] sm:$0xff]
    %v7251 = vld [vmem:[%s7148 + $0x330] sm:$0xff]
    %v7252 = vld [vmem:[%s7148 + $0x338] sm:$0xff]
    %v7253 = vld [vmem:[%s7148 + $0x340] sm:$0xff]
    %v7254 = vld [vmem:[%s7148 + $0x348] sm:$0xff]
    %v7255 = vld [vmem:[%s7148 + $0x350] sm:$0xff]
    %v7256 = vld [vmem:[%s7148 + $0x358] sm:$0xff]
    %v7257 = vld [vmem:[%s7148 + $0x360] sm:$0xff]
    %v7258 = vld [vmem:[%s7148 + $0x368] sm:$0xff]
    %v7259 = vld [vmem:[%s7148 + $0x370] sm:$0xff]
    %v7260 = vld [vmem:[%s7148 + $0x378] sm:$0xff]
    %7261 = vmatprep.subr.mxu0 0.0
    %7262 = vmatpush1.msra.mxu0 %v7164
    %7263 = vmatprep.subr.mxu0 0.0
    %7264 = vmatpush1.msra.mxu0 %v7163
    %7265 = vmatprep.subr.mxu0 0.0
    %7266 = vmatpush1.msra.mxu0 %v7162
    %7267 = vmatprep.subr.mxu0 0.0
    %7268 = vmatpush1.msra.mxu0 %v7161
    %7269 = vmatprep.subr.mxu0 0.0
    %7270 = vmatpush1.msra.mxu0 %v7160
    %7271 = vmatprep.subr.mxu0 0.0
    %7272 = vmatpush1.msra.mxu0 %v7159
    %7273 = vmatprep.subr.mxu0 0.0
    %7274 = vmatpush1.msra.mxu0 %v7158
    %7275 = vmatprep.subr.mxu0 0.0
    %7276 = vmatpush1.msra.mxu0 %v7157
    %7277 = vmatprep.subr.mxu0 0.0
    %7278 = vmatpush1.msra.mxu0 %v7156
    %7279 = vmatprep.subr.mxu0 0.0
    %7280 = vmatpush1.msra.mxu0 %v7155
    %7281 = vmatprep.subr.mxu0 0.0
    %7282 = vmatpush1.msra.mxu0 %v7154
    %7283 = vmatprep.subr.mxu0 0.0
    %7284 = vmatpush1.msra.mxu0 %v7153
    %7285 = vmatprep.subr.mxu0 0.0
    %7286 = vmatpush1.msra.mxu0 %v7152
    %7287 = vmatprep.subr.mxu0 0.0
    %7288 = vmatpush1.msra.mxu0 %v7151
    %7289 = vmatprep.subr.mxu0 0.0
    %7290 = vmatpush1.msra.mxu0 %v7150
    %7291 = vmatprep.subr.mxu0 0.0
    %7292 = vmatpush1.msra.mxu0 %v7149
    %7293 = vmatprep.subr.mxu0 0.0
    %7294 = vmatpush2.msra.mxu0 %v7180
    %7295 = vmatprep.subr.mxu0 0.0
    %7296 = vmatpush2.msra.mxu0 %v7179
    %7297 = vmatprep.subr.mxu0 0.0
    %7298 = vmatpush2.msra.mxu0 %v7178
    %7299 = vmatprep.subr.mxu0 0.0
    %7300 = vmatpush2.msra.mxu0 %v7177
    %7301 = vmatprep.subr.mxu0 0.0
    %7302 = vmatpush2.msra.mxu0 %v7176
    %7303 = vmatprep.subr.mxu0 0.0
    %7304 = vmatpush2.msra.mxu0 %v7175
    %7305 = vmatprep.subr.mxu0 0.0
    %7306 = vmatpush2.msra.mxu0 %v7174
    %7307 = vmatprep.subr.mxu0 0.0
    %7308 = vmatpush2.msra.mxu0 %v7173
    %7309 = vmatprep.subr.mxu0 0.0
    %7310 = vmatpush2.msra.mxu0 %v7172
    %7311 = vmatprep.subr.mxu0 0.0
    %7312 = vmatpush2.msra.mxu0 %v7171
    %7313 = vmatprep.subr.mxu0 0.0
    %7314 = vmatpush2.msra.mxu0 %v7170
    %7315 = vmatprep.subr.mxu0 0.0
    %7316 = vmatpush2.msra.mxu0 %v7169
    %7317 = vmatprep.subr.mxu0 0.0
    %7318 = vmatpush2.msra.mxu0 %v7168
    %7319 = vmatprep.subr.mxu0 0.0
    %7320 = vmatpush2.msra.mxu0 %v7167
    %7321 = vmatprep.subr.mxu0 0.0
    %7322 = vmatpush2.msra.mxu0 %v7166
    %7323 = vmatprep.subr.mxu0 0.0
    %7324 = vmatpush2.msra.mxu0 %v7165
    %7325 = vmatprep.mubr.f32.mxu0 %v5935
    %7326 = vmatmul.mubr.f32.gmra.mxu0 %v5934
    %v7327 = vpop.f32.mrf.mxu0
    %v7328 = vadd.f32 0.0, %v7327
    %v7329 = vpop.f32.mrf.mxu0
    %7330 = vdwg.mxu0
    %7331 = vmatprep.subr.mxu0 0.0
    %7332 = vmatpush1.msra.mxu0 %v7196
    %7333 = vmatprep.subr.mxu0 0.0
    %7334 = vmatpush1.msra.mxu0 %v7195
    %7335 = vmatprep.subr.mxu0 0.0
    %7336 = vmatpush1.msra.mxu0 %v7194
    %7337 = vmatprep.subr.mxu0 0.0
    %7338 = vmatpush1.msra.mxu0 %v7193
    %7339 = vmatprep.subr.mxu0 0.0
    %7340 = vmatpush1.msra.mxu0 %v7192
    %7341 = vmatprep.subr.mxu0 0.0
    %7342 = vmatpush1.msra.mxu0 %v7191
    %7343 = vmatprep.subr.mxu0 0.0
    %7344 = vmatpush1.msra.mxu0 %v7190
    %7345 = vmatprep.subr.mxu0 0.0
    %7346 = vmatpush1.msra.mxu0 %v7189
    %7347 = vmatprep.subr.mxu0 0.0
    %7348 = vmatpush1.msra.mxu0 %v7188
    %7349 = vmatprep.subr.mxu0 0.0
    %7350 = vmatpush1.msra.mxu0 %v7187
    %7351 = vmatprep.subr.mxu0 0.0
    %7352 = vmatpush1.msra.mxu0 %v7186
    %7353 = vmatprep.subr.mxu0 0.0
    %7354 = vmatpush1.msra.mxu0 %v7185
    %7355 = vmatprep.subr.mxu0 0.0
    %7356 = vmatpush1.msra.mxu0 %v7184
    %7357 = vmatprep.subr.mxu0 0.0
    %7358 = vmatpush1.msra.mxu0 %v7183
    %7359 = vmatprep.subr.mxu0 0.0
    %7360 = vmatpush1.msra.mxu0 %v7182
    %7361 = vmatprep.subr.mxu0 0.0
    %7362 = vmatpush1.msra.mxu0 %v7181
    %7363 = vmatprep.subr.mxu0 0.0
    %7364 = vmatpush2.msra.mxu0 %v7212
    %7365 = vmatprep.subr.mxu0 0.0
    %7366 = vmatpush2.msra.mxu0 %v7211
    %7367 = vmatprep.subr.mxu0 0.0
    %7368 = vmatpush2.msra.mxu0 %v7210
    %7369 = vmatprep.subr.mxu0 0.0
    %7370 = vmatpush2.msra.mxu0 %v7209
    %7371 = vmatprep.subr.mxu0 0.0
    %7372 = vmatpush2.msra.mxu0 %v7208
    %7373 = vmatprep.subr.mxu0 0.0
    %7374 = vmatpush2.msra.mxu0 %v7207
    %7375 = vmatprep.subr.mxu0 0.0
    %7376 = vmatpush2.msra.mxu0 %v7206
    %7377 = vmatprep.subr.mxu0 0.0
    %7378 = vmatpush2.msra.mxu0 %v7205
    %7379 = vmatprep.subr.mxu0 0.0
    %7380 = vmatpush2.msra.mxu0 %v7204
    %7381 = vmatprep.subr.mxu0 0.0
    %7382 = vmatpush2.msra.mxu0 %v7203
    %7383 = vmatprep.subr.mxu0 0.0
    %7384 = vmatpush2.msra.mxu0 %v7202
    %7385 = vmatprep.subr.mxu0 0.0
    %7386 = vmatpush2.msra.mxu0 %v7201
    %7387 = vmatprep.subr.mxu0 0.0
    %7388 = vmatpush2.msra.mxu0 %v7200
    %7389 = vmatprep.subr.mxu0 0.0
    %7390 = vmatpush2.msra.mxu0 %v7199
    %7391 = vmatprep.subr.mxu0 0.0
    %7392 = vmatpush2.msra.mxu0 %v7198
    %7393 = vmatprep.subr.mxu0 0.0
    %7394 = vmatpush2.msra.mxu0 %v7197
    %7395 = vmatprep.mubr.f32.mxu0 %v5937
    %7396 = vmatmul.mubr.f32.gmra.mxu0 %v5936
    %v7397 = vpop.f32.mrf.mxu0
    %v7398 = vadd.f32 %v7328, %v7397
    %v7399 = vpop.f32.mrf.mxu0
    %7400 = vdwg.mxu0
    %7401 = vmatprep.subr.mxu0 0.0
    %7402 = vmatpush1.msra.mxu0 %v7228
    %7403 = vmatprep.subr.mxu0 0.0
    %7404 = vmatpush1.msra.mxu0 %v7227
    %7405 = vmatprep.subr.mxu0 0.0
    %7406 = vmatpush1.msra.mxu0 %v7226
    %7407 = vmatprep.subr.mxu0 0.0
    %7408 = vmatpush1.msra.mxu0 %v7225
    %7409 = vmatprep.subr.mxu0 0.0
    %7410 = vmatpush1.msra.mxu0 %v7224
    %7411 = vmatprep.subr.mxu0 0.0
    %7412 = vmatpush1.msra.mxu0 %v7223
    %7413 = vmatprep.subr.mxu0 0.0
    %7414 = vmatpush1.msra.mxu0 %v7222
    %7415 = vmatprep.subr.mxu0 0.0
    %7416 = vmatpush1.msra.mxu0 %v7221
    %7417 = vmatprep.subr.mxu0 0.0
    %7418 = vmatpush1.msra.mxu0 %v7220
    %7419 = vmatprep.subr.mxu0 0.0
    %7420 = vmatpush1.msra.mxu0 %v7219
    %7421 = vmatprep.subr.mxu0 0.0
    %7422 = vmatpush1.msra.mxu0 %v7218
    %7423 = vmatprep.subr.mxu0 0.0
    %7424 = vmatpush1.msra.mxu0 %v7217
    %7425 = vmatprep.subr.mxu0 0.0
    %7426 = vmatpush1.msra.mxu0 %v7216
    %7427 = vmatprep.subr.mxu0 0.0
    %7428 = vmatpush1.msra.mxu0 %v7215
    %7429 = vmatprep.subr.mxu0 0.0
    %7430 = vmatpush1.msra.mxu0 %v7214
    %7431 = vmatprep.subr.mxu0 0.0
    %7432 = vmatpush1.msra.mxu0 %v7213
    %7433 = vmatprep.subr.mxu0 0.0
    %7434 = vmatpush2.msra.mxu0 %v7244
    %7435 = vmatprep.subr.mxu0 0.0
    %7436 = vmatpush2.msra.mxu0 %v7243
    %7437 = vmatprep.subr.mxu0 0.0
    %7438 = vmatpush2.msra.mxu0 %v7242
    %7439 = vmatprep.subr.mxu0 0.0
    %7440 = vmatpush2.msra.mxu0 %v7241
    %7441 = vmatprep.subr.mxu0 0.0
    %7442 = vmatpush2.msra.mxu0 %v7240
    %7443 = vmatprep.subr.mxu0 0.0
    %7444 = vmatpush2.msra.mxu0 %v7239
    %7445 = vmatprep.subr.mxu0 0.0
    %7446 = vmatpush2.msra.mxu0 %v7238
    %7447 = vmatprep.subr.mxu0 0.0
    %7448 = vmatpush2.msra.mxu0 %v7237
    %7449 = vmatprep.subr.mxu0 0.0
    %7450 = vmatpush2.msra.mxu0 %v7236
    %7451 = vmatprep.subr.mxu0 0.0
    %7452 = vmatpush2.msra.mxu0 %v7235
    %7453 = vmatprep.subr.mxu0 0.0
    %7454 = vmatpush2.msra.mxu0 %v7234
    %7455 = vmatprep.subr.mxu0 0.0
    %7456 = vmatpush2.msra.mxu0 %v7233
    %7457 = vmatprep.subr.mxu0 0.0
    %7458 = vmatpush2.msra.mxu0 %v7232
    %7459 = vmatprep.subr.mxu0 0.0
    %7460 = vmatpush2.msra.mxu0 %v7231
    %7461 = vmatprep.subr.mxu0 0.0
    %7462 = vmatpush2.msra.mxu0 %v7230
    %7463 = vmatprep.subr.mxu0 0.0
    %7464 = vmatpush2.msra.mxu0 %v7229
    %7465 = vmatprep.mubr.f32.mxu0 %v5939
    %7466 = vmatmul.mubr.f32.gmra.mxu0 %v5938
    %v7467 = vpop.f32.mrf.mxu0
    %v7468 = vadd.f32 %v7398, %v7467
    %v7469 = vpop.f32.mrf.mxu0
    %7470 = vdwg.mxu0
    %7471 = vmatprep.subr.mxu0 0.0
    %7472 = vmatpush1.msra.mxu0 %v7260
    %7473 = vmatprep.subr.mxu0 0.0
    %7474 = vmatpush1.msra.mxu0 %v7259
    %7475 = vmatprep.subr.mxu0 0.0
    %7476 = vmatpush1.msra.mxu0 %v7258
    %7477 = vmatprep.subr.mxu0 0.0
    %7478 = vmatpush1.msra.mxu0 %v7257
    %7479 = vmatprep.subr.mxu0 0.0
    %7480 = vmatpush1.msra.mxu0 %v7256
    %7481 = vmatprep.subr.mxu0 0.0
    %7482 = vmatpush1.msra.mxu0 %v7255
    %7483 = vmatprep.subr.mxu0 0.0
    %7484 = vmatpush1.msra.mxu0 %v7254
    %7485 = vmatprep.subr.mxu0 0.0
    %7486 = vmatpush1.msra.mxu0 %v7253
    %7487 = vmatprep.subr.mxu0 0.0
    %7488 = vmatpush1.msra.mxu0 %v7252
    %7489 = vmatprep.subr.mxu0 0.0
    %7490 = vmatpush1.msra.mxu0 %v7251
    %7491 = vmatprep.subr.mxu0 0.0
    %7492 = vmatpush1.msra.mxu0 %v7250
    %7493 = vmatprep.subr.mxu0 0.0
    %7494 = vmatpush1.msra.mxu0 %v7249
    %7495 = vmatprep.subr.mxu0 0.0
    %7496 = vmatpush1.msra.mxu0 %v7248
    %7497 = vmatprep.subr.mxu0 0.0
    %7498 = vmatpush1.msra.mxu0 %v7247
    %7499 = vmatprep.subr.mxu0 0.0
    %7500 = vmatpush1.msra.mxu0 %v7246
    %7501 = vmatprep.subr.mxu0 0.0
    %7502 = vmatpush1.msra.mxu0 %v7245
    %7503 = vmatprep.subr.mxu0 0.0
    %7504 = vmatpush2.msra.mxu0 0.0
    %7505 = vmatprep.subr.mxu0 0.0
    %7506 = vmatpush2.msra.mxu0 0.0
    %7507 = vmatprep.subr.mxu0 0.0
    %7508 = vmatpush2.msra.mxu0 0.0
    %7509 = vmatprep.subr.mxu0 0.0
    %7510 = vmatpush2.msra.mxu0 0.0
    %7511 = vmatprep.subr.mxu0 0.0
    %7512 = vmatpush2.msra.mxu0 0.0
    %7513 = vmatprep.subr.mxu0 0.0
    %7514 = vmatpush2.msra.mxu0 0.0
    %7515 = vmatprep.subr.mxu0 0.0
    %7516 = vmatpush2.msra.mxu0 0.0
    %7517 = vmatprep.subr.mxu0 0.0
    %7518 = vmatpush2.msra.mxu0 0.0
    %7519 = vmatprep.subr.mxu0 0.0
    %7520 = vmatpush2.msra.mxu0 0.0
    %7521 = vmatprep.subr.mxu0 0.0
    %7522 = vmatpush2.msra.mxu0 0.0
    %7523 = vmatprep.subr.mxu0 0.0
    %7524 = vmatpush2.msra.mxu0 0.0
    %7525 = vmatprep.subr.mxu0 0.0
    %7526 = vmatpush2.msra.mxu0 0.0
    %7527 = vmatprep.subr.mxu0 0.0
    %7528 = vmatpush2.msra.mxu0 0.0
    %7529 = vmatprep.subr.mxu0 0.0
    %7530 = vmatpush2.msra.mxu0 0.0
    %7531 = vmatprep.subr.mxu0 0.0
    %7532 = vmatpush2.msra.mxu0 0.0
    %7533 = vmatprep.subr.mxu0 0.0
    %7534 = vmatpush2.msra.mxu0 0.0
    %7535 = vmatprep.mubr.f32.mxu0 0.0
    %7536 = vmatmul.mubr.f32.gmra.mxu0 %v5940
    %v7537 = vpop.f32.mrf.mxu0
    %v7538 = vadd.f32 %v7468, %v7537
    %v7539 = vpop.f32.mrf.mxu0
    %7540 = vdwg.mxu0
    %v7541 = vadd.f32 %v7147, %v7538
    %s7542 = scalar_lea.vmem [#allocation7], 3584
    %v7543 = vld [vmem:[%s7542] sm:$0xff]
    %v7544 = vld [vmem:[%s7542 + $0x8] sm:$0xff]
    %v7545 = vld [vmem:[%s7542 + $0x10] sm:$0xff]
    %v7546 = vld [vmem:[%s7542 + $0x18] sm:$0xff]
    %v7547 = vld [vmem:[%s7542 + $0x20] sm:$0xff]
    %v7548 = vld [vmem:[%s7542 + $0x28] sm:$0xff]
    %v7549 = vld [vmem:[%s7542 + $0x30] sm:$0xff]
    %v7550 = vld [vmem:[%s7542 + $0x38] sm:$0xff]
    %v7551 = vld [vmem:[%s7542 + $0x40] sm:$0xff]
    %v7552 = vld [vmem:[%s7542 + $0x48] sm:$0xff]
    %v7553 = vld [vmem:[%s7542 + $0x50] sm:$0xff]
    %v7554 = vld [vmem:[%s7542 + $0x58] sm:$0xff]
    %v7555 = vld [vmem:[%s7542 + $0x60] sm:$0xff]
    %v7556 = vld [vmem:[%s7542 + $0x68] sm:$0xff]
    %v7557 = vld [vmem:[%s7542 + $0x70] sm:$0xff]
    %v7558 = vld [vmem:[%s7542 + $0x78] sm:$0xff]
    %v7559 = vld [vmem:[%s7542 + $0x80] sm:$0xff]
    %v7560 = vld [vmem:[%s7542 + $0x88] sm:$0xff]
    %v7561 = vld [vmem:[%s7542 + $0x90] sm:$0xff]
    %v7562 = vld [vmem:[%s7542 + $0x98] sm:$0xff]
    %v7563 = vld [vmem:[%s7542 + $0xa0] sm:$0xff]
    %v7564 = vld [vmem:[%s7542 + $0xa8] sm:$0xff]
    %v7565 = vld [vmem:[%s7542 + $0xb0] sm:$0xff]
    %v7566 = vld [vmem:[%s7542 + $0xb8] sm:$0xff]
    %v7567 = vld [vmem:[%s7542 + $0xc0] sm:$0xff]
    %v7568 = vld [vmem:[%s7542 + $0xc8] sm:$0xff]
    %v7569 = vld [vmem:[%s7542 + $0xd0] sm:$0xff]
    %v7570 = vld [vmem:[%s7542 + $0xd8] sm:$0xff]
    %v7571 = vld [vmem:[%s7542 + $0xe0] sm:$0xff]
    %v7572 = vld [vmem:[%s7542 + $0xe8] sm:$0xff]
    %v7573 = vld [vmem:[%s7542 + $0xf0] sm:$0xff]
    %v7574 = vld [vmem:[%s7542 + $0xf8] sm:$0xff]
    %v7575 = vld [vmem:[%s7542 + $0x100] sm:$0xff]
    %v7576 = vld [vmem:[%s7542 + $0x108] sm:$0xff]
    %v7577 = vld [vmem:[%s7542 + $0x110] sm:$0xff]
    %v7578 = vld [vmem:[%s7542 + $0x118] sm:$0xff]
    %v7579 = vld [vmem:[%s7542 + $0x120] sm:$0xff]
    %v7580 = vld [vmem:[%s7542 + $0x128] sm:$0xff]
    %v7581 = vld [vmem:[%s7542 + $0x130] sm:$0xff]
    %v7582 = vld [vmem:[%s7542 + $0x138] sm:$0xff]
    %v7583 = vld [vmem:[%s7542 + $0x140] sm:$0xff]
    %v7584 = vld [vmem:[%s7542 + $0x148] sm:$0xff]
    %v7585 = vld [vmem:[%s7542 + $0x150] sm:$0xff]
    %v7586 = vld [vmem:[%s7542 + $0x158] sm:$0xff]
    %v7587 = vld [vmem:[%s7542 + $0x160] sm:$0xff]
    %v7588 = vld [vmem:[%s7542 + $0x168] sm:$0xff]
    %v7589 = vld [vmem:[%s7542 + $0x170] sm:$0xff]
    %v7590 = vld [vmem:[%s7542 + $0x178] sm:$0xff]
    %v7591 = vld [vmem:[%s7542 + $0x180] sm:$0xff]
    %v7592 = vld [vmem:[%s7542 + $0x188] sm:$0xff]
    %v7593 = vld [vmem:[%s7542 + $0x190] sm:$0xff]
    %v7594 = vld [vmem:[%s7542 + $0x198] sm:$0xff]
    %v7595 = vld [vmem:[%s7542 + $0x1a0] sm:$0xff]
    %v7596 = vld [vmem:[%s7542 + $0x1a8] sm:$0xff]
    %v7597 = vld [vmem:[%s7542 + $0x1b0] sm:$0xff]
    %v7598 = vld [vmem:[%s7542 + $0x1b8] sm:$0xff]
    %v7599 = vld [vmem:[%s7542 + $0x1c0] sm:$0xff]
    %v7600 = vld [vmem:[%s7542 + $0x1c8] sm:$0xff]
    %v7601 = vld [vmem:[%s7542 + $0x1d0] sm:$0xff]
    %v7602 = vld [vmem:[%s7542 + $0x1d8] sm:$0xff]
    %v7603 = vld [vmem:[%s7542 + $0x1e0] sm:$0xff]
    %v7604 = vld [vmem:[%s7542 + $0x1e8] sm:$0xff]
    %v7605 = vld [vmem:[%s7542 + $0x1f0] sm:$0xff]
    %v7606 = vld [vmem:[%s7542 + $0x1f8] sm:$0xff]
    %v7607 = vld [vmem:[%s7542 + $0x200] sm:$0xff]
    %v7608 = vld [vmem:[%s7542 + $0x208] sm:$0xff]
    %v7609 = vld [vmem:[%s7542 + $0x210] sm:$0xff]
    %v7610 = vld [vmem:[%s7542 + $0x218] sm:$0xff]
    %v7611 = vld [vmem:[%s7542 + $0x220] sm:$0xff]
    %v7612 = vld [vmem:[%s7542 + $0x228] sm:$0xff]
    %v7613 = vld [vmem:[%s7542 + $0x230] sm:$0xff]
    %v7614 = vld [vmem:[%s7542 + $0x238] sm:$0xff]
    %v7615 = vld [vmem:[%s7542 + $0x240] sm:$0xff]
    %v7616 = vld [vmem:[%s7542 + $0x248] sm:$0xff]
    %v7617 = vld [vmem:[%s7542 + $0x250] sm:$0xff]
    %v7618 = vld [vmem:[%s7542 + $0x258] sm:$0xff]
    %v7619 = vld [vmem:[%s7542 + $0x260] sm:$0xff]
    %v7620 = vld [vmem:[%s7542 + $0x268] sm:$0xff]
    %v7621 = vld [vmem:[%s7542 + $0x270] sm:$0xff]
    %v7622 = vld [vmem:[%s7542 + $0x278] sm:$0xff]
    %v7623 = vld [vmem:[%s7542 + $0x280] sm:$0xff]
    %v7624 = vld [vmem:[%s7542 + $0x288] sm:$0xff]
    %v7625 = vld [vmem:[%s7542 + $0x290] sm:$0xff]
    %v7626 = vld [vmem:[%s7542 + $0x298] sm:$0xff]
    %v7627 = vld [vmem:[%s7542 + $0x2a0] sm:$0xff]
    %v7628 = vld [vmem:[%s7542 + $0x2a8] sm:$0xff]
    %v7629 = vld [vmem:[%s7542 + $0x2b0] sm:$0xff]
    %v7630 = vld [vmem:[%s7542 + $0x2b8] sm:$0xff]
    %v7631 = vld [vmem:[%s7542 + $0x2c0] sm:$0xff]
    %v7632 = vld [vmem:[%s7542 + $0x2c8] sm:$0xff]
    %v7633 = vld [vmem:[%s7542 + $0x2d0] sm:$0xff]
    %v7634 = vld [vmem:[%s7542 + $0x2d8] sm:$0xff]
    %v7635 = vld [vmem:[%s7542 + $0x2e0] sm:$0xff]
    %v7636 = vld [vmem:[%s7542 + $0x2e8] sm:$0xff]
    %v7637 = vld [vmem:[%s7542 + $0x2f0] sm:$0xff]
    %v7638 = vld [vmem:[%s7542 + $0x2f8] sm:$0xff]
    %v7639 = vld [vmem:[%s7542 + $0x300] sm:$0xff]
    %v7640 = vld [vmem:[%s7542 + $0x308] sm:$0xff]
    %v7641 = vld [vmem:[%s7542 + $0x310] sm:$0xff]
    %v7642 = vld [vmem:[%s7542 + $0x318] sm:$0xff]
    %v7643 = vld [vmem:[%s7542 + $0x320] sm:$0xff]
    %v7644 = vld [vmem:[%s7542 + $0x328] sm:$0xff]
    %v7645 = vld [vmem:[%s7542 + $0x330] sm:$0xff]
    %v7646 = vld [vmem:[%s7542 + $0x338] sm:$0xff]
    %v7647 = vld [vmem:[%s7542 + $0x340] sm:$0xff]
    %v7648 = vld [vmem:[%s7542 + $0x348] sm:$0xff]
    %v7649 = vld [vmem:[%s7542 + $0x350] sm:$0xff]
    %v7650 = vld [vmem:[%s7542 + $0x358] sm:$0xff]
    %v7651 = vld [vmem:[%s7542 + $0x360] sm:$0xff]
    %v7652 = vld [vmem:[%s7542 + $0x368] sm:$0xff]
    %v7653 = vld [vmem:[%s7542 + $0x370] sm:$0xff]
    %v7654 = vld [vmem:[%s7542 + $0x378] sm:$0xff]
    %7655 = vmatprep.subr.mxu0 0.0
    %7656 = vmatpush1.msra.mxu0 %v7558
    %7657 = vmatprep.subr.mxu0 0.0
    %7658 = vmatpush1.msra.mxu0 %v7557
    %7659 = vmatprep.subr.mxu0 0.0
    %7660 = vmatpush1.msra.mxu0 %v7556
    %7661 = vmatprep.subr.mxu0 0.0
    %7662 = vmatpush1.msra.mxu0 %v7555
    %7663 = vmatprep.subr.mxu0 0.0
    %7664 = vmatpush1.msra.mxu0 %v7554
    %7665 = vmatprep.subr.mxu0 0.0
    %7666 = vmatpush1.msra.mxu0 %v7553
    %7667 = vmatprep.subr.mxu0 0.0
    %7668 = vmatpush1.msra.mxu0 %v7552
    %7669 = vmatprep.subr.mxu0 0.0
    %7670 = vmatpush1.msra.mxu0 %v7551
    %7671 = vmatprep.subr.mxu0 0.0
    %7672 = vmatpush1.msra.mxu0 %v7550
    %7673 = vmatprep.subr.mxu0 0.0
    %7674 = vmatpush1.msra.mxu0 %v7549
    %7675 = vmatprep.subr.mxu0 0.0
    %7676 = vmatpush1.msra.mxu0 %v7548
    %7677 = vmatprep.subr.mxu0 0.0
    %7678 = vmatpush1.msra.mxu0 %v7547
    %7679 = vmatprep.subr.mxu0 0.0
    %7680 = vmatpush1.msra.mxu0 %v7546
    %7681 = vmatprep.subr.mxu0 0.0
    %7682 = vmatpush1.msra.mxu0 %v7545
    %7683 = vmatprep.subr.mxu0 0.0
    %7684 = vmatpush1.msra.mxu0 %v7544
    %7685 = vmatprep.subr.mxu0 0.0
    %7686 = vmatpush1.msra.mxu0 %v7543
    %7687 = vmatprep.subr.mxu0 0.0
    %7688 = vmatpush2.msra.mxu0 %v7574
    %7689 = vmatprep.subr.mxu0 0.0
    %7690 = vmatpush2.msra.mxu0 %v7573
    %7691 = vmatprep.subr.mxu0 0.0
    %7692 = vmatpush2.msra.mxu0 %v7572
    %7693 = vmatprep.subr.mxu0 0.0
    %7694 = vmatpush2.msra.mxu0 %v7571
    %7695 = vmatprep.subr.mxu0 0.0
    %7696 = vmatpush2.msra.mxu0 %v7570
    %7697 = vmatprep.subr.mxu0 0.0
    %7698 = vmatpush2.msra.mxu0 %v7569
    %7699 = vmatprep.subr.mxu0 0.0
    %7700 = vmatpush2.msra.mxu0 %v7568
    %7701 = vmatprep.subr.mxu0 0.0
    %7702 = vmatpush2.msra.mxu0 %v7567
    %7703 = vmatprep.subr.mxu0 0.0
    %7704 = vmatpush2.msra.mxu0 %v7566
    %7705 = vmatprep.subr.mxu0 0.0
    %7706 = vmatpush2.msra.mxu0 %v7565
    %7707 = vmatprep.subr.mxu0 0.0
    %7708 = vmatpush2.msra.mxu0 %v7564
    %7709 = vmatprep.subr.mxu0 0.0
    %7710 = vmatpush2.msra.mxu0 %v7563
    %7711 = vmatprep.subr.mxu0 0.0
    %7712 = vmatpush2.msra.mxu0 %v7562
    %7713 = vmatprep.subr.mxu0 0.0
    %7714 = vmatpush2.msra.mxu0 %v7561
    %7715 = vmatprep.subr.mxu0 0.0
    %7716 = vmatpush2.msra.mxu0 %v7560
    %7717 = vmatprep.subr.mxu0 0.0
    %7718 = vmatpush2.msra.mxu0 %v7559
    %7719 = vmatprep.mubr.f32.mxu0 %v5942
    %7720 = vmatmul.mubr.f32.gmra.mxu0 %v5941
    %v7721 = vpop.f32.mrf.mxu0
    %v7722 = vadd.f32 0.0, %v7721
    %v7723 = vpop.f32.mrf.mxu0
    %7724 = vdwg.mxu0
    %7725 = vmatprep.subr.mxu0 0.0
    %7726 = vmatpush1.msra.mxu0 %v7590
    %7727 = vmatprep.subr.mxu0 0.0
    %7728 = vmatpush1.msra.mxu0 %v7589
    %7729 = vmatprep.subr.mxu0 0.0
    %7730 = vmatpush1.msra.mxu0 %v7588
    %7731 = vmatprep.subr.mxu0 0.0
    %7732 = vmatpush1.msra.mxu0 %v7587
    %7733 = vmatprep.subr.mxu0 0.0
    %7734 = vmatpush1.msra.mxu0 %v7586
    %7735 = vmatprep.subr.mxu0 0.0
    %7736 = vmatpush1.msra.mxu0 %v7585
    %7737 = vmatprep.subr.mxu0 0.0
    %7738 = vmatpush1.msra.mxu0 %v7584
    %7739 = vmatprep.subr.mxu0 0.0
    %7740 = vmatpush1.msra.mxu0 %v7583
    %7741 = vmatprep.subr.mxu0 0.0
    %7742 = vmatpush1.msra.mxu0 %v7582
    %7743 = vmatprep.subr.mxu0 0.0
    %7744 = vmatpush1.msra.mxu0 %v7581
    %7745 = vmatprep.subr.mxu0 0.0
    %7746 = vmatpush1.msra.mxu0 %v7580
    %7747 = vmatprep.subr.mxu0 0.0
    %7748 = vmatpush1.msra.mxu0 %v7579
    %7749 = vmatprep.subr.mxu0 0.0
    %7750 = vmatpush1.msra.mxu0 %v7578
    %7751 = vmatprep.subr.mxu0 0.0
    %7752 = vmatpush1.msra.mxu0 %v7577
    %7753 = vmatprep.subr.mxu0 0.0
    %7754 = vmatpush1.msra.mxu0 %v7576
    %7755 = vmatprep.subr.mxu0 0.0
    %7756 = vmatpush1.msra.mxu0 %v7575
    %7757 = vmatprep.subr.mxu0 0.0
    %7758 = vmatpush2.msra.mxu0 %v7606
    %7759 = vmatprep.subr.mxu0 0.0
    %7760 = vmatpush2.msra.mxu0 %v7605
    %7761 = vmatprep.subr.mxu0 0.0
    %7762 = vmatpush2.msra.mxu0 %v7604
    %7763 = vmatprep.subr.mxu0 0.0
    %7764 = vmatpush2.msra.mxu0 %v7603
    %7765 = vmatprep.subr.mxu0 0.0
    %7766 = vmatpush2.msra.mxu0 %v7602
    %7767 = vmatprep.subr.mxu0 0.0
    %7768 = vmatpush2.msra.mxu0 %v7601
    %7769 = vmatprep.subr.mxu0 0.0
    %7770 = vmatpush2.msra.mxu0 %v7600
    %7771 = vmatprep.subr.mxu0 0.0
    %7772 = vmatpush2.msra.mxu0 %v7599
    %7773 = vmatprep.subr.mxu0 0.0
    %7774 = vmatpush2.msra.mxu0 %v7598
    %7775 = vmatprep.subr.mxu0 0.0
    %7776 = vmatpush2.msra.mxu0 %v7597
    %7777 = vmatprep.subr.mxu0 0.0
    %7778 = vmatpush2.msra.mxu0 %v7596
    %7779 = vmatprep.subr.mxu0 0.0
    %7780 = vmatpush2.msra.mxu0 %v7595
    %7781 = vmatprep.subr.mxu0 0.0
    %7782 = vmatpush2.msra.mxu0 %v7594
    %7783 = vmatprep.subr.mxu0 0.0
    %7784 = vmatpush2.msra.mxu0 %v7593
    %7785 = vmatprep.subr.mxu0 0.0
    %7786 = vmatpush2.msra.mxu0 %v7592
    %7787 = vmatprep.subr.mxu0 0.0
    %7788 = vmatpush2.msra.mxu0 %v7591
    %7789 = vmatprep.mubr.f32.mxu0 %v5944
    %7790 = vmatmul.mubr.f32.gmra.mxu0 %v5943
    %v7791 = vpop.f32.mrf.mxu0
    %v7792 = vadd.f32 %v7722, %v7791
    %v7793 = vpop.f32.mrf.mxu0
    %7794 = vdwg.mxu0
    %7795 = vmatprep.subr.mxu0 0.0
    %7796 = vmatpush1.msra.mxu0 %v7622
    %7797 = vmatprep.subr.mxu0 0.0
    %7798 = vmatpush1.msra.mxu0 %v7621
    %7799 = vmatprep.subr.mxu0 0.0
    %7800 = vmatpush1.msra.mxu0 %v7620
    %7801 = vmatprep.subr.mxu0 0.0
    %7802 = vmatpush1.msra.mxu0 %v7619
    %7803 = vmatprep.subr.mxu0 0.0
    %7804 = vmatpush1.msra.mxu0 %v7618
    %7805 = vmatprep.subr.mxu0 0.0
    %7806 = vmatpush1.msra.mxu0 %v7617
    %7807 = vmatprep.subr.mxu0 0.0
    %7808 = vmatpush1.msra.mxu0 %v7616
    %7809 = vmatprep.subr.mxu0 0.0
    %7810 = vmatpush1.msra.mxu0 %v7615
    %7811 = vmatprep.subr.mxu0 0.0
    %7812 = vmatpush1.msra.mxu0 %v7614
    %7813 = vmatprep.subr.mxu0 0.0
    %7814 = vmatpush1.msra.mxu0 %v7613
    %7815 = vmatprep.subr.mxu0 0.0
    %7816 = vmatpush1.msra.mxu0 %v7612
    %7817 = vmatprep.subr.mxu0 0.0
    %7818 = vmatpush1.msra.mxu0 %v7611
    %7819 = vmatprep.subr.mxu0 0.0
    %7820 = vmatpush1.msra.mxu0 %v7610
    %7821 = vmatprep.subr.mxu0 0.0
    %7822 = vmatpush1.msra.mxu0 %v7609
    %7823 = vmatprep.subr.mxu0 0.0
    %7824 = vmatpush1.msra.mxu0 %v7608
    %7825 = vmatprep.subr.mxu0 0.0
    %7826 = vmatpush1.msra.mxu0 %v7607
    %7827 = vmatprep.subr.mxu0 0.0
    %7828 = vmatpush2.msra.mxu0 %v7638
    %7829 = vmatprep.subr.mxu0 0.0
    %7830 = vmatpush2.msra.mxu0 %v7637
    %7831 = vmatprep.subr.mxu0 0.0
    %7832 = vmatpush2.msra.mxu0 %v7636
    %7833 = vmatprep.subr.mxu0 0.0
    %7834 = vmatpush2.msra.mxu0 %v7635
    %7835 = vmatprep.subr.mxu0 0.0
    %7836 = vmatpush2.msra.mxu0 %v7634
    %7837 = vmatprep.subr.mxu0 0.0
    %7838 = vmatpush2.msra.mxu0 %v7633
    %7839 = vmatprep.subr.mxu0 0.0
    %7840 = vmatpush2.msra.mxu0 %v7632
    %7841 = vmatprep.subr.mxu0 0.0
    %7842 = vmatpush2.msra.mxu0 %v7631
    %7843 = vmatprep.subr.mxu0 0.0
    %7844 = vmatpush2.msra.mxu0 %v7630
    %7845 = vmatprep.subr.mxu0 0.0
    %7846 = vmatpush2.msra.mxu0 %v7629
    %7847 = vmatprep.subr.mxu0 0.0
    %7848 = vmatpush2.msra.mxu0 %v7628
    %7849 = vmatprep.subr.mxu0 0.0
    %7850 = vmatpush2.msra.mxu0 %v7627
    %7851 = vmatprep.subr.mxu0 0.0
    %7852 = vmatpush2.msra.mxu0 %v7626
    %7853 = vmatprep.subr.mxu0 0.0
    %7854 = vmatpush2.msra.mxu0 %v7625
    %7855 = vmatprep.subr.mxu0 0.0
    %7856 = vmatpush2.msra.mxu0 %v7624
    %7857 = vmatprep.subr.mxu0 0.0
    %7858 = vmatpush2.msra.mxu0 %v7623
    %7859 = vmatprep.mubr.f32.mxu0 %v5946
    %7860 = vmatmul.mubr.f32.gmra.mxu0 %v5945
    %v7861 = vpop.f32.mrf.mxu0
    %v7862 = vadd.f32 %v7792, %v7861
    %v7863 = vpop.f32.mrf.mxu0
    %7864 = vdwg.mxu0
    %7865 = vmatprep.subr.mxu0 0.0
    %7866 = vmatpush1.msra.mxu0 %v7654
    %7867 = vmatprep.subr.mxu0 0.0
    %7868 = vmatpush1.msra.mxu0 %v7653
    %7869 = vmatprep.subr.mxu0 0.0
    %7870 = vmatpush1.msra.mxu0 %v7652
    %7871 = vmatprep.subr.mxu0 0.0
    %7872 = vmatpush1.msra.mxu0 %v7651
    %7873 = vmatprep.subr.mxu0 0.0
    %7874 = vmatpush1.msra.mxu0 %v7650
    %7875 = vmatprep.subr.mxu0 0.0
    %7876 = vmatpush1.msra.mxu0 %v7649
    %7877 = vmatprep.subr.mxu0 0.0
    %7878 = vmatpush1.msra.mxu0 %v7648
    %7879 = vmatprep.subr.mxu0 0.0
    %7880 = vmatpush1.msra.mxu0 %v7647
    %7881 = vmatprep.subr.mxu0 0.0
    %7882 = vmatpush1.msra.mxu0 %v7646
    %7883 = vmatprep.subr.mxu0 0.0
    %7884 = vmatpush1.msra.mxu0 %v7645
    %7885 = vmatprep.subr.mxu0 0.0
    %7886 = vmatpush1.msra.mxu0 %v7644
    %7887 = vmatprep.subr.mxu0 0.0
    %7888 = vmatpush1.msra.mxu0 %v7643
    %7889 = vmatprep.subr.mxu0 0.0
    %7890 = vmatpush1.msra.mxu0 %v7642
    %7891 = vmatprep.subr.mxu0 0.0
    %7892 = vmatpush1.msra.mxu0 %v7641
    %7893 = vmatprep.subr.mxu0 0.0
    %7894 = vmatpush1.msra.mxu0 %v7640
    %7895 = vmatprep.subr.mxu0 0.0
    %7896 = vmatpush1.msra.mxu0 %v7639
    %7897 = vmatprep.subr.mxu0 0.0
    %7898 = vmatpush2.msra.mxu0 0.0
    %7899 = vmatprep.subr.mxu0 0.0
    %7900 = vmatpush2.msra.mxu0 0.0
    %7901 = vmatprep.subr.mxu0 0.0
    %7902 = vmatpush2.msra.mxu0 0.0
    %7903 = vmatprep.subr.mxu0 0.0
    %7904 = vmatpush2.msra.mxu0 0.0
    %7905 = vmatprep.subr.mxu0 0.0
    %7906 = vmatpush2.msra.mxu0 0.0
    %7907 = vmatprep.subr.mxu0 0.0
    %7908 = vmatpush2.msra.mxu0 0.0
    %7909 = vmatprep.subr.mxu0 0.0
    %7910 = vmatpush2.msra.mxu0 0.0
    %7911 = vmatprep.subr.mxu0 0.0
    %7912 = vmatpush2.msra.mxu0 0.0
    %7913 = vmatprep.subr.mxu0 0.0
    %7914 = vmatpush2.msra.mxu0 0.0
    %7915 = vmatprep.subr.mxu0 0.0
    %7916 = vmatpush2.msra.mxu0 0.0
    %7917 = vmatprep.subr.mxu0 0.0
    %7918 = vmatpush2.msra.mxu0 0.0
    %7919 = vmatprep.subr.mxu0 0.0
    %7920 = vmatpush2.msra.mxu0 0.0
    %7921 = vmatprep.subr.mxu0 0.0
    %7922 = vmatpush2.msra.mxu0 0.0
    %7923 = vmatprep.subr.mxu0 0.0
    %7924 = vmatpush2.msra.mxu0 0.0
    %7925 = vmatprep.subr.mxu0 0.0
    %7926 = vmatpush2.msra.mxu0 0.0
    %7927 = vmatprep.subr.mxu0 0.0
    %7928 = vmatpush2.msra.mxu0 0.0
    %7929 = vmatprep.mubr.f32.mxu0 0.0
    %7930 = vmatmul.mubr.f32.gmra.mxu0 %v5947
    %v7931 = vpop.f32.mrf.mxu0
    %v7932 = vadd.f32 %v7862, %v7931
    %v7933 = vpop.f32.mrf.mxu0
    %7934 = vdwg.mxu0
    %v7935 = vadd.f32 %v7541, %v7932
    %s7936 = scalar_lea.vmem [#allocation7], 4480
    %v7937 = vld [vmem:[%s7936] sm:$0xff]
    %v7938 = vld [vmem:[%s7936 + $0x8] sm:$0xff]
    %v7939 = vld [vmem:[%s7936 + $0x10] sm:$0xff]
    %v7940 = vld [vmem:[%s7936 + $0x18] sm:$0xff]
    %v7941 = vld [vmem:[%s7936 + $0x20] sm:$0xff]
    %v7942 = vld [vmem:[%s7936 + $0x28] sm:$0xff]
    %v7943 = vld [vmem:[%s7936 + $0x30] sm:$0xff]
    %v7944 = vld [vmem:[%s7936 + $0x38] sm:$0xff]
    %v7945 = vld [vmem:[%s7936 + $0x40] sm:$0xff]
    %v7946 = vld [vmem:[%s7936 + $0x48] sm:$0xff]
    %v7947 = vld [vmem:[%s7936 + $0x50] sm:$0xff]
    %v7948 = vld [vmem:[%s7936 + $0x58] sm:$0xff]
    %v7949 = vld [vmem:[%s7936 + $0x60] sm:$0xff]
    %v7950 = vld [vmem:[%s7936 + $0x68] sm:$0xff]
    %v7951 = vld [vmem:[%s7936 + $0x70] sm:$0xff]
    %v7952 = vld [vmem:[%s7936 + $0x78] sm:$0xff]
    %v7953 = vld [vmem:[%s7936 + $0x80] sm:$0xff]
    %v7954 = vld [vmem:[%s7936 + $0x88] sm:$0xff]
    %v7955 = vld [vmem:[%s7936 + $0x90] sm:$0xff]
    %v7956 = vld [vmem:[%s7936 + $0x98] sm:$0xff]
    %v7957 = vld [vmem:[%s7936 + $0xa0] sm:$0xff]
    %v7958 = vld [vmem:[%s7936 + $0xa8] sm:$0xff]
    %v7959 = vld [vmem:[%s7936 + $0xb0] sm:$0xff]
    %v7960 = vld [vmem:[%s7936 + $0xb8] sm:$0xff]
    %v7961 = vld [vmem:[%s7936 + $0xc0] sm:$0xff]
    %v7962 = vld [vmem:[%s7936 + $0xc8] sm:$0xff]
    %v7963 = vld [vmem:[%s7936 + $0xd0] sm:$0xff]
    %v7964 = vld [vmem:[%s7936 + $0xd8] sm:$0xff]
    %v7965 = vld [vmem:[%s7936 + $0xe0] sm:$0xff]
    %v7966 = vld [vmem:[%s7936 + $0xe8] sm:$0xff]
    %v7967 = vld [vmem:[%s7936 + $0xf0] sm:$0xff]
    %v7968 = vld [vmem:[%s7936 + $0xf8] sm:$0xff]
    %v7969 = vld [vmem:[%s7936 + $0x100] sm:$0xff]
    %v7970 = vld [vmem:[%s7936 + $0x108] sm:$0xff]
    %v7971 = vld [vmem:[%s7936 + $0x110] sm:$0xff]
    %v7972 = vld [vmem:[%s7936 + $0x118] sm:$0xff]
    %v7973 = vld [vmem:[%s7936 + $0x120] sm:$0xff]
    %v7974 = vld [vmem:[%s7936 + $0x128] sm:$0xff]
    %v7975 = vld [vmem:[%s7936 + $0x130] sm:$0xff]
    %v7976 = vld [vmem:[%s7936 + $0x138] sm:$0xff]
    %v7977 = vld [vmem:[%s7936 + $0x140] sm:$0xff]
    %v7978 = vld [vmem:[%s7936 + $0x148] sm:$0xff]
    %v7979 = vld [vmem:[%s7936 + $0x150] sm:$0xff]
    %v7980 = vld [vmem:[%s7936 + $0x158] sm:$0xff]
    %v7981 = vld [vmem:[%s7936 + $0x160] sm:$0xff]
    %v7982 = vld [vmem:[%s7936 + $0x168] sm:$0xff]
    %v7983 = vld [vmem:[%s7936 + $0x170] sm:$0xff]
    %v7984 = vld [vmem:[%s7936 + $0x178] sm:$0xff]
    %v7985 = vld [vmem:[%s7936 + $0x180] sm:$0xff]
    %v7986 = vld [vmem:[%s7936 + $0x188] sm:$0xff]
    %v7987 = vld [vmem:[%s7936 + $0x190] sm:$0xff]
    %v7988 = vld [vmem:[%s7936 + $0x198] sm:$0xff]
    %v7989 = vld [vmem:[%s7936 + $0x1a0] sm:$0xff]
    %v7990 = vld [vmem:[%s7936 + $0x1a8] sm:$0xff]
    %v7991 = vld [vmem:[%s7936 + $0x1b0] sm:$0xff]
    %v7992 = vld [vmem:[%s7936 + $0x1b8] sm:$0xff]
    %v7993 = vld [vmem:[%s7936 + $0x1c0] sm:$0xff]
    %v7994 = vld [vmem:[%s7936 + $0x1c8] sm:$0xff]
    %v7995 = vld [vmem:[%s7936 + $0x1d0] sm:$0xff]
    %v7996 = vld [vmem:[%s7936 + $0x1d8] sm:$0xff]
    %v7997 = vld [vmem:[%s7936 + $0x1e0] sm:$0xff]
    %v7998 = vld [vmem:[%s7936 + $0x1e8] sm:$0xff]
    %v7999 = vld [vmem:[%s7936 + $0x1f0] sm:$0xff]
    %v8000 = vld [vmem:[%s7936 + $0x1f8] sm:$0xff]
    %v8001 = vld [vmem:[%s7936 + $0x200] sm:$0xff]
    %v8002 = vld [vmem:[%s7936 + $0x208] sm:$0xff]
    %v8003 = vld [vmem:[%s7936 + $0x210] sm:$0xff]
    %v8004 = vld [vmem:[%s7936 + $0x218] sm:$0xff]
    %v8005 = vld [vmem:[%s7936 + $0x220] sm:$0xff]
    %v8006 = vld [vmem:[%s7936 + $0x228] sm:$0xff]
    %v8007 = vld [vmem:[%s7936 + $0x230] sm:$0xff]
    %v8008 = vld [vmem:[%s7936 + $0x238] sm:$0xff]
    %v8009 = vld [vmem:[%s7936 + $0x240] sm:$0xff]
    %v8010 = vld [vmem:[%s7936 + $0x248] sm:$0xff]
    %v8011 = vld [vmem:[%s7936 + $0x250] sm:$0xff]
    %v8012 = vld [vmem:[%s7936 + $0x258] sm:$0xff]
    %v8013 = vld [vmem:[%s7936 + $0x260] sm:$0xff]
    %v8014 = vld [vmem:[%s7936 + $0x268] sm:$0xff]
    %v8015 = vld [vmem:[%s7936 + $0x270] sm:$0xff]
    %v8016 = vld [vmem:[%s7936 + $0x278] sm:$0xff]
    %v8017 = vld [vmem:[%s7936 + $0x280] sm:$0xff]
    %v8018 = vld [vmem:[%s7936 + $0x288] sm:$0xff]
    %v8019 = vld [vmem:[%s7936 + $0x290] sm:$0xff]
    %v8020 = vld [vmem:[%s7936 + $0x298] sm:$0xff]
    %v8021 = vld [vmem:[%s7936 + $0x2a0] sm:$0xff]
    %v8022 = vld [vmem:[%s7936 + $0x2a8] sm:$0xff]
    %v8023 = vld [vmem:[%s7936 + $0x2b0] sm:$0xff]
    %v8024 = vld [vmem:[%s7936 + $0x2b8] sm:$0xff]
    %v8025 = vld [vmem:[%s7936 + $0x2c0] sm:$0xff]
    %v8026 = vld [vmem:[%s7936 + $0x2c8] sm:$0xff]
    %v8027 = vld [vmem:[%s7936 + $0x2d0] sm:$0xff]
    %v8028 = vld [vmem:[%s7936 + $0x2d8] sm:$0xff]
    %v8029 = vld [vmem:[%s7936 + $0x2e0] sm:$0xff]
    %v8030 = vld [vmem:[%s7936 + $0x2e8] sm:$0xff]
    %v8031 = vld [vmem:[%s7936 + $0x2f0] sm:$0xff]
    %v8032 = vld [vmem:[%s7936 + $0x2f8] sm:$0xff]
    %v8033 = vld [vmem:[%s7936 + $0x300] sm:$0xff]
    %v8034 = vld [vmem:[%s7936 + $0x308] sm:$0xff]
    %v8035 = vld [vmem:[%s7936 + $0x310] sm:$0xff]
    %v8036 = vld [vmem:[%s7936 + $0x318] sm:$0xff]
    %v8037 = vld [vmem:[%s7936 + $0x320] sm:$0xff]
    %v8038 = vld [vmem:[%s7936 + $0x328] sm:$0xff]
    %v8039 = vld [vmem:[%s7936 + $0x330] sm:$0xff]
    %v8040 = vld [vmem:[%s7936 + $0x338] sm:$0xff]
    %v8041 = vld [vmem:[%s7936 + $0x340] sm:$0xff]
    %v8042 = vld [vmem:[%s7936 + $0x348] sm:$0xff]
    %v8043 = vld [vmem:[%s7936 + $0x350] sm:$0xff]
    %v8044 = vld [vmem:[%s7936 + $0x358] sm:$0xff]
    %v8045 = vld [vmem:[%s7936 + $0x360] sm:$0xff]
    %v8046 = vld [vmem:[%s7936 + $0x368] sm:$0xff]
    %v8047 = vld [vmem:[%s7936 + $0x370] sm:$0xff]
    %v8048 = vld [vmem:[%s7936 + $0x378] sm:$0xff]
    %8049 = vmatprep.subr.mxu0 0.0
    %8050 = vmatpush1.msra.mxu0 %v7952
    %8051 = vmatprep.subr.mxu0 0.0
    %8052 = vmatpush1.msra.mxu0 %v7951
    %8053 = vmatprep.subr.mxu0 0.0
    %8054 = vmatpush1.msra.mxu0 %v7950
    %8055 = vmatprep.subr.mxu0 0.0
    %8056 = vmatpush1.msra.mxu0 %v7949
    %8057 = vmatprep.subr.mxu0 0.0
    %8058 = vmatpush1.msra.mxu0 %v7948
    %8059 = vmatprep.subr.mxu0 0.0
    %8060 = vmatpush1.msra.mxu0 %v7947
    %8061 = vmatprep.subr.mxu0 0.0
    %8062 = vmatpush1.msra.mxu0 %v7946
    %8063 = vmatprep.subr.mxu0 0.0
    %8064 = vmatpush1.msra.mxu0 %v7945
    %8065 = vmatprep.subr.mxu0 0.0
    %8066 = vmatpush1.msra.mxu0 %v7944
    %8067 = vmatprep.subr.mxu0 0.0
    %8068 = vmatpush1.msra.mxu0 %v7943
    %8069 = vmatprep.subr.mxu0 0.0
    %8070 = vmatpush1.msra.mxu0 %v7942
    %8071 = vmatprep.subr.mxu0 0.0
    %8072 = vmatpush1.msra.mxu0 %v7941
    %8073 = vmatprep.subr.mxu0 0.0
    %8074 = vmatpush1.msra.mxu0 %v7940
    %8075 = vmatprep.subr.mxu0 0.0
    %8076 = vmatpush1.msra.mxu0 %v7939
    %8077 = vmatprep.subr.mxu0 0.0
    %8078 = vmatpush1.msra.mxu0 %v7938
    %8079 = vmatprep.subr.mxu0 0.0
    %8080 = vmatpush1.msra.mxu0 %v7937
    %8081 = vmatprep.subr.mxu0 0.0
    %8082 = vmatpush2.msra.mxu0 %v7968
    %8083 = vmatprep.subr.mxu0 0.0
    %8084 = vmatpush2.msra.mxu0 %v7967
    %8085 = vmatprep.subr.mxu0 0.0
    %8086 = vmatpush2.msra.mxu0 %v7966
    %8087 = vmatprep.subr.mxu0 0.0
    %8088 = vmatpush2.msra.mxu0 %v7965
    %8089 = vmatprep.subr.mxu0 0.0
    %8090 = vmatpush2.msra.mxu0 %v7964
    %8091 = vmatprep.subr.mxu0 0.0
    %8092 = vmatpush2.msra.mxu0 %v7963
    %8093 = vmatprep.subr.mxu0 0.0
    %8094 = vmatpush2.msra.mxu0 %v7962
    %8095 = vmatprep.subr.mxu0 0.0
    %8096 = vmatpush2.msra.mxu0 %v7961
    %8097 = vmatprep.subr.mxu0 0.0
    %8098 = vmatpush2.msra.mxu0 %v7960
    %8099 = vmatprep.subr.mxu0 0.0
    %8100 = vmatpush2.msra.mxu0 %v7959
    %8101 = vmatprep.subr.mxu0 0.0
    %8102 = vmatpush2.msra.mxu0 %v7958
    %8103 = vmatprep.subr.mxu0 0.0
    %8104 = vmatpush2.msra.mxu0 %v7957
    %8105 = vmatprep.subr.mxu0 0.0
    %8106 = vmatpush2.msra.mxu0 %v7956
    %8107 = vmatprep.subr.mxu0 0.0
    %8108 = vmatpush2.msra.mxu0 %v7955
    %8109 = vmatprep.subr.mxu0 0.0
    %8110 = vmatpush2.msra.mxu0 %v7954
    %8111 = vmatprep.subr.mxu0 0.0
    %8112 = vmatpush2.msra.mxu0 %v7953
    %8113 = vmatprep.mubr.f32.mxu0 %v5949
    %8114 = vmatmul.mubr.f32.gmra.mxu0 %v5948
    %v8115 = vpop.f32.mrf.mxu0
    %v8116 = vadd.f32 0.0, %v8115
    %v8117 = vpop.f32.mrf.mxu0
    %8118 = vdwg.mxu0
    %8119 = vmatprep.subr.mxu0 0.0
    %8120 = vmatpush1.msra.mxu0 %v7984
    %8121 = vmatprep.subr.mxu0 0.0
    %8122 = vmatpush1.msra.mxu0 %v7983
    %8123 = vmatprep.subr.mxu0 0.0
    %8124 = vmatpush1.msra.mxu0 %v7982
    %8125 = vmatprep.subr.mxu0 0.0
    %8126 = vmatpush1.msra.mxu0 %v7981
    %8127 = vmatprep.subr.mxu0 0.0
    %8128 = vmatpush1.msra.mxu0 %v7980
    %8129 = vmatprep.subr.mxu0 0.0
    %8130 = vmatpush1.msra.mxu0 %v7979
    %8131 = vmatprep.subr.mxu0 0.0
    %8132 = vmatpush1.msra.mxu0 %v7978
    %8133 = vmatprep.subr.mxu0 0.0
    %8134 = vmatpush1.msra.mxu0 %v7977
    %8135 = vmatprep.subr.mxu0 0.0
    %8136 = vmatpush1.msra.mxu0 %v7976
    %8137 = vmatprep.subr.mxu0 0.0
    %8138 = vmatpush1.msra.mxu0 %v7975
    %8139 = vmatprep.subr.mxu0 0.0
    %8140 = vmatpush1.msra.mxu0 %v7974
    %8141 = vmatprep.subr.mxu0 0.0
    %8142 = vmatpush1.msra.mxu0 %v7973
    %8143 = vmatprep.subr.mxu0 0.0
    %8144 = vmatpush1.msra.mxu0 %v7972
    %8145 = vmatprep.subr.mxu0 0.0
    %8146 = vmatpush1.msra.mxu0 %v7971
    %8147 = vmatprep.subr.mxu0 0.0
    %8148 = vmatpush1.msra.mxu0 %v7970
    %8149 = vmatprep.subr.mxu0 0.0
    %8150 = vmatpush1.msra.mxu0 %v7969
    %8151 = vmatprep.subr.mxu0 0.0
    %8152 = vmatpush2.msra.mxu0 %v8000
    %8153 = vmatprep.subr.mxu0 0.0
    %8154 = vmatpush2.msra.mxu0 %v7999
    %8155 = vmatprep.subr.mxu0 0.0
    %8156 = vmatpush2.msra.mxu0 %v7998
    %8157 = vmatprep.subr.mxu0 0.0
    %8158 = vmatpush2.msra.mxu0 %v7997
    %8159 = vmatprep.subr.mxu0 0.0
    %8160 = vmatpush2.msra.mxu0 %v7996
    %8161 = vmatprep.subr.mxu0 0.0
    %8162 = vmatpush2.msra.mxu0 %v7995
    %8163 = vmatprep.subr.mxu0 0.0
    %8164 = vmatpush2.msra.mxu0 %v7994
    %8165 = vmatprep.subr.mxu0 0.0
    %8166 = vmatpush2.msra.mxu0 %v7993
    %8167 = vmatprep.subr.mxu0 0.0
    %8168 = vmatpush2.msra.mxu0 %v7992
    %8169 = vmatprep.subr.mxu0 0.0
    %8170 = vmatpush2.msra.mxu0 %v7991
    %8171 = vmatprep.subr.mxu0 0.0
    %8172 = vmatpush2.msra.mxu0 %v7990
    %8173 = vmatprep.subr.mxu0 0.0
    %8174 = vmatpush2.msra.mxu0 %v7989
    %8175 = vmatprep.subr.mxu0 0.0
    %8176 = vmatpush2.msra.mxu0 %v7988
    %8177 = vmatprep.subr.mxu0 0.0
    %8178 = vmatpush2.msra.mxu0 %v7987
    %8179 = vmatprep.subr.mxu0 0.0
    %8180 = vmatpush2.msra.mxu0 %v7986
    %8181 = vmatprep.subr.mxu0 0.0
    %8182 = vmatpush2.msra.mxu0 %v7985
    %8183 = vmatprep.mubr.f32.mxu0 %v5951
    %8184 = vmatmul.mubr.f32.gmra.mxu0 %v5950
    %v8185 = vpop.f32.mrf.mxu0
    %v8186 = vadd.f32 %v8116, %v8185
    %v8187 = vpop.f32.mrf.mxu0
    %8188 = vdwg.mxu0
    %8189 = vmatprep.subr.mxu0 0.0
    %8190 = vmatpush1.msra.mxu0 %v8016
    %8191 = vmatprep.subr.mxu0 0.0
    %8192 = vmatpush1.msra.mxu0 %v8015
    %8193 = vmatprep.subr.mxu0 0.0
    %8194 = vmatpush1.msra.mxu0 %v8014
    %8195 = vmatprep.subr.mxu0 0.0
    %8196 = vmatpush1.msra.mxu0 %v8013
    %8197 = vmatprep.subr.mxu0 0.0
    %8198 = vmatpush1.msra.mxu0 %v8012
    %8199 = vmatprep.subr.mxu0 0.0
    %8200 = vmatpush1.msra.mxu0 %v8011
    %8201 = vmatprep.subr.mxu0 0.0
    %8202 = vmatpush1.msra.mxu0 %v8010
    %8203 = vmatprep.subr.mxu0 0.0
    %8204 = vmatpush1.msra.mxu0 %v8009
    %8205 = vmatprep.subr.mxu0 0.0
    %8206 = vmatpush1.msra.mxu0 %v8008
    %8207 = vmatprep.subr.mxu0 0.0
    %8208 = vmatpush1.msra.mxu0 %v8007
    %8209 = vmatprep.subr.mxu0 0.0
    %8210 = vmatpush1.msra.mxu0 %v8006
    %8211 = vmatprep.subr.mxu0 0.0
    %8212 = vmatpush1.msra.mxu0 %v8005
    %8213 = vmatprep.subr.mxu0 0.0
    %8214 = vmatpush1.msra.mxu0 %v8004
    %8215 = vmatprep.subr.mxu0 0.0
    %8216 = vmatpush1.msra.mxu0 %v8003
    %8217 = vmatprep.subr.mxu0 0.0
    %8218 = vmatpush1.msra.mxu0 %v8002
    %8219 = vmatprep.subr.mxu0 0.0
    %8220 = vmatpush1.msra.mxu0 %v8001
    %8221 = vmatprep.subr.mxu0 0.0
    %8222 = vmatpush2.msra.mxu0 %v8032
    %8223 = vmatprep.subr.mxu0 0.0
    %8224 = vmatpush2.msra.mxu0 %v8031
    %8225 = vmatprep.subr.mxu0 0.0
    %8226 = vmatpush2.msra.mxu0 %v8030
    %8227 = vmatprep.subr.mxu0 0.0
    %8228 = vmatpush2.msra.mxu0 %v8029
    %8229 = vmatprep.subr.mxu0 0.0
    %8230 = vmatpush2.msra.mxu0 %v8028
    %8231 = vmatprep.subr.mxu0 0.0
    %8232 = vmatpush2.msra.mxu0 %v8027
    %8233 = vmatprep.subr.mxu0 0.0
    %8234 = vmatpush2.msra.mxu0 %v8026
    %8235 = vmatprep.subr.mxu0 0.0
    %8236 = vmatpush2.msra.mxu0 %v8025
    %8237 = vmatprep.subr.mxu0 0.0
    %8238 = vmatpush2.msra.mxu0 %v8024
    %8239 = vmatprep.subr.mxu0 0.0
    %8240 = vmatpush2.msra.mxu0 %v8023
    %8241 = vmatprep.subr.mxu0 0.0
    %8242 = vmatpush2.msra.mxu0 %v8022
    %8243 = vmatprep.subr.mxu0 0.0
    %8244 = vmatpush2.msra.mxu0 %v8021
    %8245 = vmatprep.subr.mxu0 0.0
    %8246 = vmatpush2.msra.mxu0 %v8020
    %8247 = vmatprep.subr.mxu0 0.0
    %8248 = vmatpush2.msra.mxu0 %v8019
    %8249 = vmatprep.subr.mxu0 0.0
    %8250 = vmatpush2.msra.mxu0 %v8018
    %8251 = vmatprep.subr.mxu0 0.0
    %8252 = vmatpush2.msra.mxu0 %v8017
    %8253 = vmatprep.mubr.f32.mxu0 %v5953
    %8254 = vmatmul.mubr.f32.gmra.mxu0 %v5952
    %v8255 = vpop.f32.mrf.mxu0
    %v8256 = vadd.f32 %v8186, %v8255
    %v8257 = vpop.f32.mrf.mxu0
    %8258 = vdwg.mxu0
    %8259 = vmatprep.subr.mxu0 0.0
    %8260 = vmatpush1.msra.mxu0 %v8048
    %8261 = vmatprep.subr.mxu0 0.0
    %8262 = vmatpush1.msra.mxu0 %v8047
    %8263 = vmatprep.subr.mxu0 0.0
    %8264 = vmatpush1.msra.mxu0 %v8046
    %8265 = vmatprep.subr.mxu0 0.0
    %8266 = vmatpush1.msra.mxu0 %v8045
    %8267 = vmatprep.subr.mxu0 0.0
    %8268 = vmatpush1.msra.mxu0 %v8044
    %8269 = vmatprep.subr.mxu0 0.0
    %8270 = vmatpush1.msra.mxu0 %v8043
    %8271 = vmatprep.subr.mxu0 0.0
    %8272 = vmatpush1.msra.mxu0 %v8042
    %8273 = vmatprep.subr.mxu0 0.0
    %8274 = vmatpush1.msra.mxu0 %v8041
    %8275 = vmatprep.subr.mxu0 0.0
    %8276 = vmatpush1.msra.mxu0 %v8040
    %8277 = vmatprep.subr.mxu0 0.0
    %8278 = vmatpush1.msra.mxu0 %v8039
    %8279 = vmatprep.subr.mxu0 0.0
    %8280 = vmatpush1.msra.mxu0 %v8038
    %8281 = vmatprep.subr.mxu0 0.0
    %8282 = vmatpush1.msra.mxu0 %v8037
    %8283 = vmatprep.subr.mxu0 0.0
    %8284 = vmatpush1.msra.mxu0 %v8036
    %8285 = vmatprep.subr.mxu0 0.0
    %8286 = vmatpush1.msra.mxu0 %v8035
    %8287 = vmatprep.subr.mxu0 0.0
    %8288 = vmatpush1.msra.mxu0 %v8034
    %8289 = vmatprep.subr.mxu0 0.0
    %8290 = vmatpush1.msra.mxu0 %v8033
    %8291 = vmatprep.subr.mxu0 0.0
    %8292 = vmatpush2.msra.mxu0 0.0
    %8293 = vmatprep.subr.mxu0 0.0
    %8294 = vmatpush2.msra.mxu0 0.0
    %8295 = vmatprep.subr.mxu0 0.0
    %8296 = vmatpush2.msra.mxu0 0.0
    %8297 = vmatprep.subr.mxu0 0.0
    %8298 = vmatpush2.msra.mxu0 0.0
    %8299 = vmatprep.subr.mxu0 0.0
    %8300 = vmatpush2.msra.mxu0 0.0
    %8301 = vmatprep.subr.mxu0 0.0
    %8302 = vmatpush2.msra.mxu0 0.0
    %8303 = vmatprep.subr.mxu0 0.0
    %8304 = vmatpush2.msra.mxu0 0.0
    %8305 = vmatprep.subr.mxu0 0.0
    %8306 = vmatpush2.msra.mxu0 0.0
    %8307 = vmatprep.subr.mxu0 0.0
    %8308 = vmatpush2.msra.mxu0 0.0
    %8309 = vmatprep.subr.mxu0 0.0
    %8310 = vmatpush2.msra.mxu0 0.0
    %8311 = vmatprep.subr.mxu0 0.0
    %8312 = vmatpush2.msra.mxu0 0.0
    %8313 = vmatprep.subr.mxu0 0.0
    %8314 = vmatpush2.msra.mxu0 0.0
    %8315 = vmatprep.subr.mxu0 0.0
    %8316 = vmatpush2.msra.mxu0 0.0
    %8317 = vmatprep.subr.mxu0 0.0
    %8318 = vmatpush2.msra.mxu0 0.0
    %8319 = vmatprep.subr.mxu0 0.0
    %8320 = vmatpush2.msra.mxu0 0.0
    %8321 = vmatprep.subr.mxu0 0.0
    %8322 = vmatpush2.msra.mxu0 0.0
    %8323 = vmatprep.mubr.f32.mxu0 0.0
    %8324 = vmatmul.mubr.f32.gmra.mxu0 %v5954
    %v8325 = vpop.f32.mrf.mxu0
    %v8326 = vadd.f32 %v8256, %v8325
    %v8327 = vpop.f32.mrf.mxu0
    %8328 = vdwg.mxu0
    %v8329 = vadd.f32 %v7935, %v8326
    %s8330 = scalar_lea.vmem [#allocation7], 5376
    %v8331 = vld [vmem:[%s8330] sm:$0xff]
    %v8332 = vld [vmem:[%s8330 + $0x8] sm:$0xff]
    %v8333 = vld [vmem:[%s8330 + $0x10] sm:$0xff]
    %v8334 = vld [vmem:[%s8330 + $0x18] sm:$0xff]
    %v8335 = vld [vmem:[%s8330 + $0x20] sm:$0xff]
    %v8336 = vld [vmem:[%s8330 + $0x28] sm:$0xff]
    %v8337 = vld [vmem:[%s8330 + $0x30] sm:$0xff]
    %v8338 = vld [vmem:[%s8330 + $0x38] sm:$0xff]
    %v8339 = vld [vmem:[%s8330 + $0x40] sm:$0xff]
    %v8340 = vld [vmem:[%s8330 + $0x48] sm:$0xff]
    %v8341 = vld [vmem:[%s8330 + $0x50] sm:$0xff]
    %v8342 = vld [vmem:[%s8330 + $0x58] sm:$0xff]
    %v8343 = vld [vmem:[%s8330 + $0x60] sm:$0xff]
    %v8344 = vld [vmem:[%s8330 + $0x68] sm:$0xff]
    %v8345 = vld [vmem:[%s8330 + $0x70] sm:$0xff]
    %v8346 = vld [vmem:[%s8330 + $0x78] sm:$0xff]
    %v8347 = vld [vmem:[%s8330 + $0x80] sm:$0xff]
    %v8348 = vld [vmem:[%s8330 + $0x88] sm:$0xff]
    %v8349 = vld [vmem:[%s8330 + $0x90] sm:$0xff]
    %v8350 = vld [vmem:[%s8330 + $0x98] sm:$0xff]
    %v8351 = vld [vmem:[%s8330 + $0xa0] sm:$0xff]
    %v8352 = vld [vmem:[%s8330 + $0xa8] sm:$0xff]
    %v8353 = vld [vmem:[%s8330 + $0xb0] sm:$0xff]
    %v8354 = vld [vmem:[%s8330 + $0xb8] sm:$0xff]
    %v8355 = vld [vmem:[%s8330 + $0xc0] sm:$0xff]
    %v8356 = vld [vmem:[%s8330 + $0xc8] sm:$0xff]
    %v8357 = vld [vmem:[%s8330 + $0xd0] sm:$0xff]
    %v8358 = vld [vmem:[%s8330 + $0xd8] sm:$0xff]
    %v8359 = vld [vmem:[%s8330 + $0xe0] sm:$0xff]
    %v8360 = vld [vmem:[%s8330 + $0xe8] sm:$0xff]
    %v8361 = vld [vmem:[%s8330 + $0xf0] sm:$0xff]
    %v8362 = vld [vmem:[%s8330 + $0xf8] sm:$0xff]
    %v8363 = vld [vmem:[%s8330 + $0x100] sm:$0xff]
    %v8364 = vld [vmem:[%s8330 + $0x108] sm:$0xff]
    %v8365 = vld [vmem:[%s8330 + $0x110] sm:$0xff]
    %v8366 = vld [vmem:[%s8330 + $0x118] sm:$0xff]
    %v8367 = vld [vmem:[%s8330 + $0x120] sm:$0xff]
    %v8368 = vld [vmem:[%s8330 + $0x128] sm:$0xff]
    %v8369 = vld [vmem:[%s8330 + $0x130] sm:$0xff]
    %v8370 = vld [vmem:[%s8330 + $0x138] sm:$0xff]
    %v8371 = vld [vmem:[%s8330 + $0x140] sm:$0xff]
    %v8372 = vld [vmem:[%s8330 + $0x148] sm:$0xff]
    %v8373 = vld [vmem:[%s8330 + $0x150] sm:$0xff]
    %v8374 = vld [vmem:[%s8330 + $0x158] sm:$0xff]
    %v8375 = vld [vmem:[%s8330 + $0x160] sm:$0xff]
    %v8376 = vld [vmem:[%s8330 + $0x168] sm:$0xff]
    %v8377 = vld [vmem:[%s8330 + $0x170] sm:$0xff]
    %v8378 = vld [vmem:[%s8330 + $0x178] sm:$0xff]
    %v8379 = vld [vmem:[%s8330 + $0x180] sm:$0xff]
    %v8380 = vld [vmem:[%s8330 + $0x188] sm:$0xff]
    %v8381 = vld [vmem:[%s8330 + $0x190] sm:$0xff]
    %v8382 = vld [vmem:[%s8330 + $0x198] sm:$0xff]
    %v8383 = vld [vmem:[%s8330 + $0x1a0] sm:$0xff]
    %v8384 = vld [vmem:[%s8330 + $0x1a8] sm:$0xff]
    %v8385 = vld [vmem:[%s8330 + $0x1b0] sm:$0xff]
    %v8386 = vld [vmem:[%s8330 + $0x1b8] sm:$0xff]
    %v8387 = vld [vmem:[%s8330 + $0x1c0] sm:$0xff]
    %v8388 = vld [vmem:[%s8330 + $0x1c8] sm:$0xff]
    %v8389 = vld [vmem:[%s8330 + $0x1d0] sm:$0xff]
    %v8390 = vld [vmem:[%s8330 + $0x1d8] sm:$0xff]
    %v8391 = vld [vmem:[%s8330 + $0x1e0] sm:$0xff]
    %v8392 = vld [vmem:[%s8330 + $0x1e8] sm:$0xff]
    %v8393 = vld [vmem:[%s8330 + $0x1f0] sm:$0xff]
    %v8394 = vld [vmem:[%s8330 + $0x1f8] sm:$0xff]
    %v8395 = vld [vmem:[%s8330 + $0x200] sm:$0xff]
    %v8396 = vld [vmem:[%s8330 + $0x208] sm:$0xff]
    %v8397 = vld [vmem:[%s8330 + $0x210] sm:$0xff]
    %v8398 = vld [vmem:[%s8330 + $0x218] sm:$0xff]
    %v8399 = vld [vmem:[%s8330 + $0x220] sm:$0xff]
    %v8400 = vld [vmem:[%s8330 + $0x228] sm:$0xff]
    %v8401 = vld [vmem:[%s8330 + $0x230] sm:$0xff]
    %v8402 = vld [vmem:[%s8330 + $0x238] sm:$0xff]
    %v8403 = vld [vmem:[%s8330 + $0x240] sm:$0xff]
    %v8404 = vld [vmem:[%s8330 + $0x248] sm:$0xff]
    %v8405 = vld [vmem:[%s8330 + $0x250] sm:$0xff]
    %v8406 = vld [vmem:[%s8330 + $0x258] sm:$0xff]
    %v8407 = vld [vmem:[%s8330 + $0x260] sm:$0xff]
    %v8408 = vld [vmem:[%s8330 + $0x268] sm:$0xff]
    %v8409 = vld [vmem:[%s8330 + $0x270] sm:$0xff]
    %v8410 = vld [vmem:[%s8330 + $0x278] sm:$0xff]
    %v8411 = vld [vmem:[%s8330 + $0x280] sm:$0xff]
    %v8412 = vld [vmem:[%s8330 + $0x288] sm:$0xff]
    %v8413 = vld [vmem:[%s8330 + $0x290] sm:$0xff]
    %v8414 = vld [vmem:[%s8330 + $0x298] sm:$0xff]
    %v8415 = vld [vmem:[%s8330 + $0x2a0] sm:$0xff]
    %v8416 = vld [vmem:[%s8330 + $0x2a8] sm:$0xff]
    %v8417 = vld [vmem:[%s8330 + $0x2b0] sm:$0xff]
    %v8418 = vld [vmem:[%s8330 + $0x2b8] sm:$0xff]
    %v8419 = vld [vmem:[%s8330 + $0x2c0] sm:$0xff]
    %v8420 = vld [vmem:[%s8330 + $0x2c8] sm:$0xff]
    %v8421 = vld [vmem:[%s8330 + $0x2d0] sm:$0xff]
    %v8422 = vld [vmem:[%s8330 + $0x2d8] sm:$0xff]
    %v8423 = vld [vmem:[%s8330 + $0x2e0] sm:$0xff]
    %v8424 = vld [vmem:[%s8330 + $0x2e8] sm:$0xff]
    %v8425 = vld [vmem:[%s8330 + $0x2f0] sm:$0xff]
    %v8426 = vld [vmem:[%s8330 + $0x2f8] sm:$0xff]
    %v8427 = vld [vmem:[%s8330 + $0x300] sm:$0xff]
    %v8428 = vld [vmem:[%s8330 + $0x308] sm:$0xff]
    %v8429 = vld [vmem:[%s8330 + $0x310] sm:$0xff]
    %v8430 = vld [vmem:[%s8330 + $0x318] sm:$0xff]
    %v8431 = vld [vmem:[%s8330 + $0x320] sm:$0xff]
    %v8432 = vld [vmem:[%s8330 + $0x328] sm:$0xff]
    %v8433 = vld [vmem:[%s8330 + $0x330] sm:$0xff]
    %v8434 = vld [vmem:[%s8330 + $0x338] sm:$0xff]
    %v8435 = vld [vmem:[%s8330 + $0x340] sm:$0xff]
    %v8436 = vld [vmem:[%s8330 + $0x348] sm:$0xff]
    %v8437 = vld [vmem:[%s8330 + $0x350] sm:$0xff]
    %v8438 = vld [vmem:[%s8330 + $0x358] sm:$0xff]
    %v8439 = vld [vmem:[%s8330 + $0x360] sm:$0xff]
    %v8440 = vld [vmem:[%s8330 + $0x368] sm:$0xff]
    %v8441 = vld [vmem:[%s8330 + $0x370] sm:$0xff]
    %v8442 = vld [vmem:[%s8330 + $0x378] sm:$0xff]
    %8443 = vmatprep.subr.mxu0 0.0
    %8444 = vmatpush1.msra.mxu0 %v8346
    %8445 = vmatprep.subr.mxu0 0.0
    %8446 = vmatpush1.msra.mxu0 %v8345
    %8447 = vmatprep.subr.mxu0 0.0
    %8448 = vmatpush1.msra.mxu0 %v8344
    %8449 = vmatprep.subr.mxu0 0.0
    %8450 = vmatpush1.msra.mxu0 %v8343
    %8451 = vmatprep.subr.mxu0 0.0
    %8452 = vmatpush1.msra.mxu0 %v8342
    %8453 = vmatprep.subr.mxu0 0.0
    %8454 = vmatpush1.msra.mxu0 %v8341
    %8455 = vmatprep.subr.mxu0 0.0
    %8456 = vmatpush1.msra.mxu0 %v8340
    %8457 = vmatprep.subr.mxu0 0.0
    %8458 = vmatpush1.msra.mxu0 %v8339
    %8459 = vmatprep.subr.mxu0 0.0
    %8460 = vmatpush1.msra.mxu0 %v8338
    %8461 = vmatprep.subr.mxu0 0.0
    %8462 = vmatpush1.msra.mxu0 %v8337
    %8463 = vmatprep.subr.mxu0 0.0
    %8464 = vmatpush1.msra.mxu0 %v8336
    %8465 = vmatprep.subr.mxu0 0.0
    %8466 = vmatpush1.msra.mxu0 %v8335
    %8467 = vmatprep.subr.mxu0 0.0
    %8468 = vmatpush1.msra.mxu0 %v8334
    %8469 = vmatprep.subr.mxu0 0.0
    %8470 = vmatpush1.msra.mxu0 %v8333
    %8471 = vmatprep.subr.mxu0 0.0
    %8472 = vmatpush1.msra.mxu0 %v8332
    %8473 = vmatprep.subr.mxu0 0.0
    %8474 = vmatpush1.msra.mxu0 %v8331
    %8475 = vmatprep.subr.mxu0 0.0
    %8476 = vmatpush2.msra.mxu0 %v8362
    %8477 = vmatprep.subr.mxu0 0.0
    %8478 = vmatpush2.msra.mxu0 %v8361
    %8479 = vmatprep.subr.mxu0 0.0
    %8480 = vmatpush2.msra.mxu0 %v8360
    %8481 = vmatprep.subr.mxu0 0.0
    %8482 = vmatpush2.msra.mxu0 %v8359
    %8483 = vmatprep.subr.mxu0 0.0
    %8484 = vmatpush2.msra.mxu0 %v8358
    %8485 = vmatprep.subr.mxu0 0.0
    %8486 = vmatpush2.msra.mxu0 %v8357
    %8487 = vmatprep.subr.mxu0 0.0
    %8488 = vmatpush2.msra.mxu0 %v8356
    %8489 = vmatprep.subr.mxu0 0.0
    %8490 = vmatpush2.msra.mxu0 %v8355
    %8491 = vmatprep.subr.mxu0 0.0
    %8492 = vmatpush2.msra.mxu0 %v8354
    %8493 = vmatprep.subr.mxu0 0.0
    %8494 = vmatpush2.msra.mxu0 %v8353
    %8495 = vmatprep.subr.mxu0 0.0
    %8496 = vmatpush2.msra.mxu0 %v8352
    %8497 = vmatprep.subr.mxu0 0.0
    %8498 = vmatpush2.msra.mxu0 %v8351
    %8499 = vmatprep.subr.mxu0 0.0
    %8500 = vmatpush2.msra.mxu0 %v8350
    %8501 = vmatprep.subr.mxu0 0.0
    %8502 = vmatpush2.msra.mxu0 %v8349
    %8503 = vmatprep.subr.mxu0 0.0
    %8504 = vmatpush2.msra.mxu0 %v8348
    %8505 = vmatprep.subr.mxu0 0.0
    %8506 = vmatpush2.msra.mxu0 %v8347
    %8507 = vmatprep.mubr.f32.mxu0 %v5956
    %8508 = vmatmul.mubr.f32.gmra.mxu0 %v5955
    %v8509 = vpop.f32.mrf.mxu0
    %v8510 = vadd.f32 0.0, %v8509
    %v8511 = vpop.f32.mrf.mxu0
    %8512 = vdwg.mxu0
    %8513 = vmatprep.subr.mxu0 0.0
    %8514 = vmatpush1.msra.mxu0 %v8378
    %8515 = vmatprep.subr.mxu0 0.0
    %8516 = vmatpush1.msra.mxu0 %v8377
    %8517 = vmatprep.subr.mxu0 0.0
    %8518 = vmatpush1.msra.mxu0 %v8376
    %8519 = vmatprep.subr.mxu0 0.0
    %8520 = vmatpush1.msra.mxu0 %v8375
    %8521 = vmatprep.subr.mxu0 0.0
    %8522 = vmatpush1.msra.mxu0 %v8374
    %8523 = vmatprep.subr.mxu0 0.0
    %8524 = vmatpush1.msra.mxu0 %v8373
    %8525 = vmatprep.subr.mxu0 0.0
    %8526 = vmatpush1.msra.mxu0 %v8372
    %8527 = vmatprep.subr.mxu0 0.0
    %8528 = vmatpush1.msra.mxu0 %v8371
    %8529 = vmatprep.subr.mxu0 0.0
    %8530 = vmatpush1.msra.mxu0 %v8370
    %8531 = vmatprep.subr.mxu0 0.0
    %8532 = vmatpush1.msra.mxu0 %v8369
    %8533 = vmatprep.subr.mxu0 0.0
    %8534 = vmatpush1.msra.mxu0 %v8368
    %8535 = vmatprep.subr.mxu0 0.0
    %8536 = vmatpush1.msra.mxu0 %v8367
    %8537 = vmatprep.subr.mxu0 0.0
    %8538 = vmatpush1.msra.mxu0 %v8366
    %8539 = vmatprep.subr.mxu0 0.0
    %8540 = vmatpush1.msra.mxu0 %v8365
    %8541 = vmatprep.subr.mxu0 0.0
    %8542 = vmatpush1.msra.mxu0 %v8364
    %8543 = vmatprep.subr.mxu0 0.0
    %8544 = vmatpush1.msra.mxu0 %v8363
    %8545 = vmatprep.subr.mxu0 0.0
    %8546 = vmatpush2.msra.mxu0 %v8394
    %8547 = vmatprep.subr.mxu0 0.0
    %8548 = vmatpush2.msra.mxu0 %v8393
    %8549 = vmatprep.subr.mxu0 0.0
    %8550 = vmatpush2.msra.mxu0 %v8392
    %8551 = vmatprep.subr.mxu0 0.0
    %8552 = vmatpush2.msra.mxu0 %v8391
    %8553 = vmatprep.subr.mxu0 0.0
    %8554 = vmatpush2.msra.mxu0 %v8390
    %8555 = vmatprep.subr.mxu0 0.0
    %8556 = vmatpush2.msra.mxu0 %v8389
    %8557 = vmatprep.subr.mxu0 0.0
    %8558 = vmatpush2.msra.mxu0 %v8388
    %8559 = vmatprep.subr.mxu0 0.0
    %8560 = vmatpush2.msra.mxu0 %v8387
    %8561 = vmatprep.subr.mxu0 0.0
    %8562 = vmatpush2.msra.mxu0 %v8386
    %8563 = vmatprep.subr.mxu0 0.0
    %8564 = vmatpush2.msra.mxu0 %v8385
    %8565 = vmatprep.subr.mxu0 0.0
    %8566 = vmatpush2.msra.mxu0 %v8384
    %8567 = vmatprep.subr.mxu0 0.0
    %8568 = vmatpush2.msra.mxu0 %v8383
    %8569 = vmatprep.subr.mxu0 0.0
    %8570 = vmatpush2.msra.mxu0 %v8382
    %8571 = vmatprep.subr.mxu0 0.0
    %8572 = vmatpush2.msra.mxu0 %v8381
    %8573 = vmatprep.subr.mxu0 0.0
    %8574 = vmatpush2.msra.mxu0 %v8380
    %8575 = vmatprep.subr.mxu0 0.0
    %8576 = vmatpush2.msra.mxu0 %v8379
    %8577 = vmatprep.mubr.f32.mxu0 %v5958
    %8578 = vmatmul.mubr.f32.gmra.mxu0 %v5957
    %v8579 = vpop.f32.mrf.mxu0
    %v8580 = vadd.f32 %v8510, %v8579
    %v8581 = vpop.f32.mrf.mxu0
    %8582 = vdwg.mxu0
    %8583 = vmatprep.subr.mxu0 0.0
    %8584 = vmatpush1.msra.mxu0 %v8410
    %8585 = vmatprep.subr.mxu0 0.0
    %8586 = vmatpush1.msra.mxu0 %v8409
    %8587 = vmatprep.subr.mxu0 0.0
    %8588 = vmatpush1.msra.mxu0 %v8408
    %8589 = vmatprep.subr.mxu0 0.0
    %8590 = vmatpush1.msra.mxu0 %v8407
    %8591 = vmatprep.subr.mxu0 0.0
    %8592 = vmatpush1.msra.mxu0 %v8406
    %8593 = vmatprep.subr.mxu0 0.0
    %8594 = vmatpush1.msra.mxu0 %v8405
    %8595 = vmatprep.subr.mxu0 0.0
    %8596 = vmatpush1.msra.mxu0 %v8404
    %8597 = vmatprep.subr.mxu0 0.0
    %8598 = vmatpush1.msra.mxu0 %v8403
    %8599 = vmatprep.subr.mxu0 0.0
    %8600 = vmatpush1.msra.mxu0 %v8402
    %8601 = vmatprep.subr.mxu0 0.0
    %8602 = vmatpush1.msra.mxu0 %v8401
    %8603 = vmatprep.subr.mxu0 0.0
    %8604 = vmatpush1.msra.mxu0 %v8400
    %8605 = vmatprep.subr.mxu0 0.0
    %8606 = vmatpush1.msra.mxu0 %v8399
    %8607 = vmatprep.subr.mxu0 0.0
    %8608 = vmatpush1.msra.mxu0 %v8398
    %8609 = vmatprep.subr.mxu0 0.0
    %8610 = vmatpush1.msra.mxu0 %v8397
    %8611 = vmatprep.subr.mxu0 0.0
    %8612 = vmatpush1.msra.mxu0 %v8396
    %8613 = vmatprep.subr.mxu0 0.0
    %8614 = vmatpush1.msra.mxu0 %v8395
    %8615 = vmatprep.subr.mxu0 0.0
    %8616 = vmatpush2.msra.mxu0 %v8426
    %8617 = vmatprep.subr.mxu0 0.0
    %8618 = vmatpush2.msra.mxu0 %v8425
    %8619 = vmatprep.subr.mxu0 0.0
    %8620 = vmatpush2.msra.mxu0 %v8424
    %8621 = vmatprep.subr.mxu0 0.0
    %8622 = vmatpush2.msra.mxu0 %v8423
    %8623 = vmatprep.subr.mxu0 0.0
    %8624 = vmatpush2.msra.mxu0 %v8422
    %8625 = vmatprep.subr.mxu0 0.0
    %8626 = vmatpush2.msra.mxu0 %v8421
    %8627 = vmatprep.subr.mxu0 0.0
    %8628 = vmatpush2.msra.mxu0 %v8420
    %8629 = vmatprep.subr.mxu0 0.0
    %8630 = vmatpush2.msra.mxu0 %v8419
    %8631 = vmatprep.subr.mxu0 0.0
    %8632 = vmatpush2.msra.mxu0 %v8418
    %8633 = vmatprep.subr.mxu0 0.0
    %8634 = vmatpush2.msra.mxu0 %v8417
    %8635 = vmatprep.subr.mxu0 0.0
    %8636 = vmatpush2.msra.mxu0 %v8416
    %8637 = vmatprep.subr.mxu0 0.0
    %8638 = vmatpush2.msra.mxu0 %v8415
    %8639 = vmatprep.subr.mxu0 0.0
    %8640 = vmatpush2.msra.mxu0 %v8414
    %8641 = vmatprep.subr.mxu0 0.0
    %8642 = vmatpush2.msra.mxu0 %v8413
    %8643 = vmatprep.subr.mxu0 0.0
    %8644 = vmatpush2.msra.mxu0 %v8412
    %8645 = vmatprep.subr.mxu0 0.0
    %8646 = vmatpush2.msra.mxu0 %v8411
    %8647 = vmatprep.mubr.f32.mxu0 %v5960
    %8648 = vmatmul.mubr.f32.gmra.mxu0 %v5959
    %v8649 = vpop.f32.mrf.mxu0
    %v8650 = vadd.f32 %v8580, %v8649
    %v8651 = vpop.f32.mrf.mxu0
    %8652 = vdwg.mxu0
    %8653 = vmatprep.subr.mxu0 0.0
    %8654 = vmatpush1.msra.mxu0 %v8442
    %8655 = vmatprep.subr.mxu0 0.0
    %8656 = vmatpush1.msra.mxu0 %v8441
    %8657 = vmatprep.subr.mxu0 0.0
    %8658 = vmatpush1.msra.mxu0 %v8440
    %8659 = vmatprep.subr.mxu0 0.0
    %8660 = vmatpush1.msra.mxu0 %v8439
    %8661 = vmatprep.subr.mxu0 0.0
    %8662 = vmatpush1.msra.mxu0 %v8438
    %8663 = vmatprep.subr.mxu0 0.0
    %8664 = vmatpush1.msra.mxu0 %v8437
    %8665 = vmatprep.subr.mxu0 0.0
    %8666 = vmatpush1.msra.mxu0 %v8436
    %8667 = vmatprep.subr.mxu0 0.0
    %8668 = vmatpush1.msra.mxu0 %v8435
    %8669 = vmatprep.subr.mxu0 0.0
    %8670 = vmatpush1.msra.mxu0 %v8434
    %8671 = vmatprep.subr.mxu0 0.0
    %8672 = vmatpush1.msra.mxu0 %v8433
    %8673 = vmatprep.subr.mxu0 0.0
    %8674 = vmatpush1.msra.mxu0 %v8432
    %8675 = vmatprep.subr.mxu0 0.0
    %8676 = vmatpush1.msra.mxu0 %v8431
    %8677 = vmatprep.subr.mxu0 0.0
    %8678 = vmatpush1.msra.mxu0 %v8430
    %8679 = vmatprep.subr.mxu0 0.0
    %8680 = vmatpush1.msra.mxu0 %v8429
    %8681 = vmatprep.subr.mxu0 0.0
    %8682 = vmatpush1.msra.mxu0 %v8428
    %8683 = vmatprep.subr.mxu0 0.0
    %8684 = vmatpush1.msra.mxu0 %v8427
    %8685 = vmatprep.subr.mxu0 0.0
    %8686 = vmatpush2.msra.mxu0 0.0
    %8687 = vmatprep.subr.mxu0 0.0
    %8688 = vmatpush2.msra.mxu0 0.0
    %8689 = vmatprep.subr.mxu0 0.0
    %8690 = vmatpush2.msra.mxu0 0.0
    %8691 = vmatprep.subr.mxu0 0.0
    %8692 = vmatpush2.msra.mxu0 0.0
    %8693 = vmatprep.subr.mxu0 0.0
    %8694 = vmatpush2.msra.mxu0 0.0
    %8695 = vmatprep.subr.mxu0 0.0
    %8696 = vmatpush2.msra.mxu0 0.0
    %8697 = vmatprep.subr.mxu0 0.0
    %8698 = vmatpush2.msra.mxu0 0.0
    %8699 = vmatprep.subr.mxu0 0.0
    %8700 = vmatpush2.msra.mxu0 0.0
    %8701 = vmatprep.subr.mxu0 0.0
    %8702 = vmatpush2.msra.mxu0 0.0
    %8703 = vmatprep.subr.mxu0 0.0
    %8704 = vmatpush2.msra.mxu0 0.0
    %8705 = vmatprep.subr.mxu0 0.0
    %8706 = vmatpush2.msra.mxu0 0.0
    %8707 = vmatprep.subr.mxu0 0.0
    %8708 = vmatpush2.msra.mxu0 0.0
    %8709 = vmatprep.subr.mxu0 0.0
    %8710 = vmatpush2.msra.mxu0 0.0
    %8711 = vmatprep.subr.mxu0 0.0
    %8712 = vmatpush2.msra.mxu0 0.0
    %8713 = vmatprep.subr.mxu0 0.0
    %8714 = vmatpush2.msra.mxu0 0.0
    %8715 = vmatprep.subr.mxu0 0.0
    %8716 = vmatpush2.msra.mxu0 0.0
    %8717 = vmatprep.mubr.f32.mxu0 0.0
    %8718 = vmatmul.mubr.f32.gmra.mxu0 %v5961
    %v8719 = vpop.f32.mrf.mxu0
    %v8720 = vadd.f32 %v8650, %v8719
    %v8721 = vpop.f32.mrf.mxu0
    %8722 = vdwg.mxu0
    %v8723 = vadd.f32 %v8329, %v8720
    %s8724 = scalar_lea.vmem [#allocation7], 6272
    %v8725 = vld [vmem:[%s8724] sm:$0xff]
    %v8726 = vld [vmem:[%s8724 + $0x8] sm:$0xff]
    %v8727 = vld [vmem:[%s8724 + $0x10] sm:$0xff]
    %v8728 = vld [vmem:[%s8724 + $0x18] sm:$0xff]
    %v8729 = vld [vmem:[%s8724 + $0x20] sm:$0xff]
    %v8730 = vld [vmem:[%s8724 + $0x28] sm:$0xff]
    %v8731 = vld [vmem:[%s8724 + $0x30] sm:$0xff]
    %v8732 = vld [vmem:[%s8724 + $0x38] sm:$0xff]
    %v8733 = vld [vmem:[%s8724 + $0x40] sm:$0xff]
    %v8734 = vld [vmem:[%s8724 + $0x48] sm:$0xff]
    %v8735 = vld [vmem:[%s8724 + $0x50] sm:$0xff]
    %v8736 = vld [vmem:[%s8724 + $0x58] sm:$0xff]
    %v8737 = vld [vmem:[%s8724 + $0x60] sm:$0xff]
    %v8738 = vld [vmem:[%s8724 + $0x68] sm:$0xff]
    %v8739 = vld [vmem:[%s8724 + $0x70] sm:$0xff]
    %v8740 = vld [vmem:[%s8724 + $0x78] sm:$0xff]
    %v8741 = vld [vmem:[%s8724 + $0x80] sm:$0xff]
    %v8742 = vld [vmem:[%s8724 + $0x88] sm:$0xff]
    %v8743 = vld [vmem:[%s8724 + $0x90] sm:$0xff]
    %v8744 = vld [vmem:[%s8724 + $0x98] sm:$0xff]
    %v8745 = vld [vmem:[%s8724 + $0xa0] sm:$0xff]
    %v8746 = vld [vmem:[%s8724 + $0xa8] sm:$0xff]
    %v8747 = vld [vmem:[%s8724 + $0xb0] sm:$0xff]
    %v8748 = vld [vmem:[%s8724 + $0xb8] sm:$0xff]
    %v8749 = vld [vmem:[%s8724 + $0xc0] sm:$0xff]
    %v8750 = vld [vmem:[%s8724 + $0xc8] sm:$0xff]
    %v8751 = vld [vmem:[%s8724 + $0xd0] sm:$0xff]
    %v8752 = vld [vmem:[%s8724 + $0xd8] sm:$0xff]
    %v8753 = vld [vmem:[%s8724 + $0xe0] sm:$0xff]
    %v8754 = vld [vmem:[%s8724 + $0xe8] sm:$0xff]
    %v8755 = vld [vmem:[%s8724 + $0xf0] sm:$0xff]
    %v8756 = vld [vmem:[%s8724 + $0xf8] sm:$0xff]
    %v8757 = vld [vmem:[%s8724 + $0x100] sm:$0xff]
    %v8758 = vld [vmem:[%s8724 + $0x108] sm:$0xff]
    %v8759 = vld [vmem:[%s8724 + $0x110] sm:$0xff]
    %v8760 = vld [vmem:[%s8724 + $0x118] sm:$0xff]
    %v8761 = vld [vmem:[%s8724 + $0x120] sm:$0xff]
    %v8762 = vld [vmem:[%s8724 + $0x128] sm:$0xff]
    %v8763 = vld [vmem:[%s8724 + $0x130] sm:$0xff]
    %v8764 = vld [vmem:[%s8724 + $0x138] sm:$0xff]
    %v8765 = vld [vmem:[%s8724 + $0x140] sm:$0xff]
    %v8766 = vld [vmem:[%s8724 + $0x148] sm:$0xff]
    %v8767 = vld [vmem:[%s8724 + $0x150] sm:$0xff]
    %v8768 = vld [vmem:[%s8724 + $0x158] sm:$0xff]
    %v8769 = vld [vmem:[%s8724 + $0x160] sm:$0xff]
    %v8770 = vld [vmem:[%s8724 + $0x168] sm:$0xff]
    %v8771 = vld [vmem:[%s8724 + $0x170] sm:$0xff]
    %v8772 = vld [vmem:[%s8724 + $0x178] sm:$0xff]
    %v8773 = vld [vmem:[%s8724 + $0x180] sm:$0xff]
    %v8774 = vld [vmem:[%s8724 + $0x188] sm:$0xff]
    %v8775 = vld [vmem:[%s8724 + $0x190] sm:$0xff]
    %v8776 = vld [vmem:[%s8724 + $0x198] sm:$0xff]
    %v8777 = vld [vmem:[%s8724 + $0x1a0] sm:$0xff]
    %v8778 = vld [vmem:[%s8724 + $0x1a8] sm:$0xff]
    %v8779 = vld [vmem:[%s8724 + $0x1b0] sm:$0xff]
    %v8780 = vld [vmem:[%s8724 + $0x1b8] sm:$0xff]
    %v8781 = vld [vmem:[%s8724 + $0x1c0] sm:$0xff]
    %v8782 = vld [vmem:[%s8724 + $0x1c8] sm:$0xff]
    %v8783 = vld [vmem:[%s8724 + $0x1d0] sm:$0xff]
    %v8784 = vld [vmem:[%s8724 + $0x1d8] sm:$0xff]
    %v8785 = vld [vmem:[%s8724 + $0x1e0] sm:$0xff]
    %v8786 = vld [vmem:[%s8724 + $0x1e8] sm:$0xff]
    %v8787 = vld [vmem:[%s8724 + $0x1f0] sm:$0xff]
    %v8788 = vld [vmem:[%s8724 + $0x1f8] sm:$0xff]
    %v8789 = vld [vmem:[%s8724 + $0x200] sm:$0xff]
    %v8790 = vld [vmem:[%s8724 + $0x208] sm:$0xff]
    %v8791 = vld [vmem:[%s8724 + $0x210] sm:$0xff]
    %v8792 = vld [vmem:[%s8724 + $0x218] sm:$0xff]
    %v8793 = vld [vmem:[%s8724 + $0x220] sm:$0xff]
    %v8794 = vld [vmem:[%s8724 + $0x228] sm:$0xff]
    %v8795 = vld [vmem:[%s8724 + $0x230] sm:$0xff]
    %v8796 = vld [vmem:[%s8724 + $0x238] sm:$0xff]
    %v8797 = vld [vmem:[%s8724 + $0x240] sm:$0xff]
    %v8798 = vld [vmem:[%s8724 + $0x248] sm:$0xff]
    %v8799 = vld [vmem:[%s8724 + $0x250] sm:$0xff]
    %v8800 = vld [vmem:[%s8724 + $0x258] sm:$0xff]
    %v8801 = vld [vmem:[%s8724 + $0x260] sm:$0xff]
    %v8802 = vld [vmem:[%s8724 + $0x268] sm:$0xff]
    %v8803 = vld [vmem:[%s8724 + $0x270] sm:$0xff]
    %v8804 = vld [vmem:[%s8724 + $0x278] sm:$0xff]
    %v8805 = vld [vmem:[%s8724 + $0x280] sm:$0xff]
    %v8806 = vld [vmem:[%s8724 + $0x288] sm:$0xff]
    %v8807 = vld [vmem:[%s8724 + $0x290] sm:$0xff]
    %v8808 = vld [vmem:[%s8724 + $0x298] sm:$0xff]
    %v8809 = vld [vmem:[%s8724 + $0x2a0] sm:$0xff]
    %v8810 = vld [vmem:[%s8724 + $0x2a8] sm:$0xff]
    %v8811 = vld [vmem:[%s8724 + $0x2b0] sm:$0xff]
    %v8812 = vld [vmem:[%s8724 + $0x2b8] sm:$0xff]
    %v8813 = vld [vmem:[%s8724 + $0x2c0] sm:$0xff]
    %v8814 = vld [vmem:[%s8724 + $0x2c8] sm:$0xff]
    %v8815 = vld [vmem:[%s8724 + $0x2d0] sm:$0xff]
    %v8816 = vld [vmem:[%s8724 + $0x2d8] sm:$0xff]
    %v8817 = vld [vmem:[%s8724 + $0x2e0] sm:$0xff]
    %v8818 = vld [vmem:[%s8724 + $0x2e8] sm:$0xff]
    %v8819 = vld [vmem:[%s8724 + $0x2f0] sm:$0xff]
    %v8820 = vld [vmem:[%s8724 + $0x2f8] sm:$0xff]
    %v8821 = vld [vmem:[%s8724 + $0x300] sm:$0xff]
    %v8822 = vld [vmem:[%s8724 + $0x308] sm:$0xff]
    %v8823 = vld [vmem:[%s8724 + $0x310] sm:$0xff]
    %v8824 = vld [vmem:[%s8724 + $0x318] sm:$0xff]
    %v8825 = vld [vmem:[%s8724 + $0x320] sm:$0xff]
    %v8826 = vld [vmem:[%s8724 + $0x328] sm:$0xff]
    %v8827 = vld [vmem:[%s8724 + $0x330] sm:$0xff]
    %v8828 = vld [vmem:[%s8724 + $0x338] sm:$0xff]
    %v8829 = vld [vmem:[%s8724 + $0x340] sm:$0xff]
    %v8830 = vld [vmem:[%s8724 + $0x348] sm:$0xff]
    %v8831 = vld [vmem:[%s8724 + $0x350] sm:$0xff]
    %v8832 = vld [vmem:[%s8724 + $0x358] sm:$0xff]
    %v8833 = vld [vmem:[%s8724 + $0x360] sm:$0xff]
    %v8834 = vld [vmem:[%s8724 + $0x368] sm:$0xff]
    %v8835 = vld [vmem:[%s8724 + $0x370] sm:$0xff]
    %v8836 = vld [vmem:[%s8724 + $0x378] sm:$0xff]
    %8837 = vmatprep.subr.mxu0 0.0
    %8838 = vmatpush1.msra.mxu0 %v8740
    %8839 = vmatprep.subr.mxu0 0.0
    %8840 = vmatpush1.msra.mxu0 %v8739
    %8841 = vmatprep.subr.mxu0 0.0
    %8842 = vmatpush1.msra.mxu0 %v8738
    %8843 = vmatprep.subr.mxu0 0.0
    %8844 = vmatpush1.msra.mxu0 %v8737
    %8845 = vmatprep.subr.mxu0 0.0
    %8846 = vmatpush1.msra.mxu0 %v8736
    %8847 = vmatprep.subr.mxu0 0.0
    %8848 = vmatpush1.msra.mxu0 %v8735
    %8849 = vmatprep.subr.mxu0 0.0
    %8850 = vmatpush1.msra.mxu0 %v8734
    %8851 = vmatprep.subr.mxu0 0.0
    %8852 = vmatpush1.msra.mxu0 %v8733
    %8853 = vmatprep.subr.mxu0 0.0
    %8854 = vmatpush1.msra.mxu0 %v8732
    %8855 = vmatprep.subr.mxu0 0.0
    %8856 = vmatpush1.msra.mxu0 %v8731
    %8857 = vmatprep.subr.mxu0 0.0
    %8858 = vmatpush1.msra.mxu0 %v8730
    %8859 = vmatprep.subr.mxu0 0.0
    %8860 = vmatpush1.msra.mxu0 %v8729
    %8861 = vmatprep.subr.mxu0 0.0
    %8862 = vmatpush1.msra.mxu0 %v8728
    %8863 = vmatprep.subr.mxu0 0.0
    %8864 = vmatpush1.msra.mxu0 %v8727
    %8865 = vmatprep.subr.mxu0 0.0
    %8866 = vmatpush1.msra.mxu0 %v8726
    %8867 = vmatprep.subr.mxu0 0.0
    %8868 = vmatpush1.msra.mxu0 %v8725
    %8869 = vmatprep.subr.mxu0 0.0
    %8870 = vmatpush2.msra.mxu0 %v8756
    %8871 = vmatprep.subr.mxu0 0.0
    %8872 = vmatpush2.msra.mxu0 %v8755
    %8873 = vmatprep.subr.mxu0 0.0
    %8874 = vmatpush2.msra.mxu0 %v8754
    %8875 = vmatprep.subr.mxu0 0.0
    %8876 = vmatpush2.msra.mxu0 %v8753
    %8877 = vmatprep.subr.mxu0 0.0
    %8878 = vmatpush2.msra.mxu0 %v8752
    %8879 = vmatprep.subr.mxu0 0.0
    %8880 = vmatpush2.msra.mxu0 %v8751
    %8881 = vmatprep.subr.mxu0 0.0
    %8882 = vmatpush2.msra.mxu0 %v8750
    %8883 = vmatprep.subr.mxu0 0.0
    %8884 = vmatpush2.msra.mxu0 %v8749
    %8885 = vmatprep.subr.mxu0 0.0
    %8886 = vmatpush2.msra.mxu0 %v8748
    %8887 = vmatprep.subr.mxu0 0.0
    %8888 = vmatpush2.msra.mxu0 %v8747
    %8889 = vmatprep.subr.mxu0 0.0
    %8890 = vmatpush2.msra.mxu0 %v8746
    %8891 = vmatprep.subr.mxu0 0.0
    %8892 = vmatpush2.msra.mxu0 %v8745
    %8893 = vmatprep.subr.mxu0 0.0
    %8894 = vmatpush2.msra.mxu0 %v8744
    %8895 = vmatprep.subr.mxu0 0.0
    %8896 = vmatpush2.msra.mxu0 %v8743
    %8897 = vmatprep.subr.mxu0 0.0
    %8898 = vmatpush2.msra.mxu0 %v8742
    %8899 = vmatprep.subr.mxu0 0.0
    %8900 = vmatpush2.msra.mxu0 %v8741
    %8901 = vmatprep.mubr.f32.mxu0 %v5963
    %8902 = vmatmul.mubr.f32.gmra.mxu0 %v5962
    %v8903 = vpop.f32.mrf.mxu0
    %v8904 = vadd.f32 0.0, %v8903
    %v8905 = vpop.f32.mrf.mxu0
    %8906 = vdwg.mxu0
    %8907 = vmatprep.subr.mxu0 0.0
    %8908 = vmatpush1.msra.mxu0 %v8772
    %8909 = vmatprep.subr.mxu0 0.0
    %8910 = vmatpush1.msra.mxu0 %v8771
    %8911 = vmatprep.subr.mxu0 0.0
    %8912 = vmatpush1.msra.mxu0 %v8770
    %8913 = vmatprep.subr.mxu0 0.0
    %8914 = vmatpush1.msra.mxu0 %v8769
    %8915 = vmatprep.subr.mxu0 0.0
    %8916 = vmatpush1.msra.mxu0 %v8768
    %8917 = vmatprep.subr.mxu0 0.0
    %8918 = vmatpush1.msra.mxu0 %v8767
    %8919 = vmatprep.subr.mxu0 0.0
    %8920 = vmatpush1.msra.mxu0 %v8766
    %8921 = vmatprep.subr.mxu0 0.0
    %8922 = vmatpush1.msra.mxu0 %v8765
    %8923 = vmatprep.subr.mxu0 0.0
    %8924 = vmatpush1.msra.mxu0 %v8764
    %8925 = vmatprep.subr.mxu0 0.0
    %8926 = vmatpush1.msra.mxu0 %v8763
    %8927 = vmatprep.subr.mxu0 0.0
    %8928 = vmatpush1.msra.mxu0 %v8762
    %8929 = vmatprep.subr.mxu0 0.0
    %8930 = vmatpush1.msra.mxu0 %v8761
    %8931 = vmatprep.subr.mxu0 0.0
    %8932 = vmatpush1.msra.mxu0 %v8760
    %8933 = vmatprep.subr.mxu0 0.0
    %8934 = vmatpush1.msra.mxu0 %v8759
    %8935 = vmatprep.subr.mxu0 0.0
    %8936 = vmatpush1.msra.mxu0 %v8758
    %8937 = vmatprep.subr.mxu0 0.0
    %8938 = vmatpush1.msra.mxu0 %v8757
    %8939 = vmatprep.subr.mxu0 0.0
    %8940 = vmatpush2.msra.mxu0 %v8788
    %8941 = vmatprep.subr.mxu0 0.0
    %8942 = vmatpush2.msra.mxu0 %v8787
    %8943 = vmatprep.subr.mxu0 0.0
    %8944 = vmatpush2.msra.mxu0 %v8786
    %8945 = vmatprep.subr.mxu0 0.0
    %8946 = vmatpush2.msra.mxu0 %v8785
    %8947 = vmatprep.subr.mxu0 0.0
    %8948 = vmatpush2.msra.mxu0 %v8784
    %8949 = vmatprep.subr.mxu0 0.0
    %8950 = vmatpush2.msra.mxu0 %v8783
    %8951 = vmatprep.subr.mxu0 0.0
    %8952 = vmatpush2.msra.mxu0 %v8782
    %8953 = vmatprep.subr.mxu0 0.0
    %8954 = vmatpush2.msra.mxu0 %v8781
    %8955 = vmatprep.subr.mxu0 0.0
    %8956 = vmatpush2.msra.mxu0 %v8780
    %8957 = vmatprep.subr.mxu0 0.0
    %8958 = vmatpush2.msra.mxu0 %v8779
    %8959 = vmatprep.subr.mxu0 0.0
    %8960 = vmatpush2.msra.mxu0 %v8778
    %8961 = vmatprep.subr.mxu0 0.0
    %8962 = vmatpush2.msra.mxu0 %v8777
    %8963 = vmatprep.subr.mxu0 0.0
    %8964 = vmatpush2.msra.mxu0 %v8776
    %8965 = vmatprep.subr.mxu0 0.0
    %8966 = vmatpush2.msra.mxu0 %v8775
    %8967 = vmatprep.subr.mxu0 0.0
    %8968 = vmatpush2.msra.mxu0 %v8774
    %8969 = vmatprep.subr.mxu0 0.0
    %8970 = vmatpush2.msra.mxu0 %v8773
    %8971 = vmatprep.mubr.f32.mxu0 %v5965
    %8972 = vmatmul.mubr.f32.gmra.mxu0 %v5964
    %v8973 = vpop.f32.mrf.mxu0
    %v8974 = vadd.f32 %v8904, %v8973
    %v8975 = vpop.f32.mrf.mxu0
    %8976 = vdwg.mxu0
    %8977 = vmatprep.subr.mxu0 0.0
    %8978 = vmatpush1.msra.mxu0 %v8804
    %8979 = vmatprep.subr.mxu0 0.0
    %8980 = vmatpush1.msra.mxu0 %v8803
    %8981 = vmatprep.subr.mxu0 0.0
    %8982 = vmatpush1.msra.mxu0 %v8802
    %8983 = vmatprep.subr.mxu0 0.0
    %8984 = vmatpush1.msra.mxu0 %v8801
    %8985 = vmatprep.subr.mxu0 0.0
    %8986 = vmatpush1.msra.mxu0 %v8800
    %8987 = vmatprep.subr.mxu0 0.0
    %8988 = vmatpush1.msra.mxu0 %v8799
    %8989 = vmatprep.subr.mxu0 0.0
    %8990 = vmatpush1.msra.mxu0 %v8798
    %8991 = vmatprep.subr.mxu0 0.0
    %8992 = vmatpush1.msra.mxu0 %v8797
    %8993 = vmatprep.subr.mxu0 0.0
    %8994 = vmatpush1.msra.mxu0 %v8796
    %8995 = vmatprep.subr.mxu0 0.0
    %8996 = vmatpush1.msra.mxu0 %v8795
    %8997 = vmatprep.subr.mxu0 0.0
    %8998 = vmatpush1.msra.mxu0 %v8794
    %8999 = vmatprep.subr.mxu0 0.0
    %9000 = vmatpush1.msra.mxu0 %v8793
    %9001 = vmatprep.subr.mxu0 0.0
    %9002 = vmatpush1.msra.mxu0 %v8792
    %9003 = vmatprep.subr.mxu0 0.0
    %9004 = vmatpush1.msra.mxu0 %v8791
    %9005 = vmatprep.subr.mxu0 0.0
    %9006 = vmatpush1.msra.mxu0 %v8790
    %9007 = vmatprep.subr.mxu0 0.0
    %9008 = vmatpush1.msra.mxu0 %v8789
    %9009 = vmatprep.subr.mxu0 0.0
    %9010 = vmatpush2.msra.mxu0 %v8820
    %9011 = vmatprep.subr.mxu0 0.0
    %9012 = vmatpush2.msra.mxu0 %v8819
    %9013 = vmatprep.subr.mxu0 0.0
    %9014 = vmatpush2.msra.mxu0 %v8818
    %9015 = vmatprep.subr.mxu0 0.0
    %9016 = vmatpush2.msra.mxu0 %v8817
    %9017 = vmatprep.subr.mxu0 0.0
    %9018 = vmatpush2.msra.mxu0 %v8816
    %9019 = vmatprep.subr.mxu0 0.0
    %9020 = vmatpush2.msra.mxu0 %v8815
    %9021 = vmatprep.subr.mxu0 0.0
    %9022 = vmatpush2.msra.mxu0 %v8814
    %9023 = vmatprep.subr.mxu0 0.0
    %9024 = vmatpush2.msra.mxu0 %v8813
    %9025 = vmatprep.subr.mxu0 0.0
    %9026 = vmatpush2.msra.mxu0 %v8812
    %9027 = vmatprep.subr.mxu0 0.0
    %9028 = vmatpush2.msra.mxu0 %v8811
    %9029 = vmatprep.subr.mxu0 0.0
    %9030 = vmatpush2.msra.mxu0 %v8810
    %9031 = vmatprep.subr.mxu0 0.0
    %9032 = vmatpush2.msra.mxu0 %v8809
    %9033 = vmatprep.subr.mxu0 0.0
    %9034 = vmatpush2.msra.mxu0 %v8808
    %9035 = vmatprep.subr.mxu0 0.0
    %9036 = vmatpush2.msra.mxu0 %v8807
    %9037 = vmatprep.subr.mxu0 0.0
    %9038 = vmatpush2.msra.mxu0 %v8806
    %9039 = vmatprep.subr.mxu0 0.0
    %9040 = vmatpush2.msra.mxu0 %v8805
    %9041 = vmatprep.mubr.f32.mxu0 %v5967
    %9042 = vmatmul.mubr.f32.gmra.mxu0 %v5966
    %v9043 = vpop.f32.mrf.mxu0
    %v9044 = vadd.f32 %v8974, %v9043
    %v9045 = vpop.f32.mrf.mxu0
    %9046 = vdwg.mxu0
    %9047 = vmatprep.subr.mxu0 0.0
    %9048 = vmatpush1.msra.mxu0 %v8836
    %9049 = vmatprep.subr.mxu0 0.0
    %9050 = vmatpush1.msra.mxu0 %v8835
    %9051 = vmatprep.subr.mxu0 0.0
    %9052 = vmatpush1.msra.mxu0 %v8834
    %9053 = vmatprep.subr.mxu0 0.0
    %9054 = vmatpush1.msra.mxu0 %v8833
    %9055 = vmatprep.subr.mxu0 0.0
    %9056 = vmatpush1.msra.mxu0 %v8832
    %9057 = vmatprep.subr.mxu0 0.0
    %9058 = vmatpush1.msra.mxu0 %v8831
    %9059 = vmatprep.subr.mxu0 0.0
    %9060 = vmatpush1.msra.mxu0 %v8830
    %9061 = vmatprep.subr.mxu0 0.0
    %9062 = vmatpush1.msra.mxu0 %v8829
    %9063 = vmatprep.subr.mxu0 0.0
    %9064 = vmatpush1.msra.mxu0 %v8828
    %9065 = vmatprep.subr.mxu0 0.0
    %9066 = vmatpush1.msra.mxu0 %v8827
    %9067 = vmatprep.subr.mxu0 0.0
    %9068 = vmatpush1.msra.mxu0 %v8826
    %9069 = vmatprep.subr.mxu0 0.0
    %9070 = vmatpush1.msra.mxu0 %v8825
    %9071 = vmatprep.subr.mxu0 0.0
    %9072 = vmatpush1.msra.mxu0 %v8824
    %9073 = vmatprep.subr.mxu0 0.0
    %9074 = vmatpush1.msra.mxu0 %v8823
    %9075 = vmatprep.subr.mxu0 0.0
    %9076 = vmatpush1.msra.mxu0 %v8822
    %9077 = vmatprep.subr.mxu0 0.0
    %9078 = vmatpush1.msra.mxu0 %v8821
    %9079 = vmatprep.subr.mxu0 0.0
    %9080 = vmatpush2.msra.mxu0 0.0
    %9081 = vmatprep.subr.mxu0 0.0
    %9082 = vmatpush2.msra.mxu0 0.0
    %9083 = vmatprep.subr.mxu0 0.0
    %9084 = vmatpush2.msra.mxu0 0.0
    %9085 = vmatprep.subr.mxu0 0.0
    %9086 = vmatpush2.msra.mxu0 0.0
    %9087 = vmatprep.subr.mxu0 0.0
    %9088 = vmatpush2.msra.mxu0 0.0
    %9089 = vmatprep.subr.mxu0 0.0
    %9090 = vmatpush2.msra.mxu0 0.0
    %9091 = vmatprep.subr.mxu0 0.0
    %9092 = vmatpush2.msra.mxu0 0.0
    %9093 = vmatprep.subr.mxu0 0.0
    %9094 = vmatpush2.msra.mxu0 0.0
    %9095 = vmatprep.subr.mxu0 0.0
    %9096 = vmatpush2.msra.mxu0 0.0
    %9097 = vmatprep.subr.mxu0 0.0
    %9098 = vmatpush2.msra.mxu0 0.0
    %9099 = vmatprep.subr.mxu0 0.0
    %9100 = vmatpush2.msra.mxu0 0.0
    %9101 = vmatprep.subr.mxu0 0.0
    %9102 = vmatpush2.msra.mxu0 0.0
    %9103 = vmatprep.subr.mxu0 0.0
    %9104 = vmatpush2.msra.mxu0 0.0
    %9105 = vmatprep.subr.mxu0 0.0
    %9106 = vmatpush2.msra.mxu0 0.0
    %9107 = vmatprep.subr.mxu0 0.0
    %9108 = vmatpush2.msra.mxu0 0.0
    %9109 = vmatprep.subr.mxu0 0.0
    %9110 = vmatpush2.msra.mxu0 0.0
    %9111 = vmatprep.mubr.f32.mxu0 0.0
    %9112 = vmatmul.mubr.f32.gmra.mxu0 %v5968
    %v9113 = vpop.f32.mrf.mxu0
    %v9114 = vadd.f32 %v9044, %v9113
    %v9115 = vpop.f32.mrf.mxu0
    %9116 = vdwg.mxu0
    %v9117 = vadd.f32 %v8723, %v9114
    %v9118 = vld [vmem:[#allocation9] sm:$0x1]
    %v9120 = vlaneseq
    %v9121 = vshrl.u32 %v9120, 7
    %v9122 = vsub.s32 0, %v9121
    %v9123 = vrot.slane %v9118, %v9122
    %v9125 = vadd.f32 %v9117, %v9123
    %9126 = vst [vmem:[%s8] sm:$0xff] %v9125
    // Predicated region
    $region54: #{cnn_encoder_forward.1} parent=1 // pred_check
      _
    $region55: #{cnn_encoder_forward.1} parent=1 // pred_check_branch
      %9128 = sbr.rel (0) target = $region57
    $region56: #{cnn_encoder_forward.1} parent=1 // pred_region
      _
    $region57: #{cnn_encoder_forward.1} parent=1 // pred_fallthru
      _
    // Predicated region
    $region58: #{cnn_encoder_forward.1} parent=1 // pred_check
      _
    $region59: #{cnn_encoder_forward.1} parent=1 // pred_check_branch
      %9130 = sbr.rel (0) target = $region61
    $region60: #{cnn_encoder_forward.1} parent=1 // pred_region
      _
    $region61: #{cnn_encoder_forward.1} parent=1 // pred_fallthru
      _
    %9131 = vsyncpa [#allocation3], 1
    %9132 = vsyncpa [#allocation5], 1
    %9133 = vsyncpa [#allocation8], 1

</llo_original>
